<compile_context>
chip_gen: v7x
topology: tpu7x:2x2x1
jax: 0.10.0
libtpu: 0.0.40
codegen_flags: <defaults>
</compile_context>

<pallas_src>
import functools
import math

import jax
import jax.numpy as jnp
from jax import lax
from jax.experimental import pallas as pl
from jax.experimental.pallas import tpu as pltpu


# ------------------------------- small helpers -------------------------------

def _round_up(x, m):
    return (x + m - 1) // m * m


def _pad_axis(a, axis, new_size):
    if a.shape[axis] == new_size:
        return a
    pads = [(0, 0)] * a.ndim
    pads[axis] = (0, new_size - a.shape[axis])
    return jnp.pad(a, pads)


def _pick_tm(mp):
    # Largest M-tile that still gives >= 2 grid steps (so v7x's 2 TCs both get work).
    for tm in (128, 64, 32, 16, 8):
        if mp % tm == 0 and mp // tm >= 2:
            return tm
    return mp


# ------------------------- fused VGG block (Pallas) ---------------------------

def _conv3x3(load_tap, w_ref, b_row, hw, cin, im2col):
    """3x3 'same' conv over an (H*W, Cin) tap loader. Returns ReLU(conv + bias), f32."""
    cout = w_ref.shape[1]
    if im2col:
        # One big-K bf16 matmul: patch (H*W, 9*Cin) @ w (9*Cin, Cout).
        patch = jnp.concatenate(
            [load_tap(kh, kw) for kh in range(3) for kw in range(3)], axis=-1)
        acc = jnp.dot(patch.astype(jnp.bfloat16), w_ref[...],
                      preferred_element_type=jnp.float32)
    else:
        # Tiny-Cin path (first conv): 9 taps, K=Cin each.
        acc = jnp.zeros((hw, cout), jnp.float32)
        for kh in range(3):
            for kw in range(3):
                t = kh * 3 + kw
                tap = load_tap(kh, kw).astype(jnp.bfloat16)
                acc = acc + jnp.dot(tap, w_ref[t * cin:(t + 1) * cin, :],
                                    preferred_element_type=jnp.float32)
    return jnp.maximum(acc + b_row, 0.0)


def _vgg_block_kernel(x_ref, w1_ref, b1_ref, w2_ref, b2_ref, o_ref, act_ref,
                      *, H, W, C1, C2, C3, im2col_first):
    # x_ref : (1, H+2, W+2, C1)  spatially zero-padded input (f32)
    # w1_ref: (9*C1, C2) bf16,  b1_ref: (1, C2) f32
    # w2_ref: (9*C2, C3) bf16,  b2_ref: (1, C3) f32
    # o_ref : (1, H//2, W//2, C3) f32
    # act_ref: VMEM scratch (H+2, W+2, C2) f32 — conv1 output with zero halo for conv2.

    def tap1(kh, kw):
        return x_ref[0, kh:kh + H, kw:kw + W, :].reshape(H * W, C1)

    a1 = _conv3x3(tap1, w1_ref, b1_ref[0], H * W, C1, im2col_first)     # (H*W, C2)

    act_ref[...] = jnp.zeros((H + 2, W + 2, C2), jnp.float32)
    act_ref[1:1 + H, 1:1 + W, :] = a1.reshape(H, W, C2)

    def tap2(kh, kw):
        return act_ref[kh:kh + H, kw:kw + W, :].reshape(H * W, C2)

    a2 = _conv3x3(tap2, w2_ref, b2_ref[0], H * W, C2, True)             # (H*W, C3)
    a2 = a2.reshape(H, W, C3)

    # 2x2 max-pool, stride 2 (H and W assumed even, as in the reference toy shapes).
    a2 = a2.reshape(H, W // 2, 2, C3).max(axis=2)
    a2 = a2.reshape(H // 2, 2, W // 2, C3).max(axis=1)
    o_ref[0] = a2.astype(o_ref.dtype)


def vgg_block(x, w1, b1, w2, b2, im2col_first=True):
    """Fused conv3x3+ReLU -> conv3x3+ReLU -> maxpool2.  x: (B,H,W,C1) NHWC f32.
    w1: (9*C1, C2) bf16, w2: (9*C2, C3) bf16.  Returns (B, H//2, W//2, C3) f32."""
    B, H, W, C1 = x.shape
    C2 = w1.shape[1]
    C3 = w2.shape[1]
    xp = jnp.pad(x, ((0, 0), (1, 1), (1, 1), (0, 0)))   # 'same' padding for both convs
    kern = functools.partial(_vgg_block_kernel, H=H, W=W, C1=C1, C2=C2, C3=C3,
                             im2col_first=im2col_first)
    return pl.pallas_call(
        kern,
        out_shape=jax.ShapeDtypeStruct((B, H // 2, W // 2, C3), jnp.float32),
        grid=(B,),
        in_specs=[
            pl.BlockSpec((1, H + 2, W + 2, C1), lambda bi: (bi, 0, 0, 0)),
            pl.BlockSpec((9 * C1, C2), lambda bi: (0, 0)),
            pl.BlockSpec((1, C2), lambda bi: (0, 0)),
            pl.BlockSpec((9 * C2, C3), lambda bi: (0, 0)),
            pl.BlockSpec((1, C3), lambda bi: (0, 0)),
        ],
        out_specs=pl.BlockSpec((1, H // 2, W // 2, C3), lambda bi: (bi, 0, 0, 0)),
        scratch_shapes=[pltpu.VMEM((H + 2, W + 2, C2), jnp.float32)],
        compiler_params=pltpu.CompilerParams(dimension_semantics=("parallel",)),
    )(xp, w1, b1.reshape(1, C2), w2, b2.reshape(1, C3))


# ---------------------------- linear (Pallas) ---------------------------------

def _linear_kernel(x_ref, w_ref, b_ref, o_ref, *, apply_relu):
    y = jnp.dot(x_ref[...].astype(jnp.bfloat16), w_ref[...],
                preferred_element_type=jnp.float32) + b_ref[0]
    if apply_relu:
        y = jnp.maximum(y, 0.0)
    o_ref[...] = y.astype(o_ref.dtype)


def linear(x2d, w, b, apply_relu=False):
    """x2d: (M, K) f32, w: (K, N) f32, b: (N,) f32.
    Returns (M, Np) f32 with Np = round_up(N, 128); columns >= N are exact zeros
    (zero-padded weights / bias), so downstream matmuls stay correct. Lane-dense stores."""
    M, K = x2d.shape
    Kw, N = w.shape
    assert Kw == K, (Kw, K)
    Np = _round_up(N, 128)
    Mp = _round_up(M, 8)
    w = _pad_axis(w, 1, Np).astype(jnp.bfloat16)
    b = _pad_axis(b, 0, Np).astype(jnp.float32)
    xp = _pad_axis(x2d, 0, Mp)
    tm = _pick_tm(Mp)
    kern = functools.partial(_linear_kernel, apply_relu=apply_relu)
    y = pl.pallas_call(
        kern,
        out_shape=jax.ShapeDtypeStruct((Mp, Np), jnp.float32),
        grid=(Mp // tm,),
        in_specs=[pl.BlockSpec((tm, K), lambda i: (i, 0)),
                  pl.BlockSpec((K, Np), lambda i: (0, 0)),
                  pl.BlockSpec((1, Np), lambda i: (0, 0))],
        out_specs=pl.BlockSpec((tm, Np), lambda i: (i, 0)),
        compiler_params=pltpu.CompilerParams(dimension_semantics=("parallel",)),
    )(xp, w, b.reshape(1, Np))
    return y[:M]


# ------------------------ cross-attention (Pallas) -----------------------------

def _xattn_kernel(q_ref, k_ref, v_ref, o_ref, *, scale):
    q = q_ref[0].astype(jnp.bfloat16)                     # (Tq, D)
    k = k_ref[0].astype(jnp.bfloat16)                     # (Tk, D)
    # Contract on the last dims; no explicit K transpose before the MXU push.
    s = lax.dot_general(q, k, (((1,), (1,)), ((), ())),
                        preferred_element_type=jnp.float32) * scale      # (Tq, Tk)
    m = jnp.max(s, axis=-1, keepdims=True)
    p = jnp.exp(s - m)
    l = jnp.sum(p, axis=-1, keepdims=True)
    pv = jnp.dot(p.astype(jnp.bfloat16), v_ref[0].astype(jnp.bfloat16),
                 preferred_element_type=jnp.float32)                     # (Tq, D)
    o_ref[0] = (pv * pl.reciprocal(l, approx=True)).astype(o_ref.dtype)


def cross_attention(q, k, v, d_true):
    """q: (B, Tq, D), k/v: (B, Tk, D) -> softmax(QK^T / sqrt(d_true)) V, (B, Tq, D)."""
    B, Tq, D = q.shape
    Tk = k.shape[1]
    kern = functools.partial(_xattn_kernel, scale=1.0 / math.sqrt(d_true))
    return pl.pallas_call(
        kern,
        out_shape=jax.ShapeDtypeStruct((B, Tq, D), jnp.float32),
        grid=(B,),
        in_specs=[pl.BlockSpec((1, Tq, D), lambda bi: (bi, 0, 0)),
                  pl.BlockSpec((1, Tk, D), lambda bi: (bi, 0, 0)),
                  pl.BlockSpec((1, Tk, D), lambda bi: (bi, 0, 0))],
        out_specs=pl.BlockSpec((1, Tq, D), lambda bi: (bi, 0, 0)),
        compiler_params=pltpu.CompilerParams(dimension_semantics=("parallel",)),
    )(q, k, v)


# --------------------------- parameter construction ----------------------------

def _xavier(key, shape, fan_in, fan_out):
    limit = math.sqrt(6.0 / (fan_in + fan_out))
    return jax.random.uniform(key, shape, jnp.float32, -limit, limit)


def init_params(key, d_in_after_cnn, d_model, vocab):
    ks = jax.random.split(key, 12)
    p = {}
    # vgg_cnn conv stack: (1->64), (64->64), pool, (64->128), (128->128), pool
    p['c1_w'] = _xavier(ks[0], (3, 3, 1, 64), 1 * 9, 64 * 9)
    p['c1_b'] = jnp.zeros((64,), jnp.float32)
    p['c2_w'] = _xavier(ks[1], (3, 3, 64, 64), 64 * 9, 64 * 9)
    p['c2_b'] = jnp.zeros((64,), jnp.float32)
    p['c3_w'] = _xavier(ks[2], (3, 3, 64, 128), 64 * 9, 128 * 9)
    p['c3_b'] = jnp.zeros((128,), jnp.float32)
    p['c4_w'] = _xavier(ks[3], (3, 3, 128, 128), 128 * 9, 128 * 9)
    p['c4_b'] = jnp.zeros((128,), jnp.float32)
    # minimal encoder: Linear(D_in, d_model) + ReLU
    p['enc_w'] = _xavier(ks[4], (d_in_after_cnn, d_model), d_in_after_cnn, d_model)
    p['enc_b'] = jnp.zeros((d_model,), jnp.float32)
    # minimal decoder: embedding + cross-attention + output projection
    p['emb'] = _xavier(ks[5], (vocab, d_model), vocab, d_model)
    p['wq'] = _xavier(ks[6], (d_model, d_model), d_model, d_model)
    p['bq'] = jnp.zeros((d_model,), jnp.float32)
    p['wk'] = _xavier(ks[7], (d_model, d_model), d_model, d_model)
    p['bk'] = jnp.zeros((d_model,), jnp.float32)
    p['wv'] = _xavier(ks[8], (d_model, d_model), d_model, d_model)
    p['bv'] = jnp.zeros((d_model,), jnp.float32)
    p['out_w'] = _xavier(ks[9], (d_model, vocab), d_model, vocab)
    p['out_b'] = jnp.zeros((vocab,), jnp.float32)
    return p


def _prep_conv_w(w, cin_pad=None):
    """(3,3,Cin,Cout) -> bf16 (9*Cin_pad, Cout) matching the im2col column order."""
    if cin_pad is not None:
        w = _pad_axis(w, 2, cin_pad)
    _, _, cin, cout = w.shape
    return w.reshape(9 * cin, cout).astype(jnp.bfloat16)


# -------------------------------- forward pass ---------------------------------

def transformer_forward(params, padded_input_nchw, input_lengths, padded_target):
    """
    padded_input_nchw: (B, 1, freq, T) like the PyTorch reference (NCHW)
    input_lengths:     (B,)   (unused by the minimal stand-in encoder)
    padded_target:     (B, T_tgt) int32
    returns (pred, gold, hyp_seq, gold_seq)
    """
    del input_lengths  # TODO(synk): length masking lives in the external encoder/decoder.
    p = params
    x = jnp.transpose(padded_input_nchw, (0, 2, 3, 1))      # NCHW -> NHWC
    C_IN_PAD = 8
    x = _pad_axis(x, 3, C_IN_PAD)                            # zero channel padding

    w1 = _prep_conv_w(p['c1_w'], C_IN_PAD)                   # (72, 64)
    w2 = _prep_conv_w(p['c2_w'])                             # (576, 64)
    w3 = _prep_conv_w(p['c3_w'])                             # (576, 128)
    w4 = _prep_conv_w(p['c4_w'])                             # (1152, 128)

    # vgg_cnn: two fused conv-conv-pool blocks (all conv/pool compute in Pallas)
    x = vgg_block(x, w1, p['c1_b'], w2, p['c2_b'], im2col_first=False)  # (B, H/2, W/2, 64)
    x = vgg_block(x, w3, p['c3_b'], w4, p['c4_b'], im2col_first=True)   # (B, H/4, W/4, 128)

    B, H, W, C = x.shape
    # PyTorch: view(B, C*H, W).transpose(1, 2)  ->  feature index = c*H + h
    feat = jnp.transpose(x, (0, 2, 3, 1)).reshape(B, W, C * H)          # (B, T', C*H)

    T_enc, D_in = feat.shape[1], feat.shape[2]
    d_model = p['enc_w'].shape[1]
    DMP = _round_up(d_model, 128)                   # lane-padded model dim (extra cols are 0)
    vocab = p['out_w'].shape[1]
    T_tgt = padded_target.shape[1]

    # ---- minimal encoder: Linear + ReLU (output lane-padded to DMP, padding cols = 0) ----
    enc = linear(feat.reshape(B * T_enc, D_in), p['enc_w'], p['enc_b'], apply_relu=True)

    # ---- minimal decoder ----
    # Embedding lookup as a gather (no one-hot matmul).
    emb_p = _pad_axis(p['emb'], 1, DMP)
    tgt_emb = jnp.take(emb_p, padded_target, axis=0)                    # (B, T_tgt, DMP)

    # Q projection (K padded to DMP with zero rows).
    wq_p = _pad_axis(p['wq'], 0, DMP)
    q = linear(tgt_emb.reshape(B * T_tgt, DMP), wq_p, p['bq'])          # (B*T_tgt, DMP)

    # Fused K/V projection: one (DMP, 2*DMP) matmul on `enc`.
    wk_p = _pad_axis(_pad_axis(p['wk'], 0, DMP), 1, DMP)
    wv_p = _pad_axis(_pad_axis(p['wv'], 0, DMP), 1, DMP)
    w_kv = jnp.concatenate([wk_p, wv_p], axis=1)                        # (DMP, 2*DMP)
    b_kv = jnp.concatenate([_pad_axis(p['bk'], 0, DMP), _pad_axis(p['bv'], 0, DMP)])
    kv = linear(enc, w_kv, b_kv)                                        # (B*T_enc, 2*DMP)
    k = kv[:, :DMP].reshape(B, T_enc, DMP)
    v = kv[:, DMP:].reshape(B, T_enc, DMP)
    q = q.reshape(B, T_tgt, DMP)

    # Zero-padded lanes contribute nothing to QK^T or PV; scale uses the true d_model.
    attn = cross_attention(q, k, v, d_model)                            # (B, T_tgt, DMP)

    out_w_p = _pad_axis(p['out_w'], 0, DMP)
    pred = linear(attn.reshape(B * T_tgt, DMP), out_w_p, p['out_b'])[:, :vocab]
    pred = pred.reshape(B, T_tgt, vocab)

    gold = padded_target
    # torch.topk(pred, 1, dim=2).indices.squeeze(2) == argmax over vocab
    hyp_seq = jnp.argmax(pred, axis=2)
    gold_seq = gold
    return pred, gold, hyp_seq, gold_seq


# ------------------------------------- main -------------------------------------

if __name__ == "__main__":
    key = jax.random.PRNGKey(0)
    k_in, k_tgt, k_par = jax.random.split(key, 3)

    B, FREQ, T = 2, 16, 16
    T_TGT, VOCAB, D_MODEL = 8, 16, 32

    padded_input = jax.random.normal(k_in, (B, 1, FREQ, T), jnp.float32)   # NCHW
    input_lengths = jnp.array([T, T], jnp.int32)
    padded_target = jax.random.randint(k_tgt, (B, T_TGT), 0, VOCAB, jnp.int32)

    # after two 2x maxpools: H=FREQ//4, W=T//4, C=128 -> feature dim = 128 * (FREQ//4)
    d_in_after_cnn = 128 * (FREQ // 4)
    params = init_params(k_par, d_in_after_cnn, D_MODEL, VOCAB)

    pred, gold, hyp_seq, gold_seq = transformer_forward(
        params, padded_input, input_lengths, padded_target)
    jax.block_until_ready((pred, gold, hyp_seq, gold_seq))

    assert pred.shape == (B, T_TGT, VOCAB)
    assert gold.shape == (B, T_TGT)
    assert hyp_seq.shape == (B, T_TGT)
    assert gold_seq.shape == (B, T_TGT)
    print("KERNEL_OK")
</pallas_src>

<mosaic_0001>
module attributes {stable_mosaic.version = 11 : i64} {
  func.func @_vgg_block_kernel(%arg0: i32, %arg1: memref<1x18x18x8xf32, #tpu.memory_space<vmem>>, %arg2: memref<72x64xbf16, #tpu.memory_space<vmem>>, %arg3: memref<1x64xf32, #tpu.memory_space<vmem>>, %arg4: memref<576x64xbf16, #tpu.memory_space<vmem>>, %arg5: memref<1x64xf32, #tpu.memory_space<vmem>>, %arg6: memref<1x8x8x64xf32, #tpu.memory_space<vmem>>, %arg7: memref<18x18x64xf32, #tpu.memory_space<vmem>>) attributes {dimension_semantics = [#tpu.dimension_semantics<parallel>], iteration_bounds = array<i64: 2>, scalar_prefetch = 0 : i64, scratch_operands = 1 : i64, tpu.core_type = #tpu.core_type<tc>, window_params = [{transform_indices = @transform_0, window_bounds = array<i64: 1, 18, 18, 8>}, {pipeline_mode = #tpu.pipeline_mode<synchronous>, transform_indices = @transform_1, window_bounds = array<i64: 72, 64>}, {pipeline_mode = #tpu.pipeline_mode<synchronous>, transform_indices = @transform_2, window_bounds = array<i64: 1, 64>}, {pipeline_mode = #tpu.pipeline_mode<synchronous>, transform_indices = @transform_3, window_bounds = array<i64: 576, 64>}, {pipeline_mode = #tpu.pipeline_mode<synchronous>, transform_indices = @transform_4, window_bounds = array<i64: 1, 64>}, {transform_indices = @transform_5, window_bounds = array<i64: 1, 8, 8, 64>}]} {
    %c0 = arith.constant 0 : index
    %c0_0 = arith.constant 0 : index
    %0 = vector.load %arg3[%c0, %c0_0] : memref<1x64xf32, #tpu.memory_space<vmem>>, vector<1x64xf32>
    %1 = vector.shape_cast %0 : vector<1x64xf32> to vector<64xf32>
    %cst = arith.constant 0.000000e+00 : f32
    %2 = vector.broadcast %cst : f32 to vector<256x64xf32>
    %c0_1 = arith.constant 0 : index
    %c0_2 = arith.constant 0 : index
    %c0_3 = arith.constant 0 : index
    %c0_4 = arith.constant 0 : index
    %3 = vector.load %arg1[%c0_1, %c0_2, %c0_3, %c0_4] : memref<1x18x18x8xf32, #tpu.memory_space<vmem>>, vector<1x16x16x8xf32>
    %4 = vector.shape_cast %3 : vector<1x16x16x8xf32> to vector<16x16x8xf32>
    %5 = vector.shape_cast %4 : vector<16x16x8xf32> to vector<256x8xf32>
    %6 = arith.truncf %5 : vector<256x8xf32> to vector<256x8xbf16>
    %c0_5 = arith.constant 0 : index
    %c0_6 = arith.constant 0 : index
    %7 = vector.load %arg2[%c0_5, %c0_6] : memref<72x64xbf16, #tpu.memory_space<vmem>>, vector<8x64xbf16>
    %cst_7 = arith.constant dense<0.000000e+00> : vector<256x64xf32>
    %8 = tpu.matmul %6, %7, %cst_7 {dimension_numbers = #tpu.dot_dimension_numbers<[1], [0], [0], [1], [0, 0, 1, 1], [], []>} : vector<256x8xbf16>, vector<8x64xbf16>, vector<256x64xf32> -> vector<256x64xf32>
    %9 = arith.addf %2, %8 : vector<256x64xf32>
    %c0_8 = arith.constant 0 : index
    %c0_9 = arith.constant 0 : index
    %c1 = arith.constant 1 : index
    %c0_10 = arith.constant 0 : index
    %10 = vector.load %arg1[%c0_8, %c0_9, %c1, %c0_10] : memref<1x18x18x8xf32, #tpu.memory_space<vmem>>, vector<1x16x16x8xf32>
    %11 = vector.shape_cast %10 : vector<1x16x16x8xf32> to vector<16x16x8xf32>
    %12 = vector.shape_cast %11 : vector<16x16x8xf32> to vector<256x8xf32>
    %13 = arith.truncf %12 : vector<256x8xf32> to vector<256x8xbf16>
    %c8 = arith.constant 8 : index
    %c0_11 = arith.constant 0 : index
    %14 = vector.load %arg2[%c8, %c0_11] : memref<72x64xbf16, #tpu.memory_space<vmem>>, vector<8x64xbf16>
    %cst_12 = arith.constant dense<0.000000e+00> : vector<256x64xf32>
    %15 = tpu.matmul %13, %14, %cst_12 {dimension_numbers = #tpu.dot_dimension_numbers<[1], [0], [0], [1], [0, 0, 1, 1], [], []>} : vector<256x8xbf16>, vector<8x64xbf16>, vector<256x64xf32> -> vector<256x64xf32>
    %16 = arith.addf %9, %15 : vector<256x64xf32>
    %c0_13 = arith.constant 0 : index
    %c0_14 = arith.constant 0 : index
    %c2 = arith.constant 2 : index
    %c0_15 = arith.constant 0 : index
    %17 = vector.load %arg1[%c0_13, %c0_14, %c2, %c0_15] : memref<1x18x18x8xf32, #tpu.memory_space<vmem>>, vector<1x16x16x8xf32>
    %18 = vector.shape_cast %17 : vector<1x16x16x8xf32> to vector<16x16x8xf32>
    %19 = vector.shape_cast %18 : vector<16x16x8xf32> to vector<256x8xf32>
    %20 = arith.truncf %19 : vector<256x8xf32> to vector<256x8xbf16>
    %c16 = arith.constant 16 : index
    %c0_16 = arith.constant 0 : index
    %21 = vector.load %arg2[%c16, %c0_16] : memref<72x64xbf16, #tpu.memory_space<vmem>>, vector<8x64xbf16>
    %cst_17 = arith.constant dense<0.000000e+00> : vector<256x64xf32>
    %22 = tpu.matmul %20, %21, %cst_17 {dimension_numbers = #tpu.dot_dimension_numbers<[1], [0], [0], [1], [0, 0, 1, 1], [], []>} : vector<256x8xbf16>, vector<8x64xbf16>, vector<256x64xf32> -> vector<256x64xf32>
    %23 = arith.addf %16, %22 : vector<256x64xf32>
    %c0_18 = arith.constant 0 : index
    %c1_19 = arith.constant 1 : index
    %c0_20 = arith.constant 0 : index
    %c0_21 = arith.constant 0 : index
    %24 = vector.load %arg1[%c0_18, %c1_19, %c0_20, %c0_21] : memref<1x18x18x8xf32, #tpu.memory_space<vmem>>, vector<1x16x16x8xf32>
    %25 = vector.shape_cast %24 : vector<1x16x16x8xf32> to vector<16x16x8xf32>
    %26 = vector.shape_cast %25 : vector<16x16x8xf32> to vector<256x8xf32>
    %27 = arith.truncf %26 : vector<256x8xf32> to vector<256x8xbf16>
    %c24 = arith.constant 24 : index
    %c0_22 = arith.constant 0 : index
    %28 = vector.load %arg2[%c24, %c0_22] : memref<72x64xbf16, #tpu.memory_space<vmem>>, vector<8x64xbf16>
    %cst_23 = arith.constant dense<0.000000e+00> : vector<256x64xf32>
    %29 = tpu.matmul %27, %28, %cst_23 {dimension_numbers = #tpu.dot_dimension_numbers<[1], [0], [0], [1], [0, 0, 1, 1], [], []>} : vector<256x8xbf16>, vector<8x64xbf16>, vector<256x64xf32> -> vector<256x64xf32>
    %30 = arith.addf %23, %29 : vector<256x64xf32>
    %c0_24 = arith.constant 0 : index
    %c1_25 = arith.constant 1 : index
    %c1_26 = arith.constant 1 : index
    %c0_27 = arith.constant 0 : index
    %31 = vector.load %arg1[%c0_24, %c1_25, %c1_26, %c0_27] : memref<1x18x18x8xf32, #tpu.memory_space<vmem>>, vector<1x16x16x8xf32>
    %32 = vector.shape_cast %31 : vector<1x16x16x8xf32> to vector<16x16x8xf32>
    %33 = vector.shape_cast %32 : vector<16x16x8xf32> to vector<256x8xf32>
    %34 = arith.truncf %33 : vector<256x8xf32> to vector<256x8xbf16>
    %c32 = arith.constant 32 : index
    %c0_28 = arith.constant 0 : index
    %35 = vector.load %arg2[%c32, %c0_28] : memref<72x64xbf16, #tpu.memory_space<vmem>>, vector<8x64xbf16>
    %cst_29 = arith.constant dense<0.000000e+00> : vector<256x64xf32>
    %36 = tpu.matmul %34, %35, %cst_29 {dimension_numbers = #tpu.dot_dimension_numbers<[1], [0], [0], [1], [0, 0, 1, 1], [], []>} : vector<256x8xbf16>, vector<8x64xbf16>, vector<256x64xf32> -> vector<256x64xf32>
    %37 = arith.addf %30, %36 : vector<256x64xf32>
    %c0_30 = arith.constant 0 : index
    %c1_31 = arith.constant 1 : index
    %c2_32 = arith.constant 2 : index
    %c0_33 = arith.constant 0 : index
    %38 = vector.load %arg1[%c0_30, %c1_31, %c2_32, %c0_33] : memref<1x18x18x8xf32, #tpu.memory_space<vmem>>, vector<1x16x16x8xf32>
    %39 = vector.shape_cast %38 : vector<1x16x16x8xf32> to vector<16x16x8xf32>
    %40 = vector.shape_cast %39 : vector<16x16x8xf32> to vector<256x8xf32>
    %41 = arith.truncf %40 : vector<256x8xf32> to vector<256x8xbf16>
    %c40 = arith.constant 40 : index
    %c0_34 = arith.constant 0 : index
    %42 = vector.load %arg2[%c40, %c0_34] : memref<72x64xbf16, #tpu.memory_space<vmem>>, vector<8x64xbf16>
    %cst_35 = arith.constant dense<0.000000e+00> : vector<256x64xf32>
    %43 = tpu.matmul %41, %42, %cst_35 {dimension_numbers = #tpu.dot_dimension_numbers<[1], [0], [0], [1], [0, 0, 1, 1], [], []>} : vector<256x8xbf16>, vector<8x64xbf16>, vector<256x64xf32> -> vector<256x64xf32>
    %44 = arith.addf %37, %43 : vector<256x64xf32>
    %c0_36 = arith.constant 0 : index
    %c2_37 = arith.constant 2 : index
    %c0_38 = arith.constant 0 : index
    %c0_39 = arith.constant 0 : index
    %45 = vector.load %arg1[%c0_36, %c2_37, %c0_38, %c0_39] : memref<1x18x18x8xf32, #tpu.memory_space<vmem>>, vector<1x16x16x8xf32>
    %46 = vector.shape_cast %45 : vector<1x16x16x8xf32> to vector<16x16x8xf32>
    %47 = vector.shape_cast %46 : vector<16x16x8xf32> to vector<256x8xf32>
    %48 = arith.truncf %47 : vector<256x8xf32> to vector<256x8xbf16>
    %c48 = arith.constant 48 : index
    %c0_40 = arith.constant 0 : index
    %49 = vector.load %arg2[%c48, %c0_40] : memref<72x64xbf16, #tpu.memory_space<vmem>>, vector<8x64xbf16>
    %cst_41 = arith.constant dense<0.000000e+00> : vector<256x64xf32>
    %50 = tpu.matmul %48, %49, %cst_41 {dimension_numbers = #tpu.dot_dimension_numbers<[1], [0], [0], [1], [0, 0, 1, 1], [], []>} : vector<256x8xbf16>, vector<8x64xbf16>, vector<256x64xf32> -> vector<256x64xf32>
    %51 = arith.addf %44, %50 : vector<256x64xf32>
    %c0_42 = arith.constant 0 : index
    %c2_43 = arith.constant 2 : index
    %c1_44 = arith.constant 1 : index
    %c0_45 = arith.constant 0 : index
    %52 = vector.load %arg1[%c0_42, %c2_43, %c1_44, %c0_45] : memref<1x18x18x8xf32, #tpu.memory_space<vmem>>, vector<1x16x16x8xf32>
    %53 = vector.shape_cast %52 : vector<1x16x16x8xf32> to vector<16x16x8xf32>
    %54 = vector.shape_cast %53 : vector<16x16x8xf32> to vector<256x8xf32>
    %55 = arith.truncf %54 : vector<256x8xf32> to vector<256x8xbf16>
    %c56 = arith.constant 56 : index
    %c0_46 = arith.constant 0 : index
    %56 = vector.load %arg2[%c56, %c0_46] : memref<72x64xbf16, #tpu.memory_space<vmem>>, vector<8x64xbf16>
    %cst_47 = arith.constant dense<0.000000e+00> : vector<256x64xf32>
    %57 = tpu.matmul %55, %56, %cst_47 {dimension_numbers = #tpu.dot_dimension_numbers<[1], [0], [0], [1], [0, 0, 1, 1], [], []>} : vector<256x8xbf16>, vector<8x64xbf16>, vector<256x64xf32> -> vector<256x64xf32>
    %58 = arith.addf %51, %57 : vector<256x64xf32>
    %c0_48 = arith.constant 0 : index
    %c2_49 = arith.constant 2 : index
    %c2_50 = arith.constant 2 : index
    %c0_51 = arith.constant 0 : index
    %59 = vector.load %arg1[%c0_48, %c2_49, %c2_50, %c0_51] : memref<1x18x18x8xf32, #tpu.memory_space<vmem>>, vector<1x16x16x8xf32>
    %60 = vector.shape_cast %59 : vector<1x16x16x8xf32> to vector<16x16x8xf32>
    %61 = vector.shape_cast %60 : vector<16x16x8xf32> to vector<256x8xf32>
    %62 = arith.truncf %61 : vector<256x8xf32> to vector<256x8xbf16>
    %c64 = arith.constant 64 : index
    %c0_52 = arith.constant 0 : index
    %63 = vector.load %arg2[%c64, %c0_52] : memref<72x64xbf16, #tpu.memory_space<vmem>>, vector<8x64xbf16>
    %cst_53 = arith.constant dense<0.000000e+00> : vector<256x64xf32>
    %64 = tpu.matmul %62, %63, %cst_53 {dimension_numbers = #tpu.dot_dimension_numbers<[1], [0], [0], [1], [0, 0, 1, 1], [], []>} : vector<256x8xbf16>, vector<8x64xbf16>, vector<256x64xf32> -> vector<256x64xf32>
    %65 = arith.addf %58, %64 : vector<256x64xf32>
    %66 = vector.shape_cast %1 : vector<64xf32> to vector<1x64xf32>
    %67 = vector.broadcast %66 : vector<1x64xf32> to vector<256x64xf32>
    %68 = arith.addf %65, %67 : vector<256x64xf32>
    %cst_54 = arith.constant 0.000000e+00 : f32
    %69 = vector.broadcast %cst_54 : f32 to vector<256x64xf32>
    %70 = arith.maximumf %68, %69 : vector<256x64xf32>
    %cst_55 = arith.constant 0.000000e+00 : f32
    %71 = vector.broadcast %cst_55 : f32 to vector<18x18x64xf32>
    %c0_56 = arith.constant 0 : index
    %c0_57 = arith.constant 0 : index
    %c0_58 = arith.constant 0 : index
    %72 = vector.load %arg7[%c0_56, %c0_57, %c0_58] : memref<18x18x64xf32, #tpu.memory_space<vmem>>, vector<18x18x64xf32>
    tpu.vector_store %arg7[%c0_56, %c0_57, %c0_58], %71 {strides = array<i32>} : memref<18x18x64xf32, #tpu.memory_space<vmem>>, vector<18x18x64xf32>,
    %73 = vector.shape_cast %70 : vector<256x64xf32> to vector<16x16x64xf32>
    %c1_59 = arith.constant 1 : index
    %c1_60 = arith.constant 1 : index
    %c0_61 = arith.constant 0 : index
    %74 = vector.load %arg7[%c1_59, %c1_60, %c0_61] : memref<18x18x64xf32, #tpu.memory_space<vmem>>, vector<16x16x64xf32>
    tpu.vector_store %arg7[%c1_59, %c1_60, %c0_61], %73 {strides = array<i32>} : memref<18x18x64xf32, #tpu.memory_space<vmem>>, vector<16x16x64xf32>,
    %c0_62 = arith.constant 0 : index
    %c0_63 = arith.constant 0 : index
    %75 = vector.load %arg5[%c0_62, %c0_63] : memref<1x64xf32, #tpu.memory_space<vmem>>, vector<1x64xf32>
    %76 = vector.shape_cast %75 : vector<1x64xf32> to vector<64xf32>
    %c0_64 = arith.constant 0 : index
    %c0_65 = arith.constant 0 : index
    %c0_66 = arith.constant 0 : index
    %77 = vector.load %arg7[%c0_64, %c0_65, %c0_66] : memref<18x18x64xf32, #tpu.memory_space<vmem>>, vector<16x16x64xf32>
    %78 = vector.shape_cast %77 : vector<16x16x64xf32> to vector<256x64xf32>
    %c0_67 = arith.constant 0 : index
    %c1_68 = arith.constant 1 : index
    %c0_69 = arith.constant 0 : index
    %79 = vector.load %arg7[%c0_67, %c1_68, %c0_69] : memref<18x18x64xf32, #tpu.memory_space<vmem>>, vector<16x16x64xf32>
    %80 = vector.shape_cast %79 : vector<16x16x64xf32> to vector<256x64xf32>
    %c0_70 = arith.constant 0 : index
    %c2_71 = arith.constant 2 : index
    %c0_72 = arith.constant 0 : index
    %81 = vector.load %arg7[%c0_70, %c2_71, %c0_72] : memref<18x18x64xf32, #tpu.memory_space<vmem>>, vector<16x16x64xf32>
    %82 = vector.shape_cast %81 : vector<16x16x64xf32> to vector<256x64xf32>
    %c1_73 = arith.constant 1 : index
    %c0_74 = arith.constant 0 : index
    %c0_75 = arith.constant 0 : index
    %83 = vector.load %arg7[%c1_73, %c0_74, %c0_75] : memref<18x18x64xf32, #tpu.memory_space<vmem>>, vector<16x16x64xf32>
    %84 = vector.shape_cast %83 : vector<16x16x64xf32> to vector<256x64xf32>
    %c1_76 = arith.constant 1 : index
    %c1_77 = arith.constant 1 : index
    %c0_78 = arith.constant 0 : index
    %85 = vector.load %arg7[%c1_76, %c1_77, %c0_78] : memref<18x18x64xf32, #tpu.memory_space<vmem>>, vector<16x16x64xf32>
    %86 = vector.shape_cast %85 : vector<16x16x64xf32> to vector<256x64xf32>
    %c1_79 = arith.constant 1 : index
    %c2_80 = arith.constant 2 : index
    %c0_81 = arith.constant 0 : index
    %87 = vector.load %arg7[%c1_79, %c2_80, %c0_81] : memref<18x18x64xf32, #tpu.memory_space<vmem>>, vector<16x16x64xf32>
    %88 = vector.shape_cast %87 : vector<16x16x64xf32> to vector<256x64xf32>
    %c2_82 = arith.constant 2 : index
    %c0_83 = arith.constant 0 : index
    %c0_84 = arith.constant 0 : index
    %89 = vector.load %arg7[%c2_82, %c0_83, %c0_84] : memref<18x18x64xf32, #tpu.memory_space<vmem>>, vector<16x16x64xf32>
    %90 = vector.shape_cast %89 : vector<16x16x64xf32> to vector<256x64xf32>
    %c2_85 = arith.constant 2 : index
    %c1_86 = arith.constant 1 : index
    %c0_87 = arith.constant 0 : index
    %91 = vector.load %arg7[%c2_85, %c1_86, %c0_87] : memref<18x18x64xf32, #tpu.memory_space<vmem>>, vector<16x16x64xf32>
    %92 = vector.shape_cast %91 : vector<16x16x64xf32> to vector<256x64xf32>
    %c2_88 = arith.constant 2 : index
    %c2_89 = arith.constant 2 : index
    %c0_90 = arith.constant 0 : index
    %93 = vector.load %arg7[%c2_88, %c2_89, %c0_90] : memref<18x18x64xf32, #tpu.memory_space<vmem>>, vector<16x16x64xf32>
    %94 = vector.shape_cast %93 : vector<16x16x64xf32> to vector<256x64xf32>
    %95 = tpu.concatenate %78, %80, %82, %84, %86, %88, %90, %92, %94 in 1 : vector<256x64xf32>, vector<256x64xf32>, vector<256x64xf32>, vector<256x64xf32>, vector<256x64xf32>, vector<256x64xf32>, vector<256x64xf32>, vector<256x64xf32>, vector<256x64xf32> -> vector<256x576xf32>
    %96 = arith.truncf %95 : vector<256x576xf32> to vector<256x576xbf16>
    %c0_91 = arith.constant 0 : index
    %c0_92 = arith.constant 0 : index
    %97 = vector.load %arg4[%c0_91, %c0_92] : memref<576x64xbf16, #tpu.memory_space<vmem>>, vector<576x64xbf16>
    %cst_93 = arith.constant dense<0.000000e+00> : vector<256x64xf32>
    %98 = tpu.matmul %96, %97, %cst_93 {dimension_numbers = #tpu.dot_dimension_numbers<[1], [0], [0], [1], [0, 0, 1, 1], [], []>} : vector<256x576xbf16>, vector<576x64xbf16>, vector<256x64xf32> -> vector<256x64xf32>
    %99 = vector.shape_cast %76 : vector<64xf32> to vector<1x64xf32>
    %100 = vector.broadcast %99 : vector<1x64xf32> to vector<256x64xf32>
    %101 = arith.addf %98, %100 : vector<256x64xf32>
    %cst_94 = arith.constant 0.000000e+00 : f32
    %102 = vector.broadcast %cst_94 : f32 to vector<256x64xf32>
    %103 = arith.maximumf %101, %102 : vector<256x64xf32>
    %104 = vector.shape_cast %103 : vector<256x64xf32> to vector<16x16x64xf32>
    %105 = vector.shape_cast %104 : vector<16x16x64xf32> to vector<16x8x2x64xf32>
    %cst_95 = arith.constant dense<0xFF800000> : vector<16x8x64xf32>
    %106 = vector.multi_reduction <maximumf>, %105, %cst_95 [2] : vector<16x8x2x64xf32> to vector<16x8x64xf32>
    %107 = vector.shape_cast %106 : vector<16x8x64xf32> to vector<8x2x8x64xf32>
    %cst_96 = arith.constant dense<0xFF800000> : vector<8x8x64xf32>
    %108 = vector.multi_reduction <maximumf>, %107, %cst_96 [1] : vector<8x2x8x64xf32> to vector<8x8x64xf32>
    %c0_97 = arith.constant 0 : index
    %c0_98 = arith.constant 0 : index
    %c0_99 = arith.constant 0 : index
    %c0_100 = arith.constant 0 : index
    %109 = vector.load %arg6[%c0_97, %c0_98, %c0_99, %c0_100] : memref<1x8x8x64xf32, #tpu.memory_space<vmem>>, vector<1x8x8x64xf32>
    %110 = vector.shape_cast %109 : vector<1x8x8x64xf32> to vector<8x8x64xf32>
    %111 = vector.shape_cast %108 : vector<8x8x64xf32> to vector<1x8x8x64xf32>
    tpu.vector_store %arg6[%c0_97, %c0_98, %c0_99, %c0_100], %111 {strides = array<i32>} : memref<1x8x8x64xf32, #tpu.memory_space<vmem>>, vector<1x8x8x64xf32>,
    return
  }
  func.func @transform_0(%arg0: i32) -> (i32, i32, i32, i32) {
    %c0_i32 = arith.constant 0 : i32
    %c0_i32_0 = arith.constant 0 : i32
    %c0_i32_1 = arith.constant 0 : i32
    %c0_i32_2 = arith.constant 0 : i32
    return %arg0, %c0_i32, %c0_i32_0, %c0_i32_1 : i32, i32, i32, i32
  }
  func.func @transform_1(%arg0: i32) -> (i32, i32) {
    %c0_i32 = arith.constant 0 : i32
    %c0_i32_0 = arith.constant 0 : i32
    %c0_i32_1 = arith.constant 0 : i32
    return %c0_i32, %c0_i32_0 : i32, i32
  }
  func.func @transform_2(%arg0: i32) -> (i32, i32) {
    %c0_i32 = arith.constant 0 : i32
    %c0_i32_0 = arith.constant 0 : i32
    %c0_i32_1 = arith.constant 0 : i32
    return %c0_i32, %c0_i32_0 : i32, i32
  }
  func.func @transform_3(%arg0: i32) -> (i32, i32) {
    %c0_i32 = arith.constant 0 : i32
    %c0_i32_0 = arith.constant 0 : i32
    %c0_i32_1 = arith.constant 0 : i32
    return %c0_i32, %c0_i32_0 : i32, i32
  }
  func.func @transform_4(%arg0: i32) -> (i32, i32) {
    %c0_i32 = arith.constant 0 : i32
    %c0_i32_0 = arith.constant 0 : i32
    %c0_i32_1 = arith.constant 0 : i32
    return %c0_i32, %c0_i32_0 : i32, i32
  }
  func.func @transform_5(%arg0: i32) -> (i32, i32, i32, i32) {
    %c0_i32 = arith.constant 0 : i32
    %c0_i32_0 = arith.constant 0 : i32
    %c0_i32_1 = arith.constant 0 : i32
    %c0_i32_2 = arith.constant 0 : i32
    return %arg0, %c0_i32, %c0_i32_0, %c0_i32_1 : i32, i32, i32, i32
  }
}

</mosaic_0001>

<llo_original>
// kernel: tpu_custom_call.1
$region0: #{tpu_custom_call.1}
  #allocation0 [shape = 'u32[]', space=smem, size = 0x4, offset = 0x4, fixed_abs, tag = 'smem constant byte address 0x4 - core index']
  #allocation1 [shape = 'u32[144,128]{1,0:T(1,128)}', space=vmem, size = 0x12000, scoped, tag = 'internal scratch']
  #allocation2 [shape = 'f32[18,18,64]{2,1,0:T(8,128)}', space=vmem, size = 0x36000, scoped, tag = 'scratch operand']
  %s0 = inlined_call_operand.vmem [shape: f32[2,18,18,8], index: 0, kind: input, shape index: {}]
  %s1 = inlined_call_operand.vmem [shape: bf16[72,64], index: 1, kind: input, shape index: {}]
  %s2 = inlined_call_operand.vmem [shape: f32[1,64], index: 2, kind: input, shape index: {}]
  %s3 = inlined_call_operand.vmem [shape: bf16[576,64], index: 3, kind: input, shape index: {}]
  %s4 = inlined_call_operand.vmem [shape: f32[1,64], index: 4, kind: input, shape index: {}]
  %s5 = inlined_call_operand.hbm [shape: f32[2,8,8,64], index: 5, kind: output, shape index: {}]
  %s6 = sld [smem:[#allocation0]]
  $region53: #{tpu_custom_call.1} parent=0
    _
  %s8 = ssub.s32 1, %s6
  %s9 = scalar_select 0, %s8, %s6
  $region1: #{tpu_custom_call.1} parent=0
    #allocation3 [shape = 'u8[65536]{0}', space=vmem, size = 0x10000, scoped, tag = 'output window, operand 0']
    #allocation4 [shape = 's32[2]{0}', space=sflag, size = 0x8, scoped, tag = 'scoped memory for tpu_custom_call.1']
    %10 = vsyncpa [#allocation4], 0
    %s11 = scalar_lea.sflag [#allocation4], 1
    %12 = vsyncpa %s11, 0
    loop: start=0, step=1, limit=4
    $region2: #{tpu_custom_call.1} parent=1 // loop_pre_header
      _
    $region3: #{tpu_custom_call.1} parent=1 // loop_header
      %s14 = sphi 0, %s18
      %p15 = scmp.ge.s32.totalorder %s14, 4
      %s24 = sphi 0, %s26
      %s27 = sphi 0, %s24
      %s28 = sphi 0, %s27
      %s44 = sphi 0, %s28
      %s48 = sphi 0, %s48
      %s50 = sphi 0, %s48
      %s51 = sphi 0, %s50
      %s65 = sphi 0, %s51
      %s69 = sphi 0, %s69
      %s71 = sphi 0, %s69
      %s72 = sphi 0, %s71
      %s86 = sphi 0, %s72
      %s90 = sphi 0, %s90
      %s92 = sphi 0, %s90
      %s93 = sphi 0, %s92
      %s107 = sphi 0, %s93
      %s111 = sphi 0, %s111
      %s113 = sphi 0, %s111
      %s114 = sphi 0, %s113
      %s128 = sphi 0, %s114
      %s134 = sphi 0, %s136
      %s137 = sphi 0, %s134
      %s138 = sphi 0, %s137
      %s154 = sphi 0, %s138
    $region4: #{tpu_custom_call.1} parent=1 // loop_header_branch
      %17 = sbr.rel (%p15) target = $region8
    $region5: #{tpu_custom_call.1} parent=1 // loop_body
      %s19 = ssub.s32 %s14, 1
      %s20 = ssub.s32 %s14, 2
      %s21 = sadd.s32 %s14, 1
      %s22 = ssub.s32 %s14, %s21
      %p23 = scmp.eq.s32.totalorder %s22, 0
      %s25 = sadd.s32 %s24, 1
      %s26 = scalar_select %p23, %s24, %s25
      %p29 = pneg %p23
      %p30 = scmp.eq.s32.totalorder %s14, 1
      %p31 = por %p29, %p30
      %p32 = scmp.ne.s32.totalorder %s24, %s27
      %p33 = scmp.eq.s32.totalorder %s14, 0
      %p34 = por %p32, %p33
      %p35 = scmp.ne.s32.totalorder %s24, %s27
      %p36 = scmp.eq.s32.totalorder %s19, 1
      %p37 = por %p35, %p36
      %p38 = scmp.ne.s32.totalorder %s27, %s28
      %p39 = scmp.eq.s32.totalorder %s19, 0
      %p40 = por %p38, %p39
      %p41 = scmp.ne.s32.totalorder %s27, %s28
      %p42 = scmp.eq.s32.totalorder %s20, 1
      %p43 = por %p41, %p42
      %p45 = scmp.ne.s32.totalorder %s28, %s44
      %p46 = scmp.eq.s32.totalorder %s20, 0
      %p47 = por %p45, %p46
      %s49 = sadd.s32 %s48, 1
      %p52 = scmp.eq.s32.totalorder %s14, 1
      %p53 = scmp.ne.s32.totalorder %s48, %s50
      %p54 = scmp.eq.s32.totalorder %s14, 0
      %p55 = por %p53, %p54
      %p56 = scmp.ne.s32.totalorder %s48, %s50
      %p57 = scmp.eq.s32.totalorder %s19, 1
      %p58 = por %p56, %p57
      %p59 = scmp.ne.s32.totalorder %s50, %s51
      %p60 = scmp.eq.s32.totalorder %s19, 0
      %p61 = por %p59, %p60
      %p62 = scmp.ne.s32.totalorder %s50, %s51
      %p63 = scmp.eq.s32.totalorder %s20, 1
      %p64 = por %p62, %p63
      %p66 = scmp.ne.s32.totalorder %s51, %s65
      %p67 = scmp.eq.s32.totalorder %s20, 0
      %p68 = por %p66, %p67
      %s70 = sadd.s32 %s69, 1
      %p73 = scmp.eq.s32.totalorder %s14, 1
      %p74 = scmp.ne.s32.totalorder %s69, %s71
      %p75 = scmp.eq.s32.totalorder %s14, 0
      %p76 = por %p74, %p75
      %p77 = scmp.ne.s32.totalorder %s69, %s71
      %p78 = scmp.eq.s32.totalorder %s19, 1
      %p79 = por %p77, %p78
      %p80 = scmp.ne.s32.totalorder %s71, %s72
      %p81 = scmp.eq.s32.totalorder %s19, 0
      %p82 = por %p80, %p81
      %p83 = scmp.ne.s32.totalorder %s71, %s72
      %p84 = scmp.eq.s32.totalorder %s20, 1
      %p85 = por %p83, %p84
      %p87 = scmp.ne.s32.totalorder %s72, %s86
      %p88 = scmp.eq.s32.totalorder %s20, 0
      %p89 = por %p87, %p88
      %s91 = sadd.s32 %s90, 1
      %p94 = scmp.eq.s32.totalorder %s14, 1
      %p95 = scmp.ne.s32.totalorder %s90, %s92
      %p96 = scmp.eq.s32.totalorder %s14, 0
      %p97 = por %p95, %p96
      %p98 = scmp.ne.s32.totalorder %s90, %s92
      %p99 = scmp.eq.s32.totalorder %s19, 1
      %p100 = por %p98, %p99
      %p101 = scmp.ne.s32.totalorder %s92, %s93
      %p102 = scmp.eq.s32.totalorder %s19, 0
      %p103 = por %p101, %p102
      %p104 = scmp.ne.s32.totalorder %s92, %s93
      %p105 = scmp.eq.s32.totalorder %s20, 1
      %p106 = por %p104, %p105
      %p108 = scmp.ne.s32.totalorder %s93, %s107
      %p109 = scmp.eq.s32.totalorder %s20, 0
      %p110 = por %p108, %p109
      %s112 = sadd.s32 %s111, 1
      %p115 = scmp.eq.s32.totalorder %s14, 1
      %p116 = scmp.ne.s32.totalorder %s111, %s113
      %p117 = scmp.eq.s32.totalorder %s14, 0
      %p118 = por %p116, %p117
      %p119 = scmp.ne.s32.totalorder %s111, %s113
      %p120 = scmp.eq.s32.totalorder %s19, 1
      %p121 = por %p119, %p120
      %p122 = scmp.ne.s32.totalorder %s113, %s114
      %p123 = scmp.eq.s32.totalorder %s19, 0
      %p124 = por %p122, %p123
      %p125 = scmp.ne.s32.totalorder %s113, %s114
      %p126 = scmp.eq.s32.totalorder %s20, 1
      %p127 = por %p125, %p126
      %p129 = scmp.ne.s32.totalorder %s114, %s128
      %p130 = scmp.eq.s32.totalorder %s20, 0
      %p131 = por %p129, %p130
      %s132 = ssub.s32 %s14, %s21
      %p133 = scmp.eq.s32.totalorder %s132, 0
      %s135 = sadd.s32 %s134, 1
      %s136 = scalar_select %p133, %s134, %s135
      %p139 = pneg %p133
      %p140 = scmp.eq.s32.totalorder %s14, 1
      %p141 = por %p139, %p140
      %p142 = scmp.ne.s32.totalorder %s134, %s137
      %p143 = scmp.eq.s32.totalorder %s14, 0
      %p144 = por %p142, %p143
      %p145 = scmp.ne.s32.totalorder %s134, %s137
      %p146 = scmp.eq.s32.totalorder %s19, 1
      %p147 = por %p145, %p146
      %p148 = scmp.ne.s32.totalorder %s137, %s138
      %p149 = scmp.eq.s32.totalorder %s19, 0
      %p150 = por %p148, %p149
      %p151 = scmp.ne.s32.totalorder %s137, %s138
      %p152 = scmp.eq.s32.totalorder %s20, 1
      %p153 = por %p151, %p152
      %p155 = scmp.ne.s32.totalorder %s138, %s154
      %p156 = scmp.eq.s32.totalorder %s20, 0
      %p157 = por %p155, %p156
      %p158 = scmp.le.s32.totalorder 1, %s14
      %p159 = scmp.lt.s32.totalorder %s14, 3
      %p160 = pnand %p158, %p159
      %p161 = pneg %p160
      // Predicated region
      $region9: #{tpu_custom_call.1} parent=5 // pred_check
        _
      $region10: #{tpu_custom_call.1} parent=5 // pred_check_branch
        %163 = sbr.rel (%p160) target = $region12
      $region11: #{tpu_custom_call.1} parent=5 // pred_region
        %s164 = ssub.s32 %s14, 1
        // Predicated region
        $region13: #{tpu_custom_call.1} parent=11 // pred_check
          %p165 = pneg %p61
        $region14: #{tpu_custom_call.1} parent=11 // pred_check_branch
          %167 = sbr.rel (%p165) target = $region16
        $region15: #{tpu_custom_call.1} parent=11 // pred_region
          _
        $region16: #{tpu_custom_call.1} parent=11 // pred_fallthru
          _
        // Predicated region
        $region17: #{tpu_custom_call.1} parent=11 // pred_check
          %p168 = pneg %p82
        $region18: #{tpu_custom_call.1} parent=11 // pred_check_branch
          %170 = sbr.rel (%p168) target = $region20
        $region19: #{tpu_custom_call.1} parent=11 // pred_region
          _
        $region20: #{tpu_custom_call.1} parent=11 // pred_fallthru
          _
        // Predicated region
        $region21: #{tpu_custom_call.1} parent=11 // pred_check
          %p171 = pneg %p103
        $region22: #{tpu_custom_call.1} parent=11 // pred_check_branch
          %173 = sbr.rel (%p171) target = $region24
        $region23: #{tpu_custom_call.1} parent=11 // pred_region
          _
        $region24: #{tpu_custom_call.1} parent=11 // pred_fallthru
          _
        // Predicated region
        $region25: #{tpu_custom_call.1} parent=11 // pred_check
          %p174 = pneg %p124
        $region26: #{tpu_custom_call.1} parent=11 // pred_check_branch
          %176 = sbr.rel (%p174) target = $region28
        $region27: #{tpu_custom_call.1} parent=11 // pred_region
          _
        $region28: #{tpu_custom_call.1} parent=11 // pred_fallthru
          _
      $region12: #{tpu_custom_call.1} parent=5 // pred_fallthru
        _
      %p177 = scmp.lt.s32.totalorder %s14, 2
      // Predicated region
      $region29: #{tpu_custom_call.1} parent=5 // pred_check
        %p178 = pneg %p177
      $region30: #{tpu_custom_call.1} parent=5 // pred_check_branch
        %180 = sbr.rel (%p178) target = $region32
      $region31: #{tpu_custom_call.1} parent=5 // pred_region
        // Predicated region
        $region33: #{tpu_custom_call.1} parent=31 // pred_check
          %p181 = pneg %p34
        $region34: #{tpu_custom_call.1} parent=31 // pred_check_branch
          %183 = sbr.rel (%p181) target = $region36
        $region35: #{tpu_custom_call.1} parent=31 // pred_region
          %p184 = scmp.lt.s32.totalorder %s14, 1
          %s185 = scalar_select %p184, %s14, 1
          %s186 = smul.addr %s185, 54
          %s187 = smul.addr %s186, 8
          %s188 = scalar_lea.vmem %s0, %s187
        $region36: #{tpu_custom_call.1} parent=31 // pred_fallthru
          _
      $region32: #{tpu_custom_call.1} parent=5 // pred_fallthru
        _
      %p189 = scmp.le.s32.totalorder 1, %s14
      %p190 = scmp.lt.s32.totalorder %s14, 3
      %p191 = pnand %p189, %p190
      %p192 = pneg %p191
      // Predicated region
      $region37: #{tpu_custom_call.1} parent=5 // pred_check
        _
      $region38: #{tpu_custom_call.1} parent=5 // pred_check_branch
        %194 = sbr.rel (%p191) target = $region40
      $region39: #{tpu_custom_call.1} parent=5 // pred_region
        %s195 = ssub.s32 %s14, 1
        %p196 = scmp.lt.s32.totalorder %s19, 1
        %s197 = scalar_select %p196, %s19, 1
        %s198 = smul.addr %s197, 54
        %s199 = smul.addr %s198, 8
        %s200 = scalar_lea.vmem %s0, %s199
        %p201 = pneg %p40
        %p202 = pneg %p37
        %p203 = pneg %p61
        %p204 = pneg %p58
        %p205 = pneg %p82
        %p206 = pneg %p79
        %p207 = pneg %p103
        %p208 = pneg %p100
        %p209 = pneg %p124
        %p210 = pneg %p121
        %p211 = pneg %p150
        %p212 = pneg %p147
        %s213 = sand.u32 %s137, 1
        %s214 = scalar_lea.sflag [#allocation4], %s213
        %s215 = sand.u32 %s137, 1
        %s216 = smul.addr %s215, 64
        %s217 = scalar_lea.vmem [#allocation3], %s216
        %p218 = scmp.lt.s32.totalorder %s19, 1
        %s219 = scalar_select %p218, %s19, 1
        %s220 = smul.addr %s219, 54
        %s221 = smul.addr %s220, 8
        %s222 = scalar_lea.vmem %s0, %s221
        %v224 = vld [vmem:[%s2] sm:$0x1]
        %v225 = vld [vmem:[%s222] sm:$0xff]
        %v226 = vld [vmem:[%s222 + $0x8] sm:$0xff]
        %v227 = vld [vmem:[%s222 + $0x18] sm:$0xff]
        %v228 = vld [vmem:[%s222 + $0x20] sm:$0xff]
        %v229 = vld [vmem:[%s222 + $0x30] sm:$0xff]
        %v230 = vld [vmem:[%s222 + $0x38] sm:$0xff]
        %v231 = vld [vmem:[%s222 + $0x48] sm:$0xff]
        %v232 = vld [vmem:[%s222 + $0x50] sm:$0xff]
        %v233 = vld [vmem:[%s222 + $0x60] sm:$0xff]
        %v234 = vld [vmem:[%s222 + $0x68] sm:$0xff]
        %v235 = vld [vmem:[%s222 + $0x78] sm:$0xff]
        %v236 = vld [vmem:[%s222 + $0x80] sm:$0xff]
        %v237 = vld [vmem:[%s222 + $0x90] sm:$0xff]
        %v238 = vld [vmem:[%s222 + $0x98] sm:$0xff]
        %v239 = vld [vmem:[%s222 + $0xa8] sm:$0xff]
        %v240 = vld [vmem:[%s222 + $0xb0] sm:$0xff]
        %v241 = vld [vmem:[%s222 + $0xc0] sm:$0xff]
        %v242 = vld [vmem:[%s222 + $0xc8] sm:$0xff]
        %v243 = vld [vmem:[%s222 + $0xd8] sm:$0xff]
        %v244 = vld [vmem:[%s222 + $0xe0] sm:$0xff]
        %v245 = vld [vmem:[%s222 + $0xf0] sm:$0xff]
        %v246 = vld [vmem:[%s222 + $0xf8] sm:$0xff]
        %v247 = vld [vmem:[%s222 + $0x108] sm:$0xff]
        %v248 = vld [vmem:[%s222 + $0x110] sm:$0xff]
        %v249 = vld [vmem:[%s222 + $0x120] sm:$0xff]
        %v250 = vld [vmem:[%s222 + $0x128] sm:$0xff]
        %v251 = vld [vmem:[%s222 + $0x138] sm:$0xff]
        %v252 = vld [vmem:[%s222 + $0x140] sm:$0xff]
        %v253 = vld [vmem:[%s222 + $0x150] sm:$0xff]
        %v254 = vld [vmem:[%s222 + $0x158] sm:$0xff]
        %v255 = vld [vmem:[%s222 + $0x168] sm:$0xff]
        %v256 = vld [vmem:[%s222 + $0x170] sm:$0xff]
        %v257 = vpack.c.bf16 %v226, %v225
        %v258 = vpack.c.bf16 %v228, %v227
        %v259 = vpack.c.bf16 %v230, %v229
        %v260 = vpack.c.bf16 %v232, %v231
        %v261 = vpack.c.bf16 %v234, %v233
        %v262 = vpack.c.bf16 %v236, %v235
        %v263 = vpack.c.bf16 %v238, %v237
        %v264 = vpack.c.bf16 %v240, %v239
        %v265 = vpack.c.bf16 %v242, %v241
        %v266 = vpack.c.bf16 %v244, %v243
        %v267 = vpack.c.bf16 %v246, %v245
        %v268 = vpack.c.bf16 %v248, %v247
        %v269 = vpack.c.bf16 %v250, %v249
        %v270 = vpack.c.bf16 %v252, %v251
        %v271 = vpack.c.bf16 %v254, %v253
        %v272 = vpack.c.bf16 %v256, %v255
        %v273 = vld [vmem:[%s1] sm:$0xf]
        %v274 = vld [vmem:[%s222 + $0x1] sm:$0xff]
        %v275 = vld [vmem:[%s222 + $0x9] sm:$0xff]
        %v276 = vld [vmem:[%s222 + $0x19] sm:$0xff]
        %v277 = vld [vmem:[%s222 + $0x21] sm:$0xff]
        %v278 = vld [vmem:[%s222 + $0x31] sm:$0xff]
        %v279 = vld [vmem:[%s222 + $0x39] sm:$0xff]
        %v280 = vld [vmem:[%s222 + $0x49] sm:$0xff]
        %v281 = vld [vmem:[%s222 + $0x51] sm:$0xff]
        %v282 = vld [vmem:[%s222 + $0x61] sm:$0xff]
        %v283 = vld [vmem:[%s222 + $0x69] sm:$0xff]
        %v284 = vld [vmem:[%s222 + $0x79] sm:$0xff]
        %v285 = vld [vmem:[%s222 + $0x81] sm:$0xff]
        %v286 = vld [vmem:[%s222 + $0x91] sm:$0xff]
        %v287 = vld [vmem:[%s222 + $0x99] sm:$0xff]
        %v288 = vld [vmem:[%s222 + $0xa9] sm:$0xff]
        %v289 = vld [vmem:[%s222 + $0xb1] sm:$0xff]
        %v290 = vld [vmem:[%s222 + $0xc1] sm:$0xff]
        %v291 = vld [vmem:[%s222 + $0xc9] sm:$0xff]
        %v292 = vld [vmem:[%s222 + $0xd9] sm:$0xff]
        %v293 = vld [vmem:[%s222 + $0xe1] sm:$0xff]
        %v294 = vld [vmem:[%s222 + $0xf1] sm:$0xff]
        %v295 = vld [vmem:[%s222 + $0xf9] sm:$0xff]
        %v296 = vld [vmem:[%s222 + $0x109] sm:$0xff]
        %v297 = vld [vmem:[%s222 + $0x111] sm:$0xff]
        %v298 = vld [vmem:[%s222 + $0x121] sm:$0xff]
        %v299 = vld [vmem:[%s222 + $0x129] sm:$0xff]
        %v300 = vld [vmem:[%s222 + $0x139] sm:$0xff]
        %v301 = vld [vmem:[%s222 + $0x141] sm:$0xff]
        %v302 = vld [vmem:[%s222 + $0x151] sm:$0xff]
        %v303 = vld [vmem:[%s222 + $0x159] sm:$0xff]
        %v304 = vld [vmem:[%s222 + $0x169] sm:$0xff]
        %v305 = vld [vmem:[%s222 + $0x171] sm:$0xff]
        %v306 = vpack.c.bf16 %v275, %v274
        %v307 = vpack.c.bf16 %v277, %v276
        %v308 = vpack.c.bf16 %v279, %v278
        %v309 = vpack.c.bf16 %v281, %v280
        %v310 = vpack.c.bf16 %v283, %v282
        %v311 = vpack.c.bf16 %v285, %v284
        %v312 = vpack.c.bf16 %v287, %v286
        %v313 = vpack.c.bf16 %v289, %v288
        %v314 = vpack.c.bf16 %v291, %v290
        %v315 = vpack.c.bf16 %v293, %v292
        %v316 = vpack.c.bf16 %v295, %v294
        %v317 = vpack.c.bf16 %v297, %v296
        %v318 = vpack.c.bf16 %v299, %v298
        %v319 = vpack.c.bf16 %v301, %v300
        %v320 = vpack.c.bf16 %v303, %v302
        %v321 = vpack.c.bf16 %v305, %v304
        %v322 = vld [vmem:[%s1 + $0x4] sm:$0xf]
        %vm323 = vcmask 64512
        %v325 = vsel %vm323, %v306, 0
        %v328 = vsel %vm323, %v307, 0
        %v331 = vsel %vm323, %v308, 0
        %v334 = vsel %vm323, %v309, 0
        %v337 = vsel %vm323, %v310, 0
        %v340 = vsel %vm323, %v311, 0
        %v343 = vsel %vm323, %v312, 0
        %v346 = vsel %vm323, %v313, 0
        %v349 = vsel %vm323, %v314, 0
        %v352 = vsel %vm323, %v315, 0
        %v355 = vsel %vm323, %v316, 0
        %v358 = vsel %vm323, %v317, 0
        %v361 = vsel %vm323, %v318, 0
        %v364 = vsel %vm323, %v319, 0
        %v367 = vsel %vm323, %v320, 0
        %v370 = vsel %vm323, %v321, 0
        %vm372 = vcmask 1043456
        %v374 = vsel %vm372, %v322, 0
        %376 = vmatprep.subr.bf16.mxu0 0
        %377 = vmatpush1.bf16.msra.mxu0 %v374
        %378 = vmatprep.subr.bf16.mxu0 0
        %379 = vmatpush1.bf16.msra.mxu0 0
        %380 = vmatprep.subr.bf16.mxu0 0
        %381 = vmatpush1.bf16.msra.mxu0 0
        %382 = vmatprep.subr.bf16.mxu0 0
        %383 = vmatpush1.bf16.msra.mxu0 0
        %384 = vmatprep.subr.bf16.mxu0 0
        %385 = vmatpush1.bf16.msra.mxu0 0
        %386 = vmatprep.subr.bf16.mxu0 0
        %387 = vmatpush1.bf16.msra.mxu0 0
        %388 = vmatprep.subr.bf16.mxu0 0
        %389 = vmatpush1.bf16.msra.mxu0 0
        %390 = vmatprep.subr.bf16.mxu0 0
        %391 = vmatpush1.bf16.msra.mxu0 0
        %392 = vmatprep.subr.bf16.mxu0 0
        %393 = vmatpush1.bf16.msra.mxu0 0
        %394 = vmatprep.subr.bf16.mxu0 0
        %395 = vmatpush1.bf16.msra.mxu0 0
        %396 = vmatprep.subr.bf16.mxu0 0
        %397 = vmatpush1.bf16.msra.mxu0 0
        %398 = vmatprep.subr.bf16.mxu0 0
        %399 = vmatpush1.bf16.msra.mxu0 0
        %400 = vmatprep.subr.bf16.mxu0 0
        %401 = vmatpush1.bf16.msra.mxu0 0
        %402 = vmatprep.subr.bf16.mxu0 0
        %403 = vmatpush1.bf16.msra.mxu0 0
        %404 = vmatprep.subr.bf16.mxu0 0
        %405 = vmatpush1.bf16.msra.mxu0 0
        %406 = vmatprep.subr.bf16.mxu0 0
        %407 = vmatpush1.bf16.msra.mxu0 0
        %408 = vmatprep.mubr.bf16.mxu0 0
        %409 = vmatmul.mubr.bf16.gmra.mrb[0].mxu0 %v325
        %v410 = vpop.f32.mrb[0].mxu0
        %v411 = vadd.f32 0.0, %v410
        %v412 = vpop.f32.mrb[0].mxu0
        %v413 = vpop.f32.mrb[0].mxu0
        %v414 = vadd.f32 0.0, %v413
        %v415 = vpop.f32.mrb[0].mxu0
        %416 = vmatprep.mubr.bf16.mxu0 0
        %417 = vmatmul.mubr.bf16.gmra.mrb[0].mxu0 %v328
        %v418 = vpop.f32.mrb[0].mxu0
        %v419 = vadd.f32 0.0, %v418
        %v420 = vpop.f32.mrb[0].mxu0
        %v421 = vpop.f32.mrb[0].mxu0
        %v422 = vadd.f32 0.0, %v421
        %v423 = vpop.f32.mrb[0].mxu0
        %424 = vmatprep.mubr.bf16.mxu0 0
        %425 = vmatmul.mubr.bf16.gmra.mrb[0].mxu0 %v331
        %v426 = vpop.f32.mrb[0].mxu0
        %v427 = vadd.f32 0.0, %v426
        %v428 = vpop.f32.mrb[0].mxu0
        %v429 = vpop.f32.mrb[0].mxu0
        %v430 = vadd.f32 0.0, %v429
        %v431 = vpop.f32.mrb[0].mxu0
        %432 = vmatprep.mubr.bf16.mxu0 0
        %433 = vmatmul.mubr.bf16.gmra.mrb[0].mxu0 %v334
        %v434 = vpop.f32.mrb[0].mxu0
        %v435 = vadd.f32 0.0, %v434
        %v436 = vpop.f32.mrb[0].mxu0
        %v437 = vpop.f32.mrb[0].mxu0
        %v438 = vadd.f32 0.0, %v437
        %v439 = vpop.f32.mrb[0].mxu0
        %440 = vmatprep.mubr.bf16.mxu0 0
        %441 = vmatmul.mubr.bf16.gmra.mrb[0].mxu0 %v337
        %v442 = vpop.f32.mrb[0].mxu0
        %v443 = vadd.f32 0.0, %v442
        %v444 = vpop.f32.mrb[0].mxu0
        %v445 = vpop.f32.mrb[0].mxu0
        %v446 = vadd.f32 0.0, %v445
        %v447 = vpop.f32.mrb[0].mxu0
        %448 = vmatprep.mubr.bf16.mxu0 0
        %449 = vmatmul.mubr.bf16.gmra.mrb[0].mxu0 %v340
        %v450 = vpop.f32.mrb[0].mxu0
        %v451 = vadd.f32 0.0, %v450
        %v452 = vpop.f32.mrb[0].mxu0
        %v453 = vpop.f32.mrb[0].mxu0
        %v454 = vadd.f32 0.0, %v453
        %v455 = vpop.f32.mrb[0].mxu0
        %456 = vmatprep.mubr.bf16.mxu0 0
        %457 = vmatmul.mubr.bf16.gmra.mrb[0].mxu0 %v343
        %v458 = vpop.f32.mrb[0].mxu0
        %v459 = vadd.f32 0.0, %v458
        %v460 = vpop.f32.mrb[0].mxu0
        %v461 = vpop.f32.mrb[0].mxu0
        %v462 = vadd.f32 0.0, %v461
        %v463 = vpop.f32.mrb[0].mxu0
        %464 = vmatprep.mubr.bf16.mxu0 0
        %465 = vmatmul.mubr.bf16.gmra.mrb[0].mxu0 %v346
        %v466 = vpop.f32.mrb[0].mxu0
        %v467 = vadd.f32 0.0, %v466
        %v468 = vpop.f32.mrb[0].mxu0
        %v469 = vpop.f32.mrb[0].mxu0
        %v470 = vadd.f32 0.0, %v469
        %v471 = vpop.f32.mrb[0].mxu0
        %472 = vmatprep.mubr.bf16.mxu0 0
        %473 = vmatmul.mubr.bf16.gmra.mrb[0].mxu0 %v349
        %v474 = vpop.f32.mrb[0].mxu0
        %v475 = vadd.f32 0.0, %v474
        %v476 = vpop.f32.mrb[0].mxu0
        %v477 = vpop.f32.mrb[0].mxu0
        %v478 = vadd.f32 0.0, %v477
        %v479 = vpop.f32.mrb[0].mxu0
        %480 = vmatprep.mubr.bf16.mxu0 0
        %481 = vmatmul.mubr.bf16.gmra.mrb[0].mxu0 %v352
        %v482 = vpop.f32.mrb[0].mxu0
        %v483 = vadd.f32 0.0, %v482
        %v484 = vpop.f32.mrb[0].mxu0
        %v485 = vpop.f32.mrb[0].mxu0
        %v486 = vadd.f32 0.0, %v485
        %v487 = vpop.f32.mrb[0].mxu0
        %488 = vmatprep.mubr.bf16.mxu0 0
        %489 = vmatmul.mubr.bf16.gmra.mrb[0].mxu0 %v355
        %v490 = vpop.f32.mrb[0].mxu0
        %v491 = vadd.f32 0.0, %v490
        %v492 = vpop.f32.mrb[0].mxu0
        %v493 = vpop.f32.mrb[0].mxu0
        %v494 = vadd.f32 0.0, %v493
        %v495 = vpop.f32.mrb[0].mxu0
        %496 = vmatprep.mubr.bf16.mxu0 0
        %497 = vmatmul.mubr.bf16.gmra.mrb[0].mxu0 %v358
        %v498 = vpop.f32.mrb[0].mxu0
        %v499 = vadd.f32 0.0, %v498
        %v500 = vpop.f32.mrb[0].mxu0
        %v501 = vpop.f32.mrb[0].mxu0
        %v502 = vadd.f32 0.0, %v501
        %v503 = vpop.f32.mrb[0].mxu0
        %504 = vmatprep.mubr.bf16.mxu0 0
        %505 = vmatmul.mubr.bf16.gmra.mrb[0].mxu0 %v361
        %v506 = vpop.f32.mrb[0].mxu0
        %v507 = vadd.f32 0.0, %v506
        %v508 = vpop.f32.mrb[0].mxu0
        %v509 = vpop.f32.mrb[0].mxu0
        %v510 = vadd.f32 0.0, %v509
        %v511 = vpop.f32.mrb[0].mxu0
        %512 = vmatprep.mubr.bf16.mxu0 0
        %513 = vmatmul.mubr.bf16.gmra.mrb[0].mxu0 %v364
        %v514 = vpop.f32.mrb[0].mxu0
        %v515 = vadd.f32 0.0, %v514
        %v516 = vpop.f32.mrb[0].mxu0
        %v517 = vpop.f32.mrb[0].mxu0
        %v518 = vadd.f32 0.0, %v517
        %v519 = vpop.f32.mrb[0].mxu0
        %520 = vmatprep.mubr.bf16.mxu0 0
        %521 = vmatmul.mubr.bf16.gmra.mrb[0].mxu0 %v367
        %v522 = vpop.f32.mrb[0].mxu0
        %v523 = vadd.f32 0.0, %v522
        %v524 = vpop.f32.mrb[0].mxu0
        %v525 = vpop.f32.mrb[0].mxu0
        %v526 = vadd.f32 0.0, %v525
        %v527 = vpop.f32.mrb[0].mxu0
        %528 = vmatprep.mubr.bf16.mxu0 0
        %529 = vmatmul.mubr.bf16.gmra.mrb[0].mxu0 %v370
        %v530 = vpop.f32.mrb[0].mxu0
        %v531 = vadd.f32 0.0, %v530
        %v532 = vpop.f32.mrb[0].mxu0
        %v533 = vpop.f32.mrb[0].mxu0
        %v534 = vadd.f32 0.0, %v533
        %v535 = vpop.f32.mrb[0].mxu0
        %536 = vdwg.mxu0
        %v538 = vsel %vm323, %v257, 0
        %v541 = vsel %vm323, %v258, 0
        %v544 = vsel %vm323, %v259, 0
        %v547 = vsel %vm323, %v260, 0
        %v550 = vsel %vm323, %v261, 0
        %v553 = vsel %vm323, %v262, 0
        %v556 = vsel %vm323, %v263, 0
        %v559 = vsel %vm323, %v264, 0
        %v562 = vsel %vm323, %v265, 0
        %v565 = vsel %vm323, %v266, 0
        %v568 = vsel %vm323, %v267, 0
        %v571 = vsel %vm323, %v268, 0
        %v574 = vsel %vm323, %v269, 0
        %v577 = vsel %vm323, %v270, 0
        %v580 = vsel %vm323, %v271, 0
        %v583 = vsel %vm323, %v272, 0
        %v586 = vsel %vm372, %v273, 0
        %588 = vmatprep.subr.bf16.mxu0 0
        %589 = vmatpush1.bf16.msra.mxu0 %v586
        %590 = vmatprep.subr.bf16.mxu0 0
        %591 = vmatpush1.bf16.msra.mxu0 0
        %592 = vmatprep.subr.bf16.mxu0 0
        %593 = vmatpush1.bf16.msra.mxu0 0
        %594 = vmatprep.subr.bf16.mxu0 0
        %595 = vmatpush1.bf16.msra.mxu0 0
        %596 = vmatprep.subr.bf16.mxu0 0
        %597 = vmatpush1.bf16.msra.mxu0 0
        %598 = vmatprep.subr.bf16.mxu0 0
        %599 = vmatpush1.bf16.msra.mxu0 0
        %600 = vmatprep.subr.bf16.mxu0 0
        %601 = vmatpush1.bf16.msra.mxu0 0
        %602 = vmatprep.subr.bf16.mxu0 0
        %603 = vmatpush1.bf16.msra.mxu0 0
        %604 = vmatprep.subr.bf16.mxu0 0
        %605 = vmatpush1.bf16.msra.mxu0 0
        %606 = vmatprep.subr.bf16.mxu0 0
        %607 = vmatpush1.bf16.msra.mxu0 0
        %608 = vmatprep.subr.bf16.mxu0 0
        %609 = vmatpush1.bf16.msra.mxu0 0
        %610 = vmatprep.subr.bf16.mxu0 0
        %611 = vmatpush1.bf16.msra.mxu0 0
        %612 = vmatprep.subr.bf16.mxu0 0
        %613 = vmatpush1.bf16.msra.mxu0 0
        %614 = vmatprep.subr.bf16.mxu0 0
        %615 = vmatpush1.bf16.msra.mxu0 0
        %616 = vmatprep.subr.bf16.mxu0 0
        %617 = vmatpush1.bf16.msra.mxu0 0
        %618 = vmatprep.subr.bf16.mxu0 0
        %619 = vmatpush1.bf16.msra.mxu0 0
        %620 = vmatprep.mubr.bf16.mxu0 0
        %621 = vmatmul.mubr.bf16.gmra.mrb[0].mxu0 %v538
        %v622 = vpop.f32.mrb[0].mxu0
        %v623 = vadd.f32 %v411, %v622
        %v624 = vpop.f32.mrb[0].mxu0
        %v625 = vpop.f32.mrb[0].mxu0
        %v626 = vadd.f32 %v414, %v625
        %v627 = vpop.f32.mrb[0].mxu0
        %628 = vmatprep.mubr.bf16.mxu0 0
        %629 = vmatmul.mubr.bf16.gmra.mrb[0].mxu0 %v541
        %v630 = vpop.f32.mrb[0].mxu0
        %v631 = vadd.f32 %v419, %v630
        %v632 = vpop.f32.mrb[0].mxu0
        %v633 = vpop.f32.mrb[0].mxu0
        %v634 = vadd.f32 %v422, %v633
        %v635 = vpop.f32.mrb[0].mxu0
        %636 = vmatprep.mubr.bf16.mxu0 0
        %637 = vmatmul.mubr.bf16.gmra.mrb[0].mxu0 %v544
        %v638 = vpop.f32.mrb[0].mxu0
        %v639 = vadd.f32 %v427, %v638
        %v640 = vpop.f32.mrb[0].mxu0
        %v641 = vpop.f32.mrb[0].mxu0
        %v642 = vadd.f32 %v430, %v641
        %v643 = vpop.f32.mrb[0].mxu0
        %644 = vmatprep.mubr.bf16.mxu0 0
        %645 = vmatmul.mubr.bf16.gmra.mrb[0].mxu0 %v547
        %v646 = vpop.f32.mrb[0].mxu0
        %v647 = vadd.f32 %v435, %v646
        %v648 = vpop.f32.mrb[0].mxu0
        %v649 = vpop.f32.mrb[0].mxu0
        %v650 = vadd.f32 %v438, %v649
        %v651 = vpop.f32.mrb[0].mxu0
        %652 = vmatprep.mubr.bf16.mxu0 0
        %653 = vmatmul.mubr.bf16.gmra.mrb[0].mxu0 %v550
        %v654 = vpop.f32.mrb[0].mxu0
        %v655 = vadd.f32 %v443, %v654
        %v656 = vpop.f32.mrb[0].mxu0
        %v657 = vpop.f32.mrb[0].mxu0
        %v658 = vadd.f32 %v446, %v657
        %v659 = vpop.f32.mrb[0].mxu0
        %660 = vmatprep.mubr.bf16.mxu0 0
        %661 = vmatmul.mubr.bf16.gmra.mrb[0].mxu0 %v553
        %v662 = vpop.f32.mrb[0].mxu0
        %v663 = vadd.f32 %v451, %v662
        %v664 = vpop.f32.mrb[0].mxu0
        %v665 = vpop.f32.mrb[0].mxu0
        %v666 = vadd.f32 %v454, %v665
        %v667 = vpop.f32.mrb[0].mxu0
        %668 = vmatprep.mubr.bf16.mxu0 0
        %669 = vmatmul.mubr.bf16.gmra.mrb[0].mxu0 %v556
        %v670 = vpop.f32.mrb[0].mxu0
        %v671 = vadd.f32 %v459, %v670
        %v672 = vpop.f32.mrb[0].mxu0
        %v673 = vpop.f32.mrb[0].mxu0
        %v674 = vadd.f32 %v462, %v673
        %v675 = vpop.f32.mrb[0].mxu0
        %676 = vmatprep.mubr.bf16.mxu0 0
        %677 = vmatmul.mubr.bf16.gmra.mrb[0].mxu0 %v559
        %v678 = vpop.f32.mrb[0].mxu0
        %v679 = vadd.f32 %v467, %v678
        %v680 = vpop.f32.mrb[0].mxu0
        %v681 = vpop.f32.mrb[0].mxu0
        %v682 = vadd.f32 %v470, %v681
        %v683 = vpop.f32.mrb[0].mxu0
        %684 = vmatprep.mubr.bf16.mxu0 0
        %685 = vmatmul.mubr.bf16.gmra.mrb[0].mxu0 %v562
        %v686 = vpop.f32.mrb[0].mxu0
        %v687 = vadd.f32 %v475, %v686
        %v688 = vpop.f32.mrb[0].mxu0
        %v689 = vpop.f32.mrb[0].mxu0
        %v690 = vadd.f32 %v478, %v689
        %v691 = vpop.f32.mrb[0].mxu0
        %692 = vmatprep.mubr.bf16.mxu0 0
        %693 = vmatmul.mubr.bf16.gmra.mrb[0].mxu0 %v565
        %v694 = vpop.f32.mrb[0].mxu0
        %v695 = vadd.f32 %v483, %v694
        %v696 = vpop.f32.mrb[0].mxu0
        %v697 = vpop.f32.mrb[0].mxu0
        %v698 = vadd.f32 %v486, %v697
        %v699 = vpop.f32.mrb[0].mxu0
        %700 = vmatprep.mubr.bf16.mxu0 0
        %701 = vmatmul.mubr.bf16.gmra.mrb[0].mxu0 %v568
        %v702 = vpop.f32.mrb[0].mxu0
        %v703 = vadd.f32 %v491, %v702
        %v704 = vpop.f32.mrb[0].mxu0
        %v705 = vpop.f32.mrb[0].mxu0
        %v706 = vadd.f32 %v494, %v705
        %v707 = vpop.f32.mrb[0].mxu0
        %708 = vmatprep.mubr.bf16.mxu0 0
        %709 = vmatmul.mubr.bf16.gmra.mrb[0].mxu0 %v571
        %v710 = vpop.f32.mrb[0].mxu0
        %v711 = vadd.f32 %v499, %v710
        %v712 = vpop.f32.mrb[0].mxu0
        %v713 = vpop.f32.mrb[0].mxu0
        %v714 = vadd.f32 %v502, %v713
        %v715 = vpop.f32.mrb[0].mxu0
        %716 = vmatprep.mubr.bf16.mxu0 0
        %717 = vmatmul.mubr.bf16.gmra.mrb[0].mxu0 %v574
        %v718 = vpop.f32.mrb[0].mxu0
        %v719 = vadd.f32 %v507, %v718
        %v720 = vpop.f32.mrb[0].mxu0
        %v721 = vpop.f32.mrb[0].mxu0
        %v722 = vadd.f32 %v510, %v721
        %v723 = vpop.f32.mrb[0].mxu0
        %724 = vmatprep.mubr.bf16.mxu0 0
        %725 = vmatmul.mubr.bf16.gmra.mrb[0].mxu0 %v577
        %v726 = vpop.f32.mrb[0].mxu0
        %v727 = vadd.f32 %v515, %v726
        %v728 = vpop.f32.mrb[0].mxu0
        %v729 = vpop.f32.mrb[0].mxu0
        %v730 = vadd.f32 %v518, %v729
        %v731 = vpop.f32.mrb[0].mxu0
        %732 = vmatprep.mubr.bf16.mxu0 0
        %733 = vmatmul.mubr.bf16.gmra.mrb[0].mxu0 %v580
        %v734 = vpop.f32.mrb[0].mxu0
        %v735 = vadd.f32 %v523, %v734
        %v736 = vpop.f32.mrb[0].mxu0
        %v737 = vpop.f32.mrb[0].mxu0
        %v738 = vadd.f32 %v526, %v737
        %v739 = vpop.f32.mrb[0].mxu0
        %740 = vmatprep.mubr.bf16.mxu0 0
        %741 = vmatmul.mubr.bf16.gmra.mrb[0].mxu0 %v583
        %v742 = vpop.f32.mrb[0].mxu0
        %v743 = vadd.f32 %v531, %v742
        %v744 = vpop.f32.mrb[0].mxu0
        %v745 = vpop.f32.mrb[0].mxu0
        %v746 = vadd.f32 %v534, %v745
        %v747 = vpop.f32.mrb[0].mxu0
        %748 = vdwg.mxu0
        %v749 = vld [vmem:[%s222 + $0x2] sm:$0xff]
        %v750 = vld [vmem:[%s222 + $0xa] sm:$0xff]
        %v751 = vld [vmem:[%s222 + $0x1a] sm:$0xff]
        %v752 = vld [vmem:[%s222 + $0x22] sm:$0xff]
        %v753 = vld [vmem:[%s222 + $0x32] sm:$0xff]
        %v754 = vld [vmem:[%s222 + $0x3a] sm:$0xff]
        %v755 = vld [vmem:[%s222 + $0x4a] sm:$0xff]
        %v756 = vld [vmem:[%s222 + $0x52] sm:$0xff]
        %v757 = vld [vmem:[%s222 + $0x62] sm:$0xff]
        %v758 = vld [vmem:[%s222 + $0x6a] sm:$0xff]
        %v759 = vld [vmem:[%s222 + $0x7a] sm:$0xff]
        %v760 = vld [vmem:[%s222 + $0x82] sm:$0xff]
        %v761 = vld [vmem:[%s222 + $0x92] sm:$0xff]
        %v762 = vld [vmem:[%s222 + $0x9a] sm:$0xff]
        %v763 = vld [vmem:[%s222 + $0xaa] sm:$0xff]
        %v764 = vld [vmem:[%s222 + $0xb2] sm:$0xff]
        %v765 = vld [vmem:[%s222 + $0xc2] sm:$0xff]
        %v766 = vld [vmem:[%s222 + $0xca] sm:$0xff]
        %v767 = vld [vmem:[%s222 + $0xda] sm:$0xff]
        %v768 = vld [vmem:[%s222 + $0xe2] sm:$0xff]
        %v769 = vld [vmem:[%s222 + $0xf2] sm:$0xff]
        %v770 = vld [vmem:[%s222 + $0xfa] sm:$0xff]
        %v771 = vld [vmem:[%s222 + $0x10a] sm:$0xff]
        %v772 = vld [vmem:[%s222 + $0x112] sm:$0xff]
        %v773 = vld [vmem:[%s222 + $0x122] sm:$0xff]
        %v774 = vld [vmem:[%s222 + $0x12a] sm:$0xff]
        %v775 = vld [vmem:[%s222 + $0x13a] sm:$0xff]
        %v776 = vld [vmem:[%s222 + $0x142] sm:$0xff]
        %v777 = vld [vmem:[%s222 + $0x152] sm:$0xff]
        %v778 = vld [vmem:[%s222 + $0x15a] sm:$0xff]
        %v779 = vld [vmem:[%s222 + $0x16a] sm:$0xff]
        %v780 = vld [vmem:[%s222 + $0x172] sm:$0xff]
        %v781 = vpack.c.bf16 %v750, %v749
        %v782 = vpack.c.bf16 %v752, %v751
        %v783 = vpack.c.bf16 %v754, %v753
        %v784 = vpack.c.bf16 %v756, %v755
        %v785 = vpack.c.bf16 %v758, %v757
        %v786 = vpack.c.bf16 %v760, %v759
        %v787 = vpack.c.bf16 %v762, %v761
        %v788 = vpack.c.bf16 %v764, %v763
        %v789 = vpack.c.bf16 %v766, %v765
        %v790 = vpack.c.bf16 %v768, %v767
        %v791 = vpack.c.bf16 %v770, %v769
        %v792 = vpack.c.bf16 %v772, %v771
        %v793 = vpack.c.bf16 %v774, %v773
        %v794 = vpack.c.bf16 %v776, %v775
        %v795 = vpack.c.bf16 %v778, %v777
        %v796 = vpack.c.bf16 %v780, %v779
        %v797 = vld [vmem:[%s1 + $0x8] sm:$0xf]
        %v799 = vsel %vm323, %v781, 0
        %v802 = vsel %vm323, %v782, 0
        %v805 = vsel %vm323, %v783, 0
        %v808 = vsel %vm323, %v784, 0
        %v811 = vsel %vm323, %v785, 0
        %v814 = vsel %vm323, %v786, 0
        %v817 = vsel %vm323, %v787, 0
        %v820 = vsel %vm323, %v788, 0
        %v823 = vsel %vm323, %v789, 0
        %v826 = vsel %vm323, %v790, 0
        %v829 = vsel %vm323, %v791, 0
        %v832 = vsel %vm323, %v792, 0
        %v835 = vsel %vm323, %v793, 0
        %v838 = vsel %vm323, %v794, 0
        %v841 = vsel %vm323, %v795, 0
        %v844 = vsel %vm323, %v796, 0
        %v847 = vsel %vm372, %v797, 0
        %849 = vmatprep.subr.bf16.mxu0 0
        %850 = vmatpush1.bf16.msra.mxu0 %v847
        %851 = vmatprep.subr.bf16.mxu0 0
        %852 = vmatpush1.bf16.msra.mxu0 0
        %853 = vmatprep.subr.bf16.mxu0 0
        %854 = vmatpush1.bf16.msra.mxu0 0
        %855 = vmatprep.subr.bf16.mxu0 0
        %856 = vmatpush1.bf16.msra.mxu0 0
        %857 = vmatprep.subr.bf16.mxu0 0
        %858 = vmatpush1.bf16.msra.mxu0 0
        %859 = vmatprep.subr.bf16.mxu0 0
        %860 = vmatpush1.bf16.msra.mxu0 0
        %861 = vmatprep.subr.bf16.mxu0 0
        %862 = vmatpush1.bf16.msra.mxu0 0
        %863 = vmatprep.subr.bf16.mxu0 0
        %864 = vmatpush1.bf16.msra.mxu0 0
        %865 = vmatprep.subr.bf16.mxu0 0
        %866 = vmatpush1.bf16.msra.mxu0 0
        %867 = vmatprep.subr.bf16.mxu0 0
        %868 = vmatpush1.bf16.msra.mxu0 0
        %869 = vmatprep.subr.bf16.mxu0 0
        %870 = vmatpush1.bf16.msra.mxu0 0
        %871 = vmatprep.subr.bf16.mxu0 0
        %872 = vmatpush1.bf16.msra.mxu0 0
        %873 = vmatprep.subr.bf16.mxu0 0
        %874 = vmatpush1.bf16.msra.mxu0 0
        %875 = vmatprep.subr.bf16.mxu0 0
        %876 = vmatpush1.bf16.msra.mxu0 0
        %877 = vmatprep.subr.bf16.mxu0 0
        %878 = vmatpush1.bf16.msra.mxu0 0
        %879 = vmatprep.subr.bf16.mxu0 0
        %880 = vmatpush1.bf16.msra.mxu0 0
        %881 = vmatprep.mubr.bf16.mxu0 0
        %882 = vmatmul.mubr.bf16.gmra.mrb[0].mxu0 %v799
        %v883 = vpop.f32.mrb[0].mxu0
        %v884 = vadd.f32 0.0, %v883
        %v885 = vpop.f32.mrb[0].mxu0
        %v886 = vpop.f32.mrb[0].mxu0
        %v887 = vadd.f32 0.0, %v886
        %v888 = vpop.f32.mrb[0].mxu0
        %889 = vmatprep.mubr.bf16.mxu0 0
        %890 = vmatmul.mubr.bf16.gmra.mrb[0].mxu0 %v802
        %v891 = vpop.f32.mrb[0].mxu0
        %v892 = vadd.f32 0.0, %v891
        %v893 = vpop.f32.mrb[0].mxu0
        %v894 = vpop.f32.mrb[0].mxu0
        %v895 = vadd.f32 0.0, %v894
        %v896 = vpop.f32.mrb[0].mxu0
        %897 = vmatprep.mubr.bf16.mxu0 0
        %898 = vmatmul.mubr.bf16.gmra.mrb[0].mxu0 %v805
        %v899 = vpop.f32.mrb[0].mxu0
        %v900 = vadd.f32 0.0, %v899
        %v901 = vpop.f32.mrb[0].mxu0
        %v902 = vpop.f32.mrb[0].mxu0
        %v903 = vadd.f32 0.0, %v902
        %v904 = vpop.f32.mrb[0].mxu0
        %905 = vmatprep.mubr.bf16.mxu0 0
        %906 = vmatmul.mubr.bf16.gmra.mrb[0].mxu0 %v808
        %v907 = vpop.f32.mrb[0].mxu0
        %v908 = vadd.f32 0.0, %v907
        %v909 = vpop.f32.mrb[0].mxu0
        %v910 = vpop.f32.mrb[0].mxu0
        %v911 = vadd.f32 0.0, %v910
        %v912 = vpop.f32.mrb[0].mxu0
        %913 = vmatprep.mubr.bf16.mxu0 0
        %914 = vmatmul.mubr.bf16.gmra.mrb[0].mxu0 %v811
        %v915 = vpop.f32.mrb[0].mxu0
        %v916 = vadd.f32 0.0, %v915
        %v917 = vpop.f32.mrb[0].mxu0
        %v918 = vpop.f32.mrb[0].mxu0
        %v919 = vadd.f32 0.0, %v918
        %v920 = vpop.f32.mrb[0].mxu0
        %921 = vmatprep.mubr.bf16.mxu0 0
        %922 = vmatmul.mubr.bf16.gmra.mrb[0].mxu0 %v814
        %v923 = vpop.f32.mrb[0].mxu0
        %v924 = vadd.f32 0.0, %v923
        %v925 = vpop.f32.mrb[0].mxu0
        %v926 = vpop.f32.mrb[0].mxu0
        %v927 = vadd.f32 0.0, %v926
        %v928 = vpop.f32.mrb[0].mxu0
        %929 = vmatprep.mubr.bf16.mxu0 0
        %930 = vmatmul.mubr.bf16.gmra.mrb[0].mxu0 %v817
        %v931 = vpop.f32.mrb[0].mxu0
        %v932 = vadd.f32 0.0, %v931
        %v933 = vpop.f32.mrb[0].mxu0
        %v934 = vpop.f32.mrb[0].mxu0
        %v935 = vadd.f32 0.0, %v934
        %v936 = vpop.f32.mrb[0].mxu0
        %937 = vmatprep.mubr.bf16.mxu0 0
        %938 = vmatmul.mubr.bf16.gmra.mrb[0].mxu0 %v820
        %v939 = vpop.f32.mrb[0].mxu0
        %v940 = vadd.f32 0.0, %v939
        %v941 = vpop.f32.mrb[0].mxu0
        %v942 = vpop.f32.mrb[0].mxu0
        %v943 = vadd.f32 0.0, %v942
        %v944 = vpop.f32.mrb[0].mxu0
        %945 = vmatprep.mubr.bf16.mxu0 0
        %946 = vmatmul.mubr.bf16.gmra.mrb[0].mxu0 %v823
        %v947 = vpop.f32.mrb[0].mxu0
        %v948 = vadd.f32 0.0, %v947
        %v949 = vpop.f32.mrb[0].mxu0
        %v950 = vpop.f32.mrb[0].mxu0
        %v951 = vadd.f32 0.0, %v950
        %v952 = vpop.f32.mrb[0].mxu0
        %953 = vmatprep.mubr.bf16.mxu0 0
        %954 = vmatmul.mubr.bf16.gmra.mrb[0].mxu0 %v826
        %v955 = vpop.f32.mrb[0].mxu0
        %v956 = vadd.f32 0.0, %v955
        %v957 = vpop.f32.mrb[0].mxu0
        %v958 = vpop.f32.mrb[0].mxu0
        %v959 = vadd.f32 0.0, %v958
        %v960 = vpop.f32.mrb[0].mxu0
        %961 = vmatprep.mubr.bf16.mxu0 0
        %962 = vmatmul.mubr.bf16.gmra.mrb[0].mxu0 %v829
        %v963 = vpop.f32.mrb[0].mxu0
        %v964 = vadd.f32 0.0, %v963
        %v965 = vpop.f32.mrb[0].mxu0
        %v966 = vpop.f32.mrb[0].mxu0
        %v967 = vadd.f32 0.0, %v966
        %v968 = vpop.f32.mrb[0].mxu0
        %969 = vmatprep.mubr.bf16.mxu0 0
        %970 = vmatmul.mubr.bf16.gmra.mrb[0].mxu0 %v832
        %v971 = vpop.f32.mrb[0].mxu0
        %v972 = vadd.f32 0.0, %v971
        %v973 = vpop.f32.mrb[0].mxu0
        %v974 = vpop.f32.mrb[0].mxu0
        %v975 = vadd.f32 0.0, %v974
        %v976 = vpop.f32.mrb[0].mxu0
        %977 = vmatprep.mubr.bf16.mxu0 0
        %978 = vmatmul.mubr.bf16.gmra.mrb[0].mxu0 %v835
        %v979 = vpop.f32.mrb[0].mxu0
        %v980 = vadd.f32 0.0, %v979
        %v981 = vpop.f32.mrb[0].mxu0
        %v982 = vpop.f32.mrb[0].mxu0
        %v983 = vadd.f32 0.0, %v982
        %v984 = vpop.f32.mrb[0].mxu0
        %985 = vmatprep.mubr.bf16.mxu0 0
        %986 = vmatmul.mubr.bf16.gmra.mrb[0].mxu0 %v838
        %v987 = vpop.f32.mrb[0].mxu0
        %v988 = vadd.f32 0.0, %v987
        %v989 = vpop.f32.mrb[0].mxu0
        %v990 = vpop.f32.mrb[0].mxu0
        %v991 = vadd.f32 0.0, %v990
        %v992 = vpop.f32.mrb[0].mxu0
        %993 = vmatprep.mubr.bf16.mxu0 0
        %994 = vmatmul.mubr.bf16.gmra.mrb[0].mxu0 %v841
        %v995 = vpop.f32.mrb[0].mxu0
        %v996 = vadd.f32 0.0, %v995
        %v997 = vpop.f32.mrb[0].mxu0
        %v998 = vpop.f32.mrb[0].mxu0
        %v999 = vadd.f32 0.0, %v998
        %v1000 = vpop.f32.mrb[0].mxu0
        %1001 = vmatprep.mubr.bf16.mxu0 0
        %1002 = vmatmul.mubr.bf16.gmra.mrb[0].mxu0 %v844
        %v1003 = vpop.f32.mrb[0].mxu0
        %v1004 = vadd.f32 0.0, %v1003
        %v1005 = vpop.f32.mrb[0].mxu0
        %v1006 = vpop.f32.mrb[0].mxu0
        %v1007 = vadd.f32 0.0, %v1006
        %v1008 = vpop.f32.mrb[0].mxu0
        %1009 = vdwg.mxu0
        %v1010 = vadd.f32 %v623, %v884
        %v1011 = vadd.f32 %v626, %v887
        %v1012 = vadd.f32 %v631, %v892
        %v1013 = vadd.f32 %v634, %v895
        %v1014 = vadd.f32 %v639, %v900
        %v1015 = vadd.f32 %v642, %v903
        %v1016 = vadd.f32 %v647, %v908
        %v1017 = vadd.f32 %v650, %v911
        %v1018 = vadd.f32 %v655, %v916
        %v1019 = vadd.f32 %v658, %v919
        %v1020 = vadd.f32 %v663, %v924
        %v1021 = vadd.f32 %v666, %v927
        %v1022 = vadd.f32 %v671, %v932
        %v1023 = vadd.f32 %v674, %v935
        %v1024 = vadd.f32 %v679, %v940
        %v1025 = vadd.f32 %v682, %v943
        %v1026 = vadd.f32 %v687, %v948
        %v1027 = vadd.f32 %v690, %v951
        %v1028 = vadd.f32 %v695, %v956
        %v1029 = vadd.f32 %v698, %v959
        %v1030 = vadd.f32 %v703, %v964
        %v1031 = vadd.f32 %v706, %v967
        %v1032 = vadd.f32 %v711, %v972
        %v1033 = vadd.f32 %v714, %v975
        %v1034 = vadd.f32 %v719, %v980
        %v1035 = vadd.f32 %v722, %v983
        %v1036 = vadd.f32 %v727, %v988
        %v1037 = vadd.f32 %v730, %v991
        %v1038 = vadd.f32 %v735, %v996
        %v1039 = vadd.f32 %v738, %v999
        %v1040 = vadd.f32 %v743, %v1004
        %v1041 = vadd.f32 %v746, %v1007
        %s1042 = scalar_lea.vmem %s222, 24
        %v1043 = vld [vmem:[%s1042] sm:$0xff]
        %v1044 = vld [vmem:[%s1042 + $0x8] sm:$0xff]
        %v1045 = vld [vmem:[%s1042 + $0x18] sm:$0xff]
        %v1046 = vld [vmem:[%s1042 + $0x20] sm:$0xff]
        %v1047 = vld [vmem:[%s1042 + $0x30] sm:$0xff]
        %v1048 = vld [vmem:[%s1042 + $0x38] sm:$0xff]
        %v1049 = vld [vmem:[%s1042 + $0x48] sm:$0xff]
        %v1050 = vld [vmem:[%s1042 + $0x50] sm:$0xff]
        %v1051 = vld [vmem:[%s1042 + $0x60] sm:$0xff]
        %v1052 = vld [vmem:[%s1042 + $0x68] sm:$0xff]
        %v1053 = vld [vmem:[%s1042 + $0x78] sm:$0xff]
        %v1054 = vld [vmem:[%s1042 + $0x80] sm:$0xff]
        %v1055 = vld [vmem:[%s1042 + $0x90] sm:$0xff]
        %v1056 = vld [vmem:[%s1042 + $0x98] sm:$0xff]
        %v1057 = vld [vmem:[%s1042 + $0xa8] sm:$0xff]
        %v1058 = vld [vmem:[%s1042 + $0xb0] sm:$0xff]
        %v1059 = vld [vmem:[%s1042 + $0xc0] sm:$0xff]
        %v1060 = vld [vmem:[%s1042 + $0xc8] sm:$0xff]
        %v1061 = vld [vmem:[%s1042 + $0xd8] sm:$0xff]
        %v1062 = vld [vmem:[%s1042 + $0xe0] sm:$0xff]
        %v1063 = vld [vmem:[%s1042 + $0xf0] sm:$0xff]
        %v1064 = vld [vmem:[%s1042 + $0xf8] sm:$0xff]
        %v1065 = vld [vmem:[%s1042 + $0x108] sm:$0xff]
        %v1066 = vld [vmem:[%s1042 + $0x110] sm:$0xff]
        %v1067 = vld [vmem:[%s1042 + $0x120] sm:$0xff]
        %v1068 = vld [vmem:[%s1042 + $0x128] sm:$0xff]
        %v1069 = vld [vmem:[%s1042 + $0x138] sm:$0xff]
        %v1070 = vld [vmem:[%s1042 + $0x140] sm:$0xff]
        %v1071 = vld [vmem:[%s1042 + $0x150] sm:$0xff]
        %v1072 = vld [vmem:[%s1042 + $0x158] sm:$0xff]
        %v1073 = vld [vmem:[%s1042 + $0x168] sm:$0xff]
        %v1074 = vld [vmem:[%s1042 + $0x170] sm:$0xff]
        %v1075 = vpack.c.bf16 %v1044, %v1043
        %v1076 = vpack.c.bf16 %v1046, %v1045
        %v1077 = vpack.c.bf16 %v1048, %v1047
        %v1078 = vpack.c.bf16 %v1050, %v1049
        %v1079 = vpack.c.bf16 %v1052, %v1051
        %v1080 = vpack.c.bf16 %v1054, %v1053
        %v1081 = vpack.c.bf16 %v1056, %v1055
        %v1082 = vpack.c.bf16 %v1058, %v1057
        %v1083 = vpack.c.bf16 %v1060, %v1059
        %v1084 = vpack.c.bf16 %v1062, %v1061
        %v1085 = vpack.c.bf16 %v1064, %v1063
        %v1086 = vpack.c.bf16 %v1066, %v1065
        %v1087 = vpack.c.bf16 %v1068, %v1067
        %v1088 = vpack.c.bf16 %v1070, %v1069
        %v1089 = vpack.c.bf16 %v1072, %v1071
        %v1090 = vpack.c.bf16 %v1074, %v1073
        %v1091 = vld [vmem:[%s1 + $0xc] sm:$0xf]
        %v1093 = vsel %vm323, %v1075, 0
        %v1096 = vsel %vm323, %v1076, 0
        %v1099 = vsel %vm323, %v1077, 0
        %v1102 = vsel %vm323, %v1078, 0
        %v1105 = vsel %vm323, %v1079, 0
        %v1108 = vsel %vm323, %v1080, 0
        %v1111 = vsel %vm323, %v1081, 0
        %v1114 = vsel %vm323, %v1082, 0
        %v1117 = vsel %vm323, %v1083, 0
        %v1120 = vsel %vm323, %v1084, 0
        %v1123 = vsel %vm323, %v1085, 0
        %v1126 = vsel %vm323, %v1086, 0
        %v1129 = vsel %vm323, %v1087, 0
        %v1132 = vsel %vm323, %v1088, 0
        %v1135 = vsel %vm323, %v1089, 0
        %v1138 = vsel %vm323, %v1090, 0
        %v1141 = vsel %vm372, %v1091, 0
        %1143 = vmatprep.subr.bf16.mxu0 0
        %1144 = vmatpush1.bf16.msra.mxu0 %v1141
        %1145 = vmatprep.subr.bf16.mxu0 0
        %1146 = vmatpush1.bf16.msra.mxu0 0
        %1147 = vmatprep.subr.bf16.mxu0 0
        %1148 = vmatpush1.bf16.msra.mxu0 0
        %1149 = vmatprep.subr.bf16.mxu0 0
        %1150 = vmatpush1.bf16.msra.mxu0 0
        %1151 = vmatprep.subr.bf16.mxu0 0
        %1152 = vmatpush1.bf16.msra.mxu0 0
        %1153 = vmatprep.subr.bf16.mxu0 0
        %1154 = vmatpush1.bf16.msra.mxu0 0
        %1155 = vmatprep.subr.bf16.mxu0 0
        %1156 = vmatpush1.bf16.msra.mxu0 0
        %1157 = vmatprep.subr.bf16.mxu0 0
        %1158 = vmatpush1.bf16.msra.mxu0 0
        %1159 = vmatprep.subr.bf16.mxu0 0
        %1160 = vmatpush1.bf16.msra.mxu0 0
        %1161 = vmatprep.subr.bf16.mxu0 0
        %1162 = vmatpush1.bf16.msra.mxu0 0
        %1163 = vmatprep.subr.bf16.mxu0 0
        %1164 = vmatpush1.bf16.msra.mxu0 0
        %1165 = vmatprep.subr.bf16.mxu0 0
        %1166 = vmatpush1.bf16.msra.mxu0 0
        %1167 = vmatprep.subr.bf16.mxu0 0
        %1168 = vmatpush1.bf16.msra.mxu0 0
        %1169 = vmatprep.subr.bf16.mxu0 0
        %1170 = vmatpush1.bf16.msra.mxu0 0
        %1171 = vmatprep.subr.bf16.mxu0 0
        %1172 = vmatpush1.bf16.msra.mxu0 0
        %1173 = vmatprep.subr.bf16.mxu0 0
        %1174 = vmatpush1.bf16.msra.mxu0 0
        %1175 = vmatprep.mubr.bf16.mxu0 0
        %1176 = vmatmul.mubr.bf16.gmra.mrb[0].mxu0 %v1093
        %v1177 = vpop.f32.mrb[0].mxu0
        %v1178 = vadd.f32 0.0, %v1177
        %v1179 = vpop.f32.mrb[0].mxu0
        %v1180 = vpop.f32.mrb[0].mxu0
        %v1181 = vadd.f32 0.0, %v1180
        %v1182 = vpop.f32.mrb[0].mxu0
        %1183 = vmatprep.mubr.bf16.mxu0 0
        %1184 = vmatmul.mubr.bf16.gmra.mrb[0].mxu0 %v1096
        %v1185 = vpop.f32.mrb[0].mxu0
        %v1186 = vadd.f32 0.0, %v1185
        %v1187 = vpop.f32.mrb[0].mxu0
        %v1188 = vpop.f32.mrb[0].mxu0
        %v1189 = vadd.f32 0.0, %v1188
        %v1190 = vpop.f32.mrb[0].mxu0
        %1191 = vmatprep.mubr.bf16.mxu0 0
        %1192 = vmatmul.mubr.bf16.gmra.mrb[0].mxu0 %v1099
        %v1193 = vpop.f32.mrb[0].mxu0
        %v1194 = vadd.f32 0.0, %v1193
        %v1195 = vpop.f32.mrb[0].mxu0
        %v1196 = vpop.f32.mrb[0].mxu0
        %v1197 = vadd.f32 0.0, %v1196
        %v1198 = vpop.f32.mrb[0].mxu0
        %1199 = vmatprep.mubr.bf16.mxu0 0
        %1200 = vmatmul.mubr.bf16.gmra.mrb[0].mxu0 %v1102
        %v1201 = vpop.f32.mrb[0].mxu0
        %v1202 = vadd.f32 0.0, %v1201
        %v1203 = vpop.f32.mrb[0].mxu0
        %v1204 = vpop.f32.mrb[0].mxu0
        %v1205 = vadd.f32 0.0, %v1204
        %v1206 = vpop.f32.mrb[0].mxu0
        %1207 = vmatprep.mubr.bf16.mxu0 0
        %1208 = vmatmul.mubr.bf16.gmra.mrb[0].mxu0 %v1105
        %v1209 = vpop.f32.mrb[0].mxu0
        %v1210 = vadd.f32 0.0, %v1209
        %v1211 = vpop.f32.mrb[0].mxu0
        %v1212 = vpop.f32.mrb[0].mxu0
        %v1213 = vadd.f32 0.0, %v1212
        %v1214 = vpop.f32.mrb[0].mxu0
        %1215 = vmatprep.mubr.bf16.mxu0 0
        %1216 = vmatmul.mubr.bf16.gmra.mrb[0].mxu0 %v1108
        %v1217 = vpop.f32.mrb[0].mxu0
        %v1218 = vadd.f32 0.0, %v1217
        %v1219 = vpop.f32.mrb[0].mxu0
        %v1220 = vpop.f32.mrb[0].mxu0
        %v1221 = vadd.f32 0.0, %v1220
        %v1222 = vpop.f32.mrb[0].mxu0
        %1223 = vmatprep.mubr.bf16.mxu0 0
        %1224 = vmatmul.mubr.bf16.gmra.mrb[0].mxu0 %v1111
        %v1225 = vpop.f32.mrb[0].mxu0
        %v1226 = vadd.f32 0.0, %v1225
        %v1227 = vpop.f32.mrb[0].mxu0
        %v1228 = vpop.f32.mrb[0].mxu0
        %v1229 = vadd.f32 0.0, %v1228
        %v1230 = vpop.f32.mrb[0].mxu0
        %1231 = vmatprep.mubr.bf16.mxu0 0
        %1232 = vmatmul.mubr.bf16.gmra.mrb[0].mxu0 %v1114
        %v1233 = vpop.f32.mrb[0].mxu0
        %v1234 = vadd.f32 0.0, %v1233
        %v1235 = vpop.f32.mrb[0].mxu0
        %v1236 = vpop.f32.mrb[0].mxu0
        %v1237 = vadd.f32 0.0, %v1236
        %v1238 = vpop.f32.mrb[0].mxu0
        %1239 = vmatprep.mubr.bf16.mxu0 0
        %1240 = vmatmul.mubr.bf16.gmra.mrb[0].mxu0 %v1117
        %v1241 = vpop.f32.mrb[0].mxu0
        %v1242 = vadd.f32 0.0, %v1241
        %v1243 = vpop.f32.mrb[0].mxu0
        %v1244 = vpop.f32.mrb[0].mxu0
        %v1245 = vadd.f32 0.0, %v1244
        %v1246 = vpop.f32.mrb[0].mxu0
        %1247 = vmatprep.mubr.bf16.mxu0 0
        %1248 = vmatmul.mubr.bf16.gmra.mrb[0].mxu0 %v1120
        %v1249 = vpop.f32.mrb[0].mxu0
        %v1250 = vadd.f32 0.0, %v1249
        %v1251 = vpop.f32.mrb[0].mxu0
        %v1252 = vpop.f32.mrb[0].mxu0
        %v1253 = vadd.f32 0.0, %v1252
        %v1254 = vpop.f32.mrb[0].mxu0
        %1255 = vmatprep.mubr.bf16.mxu0 0
        %1256 = vmatmul.mubr.bf16.gmra.mrb[0].mxu0 %v1123
        %v1257 = vpop.f32.mrb[0].mxu0
        %v1258 = vadd.f32 0.0, %v1257
        %v1259 = vpop.f32.mrb[0].mxu0
        %v1260 = vpop.f32.mrb[0].mxu0
        %v1261 = vadd.f32 0.0, %v1260
        %v1262 = vpop.f32.mrb[0].mxu0
        %1263 = vmatprep.mubr.bf16.mxu0 0
        %1264 = vmatmul.mubr.bf16.gmra.mrb[0].mxu0 %v1126
        %v1265 = vpop.f32.mrb[0].mxu0
        %v1266 = vadd.f32 0.0, %v1265
        %v1267 = vpop.f32.mrb[0].mxu0
        %v1268 = vpop.f32.mrb[0].mxu0
        %v1269 = vadd.f32 0.0, %v1268
        %v1270 = vpop.f32.mrb[0].mxu0
        %1271 = vmatprep.mubr.bf16.mxu0 0
        %1272 = vmatmul.mubr.bf16.gmra.mrb[0].mxu0 %v1129
        %v1273 = vpop.f32.mrb[0].mxu0
        %v1274 = vadd.f32 0.0, %v1273
        %v1275 = vpop.f32.mrb[0].mxu0
        %v1276 = vpop.f32.mrb[0].mxu0
        %v1277 = vadd.f32 0.0, %v1276
        %v1278 = vpop.f32.mrb[0].mxu0
        %1279 = vmatprep.mubr.bf16.mxu0 0
        %1280 = vmatmul.mubr.bf16.gmra.mrb[0].mxu0 %v1132
        %v1281 = vpop.f32.mrb[0].mxu0
        %v1282 = vadd.f32 0.0, %v1281
        %v1283 = vpop.f32.mrb[0].mxu0
        %v1284 = vpop.f32.mrb[0].mxu0
        %v1285 = vadd.f32 0.0, %v1284
        %v1286 = vpop.f32.mrb[0].mxu0
        %1287 = vmatprep.mubr.bf16.mxu0 0
        %1288 = vmatmul.mubr.bf16.gmra.mrb[0].mxu0 %v1135
        %v1289 = vpop.f32.mrb[0].mxu0
        %v1290 = vadd.f32 0.0, %v1289
        %v1291 = vpop.f32.mrb[0].mxu0
        %v1292 = vpop.f32.mrb[0].mxu0
        %v1293 = vadd.f32 0.0, %v1292
        %v1294 = vpop.f32.mrb[0].mxu0
        %1295 = vmatprep.mubr.bf16.mxu0 0
        %1296 = vmatmul.mubr.bf16.gmra.mrb[0].mxu0 %v1138
        %v1297 = vpop.f32.mrb[0].mxu0
        %v1298 = vadd.f32 0.0, %v1297
        %v1299 = vpop.f32.mrb[0].mxu0
        %v1300 = vpop.f32.mrb[0].mxu0
        %v1301 = vadd.f32 0.0, %v1300
        %v1302 = vpop.f32.mrb[0].mxu0
        %1303 = vdwg.mxu0
        %v1304 = vadd.f32 %v1010, %v1178
        %v1305 = vadd.f32 %v1011, %v1181
        %v1306 = vadd.f32 %v1012, %v1186
        %v1307 = vadd.f32 %v1013, %v1189
        %v1308 = vadd.f32 %v1014, %v1194
        %v1309 = vadd.f32 %v1015, %v1197
        %v1310 = vadd.f32 %v1016, %v1202
        %v1311 = vadd.f32 %v1017, %v1205
        %v1312 = vadd.f32 %v1018, %v1210
        %v1313 = vadd.f32 %v1019, %v1213
        %v1314 = vadd.f32 %v1020, %v1218
        %v1315 = vadd.f32 %v1021, %v1221
        %v1316 = vadd.f32 %v1022, %v1226
        %v1317 = vadd.f32 %v1023, %v1229
        %v1318 = vadd.f32 %v1024, %v1234
        %v1319 = vadd.f32 %v1025, %v1237
        %v1320 = vadd.f32 %v1026, %v1242
        %v1321 = vadd.f32 %v1027, %v1245
        %v1322 = vadd.f32 %v1028, %v1250
        %v1323 = vadd.f32 %v1029, %v1253
        %v1324 = vadd.f32 %v1030, %v1258
        %v1325 = vadd.f32 %v1031, %v1261
        %v1326 = vadd.f32 %v1032, %v1266
        %v1327 = vadd.f32 %v1033, %v1269
        %v1328 = vadd.f32 %v1034, %v1274
        %v1329 = vadd.f32 %v1035, %v1277
        %v1330 = vadd.f32 %v1036, %v1282
        %v1331 = vadd.f32 %v1037, %v1285
        %v1332 = vadd.f32 %v1038, %v1290
        %v1333 = vadd.f32 %v1039, %v1293
        %v1334 = vadd.f32 %v1040, %v1298
        %v1335 = vadd.f32 %v1041, %v1301
        %v1336 = vld [vmem:[%s1042 + $0x1] sm:$0xff]
        %v1337 = vld [vmem:[%s1042 + $0x9] sm:$0xff]
        %v1338 = vld [vmem:[%s1042 + $0x19] sm:$0xff]
        %v1339 = vld [vmem:[%s1042 + $0x21] sm:$0xff]
        %v1340 = vld [vmem:[%s1042 + $0x31] sm:$0xff]
        %v1341 = vld [vmem:[%s1042 + $0x39] sm:$0xff]
        %v1342 = vld [vmem:[%s1042 + $0x49] sm:$0xff]
        %v1343 = vld [vmem:[%s1042 + $0x51] sm:$0xff]
        %v1344 = vld [vmem:[%s1042 + $0x61] sm:$0xff]
        %v1345 = vld [vmem:[%s1042 + $0x69] sm:$0xff]
        %v1346 = vld [vmem:[%s1042 + $0x79] sm:$0xff]
        %v1347 = vld [vmem:[%s1042 + $0x81] sm:$0xff]
        %v1348 = vld [vmem:[%s1042 + $0x91] sm:$0xff]
        %v1349 = vld [vmem:[%s1042 + $0x99] sm:$0xff]
        %v1350 = vld [vmem:[%s1042 + $0xa9] sm:$0xff]
        %v1351 = vld [vmem:[%s1042 + $0xb1] sm:$0xff]
        %v1352 = vld [vmem:[%s1042 + $0xc1] sm:$0xff]
        %v1353 = vld [vmem:[%s1042 + $0xc9] sm:$0xff]
        %v1354 = vld [vmem:[%s1042 + $0xd9] sm:$0xff]
        %v1355 = vld [vmem:[%s1042 + $0xe1] sm:$0xff]
        %v1356 = vld [vmem:[%s1042 + $0xf1] sm:$0xff]
        %v1357 = vld [vmem:[%s1042 + $0xf9] sm:$0xff]
        %v1358 = vld [vmem:[%s1042 + $0x109] sm:$0xff]
        %v1359 = vld [vmem:[%s1042 + $0x111] sm:$0xff]
        %v1360 = vld [vmem:[%s1042 + $0x121] sm:$0xff]
        %v1361 = vld [vmem:[%s1042 + $0x129] sm:$0xff]
        %v1362 = vld [vmem:[%s1042 + $0x139] sm:$0xff]
        %v1363 = vld [vmem:[%s1042 + $0x141] sm:$0xff]
        %v1364 = vld [vmem:[%s1042 + $0x151] sm:$0xff]
        %v1365 = vld [vmem:[%s1042 + $0x159] sm:$0xff]
        %v1366 = vld [vmem:[%s1042 + $0x169] sm:$0xff]
        %v1367 = vld [vmem:[%s1042 + $0x171] sm:$0xff]
        %v1368 = vpack.c.bf16 %v1337, %v1336
        %v1369 = vpack.c.bf16 %v1339, %v1338
        %v1370 = vpack.c.bf16 %v1341, %v1340
        %v1371 = vpack.c.bf16 %v1343, %v1342
        %v1372 = vpack.c.bf16 %v1345, %v1344
        %v1373 = vpack.c.bf16 %v1347, %v1346
        %v1374 = vpack.c.bf16 %v1349, %v1348
        %v1375 = vpack.c.bf16 %v1351, %v1350
        %v1376 = vpack.c.bf16 %v1353, %v1352
        %v1377 = vpack.c.bf16 %v1355, %v1354
        %v1378 = vpack.c.bf16 %v1357, %v1356
        %v1379 = vpack.c.bf16 %v1359, %v1358
        %v1380 = vpack.c.bf16 %v1361, %v1360
        %v1381 = vpack.c.bf16 %v1363, %v1362
        %v1382 = vpack.c.bf16 %v1365, %v1364
        %v1383 = vpack.c.bf16 %v1367, %v1366
        %v1384 = vld [vmem:[%s1 + $0x10] sm:$0xf]
        %v1386 = vsel %vm323, %v1368, 0
        %v1389 = vsel %vm323, %v1369, 0
        %v1392 = vsel %vm323, %v1370, 0
        %v1395 = vsel %vm323, %v1371, 0
        %v1398 = vsel %vm323, %v1372, 0
        %v1401 = vsel %vm323, %v1373, 0
        %v1404 = vsel %vm323, %v1374, 0
        %v1407 = vsel %vm323, %v1375, 0
        %v1410 = vsel %vm323, %v1376, 0
        %v1413 = vsel %vm323, %v1377, 0
        %v1416 = vsel %vm323, %v1378, 0
        %v1419 = vsel %vm323, %v1379, 0
        %v1422 = vsel %vm323, %v1380, 0
        %v1425 = vsel %vm323, %v1381, 0
        %v1428 = vsel %vm323, %v1382, 0
        %v1431 = vsel %vm323, %v1383, 0
        %v1434 = vsel %vm372, %v1384, 0
        %1436 = vmatprep.subr.bf16.mxu0 0
        %1437 = vmatpush1.bf16.msra.mxu0 %v1434
        %1438 = vmatprep.subr.bf16.mxu0 0
        %1439 = vmatpush1.bf16.msra.mxu0 0
        %1440 = vmatprep.subr.bf16.mxu0 0
        %1441 = vmatpush1.bf16.msra.mxu0 0
        %1442 = vmatprep.subr.bf16.mxu0 0
        %1443 = vmatpush1.bf16.msra.mxu0 0
        %1444 = vmatprep.subr.bf16.mxu0 0
        %1445 = vmatpush1.bf16.msra.mxu0 0
        %1446 = vmatprep.subr.bf16.mxu0 0
        %1447 = vmatpush1.bf16.msra.mxu0 0
        %1448 = vmatprep.subr.bf16.mxu0 0
        %1449 = vmatpush1.bf16.msra.mxu0 0
        %1450 = vmatprep.subr.bf16.mxu0 0
        %1451 = vmatpush1.bf16.msra.mxu0 0
        %1452 = vmatprep.subr.bf16.mxu0 0
        %1453 = vmatpush1.bf16.msra.mxu0 0
        %1454 = vmatprep.subr.bf16.mxu0 0
        %1455 = vmatpush1.bf16.msra.mxu0 0
        %1456 = vmatprep.subr.bf16.mxu0 0
        %1457 = vmatpush1.bf16.msra.mxu0 0
        %1458 = vmatprep.subr.bf16.mxu0 0
        %1459 = vmatpush1.bf16.msra.mxu0 0
        %1460 = vmatprep.subr.bf16.mxu0 0
        %1461 = vmatpush1.bf16.msra.mxu0 0
        %1462 = vmatprep.subr.bf16.mxu0 0
        %1463 = vmatpush1.bf16.msra.mxu0 0
        %1464 = vmatprep.subr.bf16.mxu0 0
        %1465 = vmatpush1.bf16.msra.mxu0 0
        %1466 = vmatprep.subr.bf16.mxu0 0
        %1467 = vmatpush1.bf16.msra.mxu0 0
        %1468 = vmatprep.mubr.bf16.mxu0 0
        %1469 = vmatmul.mubr.bf16.gmra.mrb[0].mxu0 %v1386
        %v1470 = vpop.f32.mrb[0].mxu0
        %v1471 = vadd.f32 0.0, %v1470
        %v1472 = vpop.f32.mrb[0].mxu0
        %v1473 = vpop.f32.mrb[0].mxu0
        %v1474 = vadd.f32 0.0, %v1473
        %v1475 = vpop.f32.mrb[0].mxu0
        %1476 = vmatprep.mubr.bf16.mxu0 0
        %1477 = vmatmul.mubr.bf16.gmra.mrb[0].mxu0 %v1389
        %v1478 = vpop.f32.mrb[0].mxu0
        %v1479 = vadd.f32 0.0, %v1478
        %v1480 = vpop.f32.mrb[0].mxu0
        %v1481 = vpop.f32.mrb[0].mxu0
        %v1482 = vadd.f32 0.0, %v1481
        %v1483 = vpop.f32.mrb[0].mxu0
        %1484 = vmatprep.mubr.bf16.mxu0 0
        %1485 = vmatmul.mubr.bf16.gmra.mrb[0].mxu0 %v1392
        %v1486 = vpop.f32.mrb[0].mxu0
        %v1487 = vadd.f32 0.0, %v1486
        %v1488 = vpop.f32.mrb[0].mxu0
        %v1489 = vpop.f32.mrb[0].mxu0
        %v1490 = vadd.f32 0.0, %v1489
        %v1491 = vpop.f32.mrb[0].mxu0
        %1492 = vmatprep.mubr.bf16.mxu0 0
        %1493 = vmatmul.mubr.bf16.gmra.mrb[0].mxu0 %v1395
        %v1494 = vpop.f32.mrb[0].mxu0
        %v1495 = vadd.f32 0.0, %v1494
        %v1496 = vpop.f32.mrb[0].mxu0
        %v1497 = vpop.f32.mrb[0].mxu0
        %v1498 = vadd.f32 0.0, %v1497
        %v1499 = vpop.f32.mrb[0].mxu0
        %1500 = vmatprep.mubr.bf16.mxu0 0
        %1501 = vmatmul.mubr.bf16.gmra.mrb[0].mxu0 %v1398
        %v1502 = vpop.f32.mrb[0].mxu0
        %v1503 = vadd.f32 0.0, %v1502
        %v1504 = vpop.f32.mrb[0].mxu0
        %v1505 = vpop.f32.mrb[0].mxu0
        %v1506 = vadd.f32 0.0, %v1505
        %v1507 = vpop.f32.mrb[0].mxu0
        %1508 = vmatprep.mubr.bf16.mxu0 0
        %1509 = vmatmul.mubr.bf16.gmra.mrb[0].mxu0 %v1401
        %v1510 = vpop.f32.mrb[0].mxu0
        %v1511 = vadd.f32 0.0, %v1510
        %v1512 = vpop.f32.mrb[0].mxu0
        %v1513 = vpop.f32.mrb[0].mxu0
        %v1514 = vadd.f32 0.0, %v1513
        %v1515 = vpop.f32.mrb[0].mxu0
        %1516 = vmatprep.mubr.bf16.mxu0 0
        %1517 = vmatmul.mubr.bf16.gmra.mrb[0].mxu0 %v1404
        %v1518 = vpop.f32.mrb[0].mxu0
        %v1519 = vadd.f32 0.0, %v1518
        %v1520 = vpop.f32.mrb[0].mxu0
        %v1521 = vpop.f32.mrb[0].mxu0
        %v1522 = vadd.f32 0.0, %v1521
        %v1523 = vpop.f32.mrb[0].mxu0
        %1524 = vmatprep.mubr.bf16.mxu0 0
        %1525 = vmatmul.mubr.bf16.gmra.mrb[0].mxu0 %v1407
        %v1526 = vpop.f32.mrb[0].mxu0
        %v1527 = vadd.f32 0.0, %v1526
        %v1528 = vpop.f32.mrb[0].mxu0
        %v1529 = vpop.f32.mrb[0].mxu0
        %v1530 = vadd.f32 0.0, %v1529
        %v1531 = vpop.f32.mrb[0].mxu0
        %1532 = vmatprep.mubr.bf16.mxu0 0
        %1533 = vmatmul.mubr.bf16.gmra.mrb[0].mxu0 %v1410
        %v1534 = vpop.f32.mrb[0].mxu0
        %v1535 = vadd.f32 0.0, %v1534
        %v1536 = vpop.f32.mrb[0].mxu0
        %v1537 = vpop.f32.mrb[0].mxu0
        %v1538 = vadd.f32 0.0, %v1537
        %v1539 = vpop.f32.mrb[0].mxu0
        %1540 = vmatprep.mubr.bf16.mxu0 0
        %1541 = vmatmul.mubr.bf16.gmra.mrb[0].mxu0 %v1413
        %v1542 = vpop.f32.mrb[0].mxu0
        %v1543 = vadd.f32 0.0, %v1542
        %v1544 = vpop.f32.mrb[0].mxu0
        %v1545 = vpop.f32.mrb[0].mxu0
        %v1546 = vadd.f32 0.0, %v1545
        %v1547 = vpop.f32.mrb[0].mxu0
        %1548 = vmatprep.mubr.bf16.mxu0 0
        %1549 = vmatmul.mubr.bf16.gmra.mrb[0].mxu0 %v1416
        %v1550 = vpop.f32.mrb[0].mxu0
        %v1551 = vadd.f32 0.0, %v1550
        %v1552 = vpop.f32.mrb[0].mxu0
        %v1553 = vpop.f32.mrb[0].mxu0
        %v1554 = vadd.f32 0.0, %v1553
        %v1555 = vpop.f32.mrb[0].mxu0
        %1556 = vmatprep.mubr.bf16.mxu0 0
        %1557 = vmatmul.mubr.bf16.gmra.mrb[0].mxu0 %v1419
        %v1558 = vpop.f32.mrb[0].mxu0
        %v1559 = vadd.f32 0.0, %v1558
        %v1560 = vpop.f32.mrb[0].mxu0
        %v1561 = vpop.f32.mrb[0].mxu0
        %v1562 = vadd.f32 0.0, %v1561
        %v1563 = vpop.f32.mrb[0].mxu0
        %1564 = vmatprep.mubr.bf16.mxu0 0
        %1565 = vmatmul.mubr.bf16.gmra.mrb[0].mxu0 %v1422
        %v1566 = vpop.f32.mrb[0].mxu0
        %v1567 = vadd.f32 0.0, %v1566
        %v1568 = vpop.f32.mrb[0].mxu0
        %v1569 = vpop.f32.mrb[0].mxu0
        %v1570 = vadd.f32 0.0, %v1569
        %v1571 = vpop.f32.mrb[0].mxu0
        %1572 = vmatprep.mubr.bf16.mxu0 0
        %1573 = vmatmul.mubr.bf16.gmra.mrb[0].mxu0 %v1425
        %v1574 = vpop.f32.mrb[0].mxu0
        %v1575 = vadd.f32 0.0, %v1574
        %v1576 = vpop.f32.mrb[0].mxu0
        %v1577 = vpop.f32.mrb[0].mxu0
        %v1578 = vadd.f32 0.0, %v1577
        %v1579 = vpop.f32.mrb[0].mxu0
        %1580 = vmatprep.mubr.bf16.mxu0 0
        %1581 = vmatmul.mubr.bf16.gmra.mrb[0].mxu0 %v1428
        %v1582 = vpop.f32.mrb[0].mxu0
        %v1583 = vadd.f32 0.0, %v1582
        %v1584 = vpop.f32.mrb[0].mxu0
        %v1585 = vpop.f32.mrb[0].mxu0
        %v1586 = vadd.f32 0.0, %v1585
        %v1587 = vpop.f32.mrb[0].mxu0
        %1588 = vmatprep.mubr.bf16.mxu0 0
        %1589 = vmatmul.mubr.bf16.gmra.mrb[0].mxu0 %v1431
        %v1590 = vpop.f32.mrb[0].mxu0
        %v1591 = vadd.f32 0.0, %v1590
        %v1592 = vpop.f32.mrb[0].mxu0
        %v1593 = vpop.f32.mrb[0].mxu0
        %v1594 = vadd.f32 0.0, %v1593
        %v1595 = vpop.f32.mrb[0].mxu0
        %1596 = vdwg.mxu0
        %v1597 = vadd.f32 %v1304, %v1471
        %v1598 = vadd.f32 %v1305, %v1474
        %v1599 = vadd.f32 %v1306, %v1479
        %v1600 = vadd.f32 %v1307, %v1482
        %v1601 = vadd.f32 %v1308, %v1487
        %v1602 = vadd.f32 %v1309, %v1490
        %v1603 = vadd.f32 %v1310, %v1495
        %v1604 = vadd.f32 %v1311, %v1498
        %v1605 = vadd.f32 %v1312, %v1503
        %v1606 = vadd.f32 %v1313, %v1506
        %v1607 = vadd.f32 %v1314, %v1511
        %v1608 = vadd.f32 %v1315, %v1514
        %v1609 = vadd.f32 %v1316, %v1519
        %v1610 = vadd.f32 %v1317, %v1522
        %v1611 = vadd.f32 %v1318, %v1527
        %v1612 = vadd.f32 %v1319, %v1530
        %v1613 = vadd.f32 %v1320, %v1535
        %v1614 = vadd.f32 %v1321, %v1538
        %v1615 = vadd.f32 %v1322, %v1543
        %v1616 = vadd.f32 %v1323, %v1546
        %v1617 = vadd.f32 %v1324, %v1551
        %v1618 = vadd.f32 %v1325, %v1554
        %v1619 = vadd.f32 %v1326, %v1559
        %v1620 = vadd.f32 %v1327, %v1562
        %v1621 = vadd.f32 %v1328, %v1567
        %v1622 = vadd.f32 %v1329, %v1570
        %v1623 = vadd.f32 %v1330, %v1575
        %v1624 = vadd.f32 %v1331, %v1578
        %v1625 = vadd.f32 %v1332, %v1583
        %v1626 = vadd.f32 %v1333, %v1586
        %v1627 = vadd.f32 %v1334, %v1591
        %v1628 = vadd.f32 %v1335, %v1594
        %v1629 = vld [vmem:[%s1042 + $0x2] sm:$0xff]
        %v1630 = vld [vmem:[%s1042 + $0xa] sm:$0xff]
        %v1631 = vld [vmem:[%s1042 + $0x1a] sm:$0xff]
        %v1632 = vld [vmem:[%s1042 + $0x22] sm:$0xff]
        %v1633 = vld [vmem:[%s1042 + $0x32] sm:$0xff]
        %v1634 = vld [vmem:[%s1042 + $0x3a] sm:$0xff]
        %v1635 = vld [vmem:[%s1042 + $0x4a] sm:$0xff]
        %v1636 = vld [vmem:[%s1042 + $0x52] sm:$0xff]
        %v1637 = vld [vmem:[%s1042 + $0x62] sm:$0xff]
        %v1638 = vld [vmem:[%s1042 + $0x6a] sm:$0xff]
        %v1639 = vld [vmem:[%s1042 + $0x7a] sm:$0xff]
        %v1640 = vld [vmem:[%s1042 + $0x82] sm:$0xff]
        %v1641 = vld [vmem:[%s1042 + $0x92] sm:$0xff]
        %v1642 = vld [vmem:[%s1042 + $0x9a] sm:$0xff]
        %v1643 = vld [vmem:[%s1042 + $0xaa] sm:$0xff]
        %v1644 = vld [vmem:[%s1042 + $0xb2] sm:$0xff]
        %v1645 = vld [vmem:[%s1042 + $0xc2] sm:$0xff]
        %v1646 = vld [vmem:[%s1042 + $0xca] sm:$0xff]
        %v1647 = vld [vmem:[%s1042 + $0xda] sm:$0xff]
        %v1648 = vld [vmem:[%s1042 + $0xe2] sm:$0xff]
        %v1649 = vld [vmem:[%s1042 + $0xf2] sm:$0xff]
        %v1650 = vld [vmem:[%s1042 + $0xfa] sm:$0xff]
        %v1651 = vld [vmem:[%s1042 + $0x10a] sm:$0xff]
        %v1652 = vld [vmem:[%s1042 + $0x112] sm:$0xff]
        %v1653 = vld [vmem:[%s1042 + $0x122] sm:$0xff]
        %v1654 = vld [vmem:[%s1042 + $0x12a] sm:$0xff]
        %v1655 = vld [vmem:[%s1042 + $0x13a] sm:$0xff]
        %v1656 = vld [vmem:[%s1042 + $0x142] sm:$0xff]
        %v1657 = vld [vmem:[%s1042 + $0x152] sm:$0xff]
        %v1658 = vld [vmem:[%s1042 + $0x15a] sm:$0xff]
        %v1659 = vld [vmem:[%s1042 + $0x16a] sm:$0xff]
        %v1660 = vld [vmem:[%s1042 + $0x172] sm:$0xff]
        %v1661 = vpack.c.bf16 %v1630, %v1629
        %v1662 = vpack.c.bf16 %v1632, %v1631
        %v1663 = vpack.c.bf16 %v1634, %v1633
        %v1664 = vpack.c.bf16 %v1636, %v1635
        %v1665 = vpack.c.bf16 %v1638, %v1637
        %v1666 = vpack.c.bf16 %v1640, %v1639
        %v1667 = vpack.c.bf16 %v1642, %v1641
        %v1668 = vpack.c.bf16 %v1644, %v1643
        %v1669 = vpack.c.bf16 %v1646, %v1645
        %v1670 = vpack.c.bf16 %v1648, %v1647
        %v1671 = vpack.c.bf16 %v1650, %v1649
        %v1672 = vpack.c.bf16 %v1652, %v1651
        %v1673 = vpack.c.bf16 %v1654, %v1653
        %v1674 = vpack.c.bf16 %v1656, %v1655
        %v1675 = vpack.c.bf16 %v1658, %v1657
        %v1676 = vpack.c.bf16 %v1660, %v1659
        %v1677 = vld [vmem:[%s1 + $0x14] sm:$0xf]
        %v1679 = vsel %vm323, %v1661, 0
        %v1682 = vsel %vm323, %v1662, 0
        %v1685 = vsel %vm323, %v1663, 0
        %v1688 = vsel %vm323, %v1664, 0
        %v1691 = vsel %vm323, %v1665, 0
        %v1694 = vsel %vm323, %v1666, 0
        %v1697 = vsel %vm323, %v1667, 0
        %v1700 = vsel %vm323, %v1668, 0
        %v1703 = vsel %vm323, %v1669, 0
        %v1706 = vsel %vm323, %v1670, 0
        %v1709 = vsel %vm323, %v1671, 0
        %v1712 = vsel %vm323, %v1672, 0
        %v1715 = vsel %vm323, %v1673, 0
        %v1718 = vsel %vm323, %v1674, 0
        %v1721 = vsel %vm323, %v1675, 0
        %v1724 = vsel %vm323, %v1676, 0
        %v1727 = vsel %vm372, %v1677, 0
        %1729 = vmatprep.subr.bf16.mxu0 0
        %1730 = vmatpush1.bf16.msra.mxu0 %v1727
        %1731 = vmatprep.subr.bf16.mxu0 0
        %1732 = vmatpush1.bf16.msra.mxu0 0
        %1733 = vmatprep.subr.bf16.mxu0 0
        %1734 = vmatpush1.bf16.msra.mxu0 0
        %1735 = vmatprep.subr.bf16.mxu0 0
        %1736 = vmatpush1.bf16.msra.mxu0 0
        %1737 = vmatprep.subr.bf16.mxu0 0
        %1738 = vmatpush1.bf16.msra.mxu0 0
        %1739 = vmatprep.subr.bf16.mxu0 0
        %1740 = vmatpush1.bf16.msra.mxu0 0
        %1741 = vmatprep.subr.bf16.mxu0 0
        %1742 = vmatpush1.bf16.msra.mxu0 0
        %1743 = vmatprep.subr.bf16.mxu0 0
        %1744 = vmatpush1.bf16.msra.mxu0 0
        %1745 = vmatprep.subr.bf16.mxu0 0
        %1746 = vmatpush1.bf16.msra.mxu0 0
        %1747 = vmatprep.subr.bf16.mxu0 0
        %1748 = vmatpush1.bf16.msra.mxu0 0
        %1749 = vmatprep.subr.bf16.mxu0 0
        %1750 = vmatpush1.bf16.msra.mxu0 0
        %1751 = vmatprep.subr.bf16.mxu0 0
        %1752 = vmatpush1.bf16.msra.mxu0 0
        %1753 = vmatprep.subr.bf16.mxu0 0
        %1754 = vmatpush1.bf16.msra.mxu0 0
        %1755 = vmatprep.subr.bf16.mxu0 0
        %1756 = vmatpush1.bf16.msra.mxu0 0
        %1757 = vmatprep.subr.bf16.mxu0 0
        %1758 = vmatpush1.bf16.msra.mxu0 0
        %1759 = vmatprep.subr.bf16.mxu0 0
        %1760 = vmatpush1.bf16.msra.mxu0 0
        %1761 = vmatprep.mubr.bf16.mxu0 0
        %1762 = vmatmul.mubr.bf16.gmra.mrb[0].mxu0 %v1679
        %v1763 = vpop.f32.mrb[0].mxu0
        %v1764 = vadd.f32 0.0, %v1763
        %v1765 = vpop.f32.mrb[0].mxu0
        %v1766 = vpop.f32.mrb[0].mxu0
        %v1767 = vadd.f32 0.0, %v1766
        %v1768 = vpop.f32.mrb[0].mxu0
        %1769 = vmatprep.mubr.bf16.mxu0 0
        %1770 = vmatmul.mubr.bf16.gmra.mrb[0].mxu0 %v1682
        %v1771 = vpop.f32.mrb[0].mxu0
        %v1772 = vadd.f32 0.0, %v1771
        %v1773 = vpop.f32.mrb[0].mxu0
        %v1774 = vpop.f32.mrb[0].mxu0
        %v1775 = vadd.f32 0.0, %v1774
        %v1776 = vpop.f32.mrb[0].mxu0
        %1777 = vmatprep.mubr.bf16.mxu0 0
        %1778 = vmatmul.mubr.bf16.gmra.mrb[0].mxu0 %v1685
        %v1779 = vpop.f32.mrb[0].mxu0
        %v1780 = vadd.f32 0.0, %v1779
        %v1781 = vpop.f32.mrb[0].mxu0
        %v1782 = vpop.f32.mrb[0].mxu0
        %v1783 = vadd.f32 0.0, %v1782
        %v1784 = vpop.f32.mrb[0].mxu0
        %1785 = vmatprep.mubr.bf16.mxu0 0
        %1786 = vmatmul.mubr.bf16.gmra.mrb[0].mxu0 %v1688
        %v1787 = vpop.f32.mrb[0].mxu0
        %v1788 = vadd.f32 0.0, %v1787
        %v1789 = vpop.f32.mrb[0].mxu0
        %v1790 = vpop.f32.mrb[0].mxu0
        %v1791 = vadd.f32 0.0, %v1790
        %v1792 = vpop.f32.mrb[0].mxu0
        %1793 = vmatprep.mubr.bf16.mxu0 0
        %1794 = vmatmul.mubr.bf16.gmra.mrb[0].mxu0 %v1691
        %v1795 = vpop.f32.mrb[0].mxu0
        %v1796 = vadd.f32 0.0, %v1795
        %v1797 = vpop.f32.mrb[0].mxu0
        %v1798 = vpop.f32.mrb[0].mxu0
        %v1799 = vadd.f32 0.0, %v1798
        %v1800 = vpop.f32.mrb[0].mxu0
        %1801 = vmatprep.mubr.bf16.mxu0 0
        %1802 = vmatmul.mubr.bf16.gmra.mrb[0].mxu0 %v1694
        %v1803 = vpop.f32.mrb[0].mxu0
        %v1804 = vadd.f32 0.0, %v1803
        %v1805 = vpop.f32.mrb[0].mxu0
        %v1806 = vpop.f32.mrb[0].mxu0
        %v1807 = vadd.f32 0.0, %v1806
        %v1808 = vpop.f32.mrb[0].mxu0
        %1809 = vmatprep.mubr.bf16.mxu0 0
        %1810 = vmatmul.mubr.bf16.gmra.mrb[0].mxu0 %v1697
        %v1811 = vpop.f32.mrb[0].mxu0
        %v1812 = vadd.f32 0.0, %v1811
        %v1813 = vpop.f32.mrb[0].mxu0
        %v1814 = vpop.f32.mrb[0].mxu0
        %v1815 = vadd.f32 0.0, %v1814
        %v1816 = vpop.f32.mrb[0].mxu0
        %1817 = vmatprep.mubr.bf16.mxu0 0
        %1818 = vmatmul.mubr.bf16.gmra.mrb[0].mxu0 %v1700
        %v1819 = vpop.f32.mrb[0].mxu0
        %v1820 = vadd.f32 0.0, %v1819
        %v1821 = vpop.f32.mrb[0].mxu0
        %v1822 = vpop.f32.mrb[0].mxu0
        %v1823 = vadd.f32 0.0, %v1822
        %v1824 = vpop.f32.mrb[0].mxu0
        %1825 = vmatprep.mubr.bf16.mxu0 0
        %1826 = vmatmul.mubr.bf16.gmra.mrb[0].mxu0 %v1703
        %v1827 = vpop.f32.mrb[0].mxu0
        %v1828 = vadd.f32 0.0, %v1827
        %v1829 = vpop.f32.mrb[0].mxu0
        %v1830 = vpop.f32.mrb[0].mxu0
        %v1831 = vadd.f32 0.0, %v1830
        %v1832 = vpop.f32.mrb[0].mxu0
        %1833 = vmatprep.mubr.bf16.mxu0 0
        %1834 = vmatmul.mubr.bf16.gmra.mrb[0].mxu0 %v1706
        %v1835 = vpop.f32.mrb[0].mxu0
        %v1836 = vadd.f32 0.0, %v1835
        %v1837 = vpop.f32.mrb[0].mxu0
        %v1838 = vpop.f32.mrb[0].mxu0
        %v1839 = vadd.f32 0.0, %v1838
        %v1840 = vpop.f32.mrb[0].mxu0
        %1841 = vmatprep.mubr.bf16.mxu0 0
        %1842 = vmatmul.mubr.bf16.gmra.mrb[0].mxu0 %v1709
        %v1843 = vpop.f32.mrb[0].mxu0
        %v1844 = vadd.f32 0.0, %v1843
        %v1845 = vpop.f32.mrb[0].mxu0
        %v1846 = vpop.f32.mrb[0].mxu0
        %v1847 = vadd.f32 0.0, %v1846
        %v1848 = vpop.f32.mrb[0].mxu0
        %1849 = vmatprep.mubr.bf16.mxu0 0
        %1850 = vmatmul.mubr.bf16.gmra.mrb[0].mxu0 %v1712
        %v1851 = vpop.f32.mrb[0].mxu0
        %v1852 = vadd.f32 0.0, %v1851
        %v1853 = vpop.f32.mrb[0].mxu0
        %v1854 = vpop.f32.mrb[0].mxu0
        %v1855 = vadd.f32 0.0, %v1854
        %v1856 = vpop.f32.mrb[0].mxu0
        %1857 = vmatprep.mubr.bf16.mxu0 0
        %1858 = vmatmul.mubr.bf16.gmra.mrb[0].mxu0 %v1715
        %v1859 = vpop.f32.mrb[0].mxu0
        %v1860 = vadd.f32 0.0, %v1859
        %v1861 = vpop.f32.mrb[0].mxu0
        %v1862 = vpop.f32.mrb[0].mxu0
        %v1863 = vadd.f32 0.0, %v1862
        %v1864 = vpop.f32.mrb[0].mxu0
        %1865 = vmatprep.mubr.bf16.mxu0 0
        %1866 = vmatmul.mubr.bf16.gmra.mrb[0].mxu0 %v1718
        %v1867 = vpop.f32.mrb[0].mxu0
        %v1868 = vadd.f32 0.0, %v1867
        %v1869 = vpop.f32.mrb[0].mxu0
        %v1870 = vpop.f32.mrb[0].mxu0
        %v1871 = vadd.f32 0.0, %v1870
        %v1872 = vpop.f32.mrb[0].mxu0
        %1873 = vmatprep.mubr.bf16.mxu0 0
        %1874 = vmatmul.mubr.bf16.gmra.mrb[0].mxu0 %v1721
        %v1875 = vpop.f32.mrb[0].mxu0
        %v1876 = vadd.f32 0.0, %v1875
        %v1877 = vpop.f32.mrb[0].mxu0
        %v1878 = vpop.f32.mrb[0].mxu0
        %v1879 = vadd.f32 0.0, %v1878
        %v1880 = vpop.f32.mrb[0].mxu0
        %1881 = vmatprep.mubr.bf16.mxu0 0
        %1882 = vmatmul.mubr.bf16.gmra.mrb[0].mxu0 %v1724
        %v1883 = vpop.f32.mrb[0].mxu0
        %v1884 = vadd.f32 0.0, %v1883
        %v1885 = vpop.f32.mrb[0].mxu0
        %v1886 = vpop.f32.mrb[0].mxu0
        %v1887 = vadd.f32 0.0, %v1886
        %v1888 = vpop.f32.mrb[0].mxu0
        %1889 = vdwg.mxu0
        %v1890 = vadd.f32 %v1597, %v1764
        %v1891 = vadd.f32 %v1598, %v1767
        %v1892 = vadd.f32 %v1599, %v1772
        %v1893 = vadd.f32 %v1600, %v1775
        %v1894 = vadd.f32 %v1601, %v1780
        %v1895 = vadd.f32 %v1602, %v1783
        %v1896 = vadd.f32 %v1603, %v1788
        %v1897 = vadd.f32 %v1604, %v1791
        %v1898 = vadd.f32 %v1605, %v1796
        %v1899 = vadd.f32 %v1606, %v1799
        %v1900 = vadd.f32 %v1607, %v1804
        %v1901 = vadd.f32 %v1608, %v1807
        %v1902 = vadd.f32 %v1609, %v1812
        %v1903 = vadd.f32 %v1610, %v1815
        %v1904 = vadd.f32 %v1611, %v1820
        %v1905 = vadd.f32 %v1612, %v1823
        %v1906 = vadd.f32 %v1613, %v1828
        %v1907 = vadd.f32 %v1614, %v1831
        %v1908 = vadd.f32 %v1615, %v1836
        %v1909 = vadd.f32 %v1616, %v1839
        %v1910 = vadd.f32 %v1617, %v1844
        %v1911 = vadd.f32 %v1618, %v1847
        %v1912 = vadd.f32 %v1619, %v1852
        %v1913 = vadd.f32 %v1620, %v1855
        %v1914 = vadd.f32 %v1621, %v1860
        %v1915 = vadd.f32 %v1622, %v1863
        %v1916 = vadd.f32 %v1623, %v1868
        %v1917 = vadd.f32 %v1624, %v1871
        %v1918 = vadd.f32 %v1625, %v1876
        %v1919 = vadd.f32 %v1626, %v1879
        %v1920 = vadd.f32 %v1627, %v1884
        %v1921 = vadd.f32 %v1628, %v1887
        %s1922 = scalar_lea.vmem %s222, 48
        %v1923 = vld [vmem:[%s1922] sm:$0xff]
        %v1924 = vld [vmem:[%s1922 + $0x8] sm:$0xff]
        %v1925 = vld [vmem:[%s1922 + $0x18] sm:$0xff]
        %v1926 = vld [vmem:[%s1922 + $0x20] sm:$0xff]
        %v1927 = vld [vmem:[%s1922 + $0x30] sm:$0xff]
        %v1928 = vld [vmem:[%s1922 + $0x38] sm:$0xff]
        %v1929 = vld [vmem:[%s1922 + $0x48] sm:$0xff]
        %v1930 = vld [vmem:[%s1922 + $0x50] sm:$0xff]
        %v1931 = vld [vmem:[%s1922 + $0x60] sm:$0xff]
        %v1932 = vld [vmem:[%s1922 + $0x68] sm:$0xff]
        %v1933 = vld [vmem:[%s1922 + $0x78] sm:$0xff]
        %v1934 = vld [vmem:[%s1922 + $0x80] sm:$0xff]
        %v1935 = vld [vmem:[%s1922 + $0x90] sm:$0xff]
        %v1936 = vld [vmem:[%s1922 + $0x98] sm:$0xff]
        %v1937 = vld [vmem:[%s1922 + $0xa8] sm:$0xff]
        %v1938 = vld [vmem:[%s1922 + $0xb0] sm:$0xff]
        %v1939 = vld [vmem:[%s1922 + $0xc0] sm:$0xff]
        %v1940 = vld [vmem:[%s1922 + $0xc8] sm:$0xff]
        %v1941 = vld [vmem:[%s1922 + $0xd8] sm:$0xff]
        %v1942 = vld [vmem:[%s1922 + $0xe0] sm:$0xff]
        %v1943 = vld [vmem:[%s1922 + $0xf0] sm:$0xff]
        %v1944 = vld [vmem:[%s1922 + $0xf8] sm:$0xff]
        %v1945 = vld [vmem:[%s1922 + $0x108] sm:$0xff]
        %v1946 = vld [vmem:[%s1922 + $0x110] sm:$0xff]
        %v1947 = vld [vmem:[%s1922 + $0x120] sm:$0xff]
        %v1948 = vld [vmem:[%s1922 + $0x128] sm:$0xff]
        %v1949 = vld [vmem:[%s1922 + $0x138] sm:$0xff]
        %v1950 = vld [vmem:[%s1922 + $0x140] sm:$0xff]
        %v1951 = vld [vmem:[%s1922 + $0x150] sm:$0xff]
        %v1952 = vld [vmem:[%s1922 + $0x158] sm:$0xff]
        %v1953 = vld [vmem:[%s1922 + $0x168] sm:$0xff]
        %v1954 = vld [vmem:[%s1922 + $0x170] sm:$0xff]
        %v1955 = vpack.c.bf16 %v1924, %v1923
        %v1956 = vpack.c.bf16 %v1926, %v1925
        %v1957 = vpack.c.bf16 %v1928, %v1927
        %v1958 = vpack.c.bf16 %v1930, %v1929
        %v1959 = vpack.c.bf16 %v1932, %v1931
        %v1960 = vpack.c.bf16 %v1934, %v1933
        %v1961 = vpack.c.bf16 %v1936, %v1935
        %v1962 = vpack.c.bf16 %v1938, %v1937
        %v1963 = vpack.c.bf16 %v1940, %v1939
        %v1964 = vpack.c.bf16 %v1942, %v1941
        %v1965 = vpack.c.bf16 %v1944, %v1943
        %v1966 = vpack.c.bf16 %v1946, %v1945
        %v1967 = vpack.c.bf16 %v1948, %v1947
        %v1968 = vpack.c.bf16 %v1950, %v1949
        %v1969 = vpack.c.bf16 %v1952, %v1951
        %v1970 = vpack.c.bf16 %v1954, %v1953
        %v1971 = vld [vmem:[%s1 + $0x18] sm:$0xf]
        %v1973 = vsel %vm323, %v1955, 0
        %v1976 = vsel %vm323, %v1956, 0
        %v1979 = vsel %vm323, %v1957, 0
        %v1982 = vsel %vm323, %v1958, 0
        %v1985 = vsel %vm323, %v1959, 0
        %v1988 = vsel %vm323, %v1960, 0
        %v1991 = vsel %vm323, %v1961, 0
        %v1994 = vsel %vm323, %v1962, 0
        %v1997 = vsel %vm323, %v1963, 0
        %v2000 = vsel %vm323, %v1964, 0
        %v2003 = vsel %vm323, %v1965, 0
        %v2006 = vsel %vm323, %v1966, 0
        %v2009 = vsel %vm323, %v1967, 0
        %v2012 = vsel %vm323, %v1968, 0
        %v2015 = vsel %vm323, %v1969, 0
        %v2018 = vsel %vm323, %v1970, 0
        %v2021 = vsel %vm372, %v1971, 0
        %2023 = vmatprep.subr.bf16.mxu0 0
        %2024 = vmatpush1.bf16.msra.mxu0 %v2021
        %2025 = vmatprep.subr.bf16.mxu0 0
        %2026 = vmatpush1.bf16.msra.mxu0 0
        %2027 = vmatprep.subr.bf16.mxu0 0
        %2028 = vmatpush1.bf16.msra.mxu0 0
        %2029 = vmatprep.subr.bf16.mxu0 0
        %2030 = vmatpush1.bf16.msra.mxu0 0
        %2031 = vmatprep.subr.bf16.mxu0 0
        %2032 = vmatpush1.bf16.msra.mxu0 0
        %2033 = vmatprep.subr.bf16.mxu0 0
        %2034 = vmatpush1.bf16.msra.mxu0 0
        %2035 = vmatprep.subr.bf16.mxu0 0
        %2036 = vmatpush1.bf16.msra.mxu0 0
        %2037 = vmatprep.subr.bf16.mxu0 0
        %2038 = vmatpush1.bf16.msra.mxu0 0
        %2039 = vmatprep.subr.bf16.mxu0 0
        %2040 = vmatpush1.bf16.msra.mxu0 0
        %2041 = vmatprep.subr.bf16.mxu0 0
        %2042 = vmatpush1.bf16.msra.mxu0 0
        %2043 = vmatprep.subr.bf16.mxu0 0
        %2044 = vmatpush1.bf16.msra.mxu0 0
        %2045 = vmatprep.subr.bf16.mxu0 0
        %2046 = vmatpush1.bf16.msra.mxu0 0
        %2047 = vmatprep.subr.bf16.mxu0 0
        %2048 = vmatpush1.bf16.msra.mxu0 0
        %2049 = vmatprep.subr.bf16.mxu0 0
        %2050 = vmatpush1.bf16.msra.mxu0 0
        %2051 = vmatprep.subr.bf16.mxu0 0
        %2052 = vmatpush1.bf16.msra.mxu0 0
        %2053 = vmatprep.subr.bf16.mxu0 0
        %2054 = vmatpush1.bf16.msra.mxu0 0
        %2055 = vmatprep.mubr.bf16.mxu0 0
        %2056 = vmatmul.mubr.bf16.gmra.mrb[0].mxu0 %v1973
        %v2057 = vpop.f32.mrb[0].mxu0
        %v2058 = vadd.f32 0.0, %v2057
        %v2059 = vpop.f32.mrb[0].mxu0
        %v2060 = vpop.f32.mrb[0].mxu0
        %v2061 = vadd.f32 0.0, %v2060
        %v2062 = vpop.f32.mrb[0].mxu0
        %2063 = vmatprep.mubr.bf16.mxu0 0
        %2064 = vmatmul.mubr.bf16.gmra.mrb[0].mxu0 %v1976
        %v2065 = vpop.f32.mrb[0].mxu0
        %v2066 = vadd.f32 0.0, %v2065
        %v2067 = vpop.f32.mrb[0].mxu0
        %v2068 = vpop.f32.mrb[0].mxu0
        %v2069 = vadd.f32 0.0, %v2068
        %v2070 = vpop.f32.mrb[0].mxu0
        %2071 = vmatprep.mubr.bf16.mxu0 0
        %2072 = vmatmul.mubr.bf16.gmra.mrb[0].mxu0 %v1979
        %v2073 = vpop.f32.mrb[0].mxu0
        %v2074 = vadd.f32 0.0, %v2073
        %v2075 = vpop.f32.mrb[0].mxu0
        %v2076 = vpop.f32.mrb[0].mxu0
        %v2077 = vadd.f32 0.0, %v2076
        %v2078 = vpop.f32.mrb[0].mxu0
        %2079 = vmatprep.mubr.bf16.mxu0 0
        %2080 = vmatmul.mubr.bf16.gmra.mrb[0].mxu0 %v1982
        %v2081 = vpop.f32.mrb[0].mxu0
        %v2082 = vadd.f32 0.0, %v2081
        %v2083 = vpop.f32.mrb[0].mxu0
        %v2084 = vpop.f32.mrb[0].mxu0
        %v2085 = vadd.f32 0.0, %v2084
        %v2086 = vpop.f32.mrb[0].mxu0
        %2087 = vmatprep.mubr.bf16.mxu0 0
        %2088 = vmatmul.mubr.bf16.gmra.mrb[0].mxu0 %v1985
        %v2089 = vpop.f32.mrb[0].mxu0
        %v2090 = vadd.f32 0.0, %v2089
        %v2091 = vpop.f32.mrb[0].mxu0
        %v2092 = vpop.f32.mrb[0].mxu0
        %v2093 = vadd.f32 0.0, %v2092
        %v2094 = vpop.f32.mrb[0].mxu0
        %2095 = vmatprep.mubr.bf16.mxu0 0
        %2096 = vmatmul.mubr.bf16.gmra.mrb[0].mxu0 %v1988
        %v2097 = vpop.f32.mrb[0].mxu0
        %v2098 = vadd.f32 0.0, %v2097
        %v2099 = vpop.f32.mrb[0].mxu0
        %v2100 = vpop.f32.mrb[0].mxu0
        %v2101 = vadd.f32 0.0, %v2100
        %v2102 = vpop.f32.mrb[0].mxu0
        %2103 = vmatprep.mubr.bf16.mxu0 0
        %2104 = vmatmul.mubr.bf16.gmra.mrb[0].mxu0 %v1991
        %v2105 = vpop.f32.mrb[0].mxu0
        %v2106 = vadd.f32 0.0, %v2105
        %v2107 = vpop.f32.mrb[0].mxu0
        %v2108 = vpop.f32.mrb[0].mxu0
        %v2109 = vadd.f32 0.0, %v2108
        %v2110 = vpop.f32.mrb[0].mxu0
        %2111 = vmatprep.mubr.bf16.mxu0 0
        %2112 = vmatmul.mubr.bf16.gmra.mrb[0].mxu0 %v1994
        %v2113 = vpop.f32.mrb[0].mxu0
        %v2114 = vadd.f32 0.0, %v2113
        %v2115 = vpop.f32.mrb[0].mxu0
        %v2116 = vpop.f32.mrb[0].mxu0
        %v2117 = vadd.f32 0.0, %v2116
        %v2118 = vpop.f32.mrb[0].mxu0
        %2119 = vmatprep.mubr.bf16.mxu0 0
        %2120 = vmatmul.mubr.bf16.gmra.mrb[0].mxu0 %v1997
        %v2121 = vpop.f32.mrb[0].mxu0
        %v2122 = vadd.f32 0.0, %v2121
        %v2123 = vpop.f32.mrb[0].mxu0
        %v2124 = vpop.f32.mrb[0].mxu0
        %v2125 = vadd.f32 0.0, %v2124
        %v2126 = vpop.f32.mrb[0].mxu0
        %2127 = vmatprep.mubr.bf16.mxu0 0
        %2128 = vmatmul.mubr.bf16.gmra.mrb[0].mxu0 %v2000
        %v2129 = vpop.f32.mrb[0].mxu0
        %v2130 = vadd.f32 0.0, %v2129
        %v2131 = vpop.f32.mrb[0].mxu0
        %v2132 = vpop.f32.mrb[0].mxu0
        %v2133 = vadd.f32 0.0, %v2132
        %v2134 = vpop.f32.mrb[0].mxu0
        %2135 = vmatprep.mubr.bf16.mxu0 0
        %2136 = vmatmul.mubr.bf16.gmra.mrb[0].mxu0 %v2003
        %v2137 = vpop.f32.mrb[0].mxu0
        %v2138 = vadd.f32 0.0, %v2137
        %v2139 = vpop.f32.mrb[0].mxu0
        %v2140 = vpop.f32.mrb[0].mxu0
        %v2141 = vadd.f32 0.0, %v2140
        %v2142 = vpop.f32.mrb[0].mxu0
        %2143 = vmatprep.mubr.bf16.mxu0 0
        %2144 = vmatmul.mubr.bf16.gmra.mrb[0].mxu0 %v2006
        %v2145 = vpop.f32.mrb[0].mxu0
        %v2146 = vadd.f32 0.0, %v2145
        %v2147 = vpop.f32.mrb[0].mxu0
        %v2148 = vpop.f32.mrb[0].mxu0
        %v2149 = vadd.f32 0.0, %v2148
        %v2150 = vpop.f32.mrb[0].mxu0
        %2151 = vmatprep.mubr.bf16.mxu0 0
        %2152 = vmatmul.mubr.bf16.gmra.mrb[0].mxu0 %v2009
        %v2153 = vpop.f32.mrb[0].mxu0
        %v2154 = vadd.f32 0.0, %v2153
        %v2155 = vpop.f32.mrb[0].mxu0
        %v2156 = vpop.f32.mrb[0].mxu0
        %v2157 = vadd.f32 0.0, %v2156
        %v2158 = vpop.f32.mrb[0].mxu0
        %2159 = vmatprep.mubr.bf16.mxu0 0
        %2160 = vmatmul.mubr.bf16.gmra.mrb[0].mxu0 %v2012
        %v2161 = vpop.f32.mrb[0].mxu0
        %v2162 = vadd.f32 0.0, %v2161
        %v2163 = vpop.f32.mrb[0].mxu0
        %v2164 = vpop.f32.mrb[0].mxu0
        %v2165 = vadd.f32 0.0, %v2164
        %v2166 = vpop.f32.mrb[0].mxu0
        %2167 = vmatprep.mubr.bf16.mxu0 0
        %2168 = vmatmul.mubr.bf16.gmra.mrb[0].mxu0 %v2015
        %v2169 = vpop.f32.mrb[0].mxu0
        %v2170 = vadd.f32 0.0, %v2169
        %v2171 = vpop.f32.mrb[0].mxu0
        %v2172 = vpop.f32.mrb[0].mxu0
        %v2173 = vadd.f32 0.0, %v2172
        %v2174 = vpop.f32.mrb[0].mxu0
        %2175 = vmatprep.mubr.bf16.mxu0 0
        %2176 = vmatmul.mubr.bf16.gmra.mrb[0].mxu0 %v2018
        %v2177 = vpop.f32.mrb[0].mxu0
        %v2178 = vadd.f32 0.0, %v2177
        %v2179 = vpop.f32.mrb[0].mxu0
        %v2180 = vpop.f32.mrb[0].mxu0
        %v2181 = vadd.f32 0.0, %v2180
        %v2182 = vpop.f32.mrb[0].mxu0
        %2183 = vdwg.mxu0
        %v2184 = vadd.f32 %v1890, %v2058
        %v2185 = vadd.f32 %v1891, %v2061
        %v2186 = vadd.f32 %v1892, %v2066
        %v2187 = vadd.f32 %v1893, %v2069
        %v2188 = vadd.f32 %v1894, %v2074
        %v2189 = vadd.f32 %v1895, %v2077
        %v2190 = vadd.f32 %v1896, %v2082
        %v2191 = vadd.f32 %v1897, %v2085
        %v2192 = vadd.f32 %v1898, %v2090
        %v2193 = vadd.f32 %v1899, %v2093
        %v2194 = vadd.f32 %v1900, %v2098
        %v2195 = vadd.f32 %v1901, %v2101
        %v2196 = vadd.f32 %v1902, %v2106
        %v2197 = vadd.f32 %v1903, %v2109
        %v2198 = vadd.f32 %v1904, %v2114
        %v2199 = vadd.f32 %v1905, %v2117
        %v2200 = vadd.f32 %v1906, %v2122
        %v2201 = vadd.f32 %v1907, %v2125
        %v2202 = vadd.f32 %v1908, %v2130
        %v2203 = vadd.f32 %v1909, %v2133
        %v2204 = vadd.f32 %v1910, %v2138
        %v2205 = vadd.f32 %v1911, %v2141
        %v2206 = vadd.f32 %v1912, %v2146
        %v2207 = vadd.f32 %v1913, %v2149
        %v2208 = vadd.f32 %v1914, %v2154
        %v2209 = vadd.f32 %v1915, %v2157
        %v2210 = vadd.f32 %v1916, %v2162
        %v2211 = vadd.f32 %v1917, %v2165
        %v2212 = vadd.f32 %v1918, %v2170
        %v2213 = vadd.f32 %v1919, %v2173
        %v2214 = vadd.f32 %v1920, %v2178
        %v2215 = vadd.f32 %v1921, %v2181
        %v2216 = vld [vmem:[%s1922 + $0x1] sm:$0xff]
        %v2217 = vld [vmem:[%s1922 + $0x9] sm:$0xff]
        %v2218 = vld [vmem:[%s1922 + $0x19] sm:$0xff]
        %v2219 = vld [vmem:[%s1922 + $0x21] sm:$0xff]
        %v2220 = vld [vmem:[%s1922 + $0x31] sm:$0xff]
        %v2221 = vld [vmem:[%s1922 + $0x39] sm:$0xff]
        %v2222 = vld [vmem:[%s1922 + $0x49] sm:$0xff]
        %v2223 = vld [vmem:[%s1922 + $0x51] sm:$0xff]
        %v2224 = vld [vmem:[%s1922 + $0x61] sm:$0xff]
        %v2225 = vld [vmem:[%s1922 + $0x69] sm:$0xff]
        %v2226 = vld [vmem:[%s1922 + $0x79] sm:$0xff]
        %v2227 = vld [vmem:[%s1922 + $0x81] sm:$0xff]
        %v2228 = vld [vmem:[%s1922 + $0x91] sm:$0xff]
        %v2229 = vld [vmem:[%s1922 + $0x99] sm:$0xff]
        %v2230 = vld [vmem:[%s1922 + $0xa9] sm:$0xff]
        %v2231 = vld [vmem:[%s1922 + $0xb1] sm:$0xff]
        %v2232 = vld [vmem:[%s1922 + $0xc1] sm:$0xff]
        %v2233 = vld [vmem:[%s1922 + $0xc9] sm:$0xff]
        %v2234 = vld [vmem:[%s1922 + $0xd9] sm:$0xff]
        %v2235 = vld [vmem:[%s1922 + $0xe1] sm:$0xff]
        %v2236 = vld [vmem:[%s1922 + $0xf1] sm:$0xff]
        %v2237 = vld [vmem:[%s1922 + $0xf9] sm:$0xff]
        %v2238 = vld [vmem:[%s1922 + $0x109] sm:$0xff]
        %v2239 = vld [vmem:[%s1922 + $0x111] sm:$0xff]
        %v2240 = vld [vmem:[%s1922 + $0x121] sm:$0xff]
        %v2241 = vld [vmem:[%s1922 + $0x129] sm:$0xff]
        %v2242 = vld [vmem:[%s1922 + $0x139] sm:$0xff]
        %v2243 = vld [vmem:[%s1922 + $0x141] sm:$0xff]
        %v2244 = vld [vmem:[%s1922 + $0x151] sm:$0xff]
        %v2245 = vld [vmem:[%s1922 + $0x159] sm:$0xff]
        %v2246 = vld [vmem:[%s1922 + $0x169] sm:$0xff]
        %v2247 = vld [vmem:[%s1922 + $0x171] sm:$0xff]
        %v2248 = vpack.c.bf16 %v2217, %v2216
        %v2249 = vpack.c.bf16 %v2219, %v2218
        %v2250 = vpack.c.bf16 %v2221, %v2220
        %v2251 = vpack.c.bf16 %v2223, %v2222
        %v2252 = vpack.c.bf16 %v2225, %v2224
        %v2253 = vpack.c.bf16 %v2227, %v2226
        %v2254 = vpack.c.bf16 %v2229, %v2228
        %v2255 = vpack.c.bf16 %v2231, %v2230
        %v2256 = vpack.c.bf16 %v2233, %v2232
        %v2257 = vpack.c.bf16 %v2235, %v2234
        %v2258 = vpack.c.bf16 %v2237, %v2236
        %v2259 = vpack.c.bf16 %v2239, %v2238
        %v2260 = vpack.c.bf16 %v2241, %v2240
        %v2261 = vpack.c.bf16 %v2243, %v2242
        %v2262 = vpack.c.bf16 %v2245, %v2244
        %v2263 = vpack.c.bf16 %v2247, %v2246
        %v2264 = vld [vmem:[%s1 + $0x1c] sm:$0xf]
        %v2266 = vsel %vm323, %v2248, 0
        %v2269 = vsel %vm323, %v2249, 0
        %v2272 = vsel %vm323, %v2250, 0
        %v2275 = vsel %vm323, %v2251, 0
        %v2278 = vsel %vm323, %v2252, 0
        %v2281 = vsel %vm323, %v2253, 0
        %v2284 = vsel %vm323, %v2254, 0
        %v2287 = vsel %vm323, %v2255, 0
        %v2290 = vsel %vm323, %v2256, 0
        %v2293 = vsel %vm323, %v2257, 0
        %v2296 = vsel %vm323, %v2258, 0
        %v2299 = vsel %vm323, %v2259, 0
        %v2302 = vsel %vm323, %v2260, 0
        %v2305 = vsel %vm323, %v2261, 0
        %v2308 = vsel %vm323, %v2262, 0
        %v2311 = vsel %vm323, %v2263, 0
        %v2314 = vsel %vm372, %v2264, 0
        %2316 = vmatprep.subr.bf16.mxu0 0
        %2317 = vmatpush1.bf16.msra.mxu0 %v2314
        %2318 = vmatprep.subr.bf16.mxu0 0
        %2319 = vmatpush1.bf16.msra.mxu0 0
        %2320 = vmatprep.subr.bf16.mxu0 0
        %2321 = vmatpush1.bf16.msra.mxu0 0
        %2322 = vmatprep.subr.bf16.mxu0 0
        %2323 = vmatpush1.bf16.msra.mxu0 0
        %2324 = vmatprep.subr.bf16.mxu0 0
        %2325 = vmatpush1.bf16.msra.mxu0 0
        %2326 = vmatprep.subr.bf16.mxu0 0
        %2327 = vmatpush1.bf16.msra.mxu0 0
        %2328 = vmatprep.subr.bf16.mxu0 0
        %2329 = vmatpush1.bf16.msra.mxu0 0
        %2330 = vmatprep.subr.bf16.mxu0 0
        %2331 = vmatpush1.bf16.msra.mxu0 0
        %2332 = vmatprep.subr.bf16.mxu0 0
        %2333 = vmatpush1.bf16.msra.mxu0 0
        %2334 = vmatprep.subr.bf16.mxu0 0
        %2335 = vmatpush1.bf16.msra.mxu0 0
        %2336 = vmatprep.subr.bf16.mxu0 0
        %2337 = vmatpush1.bf16.msra.mxu0 0
        %2338 = vmatprep.subr.bf16.mxu0 0
        %2339 = vmatpush1.bf16.msra.mxu0 0
        %2340 = vmatprep.subr.bf16.mxu0 0
        %2341 = vmatpush1.bf16.msra.mxu0 0
        %2342 = vmatprep.subr.bf16.mxu0 0
        %2343 = vmatpush1.bf16.msra.mxu0 0
        %2344 = vmatprep.subr.bf16.mxu0 0
        %2345 = vmatpush1.bf16.msra.mxu0 0
        %2346 = vmatprep.subr.bf16.mxu0 0
        %2347 = vmatpush1.bf16.msra.mxu0 0
        %2348 = vmatprep.mubr.bf16.mxu0 0
        %2349 = vmatmul.mubr.bf16.gmra.mrb[0].mxu0 %v2266
        %v2350 = vpop.f32.mrb[0].mxu0
        %v2351 = vadd.f32 0.0, %v2350
        %v2352 = vpop.f32.mrb[0].mxu0
        %v2353 = vpop.f32.mrb[0].mxu0
        %v2354 = vadd.f32 0.0, %v2353
        %v2355 = vpop.f32.mrb[0].mxu0
        %2356 = vmatprep.mubr.bf16.mxu0 0
        %2357 = vmatmul.mubr.bf16.gmra.mrb[0].mxu0 %v2269
        %v2358 = vpop.f32.mrb[0].mxu0
        %v2359 = vadd.f32 0.0, %v2358
        %v2360 = vpop.f32.mrb[0].mxu0
        %v2361 = vpop.f32.mrb[0].mxu0
        %v2362 = vadd.f32 0.0, %v2361
        %v2363 = vpop.f32.mrb[0].mxu0
        %2364 = vmatprep.mubr.bf16.mxu0 0
        %2365 = vmatmul.mubr.bf16.gmra.mrb[0].mxu0 %v2272
        %v2366 = vpop.f32.mrb[0].mxu0
        %v2367 = vadd.f32 0.0, %v2366
        %v2368 = vpop.f32.mrb[0].mxu0
        %v2369 = vpop.f32.mrb[0].mxu0
        %v2370 = vadd.f32 0.0, %v2369
        %v2371 = vpop.f32.mrb[0].mxu0
        %2372 = vmatprep.mubr.bf16.mxu0 0
        %2373 = vmatmul.mubr.bf16.gmra.mrb[0].mxu0 %v2275
        %v2374 = vpop.f32.mrb[0].mxu0
        %v2375 = vadd.f32 0.0, %v2374
        %v2376 = vpop.f32.mrb[0].mxu0
        %v2377 = vpop.f32.mrb[0].mxu0
        %v2378 = vadd.f32 0.0, %v2377
        %v2379 = vpop.f32.mrb[0].mxu0
        %2380 = vmatprep.mubr.bf16.mxu0 0
        %2381 = vmatmul.mubr.bf16.gmra.mrb[0].mxu0 %v2278
        %v2382 = vpop.f32.mrb[0].mxu0
        %v2383 = vadd.f32 0.0, %v2382
        %v2384 = vpop.f32.mrb[0].mxu0
        %v2385 = vpop.f32.mrb[0].mxu0
        %v2386 = vadd.f32 0.0, %v2385
        %v2387 = vpop.f32.mrb[0].mxu0
        %2388 = vmatprep.mubr.bf16.mxu0 0
        %2389 = vmatmul.mubr.bf16.gmra.mrb[0].mxu0 %v2281
        %v2390 = vpop.f32.mrb[0].mxu0
        %v2391 = vadd.f32 0.0, %v2390
        %v2392 = vpop.f32.mrb[0].mxu0
        %v2393 = vpop.f32.mrb[0].mxu0
        %v2394 = vadd.f32 0.0, %v2393
        %v2395 = vpop.f32.mrb[0].mxu0
        %2396 = vmatprep.mubr.bf16.mxu0 0
        %2397 = vmatmul.mubr.bf16.gmra.mrb[0].mxu0 %v2284
        %v2398 = vpop.f32.mrb[0].mxu0
        %v2399 = vadd.f32 0.0, %v2398
        %v2400 = vpop.f32.mrb[0].mxu0
        %v2401 = vpop.f32.mrb[0].mxu0
        %v2402 = vadd.f32 0.0, %v2401
        %v2403 = vpop.f32.mrb[0].mxu0
        %2404 = vmatprep.mubr.bf16.mxu0 0
        %2405 = vmatmul.mubr.bf16.gmra.mrb[0].mxu0 %v2287
        %v2406 = vpop.f32.mrb[0].mxu0
        %v2407 = vadd.f32 0.0, %v2406
        %v2408 = vpop.f32.mrb[0].mxu0
        %v2409 = vpop.f32.mrb[0].mxu0
        %v2410 = vadd.f32 0.0, %v2409
        %v2411 = vpop.f32.mrb[0].mxu0
        %2412 = vmatprep.mubr.bf16.mxu0 0
        %2413 = vmatmul.mubr.bf16.gmra.mrb[0].mxu0 %v2290
        %v2414 = vpop.f32.mrb[0].mxu0
        %v2415 = vadd.f32 0.0, %v2414
        %v2416 = vpop.f32.mrb[0].mxu0
        %v2417 = vpop.f32.mrb[0].mxu0
        %v2418 = vadd.f32 0.0, %v2417
        %v2419 = vpop.f32.mrb[0].mxu0
        %2420 = vmatprep.mubr.bf16.mxu0 0
        %2421 = vmatmul.mubr.bf16.gmra.mrb[0].mxu0 %v2293
        %v2422 = vpop.f32.mrb[0].mxu0
        %v2423 = vadd.f32 0.0, %v2422
        %v2424 = vpop.f32.mrb[0].mxu0
        %v2425 = vpop.f32.mrb[0].mxu0
        %v2426 = vadd.f32 0.0, %v2425
        %v2427 = vpop.f32.mrb[0].mxu0
        %2428 = vmatprep.mubr.bf16.mxu0 0
        %2429 = vmatmul.mubr.bf16.gmra.mrb[0].mxu0 %v2296
        %v2430 = vpop.f32.mrb[0].mxu0
        %v2431 = vadd.f32 0.0, %v2430
        %v2432 = vpop.f32.mrb[0].mxu0
        %v2433 = vpop.f32.mrb[0].mxu0
        %v2434 = vadd.f32 0.0, %v2433
        %v2435 = vpop.f32.mrb[0].mxu0
        %2436 = vmatprep.mubr.bf16.mxu0 0
        %2437 = vmatmul.mubr.bf16.gmra.mrb[0].mxu0 %v2299
        %v2438 = vpop.f32.mrb[0].mxu0
        %v2439 = vadd.f32 0.0, %v2438
        %v2440 = vpop.f32.mrb[0].mxu0
        %v2441 = vpop.f32.mrb[0].mxu0
        %v2442 = vadd.f32 0.0, %v2441
        %v2443 = vpop.f32.mrb[0].mxu0
        %2444 = vmatprep.mubr.bf16.mxu0 0
        %2445 = vmatmul.mubr.bf16.gmra.mrb[0].mxu0 %v2302
        %v2446 = vpop.f32.mrb[0].mxu0
        %v2447 = vadd.f32 0.0, %v2446
        %v2448 = vpop.f32.mrb[0].mxu0
        %v2449 = vpop.f32.mrb[0].mxu0
        %v2450 = vadd.f32 0.0, %v2449
        %v2451 = vpop.f32.mrb[0].mxu0
        %2452 = vmatprep.mubr.bf16.mxu0 0
        %2453 = vmatmul.mubr.bf16.gmra.mrb[0].mxu0 %v2305
        %v2454 = vpop.f32.mrb[0].mxu0
        %v2455 = vadd.f32 0.0, %v2454
        %v2456 = vpop.f32.mrb[0].mxu0
        %v2457 = vpop.f32.mrb[0].mxu0
        %v2458 = vadd.f32 0.0, %v2457
        %v2459 = vpop.f32.mrb[0].mxu0
        %2460 = vmatprep.mubr.bf16.mxu0 0
        %2461 = vmatmul.mubr.bf16.gmra.mrb[0].mxu0 %v2308
        %v2462 = vpop.f32.mrb[0].mxu0
        %v2463 = vadd.f32 0.0, %v2462
        %v2464 = vpop.f32.mrb[0].mxu0
        %v2465 = vpop.f32.mrb[0].mxu0
        %v2466 = vadd.f32 0.0, %v2465
        %v2467 = vpop.f32.mrb[0].mxu0
        %2468 = vmatprep.mubr.bf16.mxu0 0
        %2469 = vmatmul.mubr.bf16.gmra.mrb[0].mxu0 %v2311
        %v2470 = vpop.f32.mrb[0].mxu0
        %v2471 = vadd.f32 0.0, %v2470
        %v2472 = vpop.f32.mrb[0].mxu0
        %v2473 = vpop.f32.mrb[0].mxu0
        %v2474 = vadd.f32 0.0, %v2473
        %v2475 = vpop.f32.mrb[0].mxu0
        %2476 = vdwg.mxu0
        %v2477 = vadd.f32 %v2184, %v2351
        %v2478 = vadd.f32 %v2185, %v2354
        %v2479 = vadd.f32 %v2186, %v2359
        %v2480 = vadd.f32 %v2187, %v2362
        %v2481 = vadd.f32 %v2188, %v2367
        %v2482 = vadd.f32 %v2189, %v2370
        %v2483 = vadd.f32 %v2190, %v2375
        %v2484 = vadd.f32 %v2191, %v2378
        %v2485 = vadd.f32 %v2192, %v2383
        %v2486 = vadd.f32 %v2193, %v2386
        %v2487 = vadd.f32 %v2194, %v2391
        %v2488 = vadd.f32 %v2195, %v2394
        %v2489 = vadd.f32 %v2196, %v2399
        %v2490 = vadd.f32 %v2197, %v2402
        %v2491 = vadd.f32 %v2198, %v2407
        %v2492 = vadd.f32 %v2199, %v2410
        %v2493 = vadd.f32 %v2200, %v2415
        %v2494 = vadd.f32 %v2201, %v2418
        %v2495 = vadd.f32 %v2202, %v2423
        %v2496 = vadd.f32 %v2203, %v2426
        %v2497 = vadd.f32 %v2204, %v2431
        %v2498 = vadd.f32 %v2205, %v2434
        %v2499 = vadd.f32 %v2206, %v2439
        %v2500 = vadd.f32 %v2207, %v2442
        %v2501 = vadd.f32 %v2208, %v2447
        %v2502 = vadd.f32 %v2209, %v2450
        %v2503 = vadd.f32 %v2210, %v2455
        %v2504 = vadd.f32 %v2211, %v2458
        %v2505 = vadd.f32 %v2212, %v2463
        %v2506 = vadd.f32 %v2213, %v2466
        %v2507 = vadd.f32 %v2214, %v2471
        %v2508 = vadd.f32 %v2215, %v2474
        %v2509 = vld [vmem:[%s1922 + $0x2] sm:$0xff]
        %v2510 = vld [vmem:[%s1922 + $0xa] sm:$0xff]
        %v2511 = vld [vmem:[%s1922 + $0x1a] sm:$0xff]
        %v2512 = vld [vmem:[%s1922 + $0x22] sm:$0xff]
        %v2513 = vld [vmem:[%s1922 + $0x32] sm:$0xff]
        %v2514 = vld [vmem:[%s1922 + $0x3a] sm:$0xff]
        %v2515 = vld [vmem:[%s1922 + $0x4a] sm:$0xff]
        %v2516 = vld [vmem:[%s1922 + $0x52] sm:$0xff]
        %v2517 = vld [vmem:[%s1922 + $0x62] sm:$0xff]
        %v2518 = vld [vmem:[%s1922 + $0x6a] sm:$0xff]
        %v2519 = vld [vmem:[%s1922 + $0x7a] sm:$0xff]
        %v2520 = vld [vmem:[%s1922 + $0x82] sm:$0xff]
        %v2521 = vld [vmem:[%s1922 + $0x92] sm:$0xff]
        %v2522 = vld [vmem:[%s1922 + $0x9a] sm:$0xff]
        %v2523 = vld [vmem:[%s1922 + $0xaa] sm:$0xff]
        %v2524 = vld [vmem:[%s1922 + $0xb2] sm:$0xff]
        %v2525 = vld [vmem:[%s1922 + $0xc2] sm:$0xff]
        %v2526 = vld [vmem:[%s1922 + $0xca] sm:$0xff]
        %v2527 = vld [vmem:[%s1922 + $0xda] sm:$0xff]
        %v2528 = vld [vmem:[%s1922 + $0xe2] sm:$0xff]
        %v2529 = vld [vmem:[%s1922 + $0xf2] sm:$0xff]
        %v2530 = vld [vmem:[%s1922 + $0xfa] sm:$0xff]
        %v2531 = vld [vmem:[%s1922 + $0x10a] sm:$0xff]
        %v2532 = vld [vmem:[%s1922 + $0x112] sm:$0xff]
        %v2533 = vld [vmem:[%s1922 + $0x122] sm:$0xff]
        %v2534 = vld [vmem:[%s1922 + $0x12a] sm:$0xff]
        %v2535 = vld [vmem:[%s1922 + $0x13a] sm:$0xff]
        %v2536 = vld [vmem:[%s1922 + $0x142] sm:$0xff]
        %v2537 = vld [vmem:[%s1922 + $0x152] sm:$0xff]
        %v2538 = vld [vmem:[%s1922 + $0x15a] sm:$0xff]
        %v2539 = vld [vmem:[%s1922 + $0x16a] sm:$0xff]
        %v2540 = vld [vmem:[%s1922 + $0x172] sm:$0xff]
        %v2541 = vpack.c.bf16 %v2510, %v2509
        %v2542 = vpack.c.bf16 %v2512, %v2511
        %v2543 = vpack.c.bf16 %v2514, %v2513
        %v2544 = vpack.c.bf16 %v2516, %v2515
        %v2545 = vpack.c.bf16 %v2518, %v2517
        %v2546 = vpack.c.bf16 %v2520, %v2519
        %v2547 = vpack.c.bf16 %v2522, %v2521
        %v2548 = vpack.c.bf16 %v2524, %v2523
        %v2549 = vpack.c.bf16 %v2526, %v2525
        %v2550 = vpack.c.bf16 %v2528, %v2527
        %v2551 = vpack.c.bf16 %v2530, %v2529
        %v2552 = vpack.c.bf16 %v2532, %v2531
        %v2553 = vpack.c.bf16 %v2534, %v2533
        %v2554 = vpack.c.bf16 %v2536, %v2535
        %v2555 = vpack.c.bf16 %v2538, %v2537
        %v2556 = vpack.c.bf16 %v2540, %v2539
        %v2557 = vld [vmem:[%s1 + $0x20] sm:$0xf]
        %v2559 = vsel %vm323, %v2541, 0
        %v2562 = vsel %vm323, %v2542, 0
        %v2565 = vsel %vm323, %v2543, 0
        %v2568 = vsel %vm323, %v2544, 0
        %v2571 = vsel %vm323, %v2545, 0
        %v2574 = vsel %vm323, %v2546, 0
        %v2577 = vsel %vm323, %v2547, 0
        %v2580 = vsel %vm323, %v2548, 0
        %v2583 = vsel %vm323, %v2549, 0
        %v2586 = vsel %vm323, %v2550, 0
        %v2589 = vsel %vm323, %v2551, 0
        %v2592 = vsel %vm323, %v2552, 0
        %v2595 = vsel %vm323, %v2553, 0
        %v2598 = vsel %vm323, %v2554, 0
        %v2601 = vsel %vm323, %v2555, 0
        %v2604 = vsel %vm323, %v2556, 0
        %v2607 = vsel %vm372, %v2557, 0
        %2609 = vmatprep.subr.bf16.mxu0 0
        %2610 = vmatpush1.bf16.msra.mxu0 %v2607
        %2611 = vmatprep.subr.bf16.mxu0 0
        %2612 = vmatpush1.bf16.msra.mxu0 0
        %2613 = vmatprep.subr.bf16.mxu0 0
        %2614 = vmatpush1.bf16.msra.mxu0 0
        %2615 = vmatprep.subr.bf16.mxu0 0
        %2616 = vmatpush1.bf16.msra.mxu0 0
        %2617 = vmatprep.subr.bf16.mxu0 0
        %2618 = vmatpush1.bf16.msra.mxu0 0
        %2619 = vmatprep.subr.bf16.mxu0 0
        %2620 = vmatpush1.bf16.msra.mxu0 0
        %2621 = vmatprep.subr.bf16.mxu0 0
        %2622 = vmatpush1.bf16.msra.mxu0 0
        %2623 = vmatprep.subr.bf16.mxu0 0
        %2624 = vmatpush1.bf16.msra.mxu0 0
        %2625 = vmatprep.subr.bf16.mxu0 0
        %2626 = vmatpush1.bf16.msra.mxu0 0
        %2627 = vmatprep.subr.bf16.mxu0 0
        %2628 = vmatpush1.bf16.msra.mxu0 0
        %2629 = vmatprep.subr.bf16.mxu0 0
        %2630 = vmatpush1.bf16.msra.mxu0 0
        %2631 = vmatprep.subr.bf16.mxu0 0
        %2632 = vmatpush1.bf16.msra.mxu0 0
        %2633 = vmatprep.subr.bf16.mxu0 0
        %2634 = vmatpush1.bf16.msra.mxu0 0
        %2635 = vmatprep.subr.bf16.mxu0 0
        %2636 = vmatpush1.bf16.msra.mxu0 0
        %2637 = vmatprep.subr.bf16.mxu0 0
        %2638 = vmatpush1.bf16.msra.mxu0 0
        %2639 = vmatprep.subr.bf16.mxu0 0
        %2640 = vmatpush1.bf16.msra.mxu0 0
        %2641 = vmatprep.mubr.bf16.mxu0 0
        %2642 = vmatmul.mubr.bf16.gmra.mrb[0].mxu0 %v2559
        %v2643 = vpop.f32.mrb[0].mxu0
        %v2644 = vadd.f32 0.0, %v2643
        %v2645 = vpop.f32.mrb[0].mxu0
        %v2646 = vpop.f32.mrb[0].mxu0
        %v2647 = vadd.f32 0.0, %v2646
        %v2648 = vpop.f32.mrb[0].mxu0
        %2649 = vmatprep.mubr.bf16.mxu0 0
        %2650 = vmatmul.mubr.bf16.gmra.mrb[0].mxu0 %v2562
        %v2651 = vpop.f32.mrb[0].mxu0
        %v2652 = vadd.f32 0.0, %v2651
        %v2653 = vpop.f32.mrb[0].mxu0
        %v2654 = vpop.f32.mrb[0].mxu0
        %v2655 = vadd.f32 0.0, %v2654
        %v2656 = vpop.f32.mrb[0].mxu0
        %2657 = vmatprep.mubr.bf16.mxu0 0
        %2658 = vmatmul.mubr.bf16.gmra.mrb[0].mxu0 %v2565
        %v2659 = vpop.f32.mrb[0].mxu0
        %v2660 = vadd.f32 0.0, %v2659
        %v2661 = vpop.f32.mrb[0].mxu0
        %v2662 = vpop.f32.mrb[0].mxu0
        %v2663 = vadd.f32 0.0, %v2662
        %v2664 = vpop.f32.mrb[0].mxu0
        %2665 = vmatprep.mubr.bf16.mxu0 0
        %2666 = vmatmul.mubr.bf16.gmra.mrb[0].mxu0 %v2568
        %v2667 = vpop.f32.mrb[0].mxu0
        %v2668 = vadd.f32 0.0, %v2667
        %v2669 = vpop.f32.mrb[0].mxu0
        %v2670 = vpop.f32.mrb[0].mxu0
        %v2671 = vadd.f32 0.0, %v2670
        %v2672 = vpop.f32.mrb[0].mxu0
        %2673 = vmatprep.mubr.bf16.mxu0 0
        %2674 = vmatmul.mubr.bf16.gmra.mrb[0].mxu0 %v2571
        %v2675 = vpop.f32.mrb[0].mxu0
        %v2676 = vadd.f32 0.0, %v2675
        %v2677 = vpop.f32.mrb[0].mxu0
        %v2678 = vpop.f32.mrb[0].mxu0
        %v2679 = vadd.f32 0.0, %v2678
        %v2680 = vpop.f32.mrb[0].mxu0
        %2681 = vmatprep.mubr.bf16.mxu0 0
        %2682 = vmatmul.mubr.bf16.gmra.mrb[0].mxu0 %v2574
        %v2683 = vpop.f32.mrb[0].mxu0
        %v2684 = vadd.f32 0.0, %v2683
        %v2685 = vpop.f32.mrb[0].mxu0
        %v2686 = vpop.f32.mrb[0].mxu0
        %v2687 = vadd.f32 0.0, %v2686
        %v2688 = vpop.f32.mrb[0].mxu0
        %2689 = vmatprep.mubr.bf16.mxu0 0
        %2690 = vmatmul.mubr.bf16.gmra.mrb[0].mxu0 %v2577
        %v2691 = vpop.f32.mrb[0].mxu0
        %v2692 = vadd.f32 0.0, %v2691
        %v2693 = vpop.f32.mrb[0].mxu0
        %v2694 = vpop.f32.mrb[0].mxu0
        %v2695 = vadd.f32 0.0, %v2694
        %v2696 = vpop.f32.mrb[0].mxu0
        %2697 = vmatprep.mubr.bf16.mxu0 0
        %2698 = vmatmul.mubr.bf16.gmra.mrb[0].mxu0 %v2580
        %v2699 = vpop.f32.mrb[0].mxu0
        %v2700 = vadd.f32 0.0, %v2699
        %v2701 = vpop.f32.mrb[0].mxu0
        %v2702 = vpop.f32.mrb[0].mxu0
        %v2703 = vadd.f32 0.0, %v2702
        %v2704 = vpop.f32.mrb[0].mxu0
        %2705 = vmatprep.mubr.bf16.mxu0 0
        %2706 = vmatmul.mubr.bf16.gmra.mrb[0].mxu0 %v2583
        %v2707 = vpop.f32.mrb[0].mxu0
        %v2708 = vadd.f32 0.0, %v2707
        %v2709 = vpop.f32.mrb[0].mxu0
        %v2710 = vpop.f32.mrb[0].mxu0
        %v2711 = vadd.f32 0.0, %v2710
        %v2712 = vpop.f32.mrb[0].mxu0
        %2713 = vmatprep.mubr.bf16.mxu0 0
        %2714 = vmatmul.mubr.bf16.gmra.mrb[0].mxu0 %v2586
        %v2715 = vpop.f32.mrb[0].mxu0
        %v2716 = vadd.f32 0.0, %v2715
        %v2717 = vpop.f32.mrb[0].mxu0
        %v2718 = vpop.f32.mrb[0].mxu0
        %v2719 = vadd.f32 0.0, %v2718
        %v2720 = vpop.f32.mrb[0].mxu0
        %2721 = vmatprep.mubr.bf16.mxu0 0
        %2722 = vmatmul.mubr.bf16.gmra.mrb[0].mxu0 %v2589
        %v2723 = vpop.f32.mrb[0].mxu0
        %v2724 = vadd.f32 0.0, %v2723
        %v2725 = vpop.f32.mrb[0].mxu0
        %v2726 = vpop.f32.mrb[0].mxu0
        %v2727 = vadd.f32 0.0, %v2726
        %v2728 = vpop.f32.mrb[0].mxu0
        %2729 = vmatprep.mubr.bf16.mxu0 0
        %2730 = vmatmul.mubr.bf16.gmra.mrb[0].mxu0 %v2592
        %v2731 = vpop.f32.mrb[0].mxu0
        %v2732 = vadd.f32 0.0, %v2731
        %v2733 = vpop.f32.mrb[0].mxu0
        %v2734 = vpop.f32.mrb[0].mxu0
        %v2735 = vadd.f32 0.0, %v2734
        %v2736 = vpop.f32.mrb[0].mxu0
        %2737 = vmatprep.mubr.bf16.mxu0 0
        %2738 = vmatmul.mubr.bf16.gmra.mrb[0].mxu0 %v2595
        %v2739 = vpop.f32.mrb[0].mxu0
        %v2740 = vadd.f32 0.0, %v2739
        %v2741 = vpop.f32.mrb[0].mxu0
        %v2742 = vpop.f32.mrb[0].mxu0
        %v2743 = vadd.f32 0.0, %v2742
        %v2744 = vpop.f32.mrb[0].mxu0
        %2745 = vmatprep.mubr.bf16.mxu0 0
        %2746 = vmatmul.mubr.bf16.gmra.mrb[0].mxu0 %v2598
        %v2747 = vpop.f32.mrb[0].mxu0
        %v2748 = vadd.f32 0.0, %v2747
        %v2749 = vpop.f32.mrb[0].mxu0
        %v2750 = vpop.f32.mrb[0].mxu0
        %v2751 = vadd.f32 0.0, %v2750
        %v2752 = vpop.f32.mrb[0].mxu0
        %2753 = vmatprep.mubr.bf16.mxu0 0
        %2754 = vmatmul.mubr.bf16.gmra.mrb[0].mxu0 %v2601
        %v2755 = vpop.f32.mrb[0].mxu0
        %v2756 = vadd.f32 0.0, %v2755
        %v2757 = vpop.f32.mrb[0].mxu0
        %v2758 = vpop.f32.mrb[0].mxu0
        %v2759 = vadd.f32 0.0, %v2758
        %v2760 = vpop.f32.mrb[0].mxu0
        %2761 = vmatprep.mubr.bf16.mxu0 0
        %2762 = vmatmul.mubr.bf16.gmra.mrb[0].mxu0 %v2604
        %v2763 = vpop.f32.mrb[0].mxu0
        %v2764 = vadd.f32 0.0, %v2763
        %v2765 = vpop.f32.mrb[0].mxu0
        %v2766 = vpop.f32.mrb[0].mxu0
        %v2767 = vadd.f32 0.0, %v2766
        %v2768 = vpop.f32.mrb[0].mxu0
        %2769 = vdwg.mxu0
        %v2770 = vadd.f32 %v2477, %v2644
        %v2771 = vadd.f32 %v2478, %v2647
        %v2772 = vadd.f32 %v2479, %v2652
        %v2773 = vadd.f32 %v2480, %v2655
        %v2774 = vadd.f32 %v2481, %v2660
        %v2775 = vadd.f32 %v2482, %v2663
        %v2776 = vadd.f32 %v2483, %v2668
        %v2777 = vadd.f32 %v2484, %v2671
        %v2778 = vadd.f32 %v2485, %v2676
        %v2779 = vadd.f32 %v2486, %v2679
        %v2780 = vadd.f32 %v2487, %v2684
        %v2781 = vadd.f32 %v2488, %v2687
        %v2782 = vadd.f32 %v2489, %v2692
        %v2783 = vadd.f32 %v2490, %v2695
        %v2784 = vadd.f32 %v2491, %v2700
        %v2785 = vadd.f32 %v2492, %v2703
        %v2786 = vadd.f32 %v2493, %v2708
        %v2787 = vadd.f32 %v2494, %v2711
        %v2788 = vadd.f32 %v2495, %v2716
        %v2789 = vadd.f32 %v2496, %v2719
        %v2790 = vadd.f32 %v2497, %v2724
        %v2791 = vadd.f32 %v2498, %v2727
        %v2792 = vadd.f32 %v2499, %v2732
        %v2793 = vadd.f32 %v2500, %v2735
        %v2794 = vadd.f32 %v2501, %v2740
        %v2795 = vadd.f32 %v2502, %v2743
        %v2796 = vadd.f32 %v2503, %v2748
        %v2797 = vadd.f32 %v2504, %v2751
        %v2798 = vadd.f32 %v2505, %v2756
        %v2799 = vadd.f32 %v2506, %v2759
        %v2800 = vadd.f32 %v2507, %v2764
        %v2801 = vadd.f32 %v2508, %v2767
        %v2803 = vlaneseq
        %v2804 = vshrl.u32 %v2803, 7
        %v2805 = vsub.s32 0, %v2804
        %v2806 = vrot.slane %v224, %v2805
        %v2808 = vadd.f32 %v2770, %v2806
        %v2809 = vadd.f32 %v2771, %v2806
        %v2810 = vadd.f32 %v2772, %v2806
        %v2811 = vadd.f32 %v2773, %v2806
        %v2812 = vadd.f32 %v2774, %v2806
        %v2813 = vadd.f32 %v2775, %v2806
        %v2814 = vadd.f32 %v2776, %v2806
        %v2815 = vadd.f32 %v2777, %v2806
        %v2816 = vadd.f32 %v2778, %v2806
        %v2817 = vadd.f32 %v2779, %v2806
        %v2818 = vadd.f32 %v2780, %v2806
        %v2819 = vadd.f32 %v2781, %v2806
        %v2820 = vadd.f32 %v2782, %v2806
        %v2821 = vadd.f32 %v2783, %v2806
        %v2822 = vadd.f32 %v2784, %v2806
        %v2823 = vadd.f32 %v2785, %v2806
        %v2824 = vadd.f32 %v2786, %v2806
        %v2825 = vadd.f32 %v2787, %v2806
        %v2826 = vadd.f32 %v2788, %v2806
        %v2827 = vadd.f32 %v2789, %v2806
        %v2828 = vadd.f32 %v2790, %v2806
        %v2829 = vadd.f32 %v2791, %v2806
        %v2830 = vadd.f32 %v2792, %v2806
        %v2831 = vadd.f32 %v2793, %v2806
        %v2832 = vadd.f32 %v2794, %v2806
        %v2833 = vadd.f32 %v2795, %v2806
        %v2834 = vadd.f32 %v2796, %v2806
        %v2835 = vadd.f32 %v2797, %v2806
        %v2836 = vadd.f32 %v2798, %v2806
        %v2837 = vadd.f32 %v2799, %v2806
        %v2838 = vadd.f32 %v2800, %v2806
        %v2839 = vadd.f32 %v2801, %v2806
        %v2840 = vmax.f32 %v2808, 0.0
        %v2841 = vmax.f32 %v2809, 0.0
        %v2842 = vmax.f32 %v2810, 0.0
        %v2843 = vmax.f32 %v2811, 0.0
        %v2844 = vmax.f32 %v2812, 0.0
        %v2845 = vmax.f32 %v2813, 0.0
        %v2846 = vmax.f32 %v2814, 0.0
        %v2847 = vmax.f32 %v2815, 0.0
        %v2848 = vmax.f32 %v2816, 0.0
        %v2849 = vmax.f32 %v2817, 0.0
        %v2850 = vmax.f32 %v2818, 0.0
        %v2851 = vmax.f32 %v2819, 0.0
        %v2852 = vmax.f32 %v2820, 0.0
        %v2853 = vmax.f32 %v2821, 0.0
        %v2854 = vmax.f32 %v2822, 0.0
        %v2855 = vmax.f32 %v2823, 0.0
        %v2856 = vmax.f32 %v2824, 0.0
        %v2857 = vmax.f32 %v2825, 0.0
        %v2858 = vmax.f32 %v2826, 0.0
        %v2859 = vmax.f32 %v2827, 0.0
        %v2860 = vmax.f32 %v2828, 0.0
        %v2861 = vmax.f32 %v2829, 0.0
        %v2862 = vmax.f32 %v2830, 0.0
        %v2863 = vmax.f32 %v2831, 0.0
        %v2864 = vmax.f32 %v2832, 0.0
        %v2865 = vmax.f32 %v2833, 0.0
        %v2866 = vmax.f32 %v2834, 0.0
        %v2867 = vmax.f32 %v2835, 0.0
        %v2868 = vmax.f32 %v2836, 0.0
        %v2869 = vmax.f32 %v2837, 0.0
        %v2870 = vmax.f32 %v2838, 0.0
        %v2871 = vmax.f32 %v2839, 0.0
        %vm2872 = vcmask 523264
        %2873 = vst.msk [vmem:[#allocation2] sm:$0xff] %vm2872, 0.0
        %2874 = vst.msk [vmem:[#allocation2 + $0x8] sm:$0xff] %vm2872, 0.0
        %vm2875 = vcmask 517120
        %2876 = vst.msk [vmem:[#allocation2 + $0x10] sm:$0x3] %vm2875, 0.0
        %2877 = vst.msk [vmem:[#allocation2 + $0x18] sm:$0xff] %vm2872, 0.0
        %2878 = vst.msk [vmem:[#allocation2 + $0x20] sm:$0xff] %vm2872, 0.0
        %2879 = vst.msk [vmem:[#allocation2 + $0x28] sm:$0x3] %vm2875, 0.0
        %2880 = vst.msk [vmem:[#allocation2 + $0x30] sm:$0xff] %vm2872, 0.0
        %2881 = vst.msk [vmem:[#allocation2 + $0x38] sm:$0xff] %vm2872, 0.0
        %2882 = vst.msk [vmem:[#allocation2 + $0x40] sm:$0x3] %vm2875, 0.0
        %2883 = vst.msk [vmem:[#allocation2 + $0x48] sm:$0xff] %vm2872, 0.0
        %2884 = vst.msk [vmem:[#allocation2 + $0x50] sm:$0xff] %vm2872, 0.0
        %2885 = vst.msk [vmem:[#allocation2 + $0x58] sm:$0x3] %vm2875, 0.0
        %2886 = vst.msk [vmem:[#allocation2 + $0x60] sm:$0xff] %vm2872, 0.0
        %2887 = vst.msk [vmem:[#allocation2 + $0x68] sm:$0xff] %vm2872, 0.0
        %2888 = vst.msk [vmem:[#allocation2 + $0x70] sm:$0x3] %vm2875, 0.0
        %2889 = vst.msk [vmem:[#allocation2 + $0x78] sm:$0xff] %vm2872, 0.0
        %2890 = vst.msk [vmem:[#allocation2 + $0x80] sm:$0xff] %vm2872, 0.0
        %2891 = vst.msk [vmem:[#allocation2 + $0x88] sm:$0x3] %vm2875, 0.0
        %2892 = vst.msk [vmem:[#allocation2 + $0x90] sm:$0xff] %vm2872, 0.0
        %2893 = vst.msk [vmem:[#allocation2 + $0x98] sm:$0xff] %vm2872, 0.0
        %2894 = vst.msk [vmem:[#allocation2 + $0xa0] sm:$0x3] %vm2875, 0.0
        %2895 = vst.msk [vmem:[#allocation2 + $0xa8] sm:$0xff] %vm2872, 0.0
        %2896 = vst.msk [vmem:[#allocation2 + $0xb0] sm:$0xff] %vm2872, 0.0
        %2897 = vst.msk [vmem:[#allocation2 + $0xb8] sm:$0x3] %vm2875, 0.0
        %2898 = vst.msk [vmem:[#allocation2 + $0xc0] sm:$0xff] %vm2872, 0.0
        %2899 = vst.msk [vmem:[#allocation2 + $0xc8] sm:$0xff] %vm2872, 0.0
        %2900 = vst.msk [vmem:[#allocation2 + $0xd0] sm:$0x3] %vm2875, 0.0
        %2901 = vst.msk [vmem:[#allocation2 + $0xd8] sm:$0xff] %vm2872, 0.0
        %2902 = vst.msk [vmem:[#allocation2 + $0xe0] sm:$0xff] %vm2872, 0.0
        %2903 = vst.msk [vmem:[#allocation2 + $0xe8] sm:$0x3] %vm2875, 0.0
        %2904 = vst.msk [vmem:[#allocation2 + $0xf0] sm:$0xff] %vm2872, 0.0
        %2905 = vst.msk [vmem:[#allocation2 + $0xf8] sm:$0xff] %vm2872, 0.0
        %2906 = vst.msk [vmem:[#allocation2 + $0x100] sm:$0x3] %vm2875, 0.0
        %2907 = vst.msk [vmem:[#allocation2 + $0x108] sm:$0xff] %vm2872, 0.0
        %2908 = vst.msk [vmem:[#allocation2 + $0x110] sm:$0xff] %vm2872, 0.0
        %2909 = vst.msk [vmem:[#allocation2 + $0x118] sm:$0x3] %vm2875, 0.0
        %2910 = vst.msk [vmem:[#allocation2 + $0x120] sm:$0xff] %vm2872, 0.0
        %2911 = vst.msk [vmem:[#allocation2 + $0x128] sm:$0xff] %vm2872, 0.0
        %2912 = vst.msk [vmem:[#allocation2 + $0x130] sm:$0x3] %vm2875, 0.0
        %2913 = vst.msk [vmem:[#allocation2 + $0x138] sm:$0xff] %vm2872, 0.0
        %2914 = vst.msk [vmem:[#allocation2 + $0x140] sm:$0xff] %vm2872, 0.0
        %2915 = vst.msk [vmem:[#allocation2 + $0x148] sm:$0x3] %vm2875, 0.0
        %2916 = vst.msk [vmem:[#allocation2 + $0x150] sm:$0xff] %vm2872, 0.0
        %2917 = vst.msk [vmem:[#allocation2 + $0x158] sm:$0xff] %vm2872, 0.0
        %2918 = vst.msk [vmem:[#allocation2 + $0x160] sm:$0x3] %vm2875, 0.0
        %2919 = vst.msk [vmem:[#allocation2 + $0x168] sm:$0xff] %vm2872, 0.0
        %2920 = vst.msk [vmem:[#allocation2 + $0x170] sm:$0xff] %vm2872, 0.0
        %2921 = vst.msk [vmem:[#allocation2 + $0x178] sm:$0x3] %vm2875, 0.0
        %2922 = vst.msk [vmem:[#allocation2 + $0x180] sm:$0xff] %vm2872, 0.0
        %2923 = vst.msk [vmem:[#allocation2 + $0x188] sm:$0xff] %vm2872, 0.0
        %2924 = vst.msk [vmem:[#allocation2 + $0x190] sm:$0x3] %vm2875, 0.0
        %2925 = vst.msk [vmem:[#allocation2 + $0x198] sm:$0xff] %vm2872, 0.0
        %2926 = vst.msk [vmem:[#allocation2 + $0x1a0] sm:$0xff] %vm2872, 0.0
        %2927 = vst.msk [vmem:[#allocation2 + $0x1a8] sm:$0x3] %vm2875, 0.0
        %s2928 = scalar_lea.vmem [#allocation2], 24
        %2929 = vst.msk [vmem:[%s2928 + $0x1] sm:$0xff] %vm2872, %v2840
        %2930 = vst.msk [vmem:[%s2928 + $0x9] sm:$0xff] %vm2872, %v2841
        %2931 = vst.msk [vmem:[%s2928 + $0x19] sm:$0xff] %vm2872, %v2842
        %2932 = vst.msk [vmem:[%s2928 + $0x21] sm:$0xff] %vm2872, %v2843
        %2933 = vst.msk [vmem:[%s2928 + $0x31] sm:$0xff] %vm2872, %v2844
        %2934 = vst.msk [vmem:[%s2928 + $0x39] sm:$0xff] %vm2872, %v2845
        %2935 = vst.msk [vmem:[%s2928 + $0x49] sm:$0xff] %vm2872, %v2846
        %2936 = vst.msk [vmem:[%s2928 + $0x51] sm:$0xff] %vm2872, %v2847
        %2937 = vst.msk [vmem:[%s2928 + $0x61] sm:$0xff] %vm2872, %v2848
        %2938 = vst.msk [vmem:[%s2928 + $0x69] sm:$0xff] %vm2872, %v2849
        %2939 = vst.msk [vmem:[%s2928 + $0x79] sm:$0xff] %vm2872, %v2850
        %2940 = vst.msk [vmem:[%s2928 + $0x81] sm:$0xff] %vm2872, %v2851
        %2941 = vst.msk [vmem:[%s2928 + $0x91] sm:$0xff] %vm2872, %v2852
        %2942 = vst.msk [vmem:[%s2928 + $0x99] sm:$0xff] %vm2872, %v2853
        %2943 = vst.msk [vmem:[%s2928 + $0xa9] sm:$0xff] %vm2872, %v2854
        %2944 = vst.msk [vmem:[%s2928 + $0xb1] sm:$0xff] %vm2872, %v2855
        %2945 = vst.msk [vmem:[%s2928 + $0xc1] sm:$0xff] %vm2872, %v2856
        %2946 = vst.msk [vmem:[%s2928 + $0xc9] sm:$0xff] %vm2872, %v2857
        %2947 = vst.msk [vmem:[%s2928 + $0xd9] sm:$0xff] %vm2872, %v2858
        %2948 = vst.msk [vmem:[%s2928 + $0xe1] sm:$0xff] %vm2872, %v2859
        %2949 = vst.msk [vmem:[%s2928 + $0xf1] sm:$0xff] %vm2872, %v2860
        %2950 = vst.msk [vmem:[%s2928 + $0xf9] sm:$0xff] %vm2872, %v2861
        %2951 = vst.msk [vmem:[%s2928 + $0x109] sm:$0xff] %vm2872, %v2862
        %2952 = vst.msk [vmem:[%s2928 + $0x111] sm:$0xff] %vm2872, %v2863
        %2953 = vst.msk [vmem:[%s2928 + $0x121] sm:$0xff] %vm2872, %v2864
        %2954 = vst.msk [vmem:[%s2928 + $0x129] sm:$0xff] %vm2872, %v2865
        %2955 = vst.msk [vmem:[%s2928 + $0x139] sm:$0xff] %vm2872, %v2866
        %2956 = vst.msk [vmem:[%s2928 + $0x141] sm:$0xff] %vm2872, %v2867
        %2957 = vst.msk [vmem:[%s2928 + $0x151] sm:$0xff] %vm2872, %v2868
        %2958 = vst.msk [vmem:[%s2928 + $0x159] sm:$0xff] %vm2872, %v2869
        %2959 = vst.msk [vmem:[%s2928 + $0x169] sm:$0xff] %vm2872, %v2870
        %2960 = vst.msk [vmem:[%s2928 + $0x171] sm:$0xff] %vm2872, %v2871
        %v2961 = vld [vmem:[%s4] sm:$0x1]
        %v2962 = vld [vmem:[#allocation2] sm:$0xff]
        %v2963 = vld [vmem:[#allocation2 + $0x8] sm:$0xff]
        %v2964 = vld [vmem:[#allocation2 + $0x18] sm:$0xff]
        %v2965 = vld [vmem:[#allocation2 + $0x20] sm:$0xff]
        %v2966 = vld [vmem:[#allocation2 + $0x30] sm:$0xff]
        %v2967 = vld [vmem:[#allocation2 + $0x38] sm:$0xff]
        %v2968 = vld [vmem:[#allocation2 + $0x48] sm:$0xff]
        %v2969 = vld [vmem:[#allocation2 + $0x50] sm:$0xff]
        %v2970 = vld [vmem:[#allocation2 + $0x60] sm:$0xff]
        %v2971 = vld [vmem:[#allocation2 + $0x68] sm:$0xff]
        %v2972 = vld [vmem:[#allocation2 + $0x78] sm:$0xff]
        %v2973 = vld [vmem:[#allocation2 + $0x80] sm:$0xff]
        %v2974 = vld [vmem:[#allocation2 + $0x90] sm:$0xff]
        %v2975 = vld [vmem:[#allocation2 + $0x98] sm:$0xff]
        %v2976 = vld [vmem:[#allocation2 + $0xa8] sm:$0xff]
        %v2977 = vld [vmem:[#allocation2 + $0xb0] sm:$0xff]
        %v2978 = vld [vmem:[#allocation2 + $0xc0] sm:$0xff]
        %v2979 = vld [vmem:[#allocation2 + $0xc8] sm:$0xff]
        %v2980 = vld [vmem:[#allocation2 + $0xd8] sm:$0xff]
        %v2981 = vld [vmem:[#allocation2 + $0xe0] sm:$0xff]
        %v2982 = vld [vmem:[#allocation2 + $0xf0] sm:$0xff]
        %v2983 = vld [vmem:[#allocation2 + $0xf8] sm:$0xff]
        %v2984 = vld [vmem:[#allocation2 + $0x108] sm:$0xff]
        %v2985 = vld [vmem:[#allocation2 + $0x110] sm:$0xff]
        %v2986 = vld [vmem:[#allocation2 + $0x120] sm:$0xff]
        %v2987 = vld [vmem:[#allocation2 + $0x128] sm:$0xff]
        %v2988 = vld [vmem:[#allocation2 + $0x138] sm:$0xff]
        %v2989 = vld [vmem:[#allocation2 + $0x140] sm:$0xff]
        %v2990 = vld [vmem:[#allocation2 + $0x150] sm:$0xff]
        %v2991 = vld [vmem:[#allocation2 + $0x158] sm:$0xff]
        %v2992 = vld [vmem:[#allocation2 + $0x168] sm:$0xff]
        %v2993 = vld [vmem:[#allocation2 + $0x170] sm:$0xff]
        %v2994 = vld [vmem:[#allocation2 + $0x1] sm:$0xff]
        %v2995 = vld [vmem:[#allocation2 + $0x9] sm:$0xff]
        %v2996 = vld [vmem:[#allocation2 + $0x19] sm:$0xff]
        %v2997 = vld [vmem:[#allocation2 + $0x21] sm:$0xff]
        %v2998 = vld [vmem:[#allocation2 + $0x31] sm:$0xff]
        %v2999 = vld [vmem:[#allocation2 + $0x39] sm:$0xff]
        %v3000 = vld [vmem:[#allocation2 + $0x49] sm:$0xff]
        %v3001 = vld [vmem:[#allocation2 + $0x51] sm:$0xff]
        %v3002 = vld [vmem:[#allocation2 + $0x61] sm:$0xff]
        %v3003 = vld [vmem:[#allocation2 + $0x69] sm:$0xff]
        %v3004 = vld [vmem:[#allocation2 + $0x79] sm:$0xff]
        %v3005 = vld [vmem:[#allocation2 + $0x81] sm:$0xff]
        %v3006 = vld [vmem:[#allocation2 + $0x91] sm:$0xff]
        %v3007 = vld [vmem:[#allocation2 + $0x99] sm:$0xff]
        %v3008 = vld [vmem:[#allocation2 + $0xa9] sm:$0xff]
        %v3009 = vld [vmem:[#allocation2 + $0xb1] sm:$0xff]
        %v3010 = vld [vmem:[#allocation2 + $0xc1] sm:$0xff]
        %v3011 = vld [vmem:[#allocation2 + $0xc9] sm:$0xff]
        %v3012 = vld [vmem:[#allocation2 + $0xd9] sm:$0xff]
        %v3013 = vld [vmem:[#allocation2 + $0xe1] sm:$0xff]
        %v3014 = vld [vmem:[#allocation2 + $0xf1] sm:$0xff]
        %v3015 = vld [vmem:[#allocation2 + $0xf9] sm:$0xff]
        %v3016 = vld [vmem:[#allocation2 + $0x109] sm:$0xff]
        %v3017 = vld [vmem:[#allocation2 + $0x111] sm:$0xff]
        %v3018 = vld [vmem:[#allocation2 + $0x121] sm:$0xff]
        %v3019 = vld [vmem:[#allocation2 + $0x129] sm:$0xff]
        %v3020 = vld [vmem:[#allocation2 + $0x139] sm:$0xff]
        %v3021 = vld [vmem:[#allocation2 + $0x141] sm:$0xff]
        %v3022 = vld [vmem:[#allocation2 + $0x151] sm:$0xff]
        %v3023 = vld [vmem:[#allocation2 + $0x159] sm:$0xff]
        %v3024 = vld [vmem:[#allocation2 + $0x169] sm:$0xff]
        %v3025 = vld [vmem:[#allocation2 + $0x171] sm:$0xff]
        %v3026 = vld [vmem:[#allocation2 + $0x2] sm:$0xff]
        %v3027 = vld [vmem:[#allocation2 + $0xa] sm:$0xff]
        %v3028 = vld [vmem:[#allocation2 + $0x1a] sm:$0xff]
        %v3029 = vld [vmem:[#allocation2 + $0x22] sm:$0xff]
        %v3030 = vld [vmem:[#allocation2 + $0x32] sm:$0xff]
        %v3031 = vld [vmem:[#allocation2 + $0x3a] sm:$0xff]
        %v3032 = vld [vmem:[#allocation2 + $0x4a] sm:$0xff]
        %v3033 = vld [vmem:[#allocation2 + $0x52] sm:$0xff]
        %v3034 = vld [vmem:[#allocation2 + $0x62] sm:$0xff]
        %v3035 = vld [vmem:[#allocation2 + $0x6a] sm:$0xff]
        %v3036 = vld [vmem:[#allocation2 + $0x7a] sm:$0xff]
        %v3037 = vld [vmem:[#allocation2 + $0x82] sm:$0xff]
        %v3038 = vld [vmem:[#allocation2 + $0x92] sm:$0xff]
        %v3039 = vld [vmem:[#allocation2 + $0x9a] sm:$0xff]
        %v3040 = vld [vmem:[#allocation2 + $0xaa] sm:$0xff]
        %v3041 = vld [vmem:[#allocation2 + $0xb2] sm:$0xff]
        %v3042 = vld [vmem:[#allocation2 + $0xc2] sm:$0xff]
        %v3043 = vld [vmem:[#allocation2 + $0xca] sm:$0xff]
        %v3044 = vld [vmem:[#allocation2 + $0xda] sm:$0xff]
        %v3045 = vld [vmem:[#allocation2 + $0xe2] sm:$0xff]
        %v3046 = vld [vmem:[#allocation2 + $0xf2] sm:$0xff]
        %v3047 = vld [vmem:[#allocation2 + $0xfa] sm:$0xff]
        %v3048 = vld [vmem:[#allocation2 + $0x10a] sm:$0xff]
        %v3049 = vld [vmem:[#allocation2 + $0x112] sm:$0xff]
        %v3050 = vld [vmem:[#allocation2 + $0x122] sm:$0xff]
        %v3051 = vld [vmem:[#allocation2 + $0x12a] sm:$0xff]
        %v3052 = vld [vmem:[#allocation2 + $0x13a] sm:$0xff]
        %v3053 = vld [vmem:[#allocation2 + $0x142] sm:$0xff]
        %v3054 = vld [vmem:[#allocation2 + $0x152] sm:$0xff]
        %v3055 = vld [vmem:[#allocation2 + $0x15a] sm:$0xff]
        %v3056 = vld [vmem:[#allocation2 + $0x16a] sm:$0xff]
        %v3057 = vld [vmem:[#allocation2 + $0x172] sm:$0xff]
        %v3058 = vld [vmem:[%s2928] sm:$0xff]
        %v3059 = vld [vmem:[%s2928 + $0x8] sm:$0xff]
        %v3060 = vld [vmem:[%s2928 + $0x18] sm:$0xff]
        %v3061 = vld [vmem:[%s2928 + $0x20] sm:$0xff]
        %v3062 = vld [vmem:[%s2928 + $0x30] sm:$0xff]
        %v3063 = vld [vmem:[%s2928 + $0x38] sm:$0xff]
        %v3064 = vld [vmem:[%s2928 + $0x48] sm:$0xff]
        %v3065 = vld [vmem:[%s2928 + $0x50] sm:$0xff]
        %v3066 = vld [vmem:[%s2928 + $0x60] sm:$0xff]
        %v3067 = vld [vmem:[%s2928 + $0x68] sm:$0xff]
        %v3068 = vld [vmem:[%s2928 + $0x78] sm:$0xff]
        %v3069 = vld [vmem:[%s2928 + $0x80] sm:$0xff]
        %v3070 = vld [vmem:[%s2928 + $0x90] sm:$0xff]
        %v3071 = vld [vmem:[%s2928 + $0x98] sm:$0xff]
        %v3072 = vld [vmem:[%s2928 + $0xa8] sm:$0xff]
        %v3073 = vld [vmem:[%s2928 + $0xb0] sm:$0xff]
        %v3074 = vld [vmem:[%s2928 + $0xc0] sm:$0xff]
        %v3075 = vld [vmem:[%s2928 + $0xc8] sm:$0xff]
        %v3076 = vld [vmem:[%s2928 + $0xd8] sm:$0xff]
        %v3077 = vld [vmem:[%s2928 + $0xe0] sm:$0xff]
        %v3078 = vld [vmem:[%s2928 + $0xf0] sm:$0xff]
        %v3079 = vld [vmem:[%s2928 + $0xf8] sm:$0xff]
        %v3080 = vld [vmem:[%s2928 + $0x108] sm:$0xff]
        %v3081 = vld [vmem:[%s2928 + $0x110] sm:$0xff]
        %v3082 = vld [vmem:[%s2928 + $0x120] sm:$0xff]
        %v3083 = vld [vmem:[%s2928 + $0x128] sm:$0xff]
        %v3084 = vld [vmem:[%s2928 + $0x138] sm:$0xff]
        %v3085 = vld [vmem:[%s2928 + $0x140] sm:$0xff]
        %v3086 = vld [vmem:[%s2928 + $0x150] sm:$0xff]
        %v3087 = vld [vmem:[%s2928 + $0x158] sm:$0xff]
        %v3088 = vld [vmem:[%s2928 + $0x168] sm:$0xff]
        %v3089 = vld [vmem:[%s2928 + $0x170] sm:$0xff]
        %v3090 = vld [vmem:[%s2928 + $0x1] sm:$0xff]
        %v3091 = vld [vmem:[%s2928 + $0x9] sm:$0xff]
        %v3092 = vld [vmem:[%s2928 + $0x19] sm:$0xff]
        %v3093 = vld [vmem:[%s2928 + $0x21] sm:$0xff]
        %v3094 = vld [vmem:[%s2928 + $0x31] sm:$0xff]
        %v3095 = vld [vmem:[%s2928 + $0x39] sm:$0xff]
        %v3096 = vld [vmem:[%s2928 + $0x49] sm:$0xff]
        %v3097 = vld [vmem:[%s2928 + $0x51] sm:$0xff]
        %v3098 = vld [vmem:[%s2928 + $0x61] sm:$0xff]
        %v3099 = vld [vmem:[%s2928 + $0x69] sm:$0xff]
        %v3100 = vld [vmem:[%s2928 + $0x79] sm:$0xff]
        %v3101 = vld [vmem:[%s2928 + $0x81] sm:$0xff]
        %v3102 = vld [vmem:[%s2928 + $0x91] sm:$0xff]
        %v3103 = vld [vmem:[%s2928 + $0x99] sm:$0xff]
        %v3104 = vld [vmem:[%s2928 + $0xa9] sm:$0xff]
        %v3105 = vld [vmem:[%s2928 + $0xb1] sm:$0xff]
        %v3106 = vld [vmem:[%s2928 + $0xc1] sm:$0xff]
        %v3107 = vld [vmem:[%s2928 + $0xc9] sm:$0xff]
        %v3108 = vld [vmem:[%s2928 + $0xd9] sm:$0xff]
        %v3109 = vld [vmem:[%s2928 + $0xe1] sm:$0xff]
        %v3110 = vld [vmem:[%s2928 + $0xf1] sm:$0xff]
        %v3111 = vld [vmem:[%s2928 + $0xf9] sm:$0xff]
        %v3112 = vld [vmem:[%s2928 + $0x109] sm:$0xff]
        %v3113 = vld [vmem:[%s2928 + $0x111] sm:$0xff]
        %v3114 = vld [vmem:[%s2928 + $0x121] sm:$0xff]
        %v3115 = vld [vmem:[%s2928 + $0x129] sm:$0xff]
        %v3116 = vld [vmem:[%s2928 + $0x139] sm:$0xff]
        %v3117 = vld [vmem:[%s2928 + $0x141] sm:$0xff]
        %v3118 = vld [vmem:[%s2928 + $0x151] sm:$0xff]
        %v3119 = vld [vmem:[%s2928 + $0x159] sm:$0xff]
        %v3120 = vld [vmem:[%s2928 + $0x169] sm:$0xff]
        %v3121 = vld [vmem:[%s2928 + $0x171] sm:$0xff]
        %v3122 = vld [vmem:[%s2928 + $0x2] sm:$0xff]
        %v3123 = vld [vmem:[%s2928 + $0xa] sm:$0xff]
        %v3124 = vld [vmem:[%s2928 + $0x1a] sm:$0xff]
        %v3125 = vld [vmem:[%s2928 + $0x22] sm:$0xff]
        %v3126 = vld [vmem:[%s2928 + $0x32] sm:$0xff]
        %v3127 = vld [vmem:[%s2928 + $0x3a] sm:$0xff]
        %v3128 = vld [vmem:[%s2928 + $0x4a] sm:$0xff]
        %v3129 = vld [vmem:[%s2928 + $0x52] sm:$0xff]
        %v3130 = vld [vmem:[%s2928 + $0x62] sm:$0xff]
        %v3131 = vld [vmem:[%s2928 + $0x6a] sm:$0xff]
        %v3132 = vld [vmem:[%s2928 + $0x7a] sm:$0xff]
        %v3133 = vld [vmem:[%s2928 + $0x82] sm:$0xff]
        %v3134 = vld [vmem:[%s2928 + $0x92] sm:$0xff]
        %v3135 = vld [vmem:[%s2928 + $0x9a] sm:$0xff]
        %v3136 = vld [vmem:[%s2928 + $0xaa] sm:$0xff]
        %v3137 = vld [vmem:[%s2928 + $0xb2] sm:$0xff]
        %v3138 = vld [vmem:[%s2928 + $0xc2] sm:$0xff]
        %v3139 = vld [vmem:[%s2928 + $0xca] sm:$0xff]
        %v3140 = vld [vmem:[%s2928 + $0xda] sm:$0xff]
        %v3141 = vld [vmem:[%s2928 + $0xe2] sm:$0xff]
        %v3142 = vld [vmem:[%s2928 + $0xf2] sm:$0xff]
        %v3143 = vld [vmem:[%s2928 + $0xfa] sm:$0xff]
        %v3144 = vld [vmem:[%s2928 + $0x10a] sm:$0xff]
        %v3145 = vld [vmem:[%s2928 + $0x112] sm:$0xff]
        %v3146 = vld [vmem:[%s2928 + $0x122] sm:$0xff]
        %v3147 = vld [vmem:[%s2928 + $0x12a] sm:$0xff]
        %v3148 = vld [vmem:[%s2928 + $0x13a] sm:$0xff]
        %v3149 = vld [vmem:[%s2928 + $0x142] sm:$0xff]
        %v3150 = vld [vmem:[%s2928 + $0x152] sm:$0xff]
        %v3151 = vld [vmem:[%s2928 + $0x15a] sm:$0xff]
        %v3152 = vld [vmem:[%s2928 + $0x16a] sm:$0xff]
        %v3153 = vld [vmem:[%s2928 + $0x172] sm:$0xff]
        %s3154 = scalar_lea.vmem [#allocation2], 48
        %v3155 = vld [vmem:[%s3154] sm:$0xff]
        %v3156 = vld [vmem:[%s3154 + $0x8] sm:$0xff]
        %v3157 = vld [vmem:[%s3154 + $0x18] sm:$0xff]
        %v3158 = vld [vmem:[%s3154 + $0x20] sm:$0xff]
        %v3159 = vld [vmem:[%s3154 + $0x30] sm:$0xff]
        %v3160 = vld [vmem:[%s3154 + $0x38] sm:$0xff]
        %v3161 = vld [vmem:[%s3154 + $0x48] sm:$0xff]
        %v3162 = vld [vmem:[%s3154 + $0x50] sm:$0xff]
        %v3163 = vld [vmem:[%s3154 + $0x60] sm:$0xff]
        %v3164 = vld [vmem:[%s3154 + $0x68] sm:$0xff]
        %v3165 = vld [vmem:[%s3154 + $0x78] sm:$0xff]
        %v3166 = vld [vmem:[%s3154 + $0x80] sm:$0xff]
        %v3167 = vld [vmem:[%s3154 + $0x90] sm:$0xff]
        %v3168 = vld [vmem:[%s3154 + $0x98] sm:$0xff]
        %v3169 = vld [vmem:[%s3154 + $0xa8] sm:$0xff]
        %v3170 = vld [vmem:[%s3154 + $0xb0] sm:$0xff]
        %v3171 = vld [vmem:[%s3154 + $0xc0] sm:$0xff]
        %v3172 = vld [vmem:[%s3154 + $0xc8] sm:$0xff]
        %v3173 = vld [vmem:[%s3154 + $0xd8] sm:$0xff]
        %v3174 = vld [vmem:[%s3154 + $0xe0] sm:$0xff]
        %v3175 = vld [vmem:[%s3154 + $0xf0] sm:$0xff]
        %v3176 = vld [vmem:[%s3154 + $0xf8] sm:$0xff]
        %v3177 = vld [vmem:[%s3154 + $0x108] sm:$0xff]
        %v3178 = vld [vmem:[%s3154 + $0x110] sm:$0xff]
        %v3179 = vld [vmem:[%s3154 + $0x120] sm:$0xff]
        %v3180 = vld [vmem:[%s3154 + $0x128] sm:$0xff]
        %v3181 = vld [vmem:[%s3154 + $0x138] sm:$0xff]
        %v3182 = vld [vmem:[%s3154 + $0x140] sm:$0xff]
        %v3183 = vld [vmem:[%s3154 + $0x150] sm:$0xff]
        %v3184 = vld [vmem:[%s3154 + $0x158] sm:$0xff]
        %v3185 = vld [vmem:[%s3154 + $0x168] sm:$0xff]
        %v3186 = vld [vmem:[%s3154 + $0x170] sm:$0xff]
        %v3187 = vld [vmem:[%s3154 + $0x1] sm:$0xff]
        %v3188 = vld [vmem:[%s3154 + $0x9] sm:$0xff]
        %v3189 = vld [vmem:[%s3154 + $0x19] sm:$0xff]
        %v3190 = vld [vmem:[%s3154 + $0x21] sm:$0xff]
        %v3191 = vld [vmem:[%s3154 + $0x31] sm:$0xff]
        %v3192 = vld [vmem:[%s3154 + $0x39] sm:$0xff]
        %v3193 = vld [vmem:[%s3154 + $0x49] sm:$0xff]
        %v3194 = vld [vmem:[%s3154 + $0x51] sm:$0xff]
        %v3195 = vld [vmem:[%s3154 + $0x61] sm:$0xff]
        %v3196 = vld [vmem:[%s3154 + $0x69] sm:$0xff]
        %v3197 = vld [vmem:[%s3154 + $0x79] sm:$0xff]
        %v3198 = vld [vmem:[%s3154 + $0x81] sm:$0xff]
        %v3199 = vld [vmem:[%s3154 + $0x91] sm:$0xff]
        %v3200 = vld [vmem:[%s3154 + $0x99] sm:$0xff]
        %v3201 = vld [vmem:[%s3154 + $0xa9] sm:$0xff]
        %v3202 = vld [vmem:[%s3154 + $0xb1] sm:$0xff]
        %v3203 = vld [vmem:[%s3154 + $0xc1] sm:$0xff]
        %v3204 = vld [vmem:[%s3154 + $0xc9] sm:$0xff]
        %v3205 = vld [vmem:[%s3154 + $0xd9] sm:$0xff]
        %v3206 = vld [vmem:[%s3154 + $0xe1] sm:$0xff]
        %v3207 = vld [vmem:[%s3154 + $0xf1] sm:$0xff]
        %v3208 = vld [vmem:[%s3154 + $0xf9] sm:$0xff]
        %v3209 = vld [vmem:[%s3154 + $0x109] sm:$0xff]
        %v3210 = vld [vmem:[%s3154 + $0x111] sm:$0xff]
        %v3211 = vld [vmem:[%s3154 + $0x121] sm:$0xff]
        %v3212 = vld [vmem:[%s3154 + $0x129] sm:$0xff]
        %v3213 = vld [vmem:[%s3154 + $0x139] sm:$0xff]
        %v3214 = vld [vmem:[%s3154 + $0x141] sm:$0xff]
        %v3215 = vld [vmem:[%s3154 + $0x151] sm:$0xff]
        %v3216 = vld [vmem:[%s3154 + $0x159] sm:$0xff]
        %v3217 = vld [vmem:[%s3154 + $0x169] sm:$0xff]
        %v3218 = vld [vmem:[%s3154 + $0x171] sm:$0xff]
        %v3219 = vld [vmem:[%s3154 + $0x2] sm:$0xff]
        %v3220 = vld [vmem:[%s3154 + $0xa] sm:$0xff]
        %v3221 = vld [vmem:[%s3154 + $0x1a] sm:$0xff]
        %v3222 = vld [vmem:[%s3154 + $0x22] sm:$0xff]
        %v3223 = vld [vmem:[%s3154 + $0x32] sm:$0xff]
        %v3224 = vld [vmem:[%s3154 + $0x3a] sm:$0xff]
        %v3225 = vld [vmem:[%s3154 + $0x4a] sm:$0xff]
        %v3226 = vld [vmem:[%s3154 + $0x52] sm:$0xff]
        %v3227 = vld [vmem:[%s3154 + $0x62] sm:$0xff]
        %v3228 = vld [vmem:[%s3154 + $0x6a] sm:$0xff]
        %v3229 = vld [vmem:[%s3154 + $0x7a] sm:$0xff]
        %v3230 = vld [vmem:[%s3154 + $0x82] sm:$0xff]
        %v3231 = vld [vmem:[%s3154 + $0x92] sm:$0xff]
        %v3232 = vld [vmem:[%s3154 + $0x9a] sm:$0xff]
        %v3233 = vld [vmem:[%s3154 + $0xaa] sm:$0xff]
        %v3234 = vld [vmem:[%s3154 + $0xb2] sm:$0xff]
        %v3235 = vld [vmem:[%s3154 + $0xc2] sm:$0xff]
        %v3236 = vld [vmem:[%s3154 + $0xca] sm:$0xff]
        %v3237 = vld [vmem:[%s3154 + $0xda] sm:$0xff]
        %v3238 = vld [vmem:[%s3154 + $0xe2] sm:$0xff]
        %v3239 = vld [vmem:[%s3154 + $0xf2] sm:$0xff]
        %v3240 = vld [vmem:[%s3154 + $0xfa] sm:$0xff]
        %v3241 = vld [vmem:[%s3154 + $0x10a] sm:$0xff]
        %v3242 = vld [vmem:[%s3154 + $0x112] sm:$0xff]
        %v3243 = vld [vmem:[%s3154 + $0x122] sm:$0xff]
        %v3244 = vld [vmem:[%s3154 + $0x12a] sm:$0xff]
        %v3245 = vld [vmem:[%s3154 + $0x13a] sm:$0xff]
        %v3246 = vld [vmem:[%s3154 + $0x142] sm:$0xff]
        %v3247 = vld [vmem:[%s3154 + $0x152] sm:$0xff]
        %v3248 = vld [vmem:[%s3154 + $0x15a] sm:$0xff]
        %v3249 = vld [vmem:[%s3154 + $0x16a] sm:$0xff]
        %v3250 = vld [vmem:[%s3154 + $0x172] sm:$0xff]
        %3283 = vrot.lane.b32.xlu0 %v2994, 64
        %v3284 = vpop.permute.xlu0 %3283
        %3285 = vrot.lane.b32.xlu0 %v2995, 64
        %v3286 = vpop.permute.xlu0 %3285
        %3287 = vrot.lane.b32.xlu0 %v2996, 64
        %v3288 = vpop.permute.xlu0 %3287
        %3289 = vrot.lane.b32.xlu0 %v2997, 64
        %v3290 = vpop.permute.xlu0 %3289
        %3291 = vrot.lane.b32.xlu0 %v2998, 64
        %v3292 = vpop.permute.xlu0 %3291
        %3293 = vrot.lane.b32.xlu0 %v2999, 64
        %v3294 = vpop.permute.xlu0 %3293
        %3295 = vrot.lane.b32.xlu0 %v3000, 64
        %v3296 = vpop.permute.xlu0 %3295
        %3297 = vrot.lane.b32.xlu0 %v3001, 64
        %v3298 = vpop.permute.xlu0 %3297
        %3299 = vrot.lane.b32.xlu0 %v3002, 64
        %v3300 = vpop.permute.xlu0 %3299
        %3301 = vrot.lane.b32.xlu0 %v3003, 64
        %v3302 = vpop.permute.xlu0 %3301
        %3303 = vrot.lane.b32.xlu0 %v3004, 64
        %v3304 = vpop.permute.xlu0 %3303
        %3305 = vrot.lane.b32.xlu0 %v3005, 64
        %v3306 = vpop.permute.xlu0 %3305
        %3307 = vrot.lane.b32.xlu0 %v3006, 64
        %v3308 = vpop.permute.xlu0 %3307
        %3309 = vrot.lane.b32.xlu0 %v3007, 64
        %v3310 = vpop.permute.xlu0 %3309
        %3311 = vrot.lane.b32.xlu0 %v3008, 64
        %v3312 = vpop.permute.xlu0 %3311
        %3313 = vrot.lane.b32.xlu0 %v3009, 64
        %v3314 = vpop.permute.xlu0 %3313
        %3315 = vrot.lane.b32.xlu0 %v3010, 64
        %v3316 = vpop.permute.xlu0 %3315
        %3317 = vrot.lane.b32.xlu0 %v3011, 64
        %v3318 = vpop.permute.xlu0 %3317
        %3319 = vrot.lane.b32.xlu0 %v3012, 64
        %v3320 = vpop.permute.xlu0 %3319
        %3321 = vrot.lane.b32.xlu0 %v3013, 64
        %v3322 = vpop.permute.xlu0 %3321
        %3323 = vrot.lane.b32.xlu0 %v3014, 64
        %v3324 = vpop.permute.xlu0 %3323
        %3325 = vrot.lane.b32.xlu0 %v3015, 64
        %v3326 = vpop.permute.xlu0 %3325
        %3327 = vrot.lane.b32.xlu0 %v3016, 64
        %v3328 = vpop.permute.xlu0 %3327
        %3329 = vrot.lane.b32.xlu0 %v3017, 64
        %v3330 = vpop.permute.xlu0 %3329
        %3331 = vrot.lane.b32.xlu0 %v3018, 64
        %v3332 = vpop.permute.xlu0 %3331
        %3333 = vrot.lane.b32.xlu0 %v3019, 64
        %v3334 = vpop.permute.xlu0 %3333
        %3335 = vrot.lane.b32.xlu0 %v3020, 64
        %v3336 = vpop.permute.xlu0 %3335
        %3337 = vrot.lane.b32.xlu0 %v3021, 64
        %v3338 = vpop.permute.xlu0 %3337
        %3339 = vrot.lane.b32.xlu0 %v3022, 64
        %v3340 = vpop.permute.xlu0 %3339
        %3341 = vrot.lane.b32.xlu0 %v3023, 64
        %v3342 = vpop.permute.xlu0 %3341
        %3343 = vrot.lane.b32.xlu0 %v3024, 64
        %v3344 = vpop.permute.xlu0 %3343
        %3345 = vrot.lane.b32.xlu0 %v3025, 64
        %v3346 = vpop.permute.xlu0 %3345
        %3411 = vrot.lane.b32.xlu0 %v3058, 64
        %v3412 = vpop.permute.xlu0 %3411
        %3413 = vrot.lane.b32.xlu0 %v3059, 64
        %v3414 = vpop.permute.xlu0 %3413
        %3415 = vrot.lane.b32.xlu0 %v3060, 64
        %v3416 = vpop.permute.xlu0 %3415
        %3417 = vrot.lane.b32.xlu0 %v3061, 64
        %v3418 = vpop.permute.xlu0 %3417
        %3419 = vrot.lane.b32.xlu0 %v3062, 64
        %v3420 = vpop.permute.xlu0 %3419
        %3421 = vrot.lane.b32.xlu0 %v3063, 64
        %v3422 = vpop.permute.xlu0 %3421
        %3423 = vrot.lane.b32.xlu0 %v3064, 64
        %v3424 = vpop.permute.xlu0 %3423
        %3425 = vrot.lane.b32.xlu0 %v3065, 64
        %v3426 = vpop.permute.xlu0 %3425
        %3427 = vrot.lane.b32.xlu0 %v3066, 64
        %v3428 = vpop.permute.xlu0 %3427
        %3429 = vrot.lane.b32.xlu0 %v3067, 64
        %v3430 = vpop.permute.xlu0 %3429
        %3431 = vrot.lane.b32.xlu0 %v3068, 64
        %v3432 = vpop.permute.xlu0 %3431
        %3433 = vrot.lane.b32.xlu0 %v3069, 64
        %v3434 = vpop.permute.xlu0 %3433
        %3435 = vrot.lane.b32.xlu0 %v3070, 64
        %v3436 = vpop.permute.xlu0 %3435
        %3437 = vrot.lane.b32.xlu0 %v3071, 64
        %v3438 = vpop.permute.xlu0 %3437
        %3439 = vrot.lane.b32.xlu0 %v3072, 64
        %v3440 = vpop.permute.xlu0 %3439
        %3441 = vrot.lane.b32.xlu0 %v3073, 64
        %v3442 = vpop.permute.xlu0 %3441
        %3443 = vrot.lane.b32.xlu0 %v3074, 64
        %v3444 = vpop.permute.xlu0 %3443
        %3445 = vrot.lane.b32.xlu0 %v3075, 64
        %v3446 = vpop.permute.xlu0 %3445
        %3447 = vrot.lane.b32.xlu0 %v3076, 64
        %v3448 = vpop.permute.xlu0 %3447
        %3449 = vrot.lane.b32.xlu0 %v3077, 64
        %v3450 = vpop.permute.xlu0 %3449
        %3451 = vrot.lane.b32.xlu0 %v3078, 64
        %v3452 = vpop.permute.xlu0 %3451
        %3453 = vrot.lane.b32.xlu0 %v3079, 64
        %v3454 = vpop.permute.xlu0 %3453
        %3455 = vrot.lane.b32.xlu0 %v3080, 64
        %v3456 = vpop.permute.xlu0 %3455
        %3457 = vrot.lane.b32.xlu0 %v3081, 64
        %v3458 = vpop.permute.xlu0 %3457
        %3459 = vrot.lane.b32.xlu0 %v3082, 64
        %v3460 = vpop.permute.xlu0 %3459
        %3461 = vrot.lane.b32.xlu0 %v3083, 64
        %v3462 = vpop.permute.xlu0 %3461
        %3463 = vrot.lane.b32.xlu0 %v3084, 64
        %v3464 = vpop.permute.xlu0 %3463
        %3465 = vrot.lane.b32.xlu0 %v3085, 64
        %v3466 = vpop.permute.xlu0 %3465
        %3467 = vrot.lane.b32.xlu0 %v3086, 64
        %v3468 = vpop.permute.xlu0 %3467
        %3469 = vrot.lane.b32.xlu0 %v3087, 64
        %v3470 = vpop.permute.xlu0 %3469
        %3471 = vrot.lane.b32.xlu0 %v3088, 64
        %v3472 = vpop.permute.xlu0 %3471
        %3473 = vrot.lane.b32.xlu0 %v3089, 64
        %v3474 = vpop.permute.xlu0 %3473
        %3539 = vrot.lane.b32.xlu0 %v3122, 64
        %v3540 = vpop.permute.xlu0 %3539
        %3541 = vrot.lane.b32.xlu0 %v3123, 64
        %v3542 = vpop.permute.xlu0 %3541
        %3543 = vrot.lane.b32.xlu0 %v3124, 64
        %v3544 = vpop.permute.xlu0 %3543
        %3545 = vrot.lane.b32.xlu0 %v3125, 64
        %v3546 = vpop.permute.xlu0 %3545
        %3547 = vrot.lane.b32.xlu0 %v3126, 64
        %v3548 = vpop.permute.xlu0 %3547
        %3549 = vrot.lane.b32.xlu0 %v3127, 64
        %v3550 = vpop.permute.xlu0 %3549
        %3551 = vrot.lane.b32.xlu0 %v3128, 64
        %v3552 = vpop.permute.xlu0 %3551
        %3553 = vrot.lane.b32.xlu0 %v3129, 64
        %v3554 = vpop.permute.xlu0 %3553
        %3555 = vrot.lane.b32.xlu0 %v3130, 64
        %v3556 = vpop.permute.xlu0 %3555
        %3557 = vrot.lane.b32.xlu0 %v3131, 64
        %v3558 = vpop.permute.xlu0 %3557
        %3559 = vrot.lane.b32.xlu0 %v3132, 64
        %v3560 = vpop.permute.xlu0 %3559
        %3561 = vrot.lane.b32.xlu0 %v3133, 64
        %v3562 = vpop.permute.xlu0 %3561
        %3563 = vrot.lane.b32.xlu0 %v3134, 64
        %v3564 = vpop.permute.xlu0 %3563
        %3565 = vrot.lane.b32.xlu0 %v3135, 64
        %v3566 = vpop.permute.xlu0 %3565
        %3567 = vrot.lane.b32.xlu0 %v3136, 64
        %v3568 = vpop.permute.xlu0 %3567
        %3569 = vrot.lane.b32.xlu0 %v3137, 64
        %v3570 = vpop.permute.xlu0 %3569
        %3571 = vrot.lane.b32.xlu0 %v3138, 64
        %v3572 = vpop.permute.xlu0 %3571
        %3573 = vrot.lane.b32.xlu0 %v3139, 64
        %v3574 = vpop.permute.xlu0 %3573
        %3575 = vrot.lane.b32.xlu0 %v3140, 64
        %v3576 = vpop.permute.xlu0 %3575
        %3577 = vrot.lane.b32.xlu0 %v3141, 64
        %v3578 = vpop.permute.xlu0 %3577
        %3579 = vrot.lane.b32.xlu0 %v3142, 64
        %v3580 = vpop.permute.xlu0 %3579
        %3581 = vrot.lane.b32.xlu0 %v3143, 64
        %v3582 = vpop.permute.xlu0 %3581
        %3583 = vrot.lane.b32.xlu0 %v3144, 64
        %v3584 = vpop.permute.xlu0 %3583
        %3585 = vrot.lane.b32.xlu0 %v3145, 64
        %v3586 = vpop.permute.xlu0 %3585
        %3587 = vrot.lane.b32.xlu0 %v3146, 64
        %v3588 = vpop.permute.xlu0 %3587
        %3589 = vrot.lane.b32.xlu0 %v3147, 64
        %v3590 = vpop.permute.xlu0 %3589
        %3591 = vrot.lane.b32.xlu0 %v3148, 64
        %v3592 = vpop.permute.xlu0 %3591
        %3593 = vrot.lane.b32.xlu0 %v3149, 64
        %v3594 = vpop.permute.xlu0 %3593
        %3595 = vrot.lane.b32.xlu0 %v3150, 64
        %v3596 = vpop.permute.xlu0 %3595
        %3597 = vrot.lane.b32.xlu0 %v3151, 64
        %v3598 = vpop.permute.xlu0 %3597
        %3599 = vrot.lane.b32.xlu0 %v3152, 64
        %v3600 = vpop.permute.xlu0 %3599
        %3601 = vrot.lane.b32.xlu0 %v3153, 64
        %v3602 = vpop.permute.xlu0 %3601
        %3667 = vrot.lane.b32.xlu0 %v3187, 64
        %v3668 = vpop.permute.xlu0 %3667
        %3669 = vrot.lane.b32.xlu0 %v3188, 64
        %v3670 = vpop.permute.xlu0 %3669
        %3671 = vrot.lane.b32.xlu0 %v3189, 64
        %v3672 = vpop.permute.xlu0 %3671
        %3673 = vrot.lane.b32.xlu0 %v3190, 64
        %v3674 = vpop.permute.xlu0 %3673
        %3675 = vrot.lane.b32.xlu0 %v3191, 64
        %v3676 = vpop.permute.xlu0 %3675
        %3677 = vrot.lane.b32.xlu0 %v3192, 64
        %v3678 = vpop.permute.xlu0 %3677
        %3679 = vrot.lane.b32.xlu0 %v3193, 64
        %v3680 = vpop.permute.xlu0 %3679
        %3681 = vrot.lane.b32.xlu0 %v3194, 64
        %v3682 = vpop.permute.xlu0 %3681
        %3683 = vrot.lane.b32.xlu0 %v3195, 64
        %v3684 = vpop.permute.xlu0 %3683
        %3685 = vrot.lane.b32.xlu0 %v3196, 64
        %v3686 = vpop.permute.xlu0 %3685
        %3687 = vrot.lane.b32.xlu0 %v3197, 64
        %v3688 = vpop.permute.xlu0 %3687
        %3689 = vrot.lane.b32.xlu0 %v3198, 64
        %v3690 = vpop.permute.xlu0 %3689
        %3691 = vrot.lane.b32.xlu0 %v3199, 64
        %v3692 = vpop.permute.xlu0 %3691
        %3693 = vrot.lane.b32.xlu0 %v3200, 64
        %v3694 = vpop.permute.xlu0 %3693
        %3695 = vrot.lane.b32.xlu0 %v3201, 64
        %v3696 = vpop.permute.xlu0 %3695
        %3697 = vrot.lane.b32.xlu0 %v3202, 64
        %v3698 = vpop.permute.xlu0 %3697
        %3699 = vrot.lane.b32.xlu0 %v3203, 64
        %v3700 = vpop.permute.xlu0 %3699
        %3701 = vrot.lane.b32.xlu0 %v3204, 64
        %v3702 = vpop.permute.xlu0 %3701
        %3703 = vrot.lane.b32.xlu0 %v3205, 64
        %v3704 = vpop.permute.xlu0 %3703
        %3705 = vrot.lane.b32.xlu0 %v3206, 64
        %v3706 = vpop.permute.xlu0 %3705
        %3707 = vrot.lane.b32.xlu0 %v3207, 64
        %v3708 = vpop.permute.xlu0 %3707
        %3709 = vrot.lane.b32.xlu0 %v3208, 64
        %v3710 = vpop.permute.xlu0 %3709
        %3711 = vrot.lane.b32.xlu0 %v3209, 64
        %v3712 = vpop.permute.xlu0 %3711
        %3713 = vrot.lane.b32.xlu0 %v3210, 64
        %v3714 = vpop.permute.xlu0 %3713
        %3715 = vrot.lane.b32.xlu0 %v3211, 64
        %v3716 = vpop.permute.xlu0 %3715
        %3717 = vrot.lane.b32.xlu0 %v3212, 64
        %v3718 = vpop.permute.xlu0 %3717
        %3719 = vrot.lane.b32.xlu0 %v3213, 64
        %v3720 = vpop.permute.xlu0 %3719
        %3721 = vrot.lane.b32.xlu0 %v3214, 64
        %v3722 = vpop.permute.xlu0 %3721
        %3723 = vrot.lane.b32.xlu0 %v3215, 64
        %v3724 = vpop.permute.xlu0 %3723
        %3725 = vrot.lane.b32.xlu0 %v3216, 64
        %v3726 = vpop.permute.xlu0 %3725
        %3727 = vrot.lane.b32.xlu0 %v3217, 64
        %v3728 = vpop.permute.xlu0 %3727
        %3729 = vrot.lane.b32.xlu0 %v3218, 64
        %v3730 = vpop.permute.xlu0 %3729
        %v3763 = vsel %vm2872, %v2962, %v3284
        %v3764 = vsel %vm2872, %v2963, %v3286
        %v3765 = vsel %vm2872, %v2964, %v3288
        %v3766 = vsel %vm2872, %v2965, %v3290
        %v3767 = vsel %vm2872, %v2966, %v3292
        %v3768 = vsel %vm2872, %v2967, %v3294
        %v3769 = vsel %vm2872, %v2968, %v3296
        %v3770 = vsel %vm2872, %v2969, %v3298
        %v3771 = vsel %vm2872, %v2970, %v3300
        %v3772 = vsel %vm2872, %v2971, %v3302
        %v3773 = vsel %vm2872, %v2972, %v3304
        %v3774 = vsel %vm2872, %v2973, %v3306
        %v3775 = vsel %vm2872, %v2974, %v3308
        %v3776 = vsel %vm2872, %v2975, %v3310
        %v3777 = vsel %vm2872, %v2976, %v3312
        %v3778 = vsel %vm2872, %v2977, %v3314
        %v3779 = vsel %vm2872, %v2978, %v3316
        %v3780 = vsel %vm2872, %v2979, %v3318
        %v3781 = vsel %vm2872, %v2980, %v3320
        %v3782 = vsel %vm2872, %v2981, %v3322
        %v3783 = vsel %vm2872, %v2982, %v3324
        %v3784 = vsel %vm2872, %v2983, %v3326
        %v3785 = vsel %vm2872, %v2984, %v3328
        %v3786 = vsel %vm2872, %v2985, %v3330
        %v3787 = vsel %vm2872, %v2986, %v3332
        %v3788 = vsel %vm2872, %v2987, %v3334
        %v3789 = vsel %vm2872, %v2988, %v3336
        %v3790 = vsel %vm2872, %v2989, %v3338
        %v3791 = vsel %vm2872, %v2990, %v3340
        %v3792 = vsel %vm2872, %v2991, %v3342
        %v3793 = vsel %vm2872, %v2992, %v3344
        %v3794 = vsel %vm2872, %v2993, %v3346
        %v3795 = vsel %vm2872, %v3026, %v3412
        %v3796 = vsel %vm2872, %v3027, %v3414
        %v3797 = vsel %vm2872, %v3028, %v3416
        %v3798 = vsel %vm2872, %v3029, %v3418
        %v3799 = vsel %vm2872, %v3030, %v3420
        %v3800 = vsel %vm2872, %v3031, %v3422
        %v3801 = vsel %vm2872, %v3032, %v3424
        %v3802 = vsel %vm2872, %v3033, %v3426
        %v3803 = vsel %vm2872, %v3034, %v3428
        %v3804 = vsel %vm2872, %v3035, %v3430
        %v3805 = vsel %vm2872, %v3036, %v3432
        %v3806 = vsel %vm2872, %v3037, %v3434
        %v3807 = vsel %vm2872, %v3038, %v3436
        %v3808 = vsel %vm2872, %v3039, %v3438
        %v3809 = vsel %vm2872, %v3040, %v3440
        %v3810 = vsel %vm2872, %v3041, %v3442
        %v3811 = vsel %vm2872, %v3042, %v3444
        %v3812 = vsel %vm2872, %v3043, %v3446
        %v3813 = vsel %vm2872, %v3044, %v3448
        %v3814 = vsel %vm2872, %v3045, %v3450
        %v3815 = vsel %vm2872, %v3046, %v3452
        %v3816 = vsel %vm2872, %v3047, %v3454
        %v3817 = vsel %vm2872, %v3048, %v3456
        %v3818 = vsel %vm2872, %v3049, %v3458
        %v3819 = vsel %vm2872, %v3050, %v3460
        %v3820 = vsel %vm2872, %v3051, %v3462
        %v3821 = vsel %vm2872, %v3052, %v3464
        %v3822 = vsel %vm2872, %v3053, %v3466
        %v3823 = vsel %vm2872, %v3054, %v3468
        %v3824 = vsel %vm2872, %v3055, %v3470
        %v3825 = vsel %vm2872, %v3056, %v3472
        %v3826 = vsel %vm2872, %v3057, %v3474
        %v3827 = vsel %vm2872, %v3090, %v3540
        %v3828 = vsel %vm2872, %v3091, %v3542
        %v3829 = vsel %vm2872, %v3092, %v3544
        %v3830 = vsel %vm2872, %v3093, %v3546
        %v3831 = vsel %vm2872, %v3094, %v3548
        %v3832 = vsel %vm2872, %v3095, %v3550
        %v3833 = vsel %vm2872, %v3096, %v3552
        %v3834 = vsel %vm2872, %v3097, %v3554
        %v3835 = vsel %vm2872, %v3098, %v3556
        %v3836 = vsel %vm2872, %v3099, %v3558
        %v3837 = vsel %vm2872, %v3100, %v3560
        %v3838 = vsel %vm2872, %v3101, %v3562
        %v3839 = vsel %vm2872, %v3102, %v3564
        %v3840 = vsel %vm2872, %v3103, %v3566
        %v3841 = vsel %vm2872, %v3104, %v3568
        %v3842 = vsel %vm2872, %v3105, %v3570
        %v3843 = vsel %vm2872, %v3106, %v3572
        %v3844 = vsel %vm2872, %v3107, %v3574
        %v3845 = vsel %vm2872, %v3108, %v3576
        %v3846 = vsel %vm2872, %v3109, %v3578
        %v3847 = vsel %vm2872, %v3110, %v3580
        %v3848 = vsel %vm2872, %v3111, %v3582
        %v3849 = vsel %vm2872, %v3112, %v3584
        %v3850 = vsel %vm2872, %v3113, %v3586
        %v3851 = vsel %vm2872, %v3114, %v3588
        %v3852 = vsel %vm2872, %v3115, %v3590
        %v3853 = vsel %vm2872, %v3116, %v3592
        %v3854 = vsel %vm2872, %v3117, %v3594
        %v3855 = vsel %vm2872, %v3118, %v3596
        %v3856 = vsel %vm2872, %v3119, %v3598
        %v3857 = vsel %vm2872, %v3120, %v3600
        %v3858 = vsel %vm2872, %v3121, %v3602
        %v3859 = vsel %vm2872, %v3155, %v3668
        %v3860 = vsel %vm2872, %v3156, %v3670
        %v3861 = vsel %vm2872, %v3157, %v3672
        %v3862 = vsel %vm2872, %v3158, %v3674
        %v3863 = vsel %vm2872, %v3159, %v3676
        %v3864 = vsel %vm2872, %v3160, %v3678
        %v3865 = vsel %vm2872, %v3161, %v3680
        %v3866 = vsel %vm2872, %v3162, %v3682
        %v3867 = vsel %vm2872, %v3163, %v3684
        %v3868 = vsel %vm2872, %v3164, %v3686
        %v3869 = vsel %vm2872, %v3165, %v3688
        %v3870 = vsel %vm2872, %v3166, %v3690
        %v3871 = vsel %vm2872, %v3167, %v3692
        %v3872 = vsel %vm2872, %v3168, %v3694
        %v3873 = vsel %vm2872, %v3169, %v3696
        %v3874 = vsel %vm2872, %v3170, %v3698
        %v3875 = vsel %vm2872, %v3171, %v3700
        %v3876 = vsel %vm2872, %v3172, %v3702
        %v3877 = vsel %vm2872, %v3173, %v3704
        %v3878 = vsel %vm2872, %v3174, %v3706
        %v3879 = vsel %vm2872, %v3175, %v3708
        %v3880 = vsel %vm2872, %v3176, %v3710
        %v3881 = vsel %vm2872, %v3177, %v3712
        %v3882 = vsel %vm2872, %v3178, %v3714
        %v3883 = vsel %vm2872, %v3179, %v3716
        %v3884 = vsel %vm2872, %v3180, %v3718
        %v3885 = vsel %vm2872, %v3181, %v3720
        %v3886 = vsel %vm2872, %v3182, %v3722
        %v3887 = vsel %vm2872, %v3183, %v3724
        %v3888 = vsel %vm2872, %v3184, %v3726
        %v3889 = vsel %vm2872, %v3185, %v3728
        %v3890 = vsel %vm2872, %v3186, %v3730
        %v3891 = vpack.c.bf16 %v3764, %v3763
        %v3892 = vpack.c.bf16 %v3796, %v3795
        %v3893 = vpack.c.bf16 %v3828, %v3827
        %v3894 = vpack.c.bf16 %v3860, %v3859
        %v3895 = vpack.c.bf16 %v3220, %v3219
        %v3896 = vpack.c.bf16 %v3766, %v3765
        %v3897 = vpack.c.bf16 %v3798, %v3797
        %v3898 = vpack.c.bf16 %v3830, %v3829
        %v3899 = vpack.c.bf16 %v3862, %v3861
        %v3900 = vpack.c.bf16 %v3222, %v3221
        %v3901 = vpack.c.bf16 %v3768, %v3767
        %v3902 = vpack.c.bf16 %v3800, %v3799
        %v3903 = vpack.c.bf16 %v3832, %v3831
        %v3904 = vpack.c.bf16 %v3864, %v3863
        %v3905 = vpack.c.bf16 %v3224, %v3223
        %v3906 = vpack.c.bf16 %v3770, %v3769
        %v3907 = vpack.c.bf16 %v3802, %v3801
        %v3908 = vpack.c.bf16 %v3834, %v3833
        %v3909 = vpack.c.bf16 %v3866, %v3865
        %v3910 = vpack.c.bf16 %v3226, %v3225
        %v3911 = vpack.c.bf16 %v3772, %v3771
        %v3912 = vpack.c.bf16 %v3804, %v3803
        %v3913 = vpack.c.bf16 %v3836, %v3835
        %v3914 = vpack.c.bf16 %v3868, %v3867
        %v3915 = vpack.c.bf16 %v3228, %v3227
        %v3916 = vpack.c.bf16 %v3774, %v3773
        %v3917 = vpack.c.bf16 %v3806, %v3805
        %v3918 = vpack.c.bf16 %v3838, %v3837
        %v3919 = vpack.c.bf16 %v3870, %v3869
        %v3920 = vpack.c.bf16 %v3230, %v3229
        %v3921 = vpack.c.bf16 %v3776, %v3775
        %v3922 = vpack.c.bf16 %v3808, %v3807
        %v3923 = vpack.c.bf16 %v3840, %v3839
        %v3924 = vpack.c.bf16 %v3872, %v3871
        %v3925 = vpack.c.bf16 %v3232, %v3231
        %v3926 = vpack.c.bf16 %v3778, %v3777
        %v3927 = vpack.c.bf16 %v3810, %v3809
        %v3928 = vpack.c.bf16 %v3842, %v3841
        %v3929 = vpack.c.bf16 %v3874, %v3873
        %v3930 = vpack.c.bf16 %v3234, %v3233
        %v3931 = vpack.c.bf16 %v3780, %v3779
        %v3932 = vpack.c.bf16 %v3812, %v3811
        %v3933 = vpack.c.bf16 %v3844, %v3843
        %v3934 = vpack.c.bf16 %v3876, %v3875
        %v3935 = vpack.c.bf16 %v3236, %v3235
        %v3936 = vpack.c.bf16 %v3782, %v3781
        %v3937 = vpack.c.bf16 %v3814, %v3813
        %v3938 = vpack.c.bf16 %v3846, %v3845
        %v3939 = vpack.c.bf16 %v3878, %v3877
        %v3940 = vpack.c.bf16 %v3238, %v3237
        %v3941 = vpack.c.bf16 %v3784, %v3783
        %v3942 = vpack.c.bf16 %v3816, %v3815
        %v3943 = vpack.c.bf16 %v3848, %v3847
        %v3944 = vpack.c.bf16 %v3880, %v3879
        %v3945 = vpack.c.bf16 %v3240, %v3239
        %v3946 = vpack.c.bf16 %v3786, %v3785
        %v3947 = vpack.c.bf16 %v3818, %v3817
        %v3948 = vpack.c.bf16 %v3850, %v3849
        %v3949 = vpack.c.bf16 %v3882, %v3881
        %v3950 = vpack.c.bf16 %v3242, %v3241
        %v3951 = vpack.c.bf16 %v3788, %v3787
        %v3952 = vpack.c.bf16 %v3820, %v3819
        %v3953 = vpack.c.bf16 %v3852, %v3851
        %v3954 = vpack.c.bf16 %v3884, %v3883
        %v3955 = vpack.c.bf16 %v3244, %v3243
        %v3956 = vpack.c.bf16 %v3790, %v3789
        %v3957 = vpack.c.bf16 %v3822, %v3821
        %v3958 = vpack.c.bf16 %v3854, %v3853
        %v3959 = vpack.c.bf16 %v3886, %v3885
        %v3960 = vpack.c.bf16 %v3246, %v3245
        %v3961 = vpack.c.bf16 %v3792, %v3791
        %v3962 = vpack.c.bf16 %v3824, %v3823
        %v3963 = vpack.c.bf16 %v3856, %v3855
        %v3964 = vpack.c.bf16 %v3888, %v3887
        %v3965 = vpack.c.bf16 %v3248, %v3247
        %v3966 = vpack.c.bf16 %v3794, %v3793
        %v3967 = vpack.c.bf16 %v3826, %v3825
        %v3968 = vpack.c.bf16 %v3858, %v3857
        %v3969 = vpack.c.bf16 %v3890, %v3889
        %v3970 = vpack.c.bf16 %v3250, %v3249
        %v3971 = vld [vmem:[%s3] sm:$0xf]
        %v3972 = vld [vmem:[%s3 + $0x4] sm:$0xf]
        %v3973 = vld [vmem:[%s3 + $0x8] sm:$0xf]
        %v3974 = vld [vmem:[%s3 + $0xc] sm:$0xf]
        %v3975 = vld [vmem:[%s3 + $0x10] sm:$0xf]
        %v3976 = vld [vmem:[%s3 + $0x14] sm:$0xf]
        %v3977 = vld [vmem:[%s3 + $0x18] sm:$0xf]
        %v3978 = vld [vmem:[%s3 + $0x1c] sm:$0xf]
        %v3979 = vld [vmem:[%s3 + $0x20] sm:$0xf]
        %v3980 = vld [vmem:[%s3 + $0x24] sm:$0xf]
        %v3981 = vld [vmem:[%s3 + $0x28] sm:$0xf]
        %v3982 = vld [vmem:[%s3 + $0x2c] sm:$0xf]
        %v3983 = vld [vmem:[%s3 + $0x30] sm:$0xf]
        %v3984 = vld [vmem:[%s3 + $0x34] sm:$0xf]
        %v3985 = vld [vmem:[%s3 + $0x38] sm:$0xf]
        %v3986 = vld [vmem:[%s3 + $0x3c] sm:$0xf]
        %v3987 = vld [vmem:[%s3 + $0x40] sm:$0xf]
        %v3988 = vld [vmem:[%s3 + $0x44] sm:$0xf]
        %v3989 = vld [vmem:[%s3 + $0x48] sm:$0xf]
        %v3990 = vld [vmem:[%s3 + $0x4c] sm:$0xf]
        %v3991 = vld [vmem:[%s3 + $0x50] sm:$0xf]
        %v3992 = vld [vmem:[%s3 + $0x54] sm:$0xf]
        %v3993 = vld [vmem:[%s3 + $0x58] sm:$0xf]
        %v3994 = vld [vmem:[%s3 + $0x5c] sm:$0xf]
        %v3995 = vld [vmem:[%s3 + $0x60] sm:$0xf]
        %v3996 = vld [vmem:[%s3 + $0x64] sm:$0xf]
        %v3997 = vld [vmem:[%s3 + $0x68] sm:$0xf]
        %v3998 = vld [vmem:[%s3 + $0x6c] sm:$0xf]
        %v3999 = vld [vmem:[%s3 + $0x70] sm:$0xf]
        %v4000 = vld [vmem:[%s3 + $0x74] sm:$0xf]
        %v4001 = vld [vmem:[%s3 + $0x78] sm:$0xf]
        %v4002 = vld [vmem:[%s3 + $0x7c] sm:$0xf]
        %v4003 = vld [vmem:[%s3 + $0x80] sm:$0xf]
        %v4004 = vld [vmem:[%s3 + $0x84] sm:$0xf]
        %v4005 = vld [vmem:[%s3 + $0x88] sm:$0xf]
        %v4006 = vld [vmem:[%s3 + $0x8c] sm:$0xf]
        %v4007 = vld [vmem:[%s3 + $0x90] sm:$0xf]
        %v4008 = vld [vmem:[%s3 + $0x94] sm:$0xf]
        %v4009 = vld [vmem:[%s3 + $0x98] sm:$0xf]
        %v4010 = vld [vmem:[%s3 + $0x9c] sm:$0xf]
        %v4011 = vld [vmem:[%s3 + $0xa0] sm:$0xf]
        %v4012 = vld [vmem:[%s3 + $0xa4] sm:$0xf]
        %v4013 = vld [vmem:[%s3 + $0xa8] sm:$0xf]
        %v4014 = vld [vmem:[%s3 + $0xac] sm:$0xf]
        %v4015 = vld [vmem:[%s3 + $0xb0] sm:$0xf]
        %v4016 = vld [vmem:[%s3 + $0xb4] sm:$0xf]
        %v4017 = vld [vmem:[%s3 + $0xb8] sm:$0xf]
        %v4018 = vld [vmem:[%s3 + $0xbc] sm:$0xf]
        %v4019 = vld [vmem:[%s3 + $0xc0] sm:$0xf]
        %v4020 = vld [vmem:[%s3 + $0xc4] sm:$0xf]
        %v4021 = vld [vmem:[%s3 + $0xc8] sm:$0xf]
        %v4022 = vld [vmem:[%s3 + $0xcc] sm:$0xf]
        %v4023 = vld [vmem:[%s3 + $0xd0] sm:$0xf]
        %v4024 = vld [vmem:[%s3 + $0xd4] sm:$0xf]
        %v4025 = vld [vmem:[%s3 + $0xd8] sm:$0xf]
        %v4026 = vld [vmem:[%s3 + $0xdc] sm:$0xf]
        %v4027 = vld [vmem:[%s3 + $0xe0] sm:$0xf]
        %v4028 = vld [vmem:[%s3 + $0xe4] sm:$0xf]
        %v4029 = vld [vmem:[%s3 + $0xe8] sm:$0xf]
        %v4030 = vld [vmem:[%s3 + $0xec] sm:$0xf]
        %v4031 = vld [vmem:[%s3 + $0xf0] sm:$0xf]
        %v4032 = vld [vmem:[%s3 + $0xf4] sm:$0xf]
        %v4033 = vld [vmem:[%s3 + $0xf8] sm:$0xf]
        %v4034 = vld [vmem:[%s3 + $0xfc] sm:$0xf]
        %v4035 = vld [vmem:[%s3 + $0x100] sm:$0xf]
        %v4036 = vld [vmem:[%s3 + $0x104] sm:$0xf]
        %v4037 = vld [vmem:[%s3 + $0x108] sm:$0xf]
        %v4038 = vld [vmem:[%s3 + $0x10c] sm:$0xf]
        %v4039 = vld [vmem:[%s3 + $0x110] sm:$0xf]
        %v4040 = vld [vmem:[%s3 + $0x114] sm:$0xf]
        %v4041 = vld [vmem:[%s3 + $0x118] sm:$0xf]
        %v4042 = vld [vmem:[%s3 + $0x11c] sm:$0xf]
        %v4044 = vlaneseq
        %v4045 = vshrl.u32 %v4044, 7
        %v4046 = vsub.s32 0, %v4045
        %v4047 = vrot.slane %v2961, %v4046
        %v4121 = vunpack.c.l.b16 %v3971
        %v4122 = vunpack.c.l.b16 %v3972
        %v4123 = vunpack.c.l.b16 %v3973
        %v4124 = vunpack.c.l.b16 %v3974
        %v4125 = vunpack.c.l.b16 %v3975
        %v4126 = vunpack.c.l.b16 %v3976
        %v4127 = vunpack.c.l.b16 %v3977
        %v4128 = vunpack.c.l.b16 %v3978
        %v4129 = vunpack.c.l.b16 %v3979
        %v4130 = vunpack.c.l.b16 %v3980
        %v4131 = vunpack.c.l.b16 %v3981
        %v4132 = vunpack.c.l.b16 %v3982
        %v4133 = vunpack.c.l.b16 %v3983
        %v4134 = vunpack.c.l.b16 %v3984
        %v4135 = vunpack.c.l.b16 %v3985
        %v4136 = vunpack.c.l.b16 %v3986
        %v4137 = vunpack.c.l.b16 %v3987
        %v4138 = vunpack.c.l.b16 %v3988
        %v4139 = vunpack.c.l.b16 %v3989
        %v4140 = vunpack.c.l.b16 %v3990
        %v4141 = vunpack.c.l.b16 %v3991
        %v4142 = vunpack.c.l.b16 %v3992
        %v4143 = vunpack.c.l.b16 %v3993
        %v4144 = vunpack.c.l.b16 %v3994
        %v4145 = vunpack.c.l.b16 %v3995
        %v4146 = vunpack.c.l.b16 %v3996
        %v4147 = vunpack.c.l.b16 %v3997
        %v4148 = vunpack.c.l.b16 %v3998
        %v4149 = vunpack.c.l.b16 %v3999
        %v4150 = vunpack.c.l.b16 %v4000
        %v4151 = vunpack.c.l.b16 %v4001
        %v4152 = vunpack.c.l.b16 %v4002
        %v4153 = vunpack.c.l.b16 %v4003
        %v4154 = vunpack.c.l.b16 %v4004
        %v4155 = vunpack.c.l.b16 %v4005
        %v4156 = vunpack.c.l.b16 %v4006
        %v4157 = vunpack.c.l.b16 %v4007
        %v4158 = vunpack.c.l.b16 %v4008
        %v4159 = vunpack.c.l.b16 %v4009
        %v4160 = vunpack.c.l.b16 %v4010
        %v4161 = vunpack.c.l.b16 %v4011
        %v4162 = vunpack.c.l.b16 %v4012
        %v4163 = vunpack.c.l.b16 %v4013
        %v4164 = vunpack.c.l.b16 %v4014
        %v4165 = vunpack.c.l.b16 %v4015
        %v4166 = vunpack.c.l.b16 %v4016
        %v4167 = vunpack.c.l.b16 %v4017
        %v4168 = vunpack.c.l.b16 %v4018
        %v4169 = vunpack.c.l.b16 %v4019
        %v4170 = vunpack.c.l.b16 %v4020
        %v4171 = vunpack.c.l.b16 %v4021
        %v4172 = vunpack.c.l.b16 %v4022
        %v4173 = vunpack.c.l.b16 %v4023
        %v4174 = vunpack.c.l.b16 %v4024
        %v4175 = vunpack.c.l.b16 %v4025
        %v4176 = vunpack.c.l.b16 %v4026
        %v4177 = vunpack.c.l.b16 %v4027
        %v4178 = vunpack.c.l.b16 %v4028
        %v4179 = vunpack.c.l.b16 %v4029
        %v4180 = vunpack.c.l.b16 %v4030
        %v4181 = vunpack.c.l.b16 %v4031
        %v4182 = vunpack.c.l.b16 %v4032
        %v4183 = vunpack.c.l.b16 %v4033
        %v4184 = vunpack.c.l.b16 %v4034
        %v4185 = vunpack.c.l.b16 %v4035
        %v4186 = vunpack.c.l.b16 %v4036
        %v4187 = vunpack.c.l.b16 %v4037
        %v4188 = vunpack.c.l.b16 %v4038
        %v4189 = vunpack.c.l.b16 %v4039
        %v4190 = vunpack.c.l.b16 %v4040
        %v4191 = vunpack.c.l.b16 %v4041
        %v4192 = vunpack.c.l.b16 %v4042
        %v4193 = vpack.c.b16 %v4122, %v4121
        %v4194 = vpack.c.b16 %v4124, %v4123
        %v4195 = vpack.c.b16 %v4126, %v4125
        %v4196 = vpack.c.b16 %v4128, %v4127
        %v4197 = vpack.c.b16 %v4130, %v4129
        %v4198 = vpack.c.b16 %v4132, %v4131
        %v4199 = vpack.c.b16 %v4134, %v4133
        %v4200 = vpack.c.b16 %v4136, %v4135
        %v4201 = vpack.c.b16 %v4138, %v4137
        %v4202 = vpack.c.b16 %v4140, %v4139
        %v4203 = vpack.c.b16 %v4142, %v4141
        %v4204 = vpack.c.b16 %v4144, %v4143
        %v4205 = vpack.c.b16 %v4146, %v4145
        %v4206 = vpack.c.b16 %v4148, %v4147
        %v4207 = vpack.c.b16 %v4150, %v4149
        %v4208 = vpack.c.b16 %v4152, %v4151
        %v4209 = vpack.c.b16 %v4154, %v4153
        %v4210 = vpack.c.b16 %v4156, %v4155
        %v4211 = vpack.c.b16 %v4158, %v4157
        %v4212 = vpack.c.b16 %v4160, %v4159
        %v4213 = vpack.c.b16 %v4162, %v4161
        %v4214 = vpack.c.b16 %v4164, %v4163
        %v4215 = vpack.c.b16 %v4166, %v4165
        %v4216 = vpack.c.b16 %v4168, %v4167
        %v4217 = vpack.c.b16 %v4170, %v4169
        %v4218 = vpack.c.b16 %v4172, %v4171
        %v4219 = vpack.c.b16 %v4174, %v4173
        %v4220 = vpack.c.b16 %v4176, %v4175
        %v4221 = vpack.c.b16 %v4178, %v4177
        %v4222 = vpack.c.b16 %v4180, %v4179
        %v4223 = vpack.c.b16 %v4182, %v4181
        %v4224 = vpack.c.b16 %v4184, %v4183
        %v4225 = vpack.c.b16 %v4186, %v4185
        %v4226 = vpack.c.b16 %v4188, %v4187
        %v4227 = vpack.c.b16 %v4190, %v4189
        %v4228 = vpack.c.b16 %v4192, %v4191
        %v4266 = vsel %vm2872, %v3895, 0
        %v4269 = vsel %vm2872, %v3900, 0
        %v4272 = vsel %vm2872, %v3905, 0
        %v4275 = vsel %vm2872, %v3910, 0
        %v4278 = vsel %vm2872, %v3915, 0
        %v4281 = vsel %vm2872, %v3920, 0
        %v4284 = vsel %vm2872, %v3925, 0
        %v4287 = vsel %vm2872, %v3930, 0
        %v4290 = vsel %vm2872, %v3935, 0
        %v4293 = vsel %vm2872, %v3940, 0
        %v4296 = vsel %vm2872, %v3945, 0
        %v4299 = vsel %vm2872, %v3950, 0
        %v4302 = vsel %vm2872, %v3955, 0
        %v4305 = vsel %vm2872, %v3960, 0
        %v4308 = vsel %vm2872, %v3965, 0
        %v4311 = vsel %vm2872, %v3970, 0
        %4313 = vmatprep.subr.bf16.mxu0 0
        %4314 = vmatpush1.bf16.msra.mxu0 %v4193
        %4315 = vmatprep.subr.bf16.mxu0 0
        %4316 = vmatpush1.bf16.msra.mxu0 %v4194
        %4317 = vmatprep.subr.bf16.mxu0 0
        %4318 = vmatpush1.bf16.msra.mxu0 %v4195
        %4319 = vmatprep.subr.bf16.mxu0 0
        %4320 = vmatpush1.bf16.msra.mxu0 %v4196
        %4321 = vmatprep.subr.bf16.mxu0 0
        %4322 = vmatpush1.bf16.msra.mxu0 %v4197
        %4323 = vmatprep.subr.bf16.mxu0 0
        %4324 = vmatpush1.bf16.msra.mxu0 %v4198
        %4325 = vmatprep.subr.bf16.mxu0 0
        %4326 = vmatpush1.bf16.msra.mxu0 %v4199
        %4327 = vmatprep.subr.bf16.mxu0 0
        %4328 = vmatpush1.bf16.msra.mxu0 %v4200
        %4329 = vmatprep.subr.bf16.mxu0 0
        %4330 = vmatpush1.bf16.msra.mxu0 %v4201
        %4331 = vmatprep.subr.bf16.mxu0 0
        %4332 = vmatpush1.bf16.msra.mxu0 %v4202
        %4333 = vmatprep.subr.bf16.mxu0 0
        %4334 = vmatpush1.bf16.msra.mxu0 %v4203
        %4335 = vmatprep.subr.bf16.mxu0 0
        %4336 = vmatpush1.bf16.msra.mxu0 %v4204
        %4337 = vmatprep.subr.bf16.mxu0 0
        %4338 = vmatpush1.bf16.msra.mxu0 %v4205
        %4339 = vmatprep.subr.bf16.mxu0 0
        %4340 = vmatpush1.bf16.msra.mxu0 %v4206
        %4341 = vmatprep.subr.bf16.mxu0 0
        %4342 = vmatpush1.bf16.msra.mxu0 %v4207
        %4343 = vmatprep.subr.bf16.mxu0 0
        %4344 = vmatpush1.bf16.msra.mxu0 %v4208
        %4345 = vmatprep.mubr.bf16.mxu0 %v3892
        %4346 = vmatmul.mubr.bf16.gmra.mrb[0].mxu0 %v3891
        %v4347 = vpop.f32.mrb[0].mxu0
        %v4348 = vadd.f32 %v4047, %v4347
        %v4349 = vpop.f32.mrb[0].mxu0
        %v4350 = vpop.f32.mrb[0].mxu0
        %v4351 = vadd.f32 %v4047, %v4350
        %v4352 = vpop.f32.mrb[0].mxu0
        %4353 = vmatprep.mubr.bf16.mxu0 %v3897
        %4354 = vmatmul.mubr.bf16.gmra.mrb[0].mxu0 %v3896
        %v4355 = vpop.f32.mrb[0].mxu0
        %v4356 = vadd.f32 %v4047, %v4355
        %v4357 = vpop.f32.mrb[0].mxu0
        %v4358 = vpop.f32.mrb[0].mxu0
        %v4359 = vadd.f32 %v4047, %v4358
        %v4360 = vpop.f32.mrb[0].mxu0
        %4361 = vmatprep.mubr.bf16.mxu0 %v3902
        %4362 = vmatmul.mubr.bf16.gmra.mrb[0].mxu0 %v3901
        %v4363 = vpop.f32.mrb[0].mxu0
        %v4364 = vadd.f32 %v4047, %v4363
        %v4365 = vpop.f32.mrb[0].mxu0
        %v4366 = vpop.f32.mrb[0].mxu0
        %v4367 = vadd.f32 %v4047, %v4366
        %v4368 = vpop.f32.mrb[0].mxu0
        %4369 = vmatprep.mubr.bf16.mxu0 %v3907
        %4370 = vmatmul.mubr.bf16.gmra.mrb[0].mxu0 %v3906
        %v4371 = vpop.f32.mrb[0].mxu0
        %v4372 = vadd.f32 %v4047, %v4371
        %v4373 = vpop.f32.mrb[0].mxu0
        %v4374 = vpop.f32.mrb[0].mxu0
        %v4375 = vadd.f32 %v4047, %v4374
        %v4376 = vpop.f32.mrb[0].mxu0
        %4377 = vmatprep.mubr.bf16.mxu0 %v3912
        %4378 = vmatmul.mubr.bf16.gmra.mrb[0].mxu0 %v3911
        %v4379 = vpop.f32.mrb[0].mxu0
        %v4380 = vadd.f32 %v4047, %v4379
        %v4381 = vpop.f32.mrb[0].mxu0
        %v4382 = vpop.f32.mrb[0].mxu0
        %v4383 = vadd.f32 %v4047, %v4382
        %v4384 = vpop.f32.mrb[0].mxu0
        %4385 = vmatprep.mubr.bf16.mxu0 %v3917
        %4386 = vmatmul.mubr.bf16.gmra.mrb[0].mxu0 %v3916
        %v4387 = vpop.f32.mrb[0].mxu0
        %v4388 = vadd.f32 %v4047, %v4387
        %v4389 = vpop.f32.mrb[0].mxu0
        %v4390 = vpop.f32.mrb[0].mxu0
        %v4391 = vadd.f32 %v4047, %v4390
        %v4392 = vpop.f32.mrb[0].mxu0
        %4393 = vmatprep.mubr.bf16.mxu0 %v3922
        %4394 = vmatmul.mubr.bf16.gmra.mrb[0].mxu0 %v3921
        %v4395 = vpop.f32.mrb[0].mxu0
        %v4396 = vadd.f32 %v4047, %v4395
        %v4397 = vpop.f32.mrb[0].mxu0
        %v4398 = vpop.f32.mrb[0].mxu0
        %v4399 = vadd.f32 %v4047, %v4398
        %v4400 = vpop.f32.mrb[0].mxu0
        %4401 = vmatprep.mubr.bf16.mxu0 %v3927
        %4402 = vmatmul.mubr.bf16.gmra.mrb[0].mxu0 %v3926
        %v4403 = vpop.f32.mrb[0].mxu0
        %v4404 = vadd.f32 %v4047, %v4403
        %v4405 = vpop.f32.mrb[0].mxu0
        %v4406 = vpop.f32.mrb[0].mxu0
        %v4407 = vadd.f32 %v4047, %v4406
        %v4408 = vpop.f32.mrb[0].mxu0
        %4409 = vmatprep.mubr.bf16.mxu0 %v3932
        %4410 = vmatmul.mubr.bf16.gmra.mrb[0].mxu0 %v3931
        %v4411 = vpop.f32.mrb[0].mxu0
        %v4412 = vadd.f32 %v4047, %v4411
        %v4413 = vpop.f32.mrb[0].mxu0
        %v4414 = vpop.f32.mrb[0].mxu0
        %v4415 = vadd.f32 %v4047, %v4414
        %v4416 = vpop.f32.mrb[0].mxu0
        %4417 = vmatprep.mubr.bf16.mxu0 %v3937
        %4418 = vmatmul.mubr.bf16.gmra.mrb[0].mxu0 %v3936
        %v4419 = vpop.f32.mrb[0].mxu0
        %v4420 = vadd.f32 %v4047, %v4419
        %v4421 = vpop.f32.mrb[0].mxu0
        %v4422 = vpop.f32.mrb[0].mxu0
        %v4423 = vadd.f32 %v4047, %v4422
        %v4424 = vpop.f32.mrb[0].mxu0
        %4425 = vmatprep.mubr.bf16.mxu0 %v3942
        %4426 = vmatmul.mubr.bf16.gmra.mrb[0].mxu0 %v3941
        %v4427 = vpop.f32.mrb[0].mxu0
        %v4428 = vadd.f32 %v4047, %v4427
        %v4429 = vpop.f32.mrb[0].mxu0
        %v4430 = vpop.f32.mrb[0].mxu0
        %v4431 = vadd.f32 %v4047, %v4430
        %v4432 = vpop.f32.mrb[0].mxu0
        %4433 = vmatprep.mubr.bf16.mxu0 %v3947
        %4434 = vmatmul.mubr.bf16.gmra.mrb[0].mxu0 %v3946
        %v4435 = vpop.f32.mrb[0].mxu0
        %v4436 = vadd.f32 %v4047, %v4435
        %v4437 = vpop.f32.mrb[0].mxu0
        %v4438 = vpop.f32.mrb[0].mxu0
        %v4439 = vadd.f32 %v4047, %v4438
        %v4440 = vpop.f32.mrb[0].mxu0
        %4441 = vmatprep.mubr.bf16.mxu0 %v3952
        %4442 = vmatmul.mubr.bf16.gmra.mrb[0].mxu0 %v3951
        %v4443 = vpop.f32.mrb[0].mxu0
        %v4444 = vadd.f32 %v4047, %v4443
        %v4445 = vpop.f32.mrb[0].mxu0
        %v4446 = vpop.f32.mrb[0].mxu0
        %v4447 = vadd.f32 %v4047, %v4446
        %v4448 = vpop.f32.mrb[0].mxu0
        %4449 = vmatprep.mubr.bf16.mxu0 %v3957
        %4450 = vmatmul.mubr.bf16.gmra.mrb[0].mxu0 %v3956
        %v4451 = vpop.f32.mrb[0].mxu0
        %v4452 = vadd.f32 %v4047, %v4451
        %v4453 = vpop.f32.mrb[0].mxu0
        %v4454 = vpop.f32.mrb[0].mxu0
        %v4455 = vadd.f32 %v4047, %v4454
        %v4456 = vpop.f32.mrb[0].mxu0
        %4457 = vmatprep.mubr.bf16.mxu0 %v3962
        %4458 = vmatmul.mubr.bf16.gmra.mrb[0].mxu0 %v3961
        %v4459 = vpop.f32.mrb[0].mxu0
        %v4460 = vadd.f32 %v4047, %v4459
        %v4461 = vpop.f32.mrb[0].mxu0
        %v4462 = vpop.f32.mrb[0].mxu0
        %v4463 = vadd.f32 %v4047, %v4462
        %v4464 = vpop.f32.mrb[0].mxu0
        %4465 = vmatprep.mubr.bf16.mxu0 %v3967
        %4466 = vmatmul.mubr.bf16.gmra.mrb[0].mxu0 %v3966
        %v4467 = vpop.f32.mrb[0].mxu0
        %v4468 = vadd.f32 %v4047, %v4467
        %v4469 = vpop.f32.mrb[0].mxu0
        %v4470 = vpop.f32.mrb[0].mxu0
        %v4471 = vadd.f32 %v4047, %v4470
        %v4472 = vpop.f32.mrb[0].mxu0
        %4473 = vdwg.mxu0
        %4474 = vmatprep.subr.bf16.mxu0 0
        %4475 = vmatpush1.bf16.msra.mxu0 %v4209
        %4476 = vmatprep.subr.bf16.mxu0 0
        %4477 = vmatpush1.bf16.msra.mxu0 %v4210
        %4478 = vmatprep.subr.bf16.mxu0 0
        %4479 = vmatpush1.bf16.msra.mxu0 %v4211
        %4480 = vmatprep.subr.bf16.mxu0 0
        %4481 = vmatpush1.bf16.msra.mxu0 %v4212
        %4482 = vmatprep.subr.bf16.mxu0 0
        %4483 = vmatpush1.bf16.msra.mxu0 %v4213
        %4484 = vmatprep.subr.bf16.mxu0 0
        %4485 = vmatpush1.bf16.msra.mxu0 %v4214
        %4486 = vmatprep.subr.bf16.mxu0 0
        %4487 = vmatpush1.bf16.msra.mxu0 %v4215
        %4488 = vmatprep.subr.bf16.mxu0 0
        %4489 = vmatpush1.bf16.msra.mxu0 %v4216
        %4490 = vmatprep.subr.bf16.mxu0 0
        %4491 = vmatpush1.bf16.msra.mxu0 %v4217
        %4492 = vmatprep.subr.bf16.mxu0 0
        %4493 = vmatpush1.bf16.msra.mxu0 %v4218
        %4494 = vmatprep.subr.bf16.mxu0 0
        %4495 = vmatpush1.bf16.msra.mxu0 %v4219
        %4496 = vmatprep.subr.bf16.mxu0 0
        %4497 = vmatpush1.bf16.msra.mxu0 %v4220
        %4498 = vmatprep.subr.bf16.mxu0 0
        %4499 = vmatpush1.bf16.msra.mxu0 %v4221
        %4500 = vmatprep.subr.bf16.mxu0 0
        %4501 = vmatpush1.bf16.msra.mxu0 %v4222
        %4502 = vmatprep.subr.bf16.mxu0 0
        %4503 = vmatpush1.bf16.msra.mxu0 %v4223
        %4504 = vmatprep.subr.bf16.mxu0 0
        %4505 = vmatpush1.bf16.msra.mxu0 %v4224
        %4506 = vmatprep.mubr.bf16.mxu0 %v3894
        %4507 = vmatmul.mubr.bf16.gmra.mrb[0].mxu0 %v3893
        %v4508 = vpop.f32.mrb[0].mxu0
        %v4509 = vadd.f32 %v4348, %v4508
        %v4510 = vpop.f32.mrb[0].mxu0
        %v4511 = vpop.f32.mrb[0].mxu0
        %v4512 = vadd.f32 %v4351, %v4511
        %v4513 = vpop.f32.mrb[0].mxu0
        %4514 = vmatprep.mubr.bf16.mxu0 %v3899
        %4515 = vmatmul.mubr.bf16.gmra.mrb[0].mxu0 %v3898
        %v4516 = vpop.f32.mrb[0].mxu0
        %v4517 = vadd.f32 %v4356, %v4516
        %v4518 = vpop.f32.mrb[0].mxu0
        %v4519 = vpop.f32.mrb[0].mxu0
        %v4520 = vadd.f32 %v4359, %v4519
        %v4521 = vpop.f32.mrb[0].mxu0
        %4522 = vmatprep.mubr.bf16.mxu0 %v3904
        %4523 = vmatmul.mubr.bf16.gmra.mrb[0].mxu0 %v3903
        %v4524 = vpop.f32.mrb[0].mxu0
        %v4525 = vadd.f32 %v4364, %v4524
        %v4526 = vpop.f32.mrb[0].mxu0
        %v4527 = vpop.f32.mrb[0].mxu0
        %v4528 = vadd.f32 %v4367, %v4527
        %v4529 = vpop.f32.mrb[0].mxu0
        %4530 = vmatprep.mubr.bf16.mxu0 %v3909
        %4531 = vmatmul.mubr.bf16.gmra.mrb[0].mxu0 %v3908
        %v4532 = vpop.f32.mrb[0].mxu0
        %v4533 = vadd.f32 %v4372, %v4532
        %v4534 = vpop.f32.mrb[0].mxu0
        %v4535 = vpop.f32.mrb[0].mxu0
        %v4536 = vadd.f32 %v4375, %v4535
        %v4537 = vpop.f32.mrb[0].mxu0
        %4538 = vmatprep.mubr.bf16.mxu0 %v3914
        %4539 = vmatmul.mubr.bf16.gmra.mrb[0].mxu0 %v3913
        %v4540 = vpop.f32.mrb[0].mxu0
        %v4541 = vadd.f32 %v4380, %v4540
        %v4542 = vpop.f32.mrb[0].mxu0
        %v4543 = vpop.f32.mrb[0].mxu0
        %v4544 = vadd.f32 %v4383, %v4543
        %v4545 = vpop.f32.mrb[0].mxu0
        %4546 = vmatprep.mubr.bf16.mxu0 %v3919
        %4547 = vmatmul.mubr.bf16.gmra.mrb[0].mxu0 %v3918
        %v4548 = vpop.f32.mrb[0].mxu0
        %v4549 = vadd.f32 %v4388, %v4548
        %v4550 = vpop.f32.mrb[0].mxu0
        %v4551 = vpop.f32.mrb[0].mxu0
        %v4552 = vadd.f32 %v4391, %v4551
        %v4553 = vpop.f32.mrb[0].mxu0
        %4554 = vmatprep.mubr.bf16.mxu0 %v3924
        %4555 = vmatmul.mubr.bf16.gmra.mrb[0].mxu0 %v3923
        %v4556 = vpop.f32.mrb[0].mxu0
        %v4557 = vadd.f32 %v4396, %v4556
        %v4558 = vpop.f32.mrb[0].mxu0
        %v4559 = vpop.f32.mrb[0].mxu0
        %v4560 = vadd.f32 %v4399, %v4559
        %v4561 = vpop.f32.mrb[0].mxu0
        %4562 = vmatprep.mubr.bf16.mxu0 %v3929
        %4563 = vmatmul.mubr.bf16.gmra.mrb[0].mxu0 %v3928
        %v4564 = vpop.f32.mrb[0].mxu0
        %v4565 = vadd.f32 %v4404, %v4564
        %v4566 = vpop.f32.mrb[0].mxu0
        %v4567 = vpop.f32.mrb[0].mxu0
        %v4568 = vadd.f32 %v4407, %v4567
        %v4569 = vpop.f32.mrb[0].mxu0
        %4570 = vmatprep.mubr.bf16.mxu0 %v3934
        %4571 = vmatmul.mubr.bf16.gmra.mrb[0].mxu0 %v3933
        %v4572 = vpop.f32.mrb[0].mxu0
        %v4573 = vadd.f32 %v4412, %v4572
        %v4574 = vpop.f32.mrb[0].mxu0
        %v4575 = vpop.f32.mrb[0].mxu0
        %v4576 = vadd.f32 %v4415, %v4575
        %v4577 = vpop.f32.mrb[0].mxu0
        %4578 = vmatprep.mubr.bf16.mxu0 %v3939
        %4579 = vmatmul.mubr.bf16.gmra.mrb[0].mxu0 %v3938
        %v4580 = vpop.f32.mrb[0].mxu0
        %v4581 = vadd.f32 %v4420, %v4580
        %v4582 = vpop.f32.mrb[0].mxu0
        %v4583 = vpop.f32.mrb[0].mxu0
        %v4584 = vadd.f32 %v4423, %v4583
        %v4585 = vpop.f32.mrb[0].mxu0
        %4586 = vmatprep.mubr.bf16.mxu0 %v3944
        %4587 = vmatmul.mubr.bf16.gmra.mrb[0].mxu0 %v3943
        %v4588 = vpop.f32.mrb[0].mxu0
        %v4589 = vadd.f32 %v4428, %v4588
        %v4590 = vpop.f32.mrb[0].mxu0
        %v4591 = vpop.f32.mrb[0].mxu0
        %v4592 = vadd.f32 %v4431, %v4591
        %v4593 = vpop.f32.mrb[0].mxu0
        %4594 = vmatprep.mubr.bf16.mxu0 %v3949
        %4595 = vmatmul.mubr.bf16.gmra.mrb[0].mxu0 %v3948
        %v4596 = vpop.f32.mrb[0].mxu0
        %v4597 = vadd.f32 %v4436, %v4596
        %v4598 = vpop.f32.mrb[0].mxu0
        %v4599 = vpop.f32.mrb[0].mxu0
        %v4600 = vadd.f32 %v4439, %v4599
        %v4601 = vpop.f32.mrb[0].mxu0
        %4602 = vmatprep.mubr.bf16.mxu0 %v3954
        %4603 = vmatmul.mubr.bf16.gmra.mrb[0].mxu0 %v3953
        %v4604 = vpop.f32.mrb[0].mxu0
        %v4605 = vadd.f32 %v4444, %v4604
        %v4606 = vpop.f32.mrb[0].mxu0
        %v4607 = vpop.f32.mrb[0].mxu0
        %v4608 = vadd.f32 %v4447, %v4607
        %v4609 = vpop.f32.mrb[0].mxu0
        %4610 = vmatprep.mubr.bf16.mxu0 %v3959
        %4611 = vmatmul.mubr.bf16.gmra.mrb[0].mxu0 %v3958
        %v4612 = vpop.f32.mrb[0].mxu0
        %v4613 = vadd.f32 %v4452, %v4612
        %v4614 = vpop.f32.mrb[0].mxu0
        %v4615 = vpop.f32.mrb[0].mxu0
        %v4616 = vadd.f32 %v4455, %v4615
        %v4617 = vpop.f32.mrb[0].mxu0
        %4618 = vmatprep.mubr.bf16.mxu0 %v3964
        %4619 = vmatmul.mubr.bf16.gmra.mrb[0].mxu0 %v3963
        %v4620 = vpop.f32.mrb[0].mxu0
        %v4621 = vadd.f32 %v4460, %v4620
        %v4622 = vpop.f32.mrb[0].mxu0
        %v4623 = vpop.f32.mrb[0].mxu0
        %v4624 = vadd.f32 %v4463, %v4623
        %v4625 = vpop.f32.mrb[0].mxu0
        %4626 = vmatprep.mubr.bf16.mxu0 %v3969
        %4627 = vmatmul.mubr.bf16.gmra.mrb[0].mxu0 %v3968
        %v4628 = vpop.f32.mrb[0].mxu0
        %v4629 = vadd.f32 %v4468, %v4628
        %v4630 = vpop.f32.mrb[0].mxu0
        %v4631 = vpop.f32.mrb[0].mxu0
        %v4632 = vadd.f32 %v4471, %v4631
        %v4633 = vpop.f32.mrb[0].mxu0
        %4634 = vdwg.mxu0
        %4635 = vmatprep.subr.bf16.mxu0 0
        %4636 = vmatpush1.bf16.msra.mxu0 %v4225
        %4637 = vmatprep.subr.bf16.mxu0 0
        %4638 = vmatpush1.bf16.msra.mxu0 %v4226
        %4639 = vmatprep.subr.bf16.mxu0 0
        %4640 = vmatpush1.bf16.msra.mxu0 %v4227
        %4641 = vmatprep.subr.bf16.mxu0 0
        %4642 = vmatpush1.bf16.msra.mxu0 %v4228
        %4643 = vmatprep.subr.bf16.mxu0 0
        %4644 = vmatpush1.bf16.msra.mxu0 0
        %4645 = vmatprep.subr.bf16.mxu0 0
        %4646 = vmatpush1.bf16.msra.mxu0 0
        %4647 = vmatprep.subr.bf16.mxu0 0
        %4648 = vmatpush1.bf16.msra.mxu0 0
        %4649 = vmatprep.subr.bf16.mxu0 0
        %4650 = vmatpush1.bf16.msra.mxu0 0
        %4651 = vmatprep.subr.bf16.mxu0 0
        %4652 = vmatpush1.bf16.msra.mxu0 0
        %4653 = vmatprep.subr.bf16.mxu0 0
        %4654 = vmatpush1.bf16.msra.mxu0 0
        %4655 = vmatprep.subr.bf16.mxu0 0
        %4656 = vmatpush1.bf16.msra.mxu0 0
        %4657 = vmatprep.subr.bf16.mxu0 0
        %4658 = vmatpush1.bf16.msra.mxu0 0
        %4659 = vmatprep.subr.bf16.mxu0 0
        %4660 = vmatpush1.bf16.msra.mxu0 0
        %4661 = vmatprep.subr.bf16.mxu0 0
        %4662 = vmatpush1.bf16.msra.mxu0 0
        %4663 = vmatprep.subr.bf16.mxu0 0
        %4664 = vmatpush1.bf16.msra.mxu0 0
        %4665 = vmatprep.subr.bf16.mxu0 0
        %4666 = vmatpush1.bf16.msra.mxu0 0
        %4667 = vmatprep.mubr.bf16.mxu0 0
        %4668 = vmatmul.mubr.bf16.gmra.mrb[0].mxu0 %v4266
        %v4669 = vpop.f32.mrb[0].mxu0
        %v4670 = vadd.f32 %v4509, %v4669
        %v4671 = vpop.f32.mrb[0].mxu0
        %v4672 = vpop.f32.mrb[0].mxu0
        %v4673 = vadd.f32 %v4512, %v4672
        %v4674 = vpop.f32.mrb[0].mxu0
        %4675 = vmatprep.mubr.bf16.mxu0 0
        %4676 = vmatmul.mubr.bf16.gmra.mrb[0].mxu0 %v4269
        %v4677 = vpop.f32.mrb[0].mxu0
        %v4678 = vadd.f32 %v4517, %v4677
        %v4679 = vpop.f32.mrb[0].mxu0
        %v4680 = vpop.f32.mrb[0].mxu0
        %v4681 = vadd.f32 %v4520, %v4680
        %v4682 = vpop.f32.mrb[0].mxu0
        %4683 = vmatprep.mubr.bf16.mxu0 0
        %4684 = vmatmul.mubr.bf16.gmra.mrb[0].mxu0 %v4272
        %v4685 = vpop.f32.mrb[0].mxu0
        %v4686 = vadd.f32 %v4525, %v4685
        %v4687 = vpop.f32.mrb[0].mxu0
        %v4688 = vpop.f32.mrb[0].mxu0
        %v4689 = vadd.f32 %v4528, %v4688
        %v4690 = vpop.f32.mrb[0].mxu0
        %4691 = vmatprep.mubr.bf16.mxu0 0
        %4692 = vmatmul.mubr.bf16.gmra.mrb[0].mxu0 %v4275
        %v4693 = vpop.f32.mrb[0].mxu0
        %v4694 = vadd.f32 %v4533, %v4693
        %v4695 = vpop.f32.mrb[0].mxu0
        %v4696 = vpop.f32.mrb[0].mxu0
        %v4697 = vadd.f32 %v4536, %v4696
        %v4698 = vpop.f32.mrb[0].mxu0
        %4699 = vmatprep.mubr.bf16.mxu0 0
        %4700 = vmatmul.mubr.bf16.gmra.mrb[0].mxu0 %v4278
        %v4701 = vpop.f32.mrb[0].mxu0
        %v4702 = vadd.f32 %v4541, %v4701
        %v4703 = vpop.f32.mrb[0].mxu0
        %v4704 = vpop.f32.mrb[0].mxu0
        %v4705 = vadd.f32 %v4544, %v4704
        %v4706 = vpop.f32.mrb[0].mxu0
        %4707 = vmatprep.mubr.bf16.mxu0 0
        %4708 = vmatmul.mubr.bf16.gmra.mrb[0].mxu0 %v4281
        %v4709 = vpop.f32.mrb[0].mxu0
        %v4710 = vadd.f32 %v4549, %v4709
        %v4711 = vpop.f32.mrb[0].mxu0
        %v4712 = vpop.f32.mrb[0].mxu0
        %v4713 = vadd.f32 %v4552, %v4712
        %v4714 = vpop.f32.mrb[0].mxu0
        %4715 = vmatprep.mubr.bf16.mxu0 0
        %4716 = vmatmul.mubr.bf16.gmra.mrb[0].mxu0 %v4284
        %v4717 = vpop.f32.mrb[0].mxu0
        %v4718 = vadd.f32 %v4557, %v4717
        %v4719 = vpop.f32.mrb[0].mxu0
        %v4720 = vpop.f32.mrb[0].mxu0
        %v4721 = vadd.f32 %v4560, %v4720
        %v4722 = vpop.f32.mrb[0].mxu0
        %4723 = vmatprep.mubr.bf16.mxu0 0
        %4724 = vmatmul.mubr.bf16.gmra.mrb[0].mxu0 %v4287
        %v4725 = vpop.f32.mrb[0].mxu0
        %v4726 = vadd.f32 %v4565, %v4725
        %v4727 = vpop.f32.mrb[0].mxu0
        %v4728 = vpop.f32.mrb[0].mxu0
        %v4729 = vadd.f32 %v4568, %v4728
        %v4730 = vpop.f32.mrb[0].mxu0
        %4731 = vmatprep.mubr.bf16.mxu0 0
        %4732 = vmatmul.mubr.bf16.gmra.mrb[0].mxu0 %v4290
        %v4733 = vpop.f32.mrb[0].mxu0
        %v4734 = vadd.f32 %v4573, %v4733
        %v4735 = vpop.f32.mrb[0].mxu0
        %v4736 = vpop.f32.mrb[0].mxu0
        %v4737 = vadd.f32 %v4576, %v4736
        %v4738 = vpop.f32.mrb[0].mxu0
        %4739 = vmatprep.mubr.bf16.mxu0 0
        %4740 = vmatmul.mubr.bf16.gmra.mrb[0].mxu0 %v4293
        %v4741 = vpop.f32.mrb[0].mxu0
        %v4742 = vadd.f32 %v4581, %v4741
        %v4743 = vpop.f32.mrb[0].mxu0
        %v4744 = vpop.f32.mrb[0].mxu0
        %v4745 = vadd.f32 %v4584, %v4744
        %v4746 = vpop.f32.mrb[0].mxu0
        %4747 = vmatprep.mubr.bf16.mxu0 0
        %4748 = vmatmul.mubr.bf16.gmra.mrb[0].mxu0 %v4296
        %v4749 = vpop.f32.mrb[0].mxu0
        %v4750 = vadd.f32 %v4589, %v4749
        %v4751 = vpop.f32.mrb[0].mxu0
        %v4752 = vpop.f32.mrb[0].mxu0
        %v4753 = vadd.f32 %v4592, %v4752
        %v4754 = vpop.f32.mrb[0].mxu0
        %4755 = vmatprep.mubr.bf16.mxu0 0
        %4756 = vmatmul.mubr.bf16.gmra.mrb[0].mxu0 %v4299
        %v4757 = vpop.f32.mrb[0].mxu0
        %v4758 = vadd.f32 %v4597, %v4757
        %v4759 = vpop.f32.mrb[0].mxu0
        %v4760 = vpop.f32.mrb[0].mxu0
        %v4761 = vadd.f32 %v4600, %v4760
        %v4762 = vpop.f32.mrb[0].mxu0
        %4763 = vmatprep.mubr.bf16.mxu0 0
        %4764 = vmatmul.mubr.bf16.gmra.mrb[0].mxu0 %v4302
        %v4765 = vpop.f32.mrb[0].mxu0
        %v4766 = vadd.f32 %v4605, %v4765
        %v4767 = vpop.f32.mrb[0].mxu0
        %v4768 = vpop.f32.mrb[0].mxu0
        %v4769 = vadd.f32 %v4608, %v4768
        %v4770 = vpop.f32.mrb[0].mxu0
        %4771 = vmatprep.mubr.bf16.mxu0 0
        %4772 = vmatmul.mubr.bf16.gmra.mrb[0].mxu0 %v4305
        %v4773 = vpop.f32.mrb[0].mxu0
        %v4774 = vadd.f32 %v4613, %v4773
        %v4775 = vpop.f32.mrb[0].mxu0
        %v4776 = vpop.f32.mrb[0].mxu0
        %v4777 = vadd.f32 %v4616, %v4776
        %v4778 = vpop.f32.mrb[0].mxu0
        %4779 = vmatprep.mubr.bf16.mxu0 0
        %4780 = vmatmul.mubr.bf16.gmra.mrb[0].mxu0 %v4308
        %v4781 = vpop.f32.mrb[0].mxu0
        %v4782 = vadd.f32 %v4621, %v4781
        %v4783 = vpop.f32.mrb[0].mxu0
        %v4784 = vpop.f32.mrb[0].mxu0
        %v4785 = vadd.f32 %v4624, %v4784
        %v4786 = vpop.f32.mrb[0].mxu0
        %4787 = vmatprep.mubr.bf16.mxu0 0
        %4788 = vmatmul.mubr.bf16.gmra.mrb[0].mxu0 %v4311
        %v4789 = vpop.f32.mrb[0].mxu0
        %v4790 = vadd.f32 %v4629, %v4789
        %v4791 = vpop.f32.mrb[0].mxu0
        %v4792 = vpop.f32.mrb[0].mxu0
        %v4793 = vadd.f32 %v4632, %v4792
        %v4794 = vpop.f32.mrb[0].mxu0
        %4795 = vdwg.mxu0
        %v4796 = vmax.f32 %v4670, 0.0
        %v4797 = vmax.f32 %v4673, 0.0
        %v4798 = vmax.f32 %v4678, 0.0
        %v4799 = vmax.f32 %v4681, 0.0
        %v4800 = vmax.f32 %v4686, 0.0
        %v4801 = vmax.f32 %v4689, 0.0
        %v4802 = vmax.f32 %v4694, 0.0
        %v4803 = vmax.f32 %v4697, 0.0
        %v4804 = vmax.f32 %v4702, 0.0
        %v4805 = vmax.f32 %v4705, 0.0
        %v4806 = vmax.f32 %v4710, 0.0
        %v4807 = vmax.f32 %v4713, 0.0
        %v4808 = vmax.f32 %v4718, 0.0
        %v4809 = vmax.f32 %v4721, 0.0
        %v4810 = vmax.f32 %v4726, 0.0
        %v4811 = vmax.f32 %v4729, 0.0
        %v4812 = vmax.f32 %v4734, 0.0
        %v4813 = vmax.f32 %v4737, 0.0
        %v4814 = vmax.f32 %v4742, 0.0
        %v4815 = vmax.f32 %v4745, 0.0
        %v4816 = vmax.f32 %v4750, 0.0
        %v4817 = vmax.f32 %v4753, 0.0
        %v4818 = vmax.f32 %v4758, 0.0
        %v4819 = vmax.f32 %v4761, 0.0
        %v4820 = vmax.f32 %v4766, 0.0
        %v4821 = vmax.f32 %v4769, 0.0
        %v4822 = vmax.f32 %v4774, 0.0
        %v4823 = vmax.f32 %v4777, 0.0
        %v4824 = vmax.f32 %v4782, 0.0
        %v4825 = vmax.f32 %v4785, 0.0
        %v4826 = vmax.f32 %v4790, 0.0
        %v4827 = vmax.f32 %v4793, 0.0
        %v4860 = vcombine.high %v4796, %v4796
        %v4862 = vunpack.c.l.s4 1983009808
        %v4863 = vunpack.c.0.s8 %v4862
        %v4864 = vlaneseq
        %v4865 = vshrl.u32 %v4864, 7
        %v4866 = vsub.s32 %v4863, %v4865
        %v4867 = vrot.slane %v4796, %v4866
        %v4869 = vunpack.c.l.s4 1983009808
        %v4870 = vunpack.c.0.s8 %v4869
        %v4871 = vlaneseq
        %v4872 = vshrl.u32 %v4871, 7
        %v4873 = vsub.s32 %v4870, %v4872
        %v4874 = vrot.slane %v4860, %v4873
        %v4875 = vcombine.high %v4867, %v4867
        %v4876 = vcombine.high %v4874, %v4874
        %v4877 = vcombine.high %v4797, %v4797
        %v4879 = vunpack.c.l.s4 1983009808
        %v4880 = vunpack.c.0.s8 %v4879
        %v4881 = vlaneseq
        %v4882 = vshrl.u32 %v4881, 7
        %v4883 = vsub.s32 %v4880, %v4882
        %v4884 = vrot.slane %v4797, %v4883
        %v4886 = vunpack.c.l.s4 1983009808
        %v4887 = vunpack.c.0.s8 %v4886
        %v4888 = vlaneseq
        %v4889 = vshrl.u32 %v4888, 7
        %v4890 = vsub.s32 %v4887, %v4889
        %v4891 = vrot.slane %v4877, %v4890
        %v4892 = vcombine.high %v4884, %v4884
        %v4893 = vcombine.high %v4891, %v4891
        %v4894 = vcombine.high %v4798, %v4798
        %v4896 = vunpack.c.l.s4 1983009808
        %v4897 = vunpack.c.0.s8 %v4896
        %v4898 = vlaneseq
        %v4899 = vshrl.u32 %v4898, 7
        %v4900 = vsub.s32 %v4897, %v4899
        %v4901 = vrot.slane %v4798, %v4900
        %v4903 = vunpack.c.l.s4 1983009808
        %v4904 = vunpack.c.0.s8 %v4903
        %v4905 = vlaneseq
        %v4906 = vshrl.u32 %v4905, 7
        %v4907 = vsub.s32 %v4904, %v4906
        %v4908 = vrot.slane %v4894, %v4907
        %v4909 = vcombine.high %v4901, %v4901
        %v4910 = vcombine.high %v4908, %v4908
        %v4911 = vcombine.high %v4799, %v4799
        %v4913 = vunpack.c.l.s4 1983009808
        %v4914 = vunpack.c.0.s8 %v4913
        %v4915 = vlaneseq
        %v4916 = vshrl.u32 %v4915, 7
        %v4917 = vsub.s32 %v4914, %v4916
        %v4918 = vrot.slane %v4799, %v4917
        %v4920 = vunpack.c.l.s4 1983009808
        %v4921 = vunpack.c.0.s8 %v4920
        %v4922 = vlaneseq
        %v4923 = vshrl.u32 %v4922, 7
        %v4924 = vsub.s32 %v4921, %v4923
        %v4925 = vrot.slane %v4911, %v4924
        %v4926 = vcombine.high %v4918, %v4918
        %v4927 = vcombine.high %v4925, %v4925
        %v4928 = vcombine.high %v4800, %v4800
        %v4930 = vunpack.c.l.s4 1983009808
        %v4931 = vunpack.c.0.s8 %v4930
        %v4932 = vlaneseq
        %v4933 = vshrl.u32 %v4932, 7
        %v4934 = vsub.s32 %v4931, %v4933
        %v4935 = vrot.slane %v4800, %v4934
        %v4937 = vunpack.c.l.s4 1983009808
        %v4938 = vunpack.c.0.s8 %v4937
        %v4939 = vlaneseq
        %v4940 = vshrl.u32 %v4939, 7
        %v4941 = vsub.s32 %v4938, %v4940
        %v4942 = vrot.slane %v4928, %v4941
        %v4943 = vcombine.high %v4935, %v4935
        %v4944 = vcombine.high %v4942, %v4942
        %v4945 = vcombine.high %v4801, %v4801
        %v4947 = vunpack.c.l.s4 1983009808
        %v4948 = vunpack.c.0.s8 %v4947
        %v4949 = vlaneseq
        %v4950 = vshrl.u32 %v4949, 7
        %v4951 = vsub.s32 %v4948, %v4950
        %v4952 = vrot.slane %v4801, %v4951
        %v4954 = vunpack.c.l.s4 1983009808
        %v4955 = vunpack.c.0.s8 %v4954
        %v4956 = vlaneseq
        %v4957 = vshrl.u32 %v4956, 7
        %v4958 = vsub.s32 %v4955, %v4957
        %v4959 = vrot.slane %v4945, %v4958
        %v4960 = vcombine.high %v4952, %v4952
        %v4961 = vcombine.high %v4959, %v4959
        %v4962 = vcombine.high %v4802, %v4802
        %v4964 = vunpack.c.l.s4 1983009808
        %v4965 = vunpack.c.0.s8 %v4964
        %v4966 = vlaneseq
        %v4967 = vshrl.u32 %v4966, 7
        %v4968 = vsub.s32 %v4965, %v4967
        %v4969 = vrot.slane %v4802, %v4968
        %v4971 = vunpack.c.l.s4 1983009808
        %v4972 = vunpack.c.0.s8 %v4971
        %v4973 = vlaneseq
        %v4974 = vshrl.u32 %v4973, 7
        %v4975 = vsub.s32 %v4972, %v4974
        %v4976 = vrot.slane %v4962, %v4975
        %v4977 = vcombine.high %v4969, %v4969
        %v4978 = vcombine.high %v4976, %v4976
        %v4979 = vcombine.high %v4803, %v4803
        %v4981 = vunpack.c.l.s4 1983009808
        %v4982 = vunpack.c.0.s8 %v4981
        %v4983 = vlaneseq
        %v4984 = vshrl.u32 %v4983, 7
        %v4985 = vsub.s32 %v4982, %v4984
        %v4986 = vrot.slane %v4803, %v4985
        %v4988 = vunpack.c.l.s4 1983009808
        %v4989 = vunpack.c.0.s8 %v4988
        %v4990 = vlaneseq
        %v4991 = vshrl.u32 %v4990, 7
        %v4992 = vsub.s32 %v4989, %v4991
        %v4993 = vrot.slane %v4979, %v4992
        %v4994 = vcombine.high %v4986, %v4986
        %v4995 = vcombine.high %v4993, %v4993
        %v4996 = vcombine.high %v4804, %v4804
        %v4998 = vunpack.c.l.s4 1983009808
        %v4999 = vunpack.c.0.s8 %v4998
        %v5000 = vlaneseq
        %v5001 = vshrl.u32 %v5000, 7
        %v5002 = vsub.s32 %v4999, %v5001
        %v5003 = vrot.slane %v4804, %v5002
        %v5005 = vunpack.c.l.s4 1983009808
        %v5006 = vunpack.c.0.s8 %v5005
        %v5007 = vlaneseq
        %v5008 = vshrl.u32 %v5007, 7
        %v5009 = vsub.s32 %v5006, %v5008
        %v5010 = vrot.slane %v4996, %v5009
        %v5011 = vcombine.high %v5003, %v5003
        %v5012 = vcombine.high %v5010, %v5010
        %v5013 = vcombine.high %v4805, %v4805
        %v5015 = vunpack.c.l.s4 1983009808
        %v5016 = vunpack.c.0.s8 %v5015
        %v5017 = vlaneseq
        %v5018 = vshrl.u32 %v5017, 7
        %v5019 = vsub.s32 %v5016, %v5018
        %v5020 = vrot.slane %v4805, %v5019
        %v5022 = vunpack.c.l.s4 1983009808
        %v5023 = vunpack.c.0.s8 %v5022
        %v5024 = vlaneseq
        %v5025 = vshrl.u32 %v5024, 7
        %v5026 = vsub.s32 %v5023, %v5025
        %v5027 = vrot.slane %v5013, %v5026
        %v5028 = vcombine.high %v5020, %v5020
        %v5029 = vcombine.high %v5027, %v5027
        %v5030 = vcombine.high %v4806, %v4806
        %v5032 = vunpack.c.l.s4 1983009808
        %v5033 = vunpack.c.0.s8 %v5032
        %v5034 = vlaneseq
        %v5035 = vshrl.u32 %v5034, 7
        %v5036 = vsub.s32 %v5033, %v5035
        %v5037 = vrot.slane %v4806, %v5036
        %v5039 = vunpack.c.l.s4 1983009808
        %v5040 = vunpack.c.0.s8 %v5039
        %v5041 = vlaneseq
        %v5042 = vshrl.u32 %v5041, 7
        %v5043 = vsub.s32 %v5040, %v5042
        %v5044 = vrot.slane %v5030, %v5043
        %v5045 = vcombine.high %v5037, %v5037
        %v5046 = vcombine.high %v5044, %v5044
        %v5047 = vcombine.high %v4807, %v4807
        %v5049 = vunpack.c.l.s4 1983009808
        %v5050 = vunpack.c.0.s8 %v5049
        %v5051 = vlaneseq
        %v5052 = vshrl.u32 %v5051, 7
        %v5053 = vsub.s32 %v5050, %v5052
        %v5054 = vrot.slane %v4807, %v5053
        %v5056 = vunpack.c.l.s4 1983009808
        %v5057 = vunpack.c.0.s8 %v5056
        %v5058 = vlaneseq
        %v5059 = vshrl.u32 %v5058, 7
        %v5060 = vsub.s32 %v5057, %v5059
        %v5061 = vrot.slane %v5047, %v5060
        %v5062 = vcombine.high %v5054, %v5054
        %v5063 = vcombine.high %v5061, %v5061
        %v5064 = vcombine.high %v4808, %v4808
        %v5066 = vunpack.c.l.s4 1983009808
        %v5067 = vunpack.c.0.s8 %v5066
        %v5068 = vlaneseq
        %v5069 = vshrl.u32 %v5068, 7
        %v5070 = vsub.s32 %v5067, %v5069
        %v5071 = vrot.slane %v4808, %v5070
        %v5073 = vunpack.c.l.s4 1983009808
        %v5074 = vunpack.c.0.s8 %v5073
        %v5075 = vlaneseq
        %v5076 = vshrl.u32 %v5075, 7
        %v5077 = vsub.s32 %v5074, %v5076
        %v5078 = vrot.slane %v5064, %v5077
        %v5079 = vcombine.high %v5071, %v5071
        %v5080 = vcombine.high %v5078, %v5078
        %v5081 = vcombine.high %v4809, %v4809
        %v5083 = vunpack.c.l.s4 1983009808
        %v5084 = vunpack.c.0.s8 %v5083
        %v5085 = vlaneseq
        %v5086 = vshrl.u32 %v5085, 7
        %v5087 = vsub.s32 %v5084, %v5086
        %v5088 = vrot.slane %v4809, %v5087
        %v5090 = vunpack.c.l.s4 1983009808
        %v5091 = vunpack.c.0.s8 %v5090
        %v5092 = vlaneseq
        %v5093 = vshrl.u32 %v5092, 7
        %v5094 = vsub.s32 %v5091, %v5093
        %v5095 = vrot.slane %v5081, %v5094
        %v5096 = vcombine.high %v5088, %v5088
        %v5097 = vcombine.high %v5095, %v5095
        %v5098 = vcombine.high %v4810, %v4810
        %v5100 = vunpack.c.l.s4 1983009808
        %v5101 = vunpack.c.0.s8 %v5100
        %v5102 = vlaneseq
        %v5103 = vshrl.u32 %v5102, 7
        %v5104 = vsub.s32 %v5101, %v5103
        %v5105 = vrot.slane %v4810, %v5104
        %v5107 = vunpack.c.l.s4 1983009808
        %v5108 = vunpack.c.0.s8 %v5107
        %v5109 = vlaneseq
        %v5110 = vshrl.u32 %v5109, 7
        %v5111 = vsub.s32 %v5108, %v5110
        %v5112 = vrot.slane %v5098, %v5111
        %v5113 = vcombine.high %v5105, %v5105
        %v5114 = vcombine.high %v5112, %v5112
        %v5115 = vcombine.high %v4811, %v4811
        %v5117 = vunpack.c.l.s4 1983009808
        %v5118 = vunpack.c.0.s8 %v5117
        %v5119 = vlaneseq
        %v5120 = vshrl.u32 %v5119, 7
        %v5121 = vsub.s32 %v5118, %v5120
        %v5122 = vrot.slane %v4811, %v5121
        %v5124 = vunpack.c.l.s4 1983009808
        %v5125 = vunpack.c.0.s8 %v5124
        %v5126 = vlaneseq
        %v5127 = vshrl.u32 %v5126, 7
        %v5128 = vsub.s32 %v5125, %v5127
        %v5129 = vrot.slane %v5115, %v5128
        %v5130 = vcombine.high %v5122, %v5122
        %v5131 = vcombine.high %v5129, %v5129
        %v5132 = vcombine.high %v4812, %v4812
        %v5134 = vunpack.c.l.s4 1983009808
        %v5135 = vunpack.c.0.s8 %v5134
        %v5136 = vlaneseq
        %v5137 = vshrl.u32 %v5136, 7
        %v5138 = vsub.s32 %v5135, %v5137
        %v5139 = vrot.slane %v4812, %v5138
        %v5141 = vunpack.c.l.s4 1983009808
        %v5142 = vunpack.c.0.s8 %v5141
        %v5143 = vlaneseq
        %v5144 = vshrl.u32 %v5143, 7
        %v5145 = vsub.s32 %v5142, %v5144
        %v5146 = vrot.slane %v5132, %v5145
        %v5147 = vcombine.high %v5139, %v5139
        %v5148 = vcombine.high %v5146, %v5146
        %v5149 = vcombine.high %v4813, %v4813
        %v5151 = vunpack.c.l.s4 1983009808
        %v5152 = vunpack.c.0.s8 %v5151
        %v5153 = vlaneseq
        %v5154 = vshrl.u32 %v5153, 7
        %v5155 = vsub.s32 %v5152, %v5154
        %v5156 = vrot.slane %v4813, %v5155
        %v5158 = vunpack.c.l.s4 1983009808
        %v5159 = vunpack.c.0.s8 %v5158
        %v5160 = vlaneseq
        %v5161 = vshrl.u32 %v5160, 7
        %v5162 = vsub.s32 %v5159, %v5161
        %v5163 = vrot.slane %v5149, %v5162
        %v5164 = vcombine.high %v5156, %v5156
        %v5165 = vcombine.high %v5163, %v5163
        %v5166 = vcombine.high %v4814, %v4814
        %v5168 = vunpack.c.l.s4 1983009808
        %v5169 = vunpack.c.0.s8 %v5168
        %v5170 = vlaneseq
        %v5171 = vshrl.u32 %v5170, 7
        %v5172 = vsub.s32 %v5169, %v5171
        %v5173 = vrot.slane %v4814, %v5172
        %v5175 = vunpack.c.l.s4 1983009808
        %v5176 = vunpack.c.0.s8 %v5175
        %v5177 = vlaneseq
        %v5178 = vshrl.u32 %v5177, 7
        %v5179 = vsub.s32 %v5176, %v5178
        %v5180 = vrot.slane %v5166, %v5179
        %v5181 = vcombine.high %v5173, %v5173
        %v5182 = vcombine.high %v5180, %v5180
        %v5183 = vcombine.high %v4815, %v4815
        %v5185 = vunpack.c.l.s4 1983009808
        %v5186 = vunpack.c.0.s8 %v5185
        %v5187 = vlaneseq
        %v5188 = vshrl.u32 %v5187, 7
        %v5189 = vsub.s32 %v5186, %v5188
        %v5190 = vrot.slane %v4815, %v5189
        %v5192 = vunpack.c.l.s4 1983009808
        %v5193 = vunpack.c.0.s8 %v5192
        %v5194 = vlaneseq
        %v5195 = vshrl.u32 %v5194, 7
        %v5196 = vsub.s32 %v5193, %v5195
        %v5197 = vrot.slane %v5183, %v5196
        %v5198 = vcombine.high %v5190, %v5190
        %v5199 = vcombine.high %v5197, %v5197
        %v5200 = vcombine.high %v4816, %v4816
        %v5202 = vunpack.c.l.s4 1983009808
        %v5203 = vunpack.c.0.s8 %v5202
        %v5204 = vlaneseq
        %v5205 = vshrl.u32 %v5204, 7
        %v5206 = vsub.s32 %v5203, %v5205
        %v5207 = vrot.slane %v4816, %v5206
        %v5209 = vunpack.c.l.s4 1983009808
        %v5210 = vunpack.c.0.s8 %v5209
        %v5211 = vlaneseq
        %v5212 = vshrl.u32 %v5211, 7
        %v5213 = vsub.s32 %v5210, %v5212
        %v5214 = vrot.slane %v5200, %v5213
        %v5215 = vcombine.high %v5207, %v5207
        %v5216 = vcombine.high %v5214, %v5214
        %v5217 = vcombine.high %v4817, %v4817
        %v5219 = vunpack.c.l.s4 1983009808
        %v5220 = vunpack.c.0.s8 %v5219
        %v5221 = vlaneseq
        %v5222 = vshrl.u32 %v5221, 7
        %v5223 = vsub.s32 %v5220, %v5222
        %v5224 = vrot.slane %v4817, %v5223
        %v5226 = vunpack.c.l.s4 1983009808
        %v5227 = vunpack.c.0.s8 %v5226
        %v5228 = vlaneseq
        %v5229 = vshrl.u32 %v5228, 7
        %v5230 = vsub.s32 %v5227, %v5229
        %v5231 = vrot.slane %v5217, %v5230
        %v5232 = vcombine.high %v5224, %v5224
        %v5233 = vcombine.high %v5231, %v5231
        %v5234 = vcombine.high %v4818, %v4818
        %v5236 = vunpack.c.l.s4 1983009808
        %v5237 = vunpack.c.0.s8 %v5236
        %v5238 = vlaneseq
        %v5239 = vshrl.u32 %v5238, 7
        %v5240 = vsub.s32 %v5237, %v5239
        %v5241 = vrot.slane %v4818, %v5240
        %v5243 = vunpack.c.l.s4 1983009808
        %v5244 = vunpack.c.0.s8 %v5243
        %v5245 = vlaneseq
        %v5246 = vshrl.u32 %v5245, 7
        %v5247 = vsub.s32 %v5244, %v5246
        %v5248 = vrot.slane %v5234, %v5247
        %v5249 = vcombine.high %v5241, %v5241
        %v5250 = vcombine.high %v5248, %v5248
        %v5251 = vcombine.high %v4819, %v4819
        %v5253 = vunpack.c.l.s4 1983009808
        %v5254 = vunpack.c.0.s8 %v5253
        %v5255 = vlaneseq
        %v5256 = vshrl.u32 %v5255, 7
        %v5257 = vsub.s32 %v5254, %v5256
        %v5258 = vrot.slane %v4819, %v5257
        %v5260 = vunpack.c.l.s4 1983009808
        %v5261 = vunpack.c.0.s8 %v5260
        %v5262 = vlaneseq
        %v5263 = vshrl.u32 %v5262, 7
        %v5264 = vsub.s32 %v5261, %v5263
        %v5265 = vrot.slane %v5251, %v5264
        %v5266 = vcombine.high %v5258, %v5258
        %v5267 = vcombine.high %v5265, %v5265
        %v5268 = vcombine.high %v4820, %v4820
        %v5270 = vunpack.c.l.s4 1983009808
        %v5271 = vunpack.c.0.s8 %v5270
        %v5272 = vlaneseq
        %v5273 = vshrl.u32 %v5272, 7
        %v5274 = vsub.s32 %v5271, %v5273
        %v5275 = vrot.slane %v4820, %v5274
        %v5277 = vunpack.c.l.s4 1983009808
        %v5278 = vunpack.c.0.s8 %v5277
        %v5279 = vlaneseq
        %v5280 = vshrl.u32 %v5279, 7
        %v5281 = vsub.s32 %v5278, %v5280
        %v5282 = vrot.slane %v5268, %v5281
        %v5283 = vcombine.high %v5275, %v5275
        %v5284 = vcombine.high %v5282, %v5282
        %v5285 = vcombine.high %v4821, %v4821
        %v5287 = vunpack.c.l.s4 1983009808
        %v5288 = vunpack.c.0.s8 %v5287
        %v5289 = vlaneseq
        %v5290 = vshrl.u32 %v5289, 7
        %v5291 = vsub.s32 %v5288, %v5290
        %v5292 = vrot.slane %v4821, %v5291
        %v5294 = vunpack.c.l.s4 1983009808
        %v5295 = vunpack.c.0.s8 %v5294
        %v5296 = vlaneseq
        %v5297 = vshrl.u32 %v5296, 7
        %v5298 = vsub.s32 %v5295, %v5297
        %v5299 = vrot.slane %v5285, %v5298
        %v5300 = vcombine.high %v5292, %v5292
        %v5301 = vcombine.high %v5299, %v5299
        %v5302 = vcombine.high %v4822, %v4822
        %v5304 = vunpack.c.l.s4 1983009808
        %v5305 = vunpack.c.0.s8 %v5304
        %v5306 = vlaneseq
        %v5307 = vshrl.u32 %v5306, 7
        %v5308 = vsub.s32 %v5305, %v5307
        %v5309 = vrot.slane %v4822, %v5308
        %v5311 = vunpack.c.l.s4 1983009808
        %v5312 = vunpack.c.0.s8 %v5311
        %v5313 = vlaneseq
        %v5314 = vshrl.u32 %v5313, 7
        %v5315 = vsub.s32 %v5312, %v5314
        %v5316 = vrot.slane %v5302, %v5315
        %v5317 = vcombine.high %v5309, %v5309
        %v5318 = vcombine.high %v5316, %v5316
        %v5319 = vcombine.high %v4823, %v4823
        %v5321 = vunpack.c.l.s4 1983009808
        %v5322 = vunpack.c.0.s8 %v5321
        %v5323 = vlaneseq
        %v5324 = vshrl.u32 %v5323, 7
        %v5325 = vsub.s32 %v5322, %v5324
        %v5326 = vrot.slane %v4823, %v5325
        %v5328 = vunpack.c.l.s4 1983009808
        %v5329 = vunpack.c.0.s8 %v5328
        %v5330 = vlaneseq
        %v5331 = vshrl.u32 %v5330, 7
        %v5332 = vsub.s32 %v5329, %v5331
        %v5333 = vrot.slane %v5319, %v5332
        %v5334 = vcombine.high %v5326, %v5326
        %v5335 = vcombine.high %v5333, %v5333
        %v5336 = vcombine.high %v4824, %v4824
        %v5338 = vunpack.c.l.s4 1983009808
        %v5339 = vunpack.c.0.s8 %v5338
        %v5340 = vlaneseq
        %v5341 = vshrl.u32 %v5340, 7
        %v5342 = vsub.s32 %v5339, %v5341
        %v5343 = vrot.slane %v4824, %v5342
        %v5345 = vunpack.c.l.s4 1983009808
        %v5346 = vunpack.c.0.s8 %v5345
        %v5347 = vlaneseq
        %v5348 = vshrl.u32 %v5347, 7
        %v5349 = vsub.s32 %v5346, %v5348
        %v5350 = vrot.slane %v5336, %v5349
        %v5351 = vcombine.high %v5343, %v5343
        %v5352 = vcombine.high %v5350, %v5350
        %v5353 = vcombine.high %v4825, %v4825
        %v5355 = vunpack.c.l.s4 1983009808
        %v5356 = vunpack.c.0.s8 %v5355
        %v5357 = vlaneseq
        %v5358 = vshrl.u32 %v5357, 7
        %v5359 = vsub.s32 %v5356, %v5358
        %v5360 = vrot.slane %v4825, %v5359
        %v5362 = vunpack.c.l.s4 1983009808
        %v5363 = vunpack.c.0.s8 %v5362
        %v5364 = vlaneseq
        %v5365 = vshrl.u32 %v5364, 7
        %v5366 = vsub.s32 %v5363, %v5365
        %v5367 = vrot.slane %v5353, %v5366
        %v5368 = vcombine.high %v5360, %v5360
        %v5369 = vcombine.high %v5367, %v5367
        %v5370 = vcombine.high %v4826, %v4826
        %v5372 = vunpack.c.l.s4 1983009808
        %v5373 = vunpack.c.0.s8 %v5372
        %v5374 = vlaneseq
        %v5375 = vshrl.u32 %v5374, 7
        %v5376 = vsub.s32 %v5373, %v5375
        %v5377 = vrot.slane %v4826, %v5376
        %v5379 = vunpack.c.l.s4 1983009808
        %v5380 = vunpack.c.0.s8 %v5379
        %v5381 = vlaneseq
        %v5382 = vshrl.u32 %v5381, 7
        %v5383 = vsub.s32 %v5380, %v5382
        %v5384 = vrot.slane %v5370, %v5383
        %v5385 = vcombine.high %v5377, %v5377
        %v5386 = vcombine.high %v5384, %v5384
        %v5387 = vcombine.high %v4827, %v4827
        %v5389 = vunpack.c.l.s4 1983009808
        %v5390 = vunpack.c.0.s8 %v5389
        %v5391 = vlaneseq
        %v5392 = vshrl.u32 %v5391, 7
        %v5393 = vsub.s32 %v5390, %v5392
        %v5394 = vrot.slane %v4827, %v5393
        %v5396 = vunpack.c.l.s4 1983009808
        %v5397 = vunpack.c.0.s8 %v5396
        %v5398 = vlaneseq
        %v5399 = vshrl.u32 %v5398, 7
        %v5400 = vsub.s32 %v5397, %v5399
        %v5401 = vrot.slane %v5387, %v5400
        %v5402 = vcombine.high %v5394, %v5394
        %v5403 = vcombine.high %v5401, %v5401
        %v5532 = vsel %vm2875, %v4867, -inf
        %v5533 = vrot.slane %v5532, 4
        %v5534 = vmax.f32 %v5532, %v5533
        %v5535 = vrot.slane %v5534, 2
        %v5536 = vmax.f32 %v5534, %v5535
        %v5537 = vrot.slane %v5536, 1
        %v5538 = vmax.f32 %v5536, %v5537
        %v5539 = vsel %vm2875, %v4875, -inf
        %v5540 = vrot.slane %v5539, 4
        %v5541 = vmax.f32 %v5539, %v5540
        %v5542 = vrot.slane %v5541, 2
        %v5543 = vmax.f32 %v5541, %v5542
        %v5544 = vrot.slane %v5543, 1
        %v5545 = vmax.f32 %v5543, %v5544
        %v5546 = vsel %vm2875, %v4874, -inf
        %v5547 = vrot.slane %v5546, 4
        %v5548 = vmax.f32 %v5546, %v5547
        %v5549 = vrot.slane %v5548, 2
        %v5550 = vmax.f32 %v5548, %v5549
        %v5551 = vrot.slane %v5550, 1
        %v5552 = vmax.f32 %v5550, %v5551
        %v5553 = vsel %vm2875, %v4876, -inf
        %v5554 = vrot.slane %v5553, 4
        %v5555 = vmax.f32 %v5553, %v5554
        %v5556 = vrot.slane %v5555, 2
        %v5557 = vmax.f32 %v5555, %v5556
        %v5558 = vrot.slane %v5557, 1
        %v5559 = vmax.f32 %v5557, %v5558
        %v5560 = vsel %vm2875, %v4884, -inf
        %v5561 = vrot.slane %v5560, 4
        %v5562 = vmax.f32 %v5560, %v5561
        %v5563 = vrot.slane %v5562, 2
        %v5564 = vmax.f32 %v5562, %v5563
        %v5565 = vrot.slane %v5564, 1
        %v5566 = vmax.f32 %v5564, %v5565
        %v5567 = vsel %vm2875, %v4892, -inf
        %v5568 = vrot.slane %v5567, 4
        %v5569 = vmax.f32 %v5567, %v5568
        %v5570 = vrot.slane %v5569, 2
        %v5571 = vmax.f32 %v5569, %v5570
        %v5572 = vrot.slane %v5571, 1
        %v5573 = vmax.f32 %v5571, %v5572
        %v5574 = vsel %vm2875, %v4891, -inf
        %v5575 = vrot.slane %v5574, 4
        %v5576 = vmax.f32 %v5574, %v5575
        %v5577 = vrot.slane %v5576, 2
        %v5578 = vmax.f32 %v5576, %v5577
        %v5579 = vrot.slane %v5578, 1
        %v5580 = vmax.f32 %v5578, %v5579
        %v5581 = vsel %vm2875, %v4893, -inf
        %v5582 = vrot.slane %v5581, 4
        %v5583 = vmax.f32 %v5581, %v5582
        %v5584 = vrot.slane %v5583, 2
        %v5585 = vmax.f32 %v5583, %v5584
        %v5586 = vrot.slane %v5585, 1
        %v5587 = vmax.f32 %v5585, %v5586
        %v5588 = vsel %vm2875, %v4901, -inf
        %v5589 = vrot.slane %v5588, 4
        %v5590 = vmax.f32 %v5588, %v5589
        %v5591 = vrot.slane %v5590, 2
        %v5592 = vmax.f32 %v5590, %v5591
        %v5593 = vrot.slane %v5592, 1
        %v5594 = vmax.f32 %v5592, %v5593
        %v5595 = vsel %vm2875, %v4909, -inf
        %v5596 = vrot.slane %v5595, 4
        %v5597 = vmax.f32 %v5595, %v5596
        %v5598 = vrot.slane %v5597, 2
        %v5599 = vmax.f32 %v5597, %v5598
        %v5600 = vrot.slane %v5599, 1
        %v5601 = vmax.f32 %v5599, %v5600
        %v5602 = vsel %vm2875, %v4908, -inf
        %v5603 = vrot.slane %v5602, 4
        %v5604 = vmax.f32 %v5602, %v5603
        %v5605 = vrot.slane %v5604, 2
        %v5606 = vmax.f32 %v5604, %v5605
        %v5607 = vrot.slane %v5606, 1
        %v5608 = vmax.f32 %v5606, %v5607
        %v5609 = vsel %vm2875, %v4910, -inf
        %v5610 = vrot.slane %v5609, 4
        %v5611 = vmax.f32 %v5609, %v5610
        %v5612 = vrot.slane %v5611, 2
        %v5613 = vmax.f32 %v5611, %v5612
        %v5614 = vrot.slane %v5613, 1
        %v5615 = vmax.f32 %v5613, %v5614
        %v5616 = vsel %vm2875, %v4918, -inf
        %v5617 = vrot.slane %v5616, 4
        %v5618 = vmax.f32 %v5616, %v5617
        %v5619 = vrot.slane %v5618, 2
        %v5620 = vmax.f32 %v5618, %v5619
        %v5621 = vrot.slane %v5620, 1
        %v5622 = vmax.f32 %v5620, %v5621
        %v5623 = vsel %vm2875, %v4926, -inf
        %v5624 = vrot.slane %v5623, 4
        %v5625 = vmax.f32 %v5623, %v5624
        %v5626 = vrot.slane %v5625, 2
        %v5627 = vmax.f32 %v5625, %v5626
        %v5628 = vrot.slane %v5627, 1
        %v5629 = vmax.f32 %v5627, %v5628
        %v5630 = vsel %vm2875, %v4925, -inf
        %v5631 = vrot.slane %v5630, 4
        %v5632 = vmax.f32 %v5630, %v5631
        %v5633 = vrot.slane %v5632, 2
        %v5634 = vmax.f32 %v5632, %v5633
        %v5635 = vrot.slane %v5634, 1
        %v5636 = vmax.f32 %v5634, %v5635
        %v5637 = vsel %vm2875, %v4927, -inf
        %v5638 = vrot.slane %v5637, 4
        %v5639 = vmax.f32 %v5637, %v5638
        %v5640 = vrot.slane %v5639, 2
        %v5641 = vmax.f32 %v5639, %v5640
        %v5642 = vrot.slane %v5641, 1
        %v5643 = vmax.f32 %v5641, %v5642
        %v5644 = vsel %vm2875, %v4935, -inf
        %v5645 = vrot.slane %v5644, 4
        %v5646 = vmax.f32 %v5644, %v5645
        %v5647 = vrot.slane %v5646, 2
        %v5648 = vmax.f32 %v5646, %v5647
        %v5649 = vrot.slane %v5648, 1
        %v5650 = vmax.f32 %v5648, %v5649
        %v5651 = vsel %vm2875, %v4943, -inf
        %v5652 = vrot.slane %v5651, 4
        %v5653 = vmax.f32 %v5651, %v5652
        %v5654 = vrot.slane %v5653, 2
        %v5655 = vmax.f32 %v5653, %v5654
        %v5656 = vrot.slane %v5655, 1
        %v5657 = vmax.f32 %v5655, %v5656
        %v5658 = vsel %vm2875, %v4942, -inf
        %v5659 = vrot.slane %v5658, 4
        %v5660 = vmax.f32 %v5658, %v5659
        %v5661 = vrot.slane %v5660, 2
        %v5662 = vmax.f32 %v5660, %v5661
        %v5663 = vrot.slane %v5662, 1
        %v5664 = vmax.f32 %v5662, %v5663
        %v5665 = vsel %vm2875, %v4944, -inf
        %v5666 = vrot.slane %v5665, 4
        %v5667 = vmax.f32 %v5665, %v5666
        %v5668 = vrot.slane %v5667, 2
        %v5669 = vmax.f32 %v5667, %v5668
        %v5670 = vrot.slane %v5669, 1
        %v5671 = vmax.f32 %v5669, %v5670
        %v5672 = vsel %vm2875, %v4952, -inf
        %v5673 = vrot.slane %v5672, 4
        %v5674 = vmax.f32 %v5672, %v5673
        %v5675 = vrot.slane %v5674, 2
        %v5676 = vmax.f32 %v5674, %v5675
        %v5677 = vrot.slane %v5676, 1
        %v5678 = vmax.f32 %v5676, %v5677
        %v5679 = vsel %vm2875, %v4960, -inf
        %v5680 = vrot.slane %v5679, 4
        %v5681 = vmax.f32 %v5679, %v5680
        %v5682 = vrot.slane %v5681, 2
        %v5683 = vmax.f32 %v5681, %v5682
        %v5684 = vrot.slane %v5683, 1
        %v5685 = vmax.f32 %v5683, %v5684
        %v5686 = vsel %vm2875, %v4959, -inf
        %v5687 = vrot.slane %v5686, 4
        %v5688 = vmax.f32 %v5686, %v5687
        %v5689 = vrot.slane %v5688, 2
        %v5690 = vmax.f32 %v5688, %v5689
        %v5691 = vrot.slane %v5690, 1
        %v5692 = vmax.f32 %v5690, %v5691
        %v5693 = vsel %vm2875, %v4961, -inf
        %v5694 = vrot.slane %v5693, 4
        %v5695 = vmax.f32 %v5693, %v5694
        %v5696 = vrot.slane %v5695, 2
        %v5697 = vmax.f32 %v5695, %v5696
        %v5698 = vrot.slane %v5697, 1
        %v5699 = vmax.f32 %v5697, %v5698
        %v5700 = vsel %vm2875, %v4969, -inf
        %v5701 = vrot.slane %v5700, 4
        %v5702 = vmax.f32 %v5700, %v5701
        %v5703 = vrot.slane %v5702, 2
        %v5704 = vmax.f32 %v5702, %v5703
        %v5705 = vrot.slane %v5704, 1
        %v5706 = vmax.f32 %v5704, %v5705
        %v5707 = vsel %vm2875, %v4977, -inf
        %v5708 = vrot.slane %v5707, 4
        %v5709 = vmax.f32 %v5707, %v5708
        %v5710 = vrot.slane %v5709, 2
        %v5711 = vmax.f32 %v5709, %v5710
        %v5712 = vrot.slane %v5711, 1
        %v5713 = vmax.f32 %v5711, %v5712
        %v5714 = vsel %vm2875, %v4976, -inf
        %v5715 = vrot.slane %v5714, 4
        %v5716 = vmax.f32 %v5714, %v5715
        %v5717 = vrot.slane %v5716, 2
        %v5718 = vmax.f32 %v5716, %v5717
        %v5719 = vrot.slane %v5718, 1
        %v5720 = vmax.f32 %v5718, %v5719
        %v5721 = vsel %vm2875, %v4978, -inf
        %v5722 = vrot.slane %v5721, 4
        %v5723 = vmax.f32 %v5721, %v5722
        %v5724 = vrot.slane %v5723, 2
        %v5725 = vmax.f32 %v5723, %v5724
        %v5726 = vrot.slane %v5725, 1
        %v5727 = vmax.f32 %v5725, %v5726
        %v5728 = vsel %vm2875, %v4986, -inf
        %v5729 = vrot.slane %v5728, 4
        %v5730 = vmax.f32 %v5728, %v5729
        %v5731 = vrot.slane %v5730, 2
        %v5732 = vmax.f32 %v5730, %v5731
        %v5733 = vrot.slane %v5732, 1
        %v5734 = vmax.f32 %v5732, %v5733
        %v5735 = vsel %vm2875, %v4994, -inf
        %v5736 = vrot.slane %v5735, 4
        %v5737 = vmax.f32 %v5735, %v5736
        %v5738 = vrot.slane %v5737, 2
        %v5739 = vmax.f32 %v5737, %v5738
        %v5740 = vrot.slane %v5739, 1
        %v5741 = vmax.f32 %v5739, %v5740
        %v5742 = vsel %vm2875, %v4993, -inf
        %v5743 = vrot.slane %v5742, 4
        %v5744 = vmax.f32 %v5742, %v5743
        %v5745 = vrot.slane %v5744, 2
        %v5746 = vmax.f32 %v5744, %v5745
        %v5747 = vrot.slane %v5746, 1
        %v5748 = vmax.f32 %v5746, %v5747
        %v5749 = vsel %vm2875, %v4995, -inf
        %v5750 = vrot.slane %v5749, 4
        %v5751 = vmax.f32 %v5749, %v5750
        %v5752 = vrot.slane %v5751, 2
        %v5753 = vmax.f32 %v5751, %v5752
        %v5754 = vrot.slane %v5753, 1
        %v5755 = vmax.f32 %v5753, %v5754
        %v5756 = vsel %vm2875, %v5003, -inf
        %v5757 = vrot.slane %v5756, 4
        %v5758 = vmax.f32 %v5756, %v5757
        %v5759 = vrot.slane %v5758, 2
        %v5760 = vmax.f32 %v5758, %v5759
        %v5761 = vrot.slane %v5760, 1
        %v5762 = vmax.f32 %v5760, %v5761
        %v5763 = vsel %vm2875, %v5011, -inf
        %v5764 = vrot.slane %v5763, 4
        %v5765 = vmax.f32 %v5763, %v5764
        %v5766 = vrot.slane %v5765, 2
        %v5767 = vmax.f32 %v5765, %v5766
        %v5768 = vrot.slane %v5767, 1
        %v5769 = vmax.f32 %v5767, %v5768
        %v5770 = vsel %vm2875, %v5010, -inf
        %v5771 = vrot.slane %v5770, 4
        %v5772 = vmax.f32 %v5770, %v5771
        %v5773 = vrot.slane %v5772, 2
        %v5774 = vmax.f32 %v5772, %v5773
        %v5775 = vrot.slane %v5774, 1
        %v5776 = vmax.f32 %v5774, %v5775
        %v5777 = vsel %vm2875, %v5012, -inf
        %v5778 = vrot.slane %v5777, 4
        %v5779 = vmax.f32 %v5777, %v5778
        %v5780 = vrot.slane %v5779, 2
        %v5781 = vmax.f32 %v5779, %v5780
        %v5782 = vrot.slane %v5781, 1
        %v5783 = vmax.f32 %v5781, %v5782
        %v5784 = vsel %vm2875, %v5020, -inf
        %v5785 = vrot.slane %v5784, 4
        %v5786 = vmax.f32 %v5784, %v5785
        %v5787 = vrot.slane %v5786, 2
        %v5788 = vmax.f32 %v5786, %v5787
        %v5789 = vrot.slane %v5788, 1
        %v5790 = vmax.f32 %v5788, %v5789
        %v5791 = vsel %vm2875, %v5028, -inf
        %v5792 = vrot.slane %v5791, 4
        %v5793 = vmax.f32 %v5791, %v5792
        %v5794 = vrot.slane %v5793, 2
        %v5795 = vmax.f32 %v5793, %v5794
        %v5796 = vrot.slane %v5795, 1
        %v5797 = vmax.f32 %v5795, %v5796
        %v5798 = vsel %vm2875, %v5027, -inf
        %v5799 = vrot.slane %v5798, 4
        %v5800 = vmax.f32 %v5798, %v5799
        %v5801 = vrot.slane %v5800, 2
        %v5802 = vmax.f32 %v5800, %v5801
        %v5803 = vrot.slane %v5802, 1
        %v5804 = vmax.f32 %v5802, %v5803
        %v5805 = vsel %vm2875, %v5029, -inf
        %v5806 = vrot.slane %v5805, 4
        %v5807 = vmax.f32 %v5805, %v5806
        %v5808 = vrot.slane %v5807, 2
        %v5809 = vmax.f32 %v5807, %v5808
        %v5810 = vrot.slane %v5809, 1
        %v5811 = vmax.f32 %v5809, %v5810
        %v5812 = vsel %vm2875, %v5037, -inf
        %v5813 = vrot.slane %v5812, 4
        %v5814 = vmax.f32 %v5812, %v5813
        %v5815 = vrot.slane %v5814, 2
        %v5816 = vmax.f32 %v5814, %v5815
        %v5817 = vrot.slane %v5816, 1
        %v5818 = vmax.f32 %v5816, %v5817
        %v5819 = vsel %vm2875, %v5045, -inf
        %v5820 = vrot.slane %v5819, 4
        %v5821 = vmax.f32 %v5819, %v5820
        %v5822 = vrot.slane %v5821, 2
        %v5823 = vmax.f32 %v5821, %v5822
        %v5824 = vrot.slane %v5823, 1
        %v5825 = vmax.f32 %v5823, %v5824
        %v5826 = vsel %vm2875, %v5044, -inf
        %v5827 = vrot.slane %v5826, 4
        %v5828 = vmax.f32 %v5826, %v5827
        %v5829 = vrot.slane %v5828, 2
        %v5830 = vmax.f32 %v5828, %v5829
        %v5831 = vrot.slane %v5830, 1
        %v5832 = vmax.f32 %v5830, %v5831
        %v5833 = vsel %vm2875, %v5046, -inf
        %v5834 = vrot.slane %v5833, 4
        %v5835 = vmax.f32 %v5833, %v5834
        %v5836 = vrot.slane %v5835, 2
        %v5837 = vmax.f32 %v5835, %v5836
        %v5838 = vrot.slane %v5837, 1
        %v5839 = vmax.f32 %v5837, %v5838
        %v5840 = vsel %vm2875, %v5054, -inf
        %v5841 = vrot.slane %v5840, 4
        %v5842 = vmax.f32 %v5840, %v5841
        %v5843 = vrot.slane %v5842, 2
        %v5844 = vmax.f32 %v5842, %v5843
        %v5845 = vrot.slane %v5844, 1
        %v5846 = vmax.f32 %v5844, %v5845
        %v5847 = vsel %vm2875, %v5062, -inf
        %v5848 = vrot.slane %v5847, 4
        %v5849 = vmax.f32 %v5847, %v5848
        %v5850 = vrot.slane %v5849, 2
        %v5851 = vmax.f32 %v5849, %v5850
        %v5852 = vrot.slane %v5851, 1
        %v5853 = vmax.f32 %v5851, %v5852
        %v5854 = vsel %vm2875, %v5061, -inf
        %v5855 = vrot.slane %v5854, 4
        %v5856 = vmax.f32 %v5854, %v5855
        %v5857 = vrot.slane %v5856, 2
        %v5858 = vmax.f32 %v5856, %v5857
        %v5859 = vrot.slane %v5858, 1
        %v5860 = vmax.f32 %v5858, %v5859
        %v5861 = vsel %vm2875, %v5063, -inf
        %v5862 = vrot.slane %v5861, 4
        %v5863 = vmax.f32 %v5861, %v5862
        %v5864 = vrot.slane %v5863, 2
        %v5865 = vmax.f32 %v5863, %v5864
        %v5866 = vrot.slane %v5865, 1
        %v5867 = vmax.f32 %v5865, %v5866
        %v5868 = vsel %vm2875, %v5071, -inf
        %v5869 = vrot.slane %v5868, 4
        %v5870 = vmax.f32 %v5868, %v5869
        %v5871 = vrot.slane %v5870, 2
        %v5872 = vmax.f32 %v5870, %v5871
        %v5873 = vrot.slane %v5872, 1
        %v5874 = vmax.f32 %v5872, %v5873
        %v5875 = vsel %vm2875, %v5079, -inf
        %v5876 = vrot.slane %v5875, 4
        %v5877 = vmax.f32 %v5875, %v5876
        %v5878 = vrot.slane %v5877, 2
        %v5879 = vmax.f32 %v5877, %v5878
        %v5880 = vrot.slane %v5879, 1
        %v5881 = vmax.f32 %v5879, %v5880
        %v5882 = vsel %vm2875, %v5078, -inf
        %v5883 = vrot.slane %v5882, 4
        %v5884 = vmax.f32 %v5882, %v5883
        %v5885 = vrot.slane %v5884, 2
        %v5886 = vmax.f32 %v5884, %v5885
        %v5887 = vrot.slane %v5886, 1
        %v5888 = vmax.f32 %v5886, %v5887
        %v5889 = vsel %vm2875, %v5080, -inf
        %v5890 = vrot.slane %v5889, 4
        %v5891 = vmax.f32 %v5889, %v5890
        %v5892 = vrot.slane %v5891, 2
        %v5893 = vmax.f32 %v5891, %v5892
        %v5894 = vrot.slane %v5893, 1
        %v5895 = vmax.f32 %v5893, %v5894
        %v5896 = vsel %vm2875, %v5088, -inf
        %v5897 = vrot.slane %v5896, 4
        %v5898 = vmax.f32 %v5896, %v5897
        %v5899 = vrot.slane %v5898, 2
        %v5900 = vmax.f32 %v5898, %v5899
        %v5901 = vrot.slane %v5900, 1
        %v5902 = vmax.f32 %v5900, %v5901
        %v5903 = vsel %vm2875, %v5096, -inf
        %v5904 = vrot.slane %v5903, 4
        %v5905 = vmax.f32 %v5903, %v5904
        %v5906 = vrot.slane %v5905, 2
        %v5907 = vmax.f32 %v5905, %v5906
        %v5908 = vrot.slane %v5907, 1
        %v5909 = vmax.f32 %v5907, %v5908
        %v5910 = vsel %vm2875, %v5095, -inf
        %v5911 = vrot.slane %v5910, 4
        %v5912 = vmax.f32 %v5910, %v5911
        %v5913 = vrot.slane %v5912, 2
        %v5914 = vmax.f32 %v5912, %v5913
        %v5915 = vrot.slane %v5914, 1
        %v5916 = vmax.f32 %v5914, %v5915
        %v5917 = vsel %vm2875, %v5097, -inf
        %v5918 = vrot.slane %v5917, 4
        %v5919 = vmax.f32 %v5917, %v5918
        %v5920 = vrot.slane %v5919, 2
        %v5921 = vmax.f32 %v5919, %v5920
        %v5922 = vrot.slane %v5921, 1
        %v5923 = vmax.f32 %v5921, %v5922
        %v5924 = vsel %vm2875, %v5105, -inf
        %v5925 = vrot.slane %v5924, 4
        %v5926 = vmax.f32 %v5924, %v5925
        %v5927 = vrot.slane %v5926, 2
        %v5928 = vmax.f32 %v5926, %v5927
        %v5929 = vrot.slane %v5928, 1
        %v5930 = vmax.f32 %v5928, %v5929
        %v5931 = vsel %vm2875, %v5113, -inf
        %v5932 = vrot.slane %v5931, 4
        %v5933 = vmax.f32 %v5931, %v5932
        %v5934 = vrot.slane %v5933, 2
        %v5935 = vmax.f32 %v5933, %v5934
        %v5936 = vrot.slane %v5935, 1
        %v5937 = vmax.f32 %v5935, %v5936
        %v5938 = vsel %vm2875, %v5112, -inf
        %v5939 = vrot.slane %v5938, 4
        %v5940 = vmax.f32 %v5938, %v5939
        %v5941 = vrot.slane %v5940, 2
        %v5942 = vmax.f32 %v5940, %v5941
        %v5943 = vrot.slane %v5942, 1
        %v5944 = vmax.f32 %v5942, %v5943
        %v5945 = vsel %vm2875, %v5114, -inf
        %v5946 = vrot.slane %v5945, 4
        %v5947 = vmax.f32 %v5945, %v5946
        %v5948 = vrot.slane %v5947, 2
        %v5949 = vmax.f32 %v5947, %v5948
        %v5950 = vrot.slane %v5949, 1
        %v5951 = vmax.f32 %v5949, %v5950
        %v5952 = vsel %vm2875, %v5122, -inf
        %v5953 = vrot.slane %v5952, 4
        %v5954 = vmax.f32 %v5952, %v5953
        %v5955 = vrot.slane %v5954, 2
        %v5956 = vmax.f32 %v5954, %v5955
        %v5957 = vrot.slane %v5956, 1
        %v5958 = vmax.f32 %v5956, %v5957
        %v5959 = vsel %vm2875, %v5130, -inf
        %v5960 = vrot.slane %v5959, 4
        %v5961 = vmax.f32 %v5959, %v5960
        %v5962 = vrot.slane %v5961, 2
        %v5963 = vmax.f32 %v5961, %v5962
        %v5964 = vrot.slane %v5963, 1
        %v5965 = vmax.f32 %v5963, %v5964
        %v5966 = vsel %vm2875, %v5129, -inf
        %v5967 = vrot.slane %v5966, 4
        %v5968 = vmax.f32 %v5966, %v5967
        %v5969 = vrot.slane %v5968, 2
        %v5970 = vmax.f32 %v5968, %v5969
        %v5971 = vrot.slane %v5970, 1
        %v5972 = vmax.f32 %v5970, %v5971
        %v5973 = vsel %vm2875, %v5131, -inf
        %v5974 = vrot.slane %v5973, 4
        %v5975 = vmax.f32 %v5973, %v5974
        %v5976 = vrot.slane %v5975, 2
        %v5977 = vmax.f32 %v5975, %v5976
        %v5978 = vrot.slane %v5977, 1
        %v5979 = vmax.f32 %v5977, %v5978
        %v5980 = vsel %vm2875, %v5139, -inf
        %v5981 = vrot.slane %v5980, 4
        %v5982 = vmax.f32 %v5980, %v5981
        %v5983 = vrot.slane %v5982, 2
        %v5984 = vmax.f32 %v5982, %v5983
        %v5985 = vrot.slane %v5984, 1
        %v5986 = vmax.f32 %v5984, %v5985
        %v5987 = vsel %vm2875, %v5147, -inf
        %v5988 = vrot.slane %v5987, 4
        %v5989 = vmax.f32 %v5987, %v5988
        %v5990 = vrot.slane %v5989, 2
        %v5991 = vmax.f32 %v5989, %v5990
        %v5992 = vrot.slane %v5991, 1
        %v5993 = vmax.f32 %v5991, %v5992
        %v5994 = vsel %vm2875, %v5146, -inf
        %v5995 = vrot.slane %v5994, 4
        %v5996 = vmax.f32 %v5994, %v5995
        %v5997 = vrot.slane %v5996, 2
        %v5998 = vmax.f32 %v5996, %v5997
        %v5999 = vrot.slane %v5998, 1
        %v6000 = vmax.f32 %v5998, %v5999
        %v6001 = vsel %vm2875, %v5148, -inf
        %v6002 = vrot.slane %v6001, 4
        %v6003 = vmax.f32 %v6001, %v6002
        %v6004 = vrot.slane %v6003, 2
        %v6005 = vmax.f32 %v6003, %v6004
        %v6006 = vrot.slane %v6005, 1
        %v6007 = vmax.f32 %v6005, %v6006
        %v6008 = vsel %vm2875, %v5156, -inf
        %v6009 = vrot.slane %v6008, 4
        %v6010 = vmax.f32 %v6008, %v6009
        %v6011 = vrot.slane %v6010, 2
        %v6012 = vmax.f32 %v6010, %v6011
        %v6013 = vrot.slane %v6012, 1
        %v6014 = vmax.f32 %v6012, %v6013
        %v6015 = vsel %vm2875, %v5164, -inf
        %v6016 = vrot.slane %v6015, 4
        %v6017 = vmax.f32 %v6015, %v6016
        %v6018 = vrot.slane %v6017, 2
        %v6019 = vmax.f32 %v6017, %v6018
        %v6020 = vrot.slane %v6019, 1
        %v6021 = vmax.f32 %v6019, %v6020
        %v6022 = vsel %vm2875, %v5163, -inf
        %v6023 = vrot.slane %v6022, 4
        %v6024 = vmax.f32 %v6022, %v6023
        %v6025 = vrot.slane %v6024, 2
        %v6026 = vmax.f32 %v6024, %v6025
        %v6027 = vrot.slane %v6026, 1
        %v6028 = vmax.f32 %v6026, %v6027
        %v6029 = vsel %vm2875, %v5165, -inf
        %v6030 = vrot.slane %v6029, 4
        %v6031 = vmax.f32 %v6029, %v6030
        %v6032 = vrot.slane %v6031, 2
        %v6033 = vmax.f32 %v6031, %v6032
        %v6034 = vrot.slane %v6033, 1
        %v6035 = vmax.f32 %v6033, %v6034
        %v6036 = vsel %vm2875, %v5173, -inf
        %v6037 = vrot.slane %v6036, 4
        %v6038 = vmax.f32 %v6036, %v6037
        %v6039 = vrot.slane %v6038, 2
        %v6040 = vmax.f32 %v6038, %v6039
        %v6041 = vrot.slane %v6040, 1
        %v6042 = vmax.f32 %v6040, %v6041
        %v6043 = vsel %vm2875, %v5181, -inf
        %v6044 = vrot.slane %v6043, 4
        %v6045 = vmax.f32 %v6043, %v6044
        %v6046 = vrot.slane %v6045, 2
        %v6047 = vmax.f32 %v6045, %v6046
        %v6048 = vrot.slane %v6047, 1
        %v6049 = vmax.f32 %v6047, %v6048
        %v6050 = vsel %vm2875, %v5180, -inf
        %v6051 = vrot.slane %v6050, 4
        %v6052 = vmax.f32 %v6050, %v6051
        %v6053 = vrot.slane %v6052, 2
        %v6054 = vmax.f32 %v6052, %v6053
        %v6055 = vrot.slane %v6054, 1
        %v6056 = vmax.f32 %v6054, %v6055
        %v6057 = vsel %vm2875, %v5182, -inf
        %v6058 = vrot.slane %v6057, 4
        %v6059 = vmax.f32 %v6057, %v6058
        %v6060 = vrot.slane %v6059, 2
        %v6061 = vmax.f32 %v6059, %v6060
        %v6062 = vrot.slane %v6061, 1
        %v6063 = vmax.f32 %v6061, %v6062
        %v6064 = vsel %vm2875, %v5190, -inf
        %v6065 = vrot.slane %v6064, 4
        %v6066 = vmax.f32 %v6064, %v6065
        %v6067 = vrot.slane %v6066, 2
        %v6068 = vmax.f32 %v6066, %v6067
        %v6069 = vrot.slane %v6068, 1
        %v6070 = vmax.f32 %v6068, %v6069
        %v6071 = vsel %vm2875, %v5198, -inf
        %v6072 = vrot.slane %v6071, 4
        %v6073 = vmax.f32 %v6071, %v6072
        %v6074 = vrot.slane %v6073, 2
        %v6075 = vmax.f32 %v6073, %v6074
        %v6076 = vrot.slane %v6075, 1
        %v6077 = vmax.f32 %v6075, %v6076
        %v6078 = vsel %vm2875, %v5197, -inf
        %v6079 = vrot.slane %v6078, 4
        %v6080 = vmax.f32 %v6078, %v6079
        %v6081 = vrot.slane %v6080, 2
        %v6082 = vmax.f32 %v6080, %v6081
        %v6083 = vrot.slane %v6082, 1
        %v6084 = vmax.f32 %v6082, %v6083
        %v6085 = vsel %vm2875, %v5199, -inf
        %v6086 = vrot.slane %v6085, 4
        %v6087 = vmax.f32 %v6085, %v6086
        %v6088 = vrot.slane %v6087, 2
        %v6089 = vmax.f32 %v6087, %v6088
        %v6090 = vrot.slane %v6089, 1
        %v6091 = vmax.f32 %v6089, %v6090
        %v6092 = vsel %vm2875, %v5207, -inf
        %v6093 = vrot.slane %v6092, 4
        %v6094 = vmax.f32 %v6092, %v6093
        %v6095 = vrot.slane %v6094, 2
        %v6096 = vmax.f32 %v6094, %v6095
        %v6097 = vrot.slane %v6096, 1
        %v6098 = vmax.f32 %v6096, %v6097
        %v6099 = vsel %vm2875, %v5215, -inf
        %v6100 = vrot.slane %v6099, 4
        %v6101 = vmax.f32 %v6099, %v6100
        %v6102 = vrot.slane %v6101, 2
        %v6103 = vmax.f32 %v6101, %v6102
        %v6104 = vrot.slane %v6103, 1
        %v6105 = vmax.f32 %v6103, %v6104
        %v6106 = vsel %vm2875, %v5214, -inf
        %v6107 = vrot.slane %v6106, 4
        %v6108 = vmax.f32 %v6106, %v6107
        %v6109 = vrot.slane %v6108, 2
        %v6110 = vmax.f32 %v6108, %v6109
        %v6111 = vrot.slane %v6110, 1
        %v6112 = vmax.f32 %v6110, %v6111
        %v6113 = vsel %vm2875, %v5216, -inf
        %v6114 = vrot.slane %v6113, 4
        %v6115 = vmax.f32 %v6113, %v6114
        %v6116 = vrot.slane %v6115, 2
        %v6117 = vmax.f32 %v6115, %v6116
        %v6118 = vrot.slane %v6117, 1
        %v6119 = vmax.f32 %v6117, %v6118
        %v6120 = vsel %vm2875, %v5224, -inf
        %v6121 = vrot.slane %v6120, 4
        %v6122 = vmax.f32 %v6120, %v6121
        %v6123 = vrot.slane %v6122, 2
        %v6124 = vmax.f32 %v6122, %v6123
        %v6125 = vrot.slane %v6124, 1
        %v6126 = vmax.f32 %v6124, %v6125
        %v6127 = vsel %vm2875, %v5232, -inf
        %v6128 = vrot.slane %v6127, 4
        %v6129 = vmax.f32 %v6127, %v6128
        %v6130 = vrot.slane %v6129, 2
        %v6131 = vmax.f32 %v6129, %v6130
        %v6132 = vrot.slane %v6131, 1
        %v6133 = vmax.f32 %v6131, %v6132
        %v6134 = vsel %vm2875, %v5231, -inf
        %v6135 = vrot.slane %v6134, 4
        %v6136 = vmax.f32 %v6134, %v6135
        %v6137 = vrot.slane %v6136, 2
        %v6138 = vmax.f32 %v6136, %v6137
        %v6139 = vrot.slane %v6138, 1
        %v6140 = vmax.f32 %v6138, %v6139
        %v6141 = vsel %vm2875, %v5233, -inf
        %v6142 = vrot.slane %v6141, 4
        %v6143 = vmax.f32 %v6141, %v6142
        %v6144 = vrot.slane %v6143, 2
        %v6145 = vmax.f32 %v6143, %v6144
        %v6146 = vrot.slane %v6145, 1
        %v6147 = vmax.f32 %v6145, %v6146
        %v6148 = vsel %vm2875, %v5241, -inf
        %v6149 = vrot.slane %v6148, 4
        %v6150 = vmax.f32 %v6148, %v6149
        %v6151 = vrot.slane %v6150, 2
        %v6152 = vmax.f32 %v6150, %v6151
        %v6153 = vrot.slane %v6152, 1
        %v6154 = vmax.f32 %v6152, %v6153
        %v6155 = vsel %vm2875, %v5249, -inf
        %v6156 = vrot.slane %v6155, 4
        %v6157 = vmax.f32 %v6155, %v6156
        %v6158 = vrot.slane %v6157, 2
        %v6159 = vmax.f32 %v6157, %v6158
        %v6160 = vrot.slane %v6159, 1
        %v6161 = vmax.f32 %v6159, %v6160
        %v6162 = vsel %vm2875, %v5248, -inf
        %v6163 = vrot.slane %v6162, 4
        %v6164 = vmax.f32 %v6162, %v6163
        %v6165 = vrot.slane %v6164, 2
        %v6166 = vmax.f32 %v6164, %v6165
        %v6167 = vrot.slane %v6166, 1
        %v6168 = vmax.f32 %v6166, %v6167
        %v6169 = vsel %vm2875, %v5250, -inf
        %v6170 = vrot.slane %v6169, 4
        %v6171 = vmax.f32 %v6169, %v6170
        %v6172 = vrot.slane %v6171, 2
        %v6173 = vmax.f32 %v6171, %v6172
        %v6174 = vrot.slane %v6173, 1
        %v6175 = vmax.f32 %v6173, %v6174
        %v6176 = vsel %vm2875, %v5258, -inf
        %v6177 = vrot.slane %v6176, 4
        %v6178 = vmax.f32 %v6176, %v6177
        %v6179 = vrot.slane %v6178, 2
        %v6180 = vmax.f32 %v6178, %v6179
        %v6181 = vrot.slane %v6180, 1
        %v6182 = vmax.f32 %v6180, %v6181
        %v6183 = vsel %vm2875, %v5266, -inf
        %v6184 = vrot.slane %v6183, 4
        %v6185 = vmax.f32 %v6183, %v6184
        %v6186 = vrot.slane %v6185, 2
        %v6187 = vmax.f32 %v6185, %v6186
        %v6188 = vrot.slane %v6187, 1
        %v6189 = vmax.f32 %v6187, %v6188
        %v6190 = vsel %vm2875, %v5265, -inf
        %v6191 = vrot.slane %v6190, 4
        %v6192 = vmax.f32 %v6190, %v6191
        %v6193 = vrot.slane %v6192, 2
        %v6194 = vmax.f32 %v6192, %v6193
        %v6195 = vrot.slane %v6194, 1
        %v6196 = vmax.f32 %v6194, %v6195
        %v6197 = vsel %vm2875, %v5267, -inf
        %v6198 = vrot.slane %v6197, 4
        %v6199 = vmax.f32 %v6197, %v6198
        %v6200 = vrot.slane %v6199, 2
        %v6201 = vmax.f32 %v6199, %v6200
        %v6202 = vrot.slane %v6201, 1
        %v6203 = vmax.f32 %v6201, %v6202
        %v6204 = vsel %vm2875, %v5275, -inf
        %v6205 = vrot.slane %v6204, 4
        %v6206 = vmax.f32 %v6204, %v6205
        %v6207 = vrot.slane %v6206, 2
        %v6208 = vmax.f32 %v6206, %v6207
        %v6209 = vrot.slane %v6208, 1
        %v6210 = vmax.f32 %v6208, %v6209
        %v6211 = vsel %vm2875, %v5283, -inf
        %v6212 = vrot.slane %v6211, 4
        %v6213 = vmax.f32 %v6211, %v6212
        %v6214 = vrot.slane %v6213, 2
        %v6215 = vmax.f32 %v6213, %v6214
        %v6216 = vrot.slane %v6215, 1
        %v6217 = vmax.f32 %v6215, %v6216
        %v6218 = vsel %vm2875, %v5282, -inf
        %v6219 = vrot.slane %v6218, 4
        %v6220 = vmax.f32 %v6218, %v6219
        %v6221 = vrot.slane %v6220, 2
        %v6222 = vmax.f32 %v6220, %v6221
        %v6223 = vrot.slane %v6222, 1
        %v6224 = vmax.f32 %v6222, %v6223
        %v6225 = vsel %vm2875, %v5284, -inf
        %v6226 = vrot.slane %v6225, 4
        %v6227 = vmax.f32 %v6225, %v6226
        %v6228 = vrot.slane %v6227, 2
        %v6229 = vmax.f32 %v6227, %v6228
        %v6230 = vrot.slane %v6229, 1
        %v6231 = vmax.f32 %v6229, %v6230
        %v6232 = vsel %vm2875, %v5292, -inf
        %v6233 = vrot.slane %v6232, 4
        %v6234 = vmax.f32 %v6232, %v6233
        %v6235 = vrot.slane %v6234, 2
        %v6236 = vmax.f32 %v6234, %v6235
        %v6237 = vrot.slane %v6236, 1
        %v6238 = vmax.f32 %v6236, %v6237
        %v6239 = vsel %vm2875, %v5300, -inf
        %v6240 = vrot.slane %v6239, 4
        %v6241 = vmax.f32 %v6239, %v6240
        %v6242 = vrot.slane %v6241, 2
        %v6243 = vmax.f32 %v6241, %v6242
        %v6244 = vrot.slane %v6243, 1
        %v6245 = vmax.f32 %v6243, %v6244
        %v6246 = vsel %vm2875, %v5299, -inf
        %v6247 = vrot.slane %v6246, 4
        %v6248 = vmax.f32 %v6246, %v6247
        %v6249 = vrot.slane %v6248, 2
        %v6250 = vmax.f32 %v6248, %v6249
        %v6251 = vrot.slane %v6250, 1
        %v6252 = vmax.f32 %v6250, %v6251
        %v6253 = vsel %vm2875, %v5301, -inf
        %v6254 = vrot.slane %v6253, 4
        %v6255 = vmax.f32 %v6253, %v6254
        %v6256 = vrot.slane %v6255, 2
        %v6257 = vmax.f32 %v6255, %v6256
        %v6258 = vrot.slane %v6257, 1
        %v6259 = vmax.f32 %v6257, %v6258
        %v6260 = vsel %vm2875, %v5309, -inf
        %v6261 = vrot.slane %v6260, 4
        %v6262 = vmax.f32 %v6260, %v6261
        %v6263 = vrot.slane %v6262, 2
        %v6264 = vmax.f32 %v6262, %v6263
        %v6265 = vrot.slane %v6264, 1
        %v6266 = vmax.f32 %v6264, %v6265
        %v6267 = vsel %vm2875, %v5317, -inf
        %v6268 = vrot.slane %v6267, 4
        %v6269 = vmax.f32 %v6267, %v6268
        %v6270 = vrot.slane %v6269, 2
        %v6271 = vmax.f32 %v6269, %v6270
        %v6272 = vrot.slane %v6271, 1
        %v6273 = vmax.f32 %v6271, %v6272
        %v6274 = vsel %vm2875, %v5316, -inf
        %v6275 = vrot.slane %v6274, 4
        %v6276 = vmax.f32 %v6274, %v6275
        %v6277 = vrot.slane %v6276, 2
        %v6278 = vmax.f32 %v6276, %v6277
        %v6279 = vrot.slane %v6278, 1
        %v6280 = vmax.f32 %v6278, %v6279
        %v6281 = vsel %vm2875, %v5318, -inf
        %v6282 = vrot.slane %v6281, 4
        %v6283 = vmax.f32 %v6281, %v6282
        %v6284 = vrot.slane %v6283, 2
        %v6285 = vmax.f32 %v6283, %v6284
        %v6286 = vrot.slane %v6285, 1
        %v6287 = vmax.f32 %v6285, %v6286
        %v6288 = vsel %vm2875, %v5326, -inf
        %v6289 = vrot.slane %v6288, 4
        %v6290 = vmax.f32 %v6288, %v6289
        %v6291 = vrot.slane %v6290, 2
        %v6292 = vmax.f32 %v6290, %v6291
        %v6293 = vrot.slane %v6292, 1
        %v6294 = vmax.f32 %v6292, %v6293
        %v6295 = vsel %vm2875, %v5334, -inf
        %v6296 = vrot.slane %v6295, 4
        %v6297 = vmax.f32 %v6295, %v6296
        %v6298 = vrot.slane %v6297, 2
        %v6299 = vmax.f32 %v6297, %v6298
        %v6300 = vrot.slane %v6299, 1
        %v6301 = vmax.f32 %v6299, %v6300
        %v6302 = vsel %vm2875, %v5333, -inf
        %v6303 = vrot.slane %v6302, 4
        %v6304 = vmax.f32 %v6302, %v6303
        %v6305 = vrot.slane %v6304, 2
        %v6306 = vmax.f32 %v6304, %v6305
        %v6307 = vrot.slane %v6306, 1
        %v6308 = vmax.f32 %v6306, %v6307
        %v6309 = vsel %vm2875, %v5335, -inf
        %v6310 = vrot.slane %v6309, 4
        %v6311 = vmax.f32 %v6309, %v6310
        %v6312 = vrot.slane %v6311, 2
        %v6313 = vmax.f32 %v6311, %v6312
        %v6314 = vrot.slane %v6313, 1
        %v6315 = vmax.f32 %v6313, %v6314
        %v6316 = vsel %vm2875, %v5343, -inf
        %v6317 = vrot.slane %v6316, 4
        %v6318 = vmax.f32 %v6316, %v6317
        %v6319 = vrot.slane %v6318, 2
        %v6320 = vmax.f32 %v6318, %v6319
        %v6321 = vrot.slane %v6320, 1
        %v6322 = vmax.f32 %v6320, %v6321
        %v6323 = vsel %vm2875, %v5351, -inf
        %v6324 = vrot.slane %v6323, 4
        %v6325 = vmax.f32 %v6323, %v6324
        %v6326 = vrot.slane %v6325, 2
        %v6327 = vmax.f32 %v6325, %v6326
        %v6328 = vrot.slane %v6327, 1
        %v6329 = vmax.f32 %v6327, %v6328
        %v6330 = vsel %vm2875, %v5350, -inf
        %v6331 = vrot.slane %v6330, 4
        %v6332 = vmax.f32 %v6330, %v6331
        %v6333 = vrot.slane %v6332, 2
        %v6334 = vmax.f32 %v6332, %v6333
        %v6335 = vrot.slane %v6334, 1
        %v6336 = vmax.f32 %v6334, %v6335
        %v6337 = vsel %vm2875, %v5352, -inf
        %v6338 = vrot.slane %v6337, 4
        %v6339 = vmax.f32 %v6337, %v6338
        %v6340 = vrot.slane %v6339, 2
        %v6341 = vmax.f32 %v6339, %v6340
        %v6342 = vrot.slane %v6341, 1
        %v6343 = vmax.f32 %v6341, %v6342
        %v6344 = vsel %vm2875, %v5360, -inf
        %v6345 = vrot.slane %v6344, 4
        %v6346 = vmax.f32 %v6344, %v6345
        %v6347 = vrot.slane %v6346, 2
        %v6348 = vmax.f32 %v6346, %v6347
        %v6349 = vrot.slane %v6348, 1
        %v6350 = vmax.f32 %v6348, %v6349
        %v6351 = vsel %vm2875, %v5368, -inf
        %v6352 = vrot.slane %v6351, 4
        %v6353 = vmax.f32 %v6351, %v6352
        %v6354 = vrot.slane %v6353, 2
        %v6355 = vmax.f32 %v6353, %v6354
        %v6356 = vrot.slane %v6355, 1
        %v6357 = vmax.f32 %v6355, %v6356
        %v6358 = vsel %vm2875, %v5367, -inf
        %v6359 = vrot.slane %v6358, 4
        %v6360 = vmax.f32 %v6358, %v6359
        %v6361 = vrot.slane %v6360, 2
        %v6362 = vmax.f32 %v6360, %v6361
        %v6363 = vrot.slane %v6362, 1
        %v6364 = vmax.f32 %v6362, %v6363
        %v6365 = vsel %vm2875, %v5369, -inf
        %v6366 = vrot.slane %v6365, 4
        %v6367 = vmax.f32 %v6365, %v6366
        %v6368 = vrot.slane %v6367, 2
        %v6369 = vmax.f32 %v6367, %v6368
        %v6370 = vrot.slane %v6369, 1
        %v6371 = vmax.f32 %v6369, %v6370
        %v6372 = vsel %vm2875, %v5377, -inf
        %v6373 = vrot.slane %v6372, 4
        %v6374 = vmax.f32 %v6372, %v6373
        %v6375 = vrot.slane %v6374, 2
        %v6376 = vmax.f32 %v6374, %v6375
        %v6377 = vrot.slane %v6376, 1
        %v6378 = vmax.f32 %v6376, %v6377
        %v6379 = vsel %vm2875, %v5385, -inf
        %v6380 = vrot.slane %v6379, 4
        %v6381 = vmax.f32 %v6379, %v6380
        %v6382 = vrot.slane %v6381, 2
        %v6383 = vmax.f32 %v6381, %v6382
        %v6384 = vrot.slane %v6383, 1
        %v6385 = vmax.f32 %v6383, %v6384
        %v6386 = vsel %vm2875, %v5384, -inf
        %v6387 = vrot.slane %v6386, 4
        %v6388 = vmax.f32 %v6386, %v6387
        %v6389 = vrot.slane %v6388, 2
        %v6390 = vmax.f32 %v6388, %v6389
        %v6391 = vrot.slane %v6390, 1
        %v6392 = vmax.f32 %v6390, %v6391
        %v6393 = vsel %vm2875, %v5386, -inf
        %v6394 = vrot.slane %v6393, 4
        %v6395 = vmax.f32 %v6393, %v6394
        %v6396 = vrot.slane %v6395, 2
        %v6397 = vmax.f32 %v6395, %v6396
        %v6398 = vrot.slane %v6397, 1
        %v6399 = vmax.f32 %v6397, %v6398
        %v6400 = vsel %vm2875, %v5394, -inf
        %v6401 = vrot.slane %v6400, 4
        %v6402 = vmax.f32 %v6400, %v6401
        %v6403 = vrot.slane %v6402, 2
        %v6404 = vmax.f32 %v6402, %v6403
        %v6405 = vrot.slane %v6404, 1
        %v6406 = vmax.f32 %v6404, %v6405
        %v6407 = vsel %vm2875, %v5402, -inf
        %v6408 = vrot.slane %v6407, 4
        %v6409 = vmax.f32 %v6407, %v6408
        %v6410 = vrot.slane %v6409, 2
        %v6411 = vmax.f32 %v6409, %v6410
        %v6412 = vrot.slane %v6411, 1
        %v6413 = vmax.f32 %v6411, %v6412
        %v6414 = vsel %vm2875, %v5401, -inf
        %v6415 = vrot.slane %v6414, 4
        %v6416 = vmax.f32 %v6414, %v6415
        %v6417 = vrot.slane %v6416, 2
        %v6418 = vmax.f32 %v6416, %v6417
        %v6419 = vrot.slane %v6418, 1
        %v6420 = vmax.f32 %v6418, %v6419
        %v6421 = vsel %vm2875, %v5403, -inf
        %v6422 = vrot.slane %v6421, 4
        %v6423 = vmax.f32 %v6421, %v6422
        %v6424 = vrot.slane %v6423, 2
        %v6425 = vmax.f32 %v6423, %v6424
        %v6426 = vrot.slane %v6425, 1
        %v6427 = vmax.f32 %v6425, %v6426
        %v6428 = vsel %vm2872, %v5538, -inf
        %v6429 = vsel %vm2872, %v5594, -inf
        %v6430 = vmax.f32 %v6428, %v6429
        %v6431 = vsel %vm2872, %v5545, -inf
        %v6432 = vsel %vm2872, %v5601, -inf
        %v6433 = vmax.f32 %v6431, %v6432
        %v6434 = vsel %vm2872, %v5552, -inf
        %v6435 = vsel %vm2872, %v5608, -inf
        %v6436 = vmax.f32 %v6434, %v6435
        %v6437 = vsel %vm2872, %v5559, -inf
        %v6438 = vsel %vm2872, %v5615, -inf
        %v6439 = vmax.f32 %v6437, %v6438
        %v6440 = vsel %vm2872, %v5566, -inf
        %v6441 = vsel %vm2872, %v5622, -inf
        %v6442 = vmax.f32 %v6440, %v6441
        %v6443 = vsel %vm2872, %v5573, -inf
        %v6444 = vsel %vm2872, %v5629, -inf
        %v6445 = vmax.f32 %v6443, %v6444
        %v6446 = vsel %vm2872, %v5580, -inf
        %v6447 = vsel %vm2872, %v5636, -inf
        %v6448 = vmax.f32 %v6446, %v6447
        %v6449 = vsel %vm2872, %v5587, -inf
        %v6450 = vsel %vm2872, %v5643, -inf
        %v6451 = vmax.f32 %v6449, %v6450
        %v6452 = vsel %vm2872, %v5650, -inf
        %v6453 = vsel %vm2872, %v5706, -inf
        %v6454 = vmax.f32 %v6452, %v6453
        %v6455 = vsel %vm2872, %v5657, -inf
        %v6456 = vsel %vm2872, %v5713, -inf
        %v6457 = vmax.f32 %v6455, %v6456
        %v6458 = vsel %vm2872, %v5664, -inf
        %v6459 = vsel %vm2872, %v5720, -inf
        %v6460 = vmax.f32 %v6458, %v6459
        %v6461 = vsel %vm2872, %v5671, -inf
        %v6462 = vsel %vm2872, %v5727, -inf
        %v6463 = vmax.f32 %v6461, %v6462
        %v6464 = vsel %vm2872, %v5678, -inf
        %v6465 = vsel %vm2872, %v5734, -inf
        %v6466 = vmax.f32 %v6464, %v6465
        %v6467 = vsel %vm2872, %v5685, -inf
        %v6468 = vsel %vm2872, %v5741, -inf
        %v6469 = vmax.f32 %v6467, %v6468
        %v6470 = vsel %vm2872, %v5692, -inf
        %v6471 = vsel %vm2872, %v5748, -inf
        %v6472 = vmax.f32 %v6470, %v6471
        %v6473 = vsel %vm2872, %v5699, -inf
        %v6474 = vsel %vm2872, %v5755, -inf
        %v6475 = vmax.f32 %v6473, %v6474
        %v6476 = vsel %vm2872, %v5762, -inf
        %v6477 = vsel %vm2872, %v5818, -inf
        %v6478 = vmax.f32 %v6476, %v6477
        %v6479 = vsel %vm2872, %v5769, -inf
        %v6480 = vsel %vm2872, %v5825, -inf
        %v6481 = vmax.f32 %v6479, %v6480
        %v6482 = vsel %vm2872, %v5776, -inf
        %v6483 = vsel %vm2872, %v5832, -inf
        %v6484 = vmax.f32 %v6482, %v6483
        %v6485 = vsel %vm2872, %v5783, -inf
        %v6486 = vsel %vm2872, %v5839, -inf
        %v6487 = vmax.f32 %v6485, %v6486
        %v6488 = vsel %vm2872, %v5790, -inf
        %v6489 = vsel %vm2872, %v5846, -inf
        %v6490 = vmax.f32 %v6488, %v6489
        %v6491 = vsel %vm2872, %v5797, -inf
        %v6492 = vsel %vm2872, %v5853, -inf
        %v6493 = vmax.f32 %v6491, %v6492
        %v6494 = vsel %vm2872, %v5804, -inf
        %v6495 = vsel %vm2872, %v5860, -inf
        %v6496 = vmax.f32 %v6494, %v6495
        %v6497 = vsel %vm2872, %v5811, -inf
        %v6498 = vsel %vm2872, %v5867, -inf
        %v6499 = vmax.f32 %v6497, %v6498
        %v6500 = vsel %vm2872, %v5874, -inf
        %v6501 = vsel %vm2872, %v5930, -inf
        %v6502 = vmax.f32 %v6500, %v6501
        %v6503 = vsel %vm2872, %v5881, -inf
        %v6504 = vsel %vm2872, %v5937, -inf
        %v6505 = vmax.f32 %v6503, %v6504
        %v6506 = vsel %vm2872, %v5888, -inf
        %v6507 = vsel %vm2872, %v5944, -inf
        %v6508 = vmax.f32 %v6506, %v6507
        %v6509 = vsel %vm2872, %v5895, -inf
        %v6510 = vsel %vm2872, %v5951, -inf
        %v6511 = vmax.f32 %v6509, %v6510
        %v6512 = vsel %vm2872, %v5902, -inf
        %v6513 = vsel %vm2872, %v5958, -inf
        %v6514 = vmax.f32 %v6512, %v6513
        %v6515 = vsel %vm2872, %v5909, -inf
        %v6516 = vsel %vm2872, %v5965, -inf
        %v6517 = vmax.f32 %v6515, %v6516
        %v6518 = vsel %vm2872, %v5916, -inf
        %v6519 = vsel %vm2872, %v5972, -inf
        %v6520 = vmax.f32 %v6518, %v6519
        %v6521 = vsel %vm2872, %v5923, -inf
        %v6522 = vsel %vm2872, %v5979, -inf
        %v6523 = vmax.f32 %v6521, %v6522
        %v6524 = vsel %vm2872, %v5986, -inf
        %v6525 = vsel %vm2872, %v6042, -inf
        %v6526 = vmax.f32 %v6524, %v6525
        %v6527 = vsel %vm2872, %v5993, -inf
        %v6528 = vsel %vm2872, %v6049, -inf
        %v6529 = vmax.f32 %v6527, %v6528
        %v6530 = vsel %vm2872, %v6000, -inf
        %v6531 = vsel %vm2872, %v6056, -inf
        %v6532 = vmax.f32 %v6530, %v6531
        %v6533 = vsel %vm2872, %v6007, -inf
        %v6534 = vsel %vm2872, %v6063, -inf
        %v6535 = vmax.f32 %v6533, %v6534
        %v6536 = vsel %vm2872, %v6014, -inf
        %v6537 = vsel %vm2872, %v6070, -inf
        %v6538 = vmax.f32 %v6536, %v6537
        %v6539 = vsel %vm2872, %v6021, -inf
        %v6540 = vsel %vm2872, %v6077, -inf
        %v6541 = vmax.f32 %v6539, %v6540
        %v6542 = vsel %vm2872, %v6028, -inf
        %v6543 = vsel %vm2872, %v6084, -inf
        %v6544 = vmax.f32 %v6542, %v6543
        %v6545 = vsel %vm2872, %v6035, -inf
        %v6546 = vsel %vm2872, %v6091, -inf
        %v6547 = vmax.f32 %v6545, %v6546
        %v6548 = vsel %vm2872, %v6098, -inf
        %v6549 = vsel %vm2872, %v6154, -inf
        %v6550 = vmax.f32 %v6548, %v6549
        %v6551 = vsel %vm2872, %v6105, -inf
        %v6552 = vsel %vm2872, %v6161, -inf
        %v6553 = vmax.f32 %v6551, %v6552
        %v6554 = vsel %vm2872, %v6112, -inf
        %v6555 = vsel %vm2872, %v6168, -inf
        %v6556 = vmax.f32 %v6554, %v6555
        %v6557 = vsel %vm2872, %v6119, -inf
        %v6558 = vsel %vm2872, %v6175, -inf
        %v6559 = vmax.f32 %v6557, %v6558
        %v6560 = vsel %vm2872, %v6126, -inf
        %v6561 = vsel %vm2872, %v6182, -inf
        %v6562 = vmax.f32 %v6560, %v6561
        %v6563 = vsel %vm2872, %v6133, -inf
        %v6564 = vsel %vm2872, %v6189, -inf
        %v6565 = vmax.f32 %v6563, %v6564
        %v6566 = vsel %vm2872, %v6140, -inf
        %v6567 = vsel %vm2872, %v6196, -inf
        %v6568 = vmax.f32 %v6566, %v6567
        %v6569 = vsel %vm2872, %v6147, -inf
        %v6570 = vsel %vm2872, %v6203, -inf
        %v6571 = vmax.f32 %v6569, %v6570
        %v6572 = vsel %vm2872, %v6210, -inf
        %v6573 = vsel %vm2872, %v6266, -inf
        %v6574 = vmax.f32 %v6572, %v6573
        %v6575 = vsel %vm2872, %v6217, -inf
        %v6576 = vsel %vm2872, %v6273, -inf
        %v6577 = vmax.f32 %v6575, %v6576
        %v6578 = vsel %vm2872, %v6224, -inf
        %v6579 = vsel %vm2872, %v6280, -inf
        %v6580 = vmax.f32 %v6578, %v6579
        %v6581 = vsel %vm2872, %v6231, -inf
        %v6582 = vsel %vm2872, %v6287, -inf
        %v6583 = vmax.f32 %v6581, %v6582
        %v6584 = vsel %vm2872, %v6238, -inf
        %v6585 = vsel %vm2872, %v6294, -inf
        %v6586 = vmax.f32 %v6584, %v6585
        %v6587 = vsel %vm2872, %v6245, -inf
        %v6588 = vsel %vm2872, %v6301, -inf
        %v6589 = vmax.f32 %v6587, %v6588
        %v6590 = vsel %vm2872, %v6252, -inf
        %v6591 = vsel %vm2872, %v6308, -inf
        %v6592 = vmax.f32 %v6590, %v6591
        %v6593 = vsel %vm2872, %v6259, -inf
        %v6594 = vsel %vm2872, %v6315, -inf
        %v6595 = vmax.f32 %v6593, %v6594
        %v6596 = vsel %vm2872, %v6322, -inf
        %v6597 = vsel %vm2872, %v6378, -inf
        %v6598 = vmax.f32 %v6596, %v6597
        %v6599 = vsel %vm2872, %v6329, -inf
        %v6600 = vsel %vm2872, %v6385, -inf
        %v6601 = vmax.f32 %v6599, %v6600
        %v6602 = vsel %vm2872, %v6336, -inf
        %v6603 = vsel %vm2872, %v6392, -inf
        %v6604 = vmax.f32 %v6602, %v6603
        %v6605 = vsel %vm2872, %v6343, -inf
        %v6606 = vsel %vm2872, %v6399, -inf
        %v6607 = vmax.f32 %v6605, %v6606
        %v6608 = vsel %vm2872, %v6350, -inf
        %v6609 = vsel %vm2872, %v6406, -inf
        %v6610 = vmax.f32 %v6608, %v6609
        %v6611 = vsel %vm2872, %v6357, -inf
        %v6612 = vsel %vm2872, %v6413, -inf
        %v6613 = vmax.f32 %v6611, %v6612
        %v6614 = vsel %vm2872, %v6364, -inf
        %v6615 = vsel %vm2872, %v6420, -inf
        %v6616 = vmax.f32 %v6614, %v6615
        %v6617 = vsel %vm2872, %v6371, -inf
        %v6618 = vsel %vm2872, %v6427, -inf
        %v6619 = vmax.f32 %v6617, %v6618
        %vm6684 = vcmask 1041409
        %v6685 = vsel %vm6684, %v6433, %v6430
        %vm6686 = vcmask 1042434
        %v6687 = vsel %vm6686, %v6436, %v6685
        %vm6688 = vcmask 1043459
        %v6689 = vsel %vm6688, %v6439, %v6687
        %vm6690 = vcmask 1044484
        %v6691 = vsel %vm6690, %v6442, %v6689
        %vm6692 = vcmask 1045509
        %v6693 = vsel %vm6692, %v6445, %v6691
        %vm6694 = vcmask 1046534
        %v6695 = vsel %vm6694, %v6448, %v6693
        %vm6696 = vcmask 1047559
        %v6697 = vsel %vm6696, %v6451, %v6695
        %v6698 = vsel %vm6684, %v6457, %v6454
        %v6699 = vsel %vm6686, %v6460, %v6698
        %v6700 = vsel %vm6688, %v6463, %v6699
        %v6701 = vsel %vm6690, %v6466, %v6700
        %v6702 = vsel %vm6692, %v6469, %v6701
        %v6703 = vsel %vm6694, %v6472, %v6702
        %v6704 = vsel %vm6696, %v6475, %v6703
        %v6705 = vsel %vm6684, %v6481, %v6478
        %v6706 = vsel %vm6686, %v6484, %v6705
        %v6707 = vsel %vm6688, %v6487, %v6706
        %v6708 = vsel %vm6690, %v6490, %v6707
        %v6709 = vsel %vm6692, %v6493, %v6708
        %v6710 = vsel %vm6694, %v6496, %v6709
        %v6711 = vsel %vm6696, %v6499, %v6710
        %v6712 = vsel %vm6684, %v6505, %v6502
        %v6713 = vsel %vm6686, %v6508, %v6712
        %v6714 = vsel %vm6688, %v6511, %v6713
        %v6715 = vsel %vm6690, %v6514, %v6714
        %v6716 = vsel %vm6692, %v6517, %v6715
        %v6717 = vsel %vm6694, %v6520, %v6716
        %v6718 = vsel %vm6696, %v6523, %v6717
        %v6719 = vsel %vm6684, %v6529, %v6526
        %v6720 = vsel %vm6686, %v6532, %v6719
        %v6721 = vsel %vm6688, %v6535, %v6720
        %v6722 = vsel %vm6690, %v6538, %v6721
        %v6723 = vsel %vm6692, %v6541, %v6722
        %v6724 = vsel %vm6694, %v6544, %v6723
        %v6725 = vsel %vm6696, %v6547, %v6724
        %v6726 = vsel %vm6684, %v6553, %v6550
        %v6727 = vsel %vm6686, %v6556, %v6726
        %v6728 = vsel %vm6688, %v6559, %v6727
        %v6729 = vsel %vm6690, %v6562, %v6728
        %v6730 = vsel %vm6692, %v6565, %v6729
        %v6731 = vsel %vm6694, %v6568, %v6730
        %v6732 = vsel %vm6696, %v6571, %v6731
        %v6733 = vsel %vm6684, %v6577, %v6574
        %v6734 = vsel %vm6686, %v6580, %v6733
        %v6735 = vsel %vm6688, %v6583, %v6734
        %v6736 = vsel %vm6690, %v6586, %v6735
        %v6737 = vsel %vm6692, %v6589, %v6736
        %v6738 = vsel %vm6694, %v6592, %v6737
        %v6739 = vsel %vm6696, %v6595, %v6738
        %v6740 = vsel %vm6684, %v6601, %v6598
        %v6741 = vsel %vm6686, %v6604, %v6740
        %v6742 = vsel %vm6688, %v6607, %v6741
        %v6743 = vsel %vm6690, %v6610, %v6742
        %v6744 = vsel %vm6692, %v6613, %v6743
        %v6745 = vsel %vm6694, %v6616, %v6744
        %v6746 = vsel %vm6696, %v6619, %v6745
        %6755 = vst.msk [vmem:[%s217] sm:$0xff] %vm2872, %v6697
        %6756 = vst.msk [vmem:[%s217 + $0x8] sm:$0xff] %vm2872, %v6704
        %6757 = vst.msk [vmem:[%s217 + $0x10] sm:$0xff] %vm2872, %v6711
        %6758 = vst.msk [vmem:[%s217 + $0x18] sm:$0xff] %vm2872, %v6718
        %6759 = vst.msk [vmem:[%s217 + $0x20] sm:$0xff] %vm2872, %v6725
        %6760 = vst.msk [vmem:[%s217 + $0x28] sm:$0xff] %vm2872, %v6732
        %6761 = vst.msk [vmem:[%s217 + $0x30] sm:$0xff] %vm2872, %v6739
        %6762 = vst.msk [vmem:[%s217 + $0x38] sm:$0xff] %vm2872, %v6746
        %s6763 = sand.u32 %s137, 1
        %s6764 = scalar_lea.sflag [#allocation4], %s6763
        %s6765 = sand.u32 %s137, 1
        %s6766 = smul.addr %s6765, 64
        %s6767 = scalar_lea.vmem [#allocation3], %s6766
        // Predicated region
        $region41: #{tpu_custom_call.1} parent=39 // pred_check
          %p6768 = pneg %p147
        $region42: #{tpu_custom_call.1} parent=39 // pred_check_branch
          %6770 = sbr.rel (%p6768) target = $region44
        $region43: #{tpu_custom_call.1} parent=39 // pred_region
          %s6772 = ssub.s32 1024, 1024
          %6773 = vsyncadd %s6764, %s6772
          %s6774 = smul.addr %s19, 8
          %s6775 = smul.addr %s6774, 128
          %s6776 = scalar_lea.hbm %s5, %s6775
          %s6777 = sshll.u32 %s6767, 4
          %s6778 = int_to_ptr.vmem [resolvable:$true] %s6777
          %6783 = dma.vmem_to_hbm [thread:$0]  %s6778, 1024, %s6776, %s6764, 128, 128, 8
        $region44: #{tpu_custom_call.1} parent=39 // pred_fallthru
          _
      $region40: #{tpu_custom_call.1} parent=5 // pred_fallthru
        _
      %p6784 = scmp.le.s32.totalorder 2, %s14
      // Predicated region
      $region45: #{tpu_custom_call.1} parent=5 // pred_check
        %p6785 = pneg %p6784
      $region46: #{tpu_custom_call.1} parent=5 // pred_check_branch
        %6787 = sbr.rel (%p6785) target = $region48
      $region47: #{tpu_custom_call.1} parent=5 // pred_region
        %s6788 = ssub.s32 %s14, 2
        // Predicated region
        $region49: #{tpu_custom_call.1} parent=47 // pred_check
          %p6789 = pneg %p153
        $region50: #{tpu_custom_call.1} parent=47 // pred_check_branch
          %6791 = sbr.rel (%p6789) target = $region52
        $region51: #{tpu_custom_call.1} parent=47 // pred_region
          %s6792 = sand.u32 %s138, 1
          %s6793 = scalar_lea.sflag [#allocation4], %s6792
          %s6794 = sand.u32 %s138, 1
          %s6795 = smul.addr %s6794, 64
          %s6796 = scalar_lea.vmem [#allocation3], %s6795
          %6797 = dma.done %s6793, 1024
        $region52: #{tpu_custom_call.1} parent=47 // pred_fallthru
          _
      $region48: #{tpu_custom_call.1} parent=5 // pred_fallthru
        _
    $region6: #{tpu_custom_call.1} parent=1 // loop_footer
      %s18 = sadd.s32 1, %s14
    $region7: #{tpu_custom_call.1} parent=1 // loop_footer_branch
      %13 = sbr.rel target = $region3
    $region8: #{tpu_custom_call.1} parent=1 // loop_exit
      _
    %6798 = vsyncpa [#allocation4], 1
    %s6799 = scalar_lea.sflag [#allocation4], 1
    %6800 = vsyncpa %s6799, 1

</llo_original>
